<compile_context>
chip_gen: v5e
topology: v5e:2x2
jax: 0.10.0
libtpu: 0.0.40
codegen_flags: <defaults>
</compile_context>

<pallas_src>
import functools

import jax
import jax.numpy as jnp
from jax.experimental import pallas as pl
from jax.experimental.pallas import tpu as pltpu


def _granger_kernel(atac_ref, rna_ref, s0_ref, s1_ref, p_ref,
                    full_ref, red_ref, *, num_layers, tanh_dtype):
    """One row-tile of pairs; S_0/S_1 are broadcast (constant index map) to every step."""
    L = num_layers

    p = p_ref[...]                              # (R, 6L+1) f32
    wa = [p[:, n:n + 1] for n in range(L)]
    ba = [p[:, L + n:L + n + 1] for n in range(L)]
    wr = [p[:, 2 * L + n:2 * L + n + 1] for n in range(L)]
    br = [p[:, 3 * L + n:3 * L + n + 1] for n in range(L)]
    wrr = [p[:, 4 * L + n:4 * L + n + 1] for n in range(L)]
    brr = [p[:, 5 * L + n:5 * L + n + 1] for n in range(L)]
    ca = p[:, 6 * L:6 * L + 1]                  # (R, 1) C_a[pair_idx]

    s0 = s0_ref[...]                            # (T, T) bf16
    s1 = s1_ref[...]                            # (T, T) bf16

    # ---- layer 1: rna @ S_0 shared between the rna and rna_r branches.
    za = jnp.dot(atac_ref[...], s0, preferred_element_type=jnp.float32)   # (R, T) f32
    zr = jnp.dot(rna_ref[...], s0, preferred_element_type=jnp.float32)    # (R, T) f32

    a_out = za * wa[0] + ba[0]
    r_out = zr * wr[0] + br[0]
    rr_out = zr * wrr[0] + brr[0]
    a_acc, r_acc, rr_acc = a_out, r_out, rr_out

    # ---- layers 2..L: per-branch (R,T) @ (T,T) matmuls, f32 accumulation.
    for n in range(1, L):
        ha = jnp.tanh(a_out.astype(tanh_dtype)).astype(s1.dtype)
        hr = jnp.tanh(r_out.astype(tanh_dtype)).astype(s1.dtype)
        hrr = jnp.tanh(rr_out.astype(tanh_dtype)).astype(s1.dtype)
        a_out = jnp.dot(ha, s1, preferred_element_type=jnp.float32) * wa[n] + ba[n]
        r_out = jnp.dot(hr, s1, preferred_element_type=jnp.float32) * wr[n] + br[n]
        rr_out = jnp.dot(hrr, s1, preferred_element_type=jnp.float32) * wrr[n] + brr[n]
        a_acc = a_acc + a_out
        r_acc = r_acc + r_out
        rr_acc = rr_acc + rr_out

    inv_L = 1.0 / L                             # mean over the L stacked layer outputs
    # final_activation == 'exp'
    full_ref[...] = jnp.exp((r_acc + a_acc * ca) * inv_L).astype(full_ref.dtype)
    red_ref[...] = jnp.exp(rr_acc * inv_L).astype(red_ref.dtype)


def _use_bf16_tanh():
    """bf16 EUP path exists on v6e/v7x; keep f32 tanh on v5e and older (and when unsure)."""
    try:
        kind = jax.devices()[0].device_kind.lower()
    except Exception:
        return False
    return not any(v in kind for v in ("v2", "v3", "v4", "v5"))


def graph_granger_forward(atac_x, rna_x, atac_idx, rna_idx, pair_idx,
                          S_0, S_1, params, *, num_layers, tile_rows=512,
                          out_dtype=jnp.float32):
    n_pairs, T = atac_x.shape
    L = num_layers
    n_tiles = pl.cdiv(n_pairs, tile_rows)
    npad = n_tiles * tile_rows
    width = 6 * L + 1                          # real packed-param width (no 128-lane padding)

    # ---------- glue (plain JAX): gather + pack per-pair parameters ----------
    cols = []
    for key_w, key_b, idx in (("atac_W", "atac_b", atac_idx),
                              ("rna_W", "rna_b", rna_idx),
                              ("rna_r_W", "rna_r_b", rna_idx)):
        cols.append(jnp.stack([params[key_w][n][idx, 0] for n in range(L)], axis=1))
        cols.append(jnp.stack([params[key_b][n][idx, 0] for n in range(L)], axis=1))
    cols.append(params["C_a"][pair_idx, 0][:, None])
    packed = jnp.concatenate(cols, axis=1).astype(jnp.float32)          # (n_pairs, 6L+1)
    packed = jnp.pad(packed, ((0, npad - n_pairs), (0, 0)))             # (npad, 6L+1)

    # pad+cast fuse into one producer; bf16 halves activation HBM traffic into the kernel.
    def pad_rows(x):
        return jnp.pad(x, ((0, npad - x.shape[0]), (0, 0))).astype(jnp.bfloat16)

    atac_p = pad_rows(atac_x)
    rna_p = pad_rows(rna_x)
    s0 = S_0.astype(jnp.bfloat16)
    s1 = S_1.astype(jnp.bfloat16)

    # ---------- VMEM budget (double-buffered pipeline blocks + f32 temp headroom) ----------
    out_bytes = jnp.dtype(out_dtype).itemsize
    blk_bytes = (2 * 2 * tile_rows * T * 2          # atac + rna input blocks (bf16, x2 buffers)
                 + 2 * tile_rows * width * 4        # packed params (f32, x2 buffers)
                 + 2 * 2 * T * T * 2                # S_0 + S_1 (bf16, constant index map)
                 + 2 * 2 * tile_rows * T * out_bytes)   # two output blocks
    tmp_bytes = 10 * tile_rows * T * 4              # f32/bf16 intermediates inside the body
    vmem_limit = int(min(max(blk_bytes + tmp_bytes + (8 << 20), 32 << 20), 48 << 20))
    # TODO(synk): on v7x with large T, single-buffer the constant S_0/S_1 blocks
    # (pipeline_mode=pl.Buffered(1) or a one-shot DMA into scratch) to reclaim 2*T^2*2 bytes.

    grid = (n_tiles,)

    def rows(r, c):
        return pl.BlockSpec((r, c), lambda i: (i, 0))

    s_spec = pl.BlockSpec((T, T), lambda i: (0, 0))   # constant index map -> fetched once

    tanh_dtype = jnp.bfloat16 if _use_bf16_tanh() else jnp.float32
    kernel = functools.partial(_granger_kernel, num_layers=L, tanh_dtype=tanh_dtype)

    cost = pl.CostEstimate(
        flops=int(2 * T * T * npad * (2 + 3 * (L - 1)) + 12 * L * npad * T),
        transcendentals=int((3 * (L - 1) + 2) * npad * T),
        bytes_accessed=int(npad * T * (2 * 2 + 2 * out_bytes)
                           + npad * width * 4 + 2 * T * T * 2),
    )

    full, reduced = pl.pallas_call(
        kernel,
        out_shape=(jax.ShapeDtypeStruct((npad, T), out_dtype),
                   jax.ShapeDtypeStruct((npad, T), out_dtype)),
        grid=grid,
        in_specs=[rows(tile_rows, T),           # atac (bf16)
                  rows(tile_rows, T),           # rna  (bf16)
                  s_spec, s_spec,               # S_0, S_1 (bf16)
                  rows(tile_rows, width)],      # packed params (f32), last dim == full extent
        out_specs=(rows(tile_rows, T), rows(tile_rows, T)),
        compiler_params=pltpu.CompilerParams(
            dimension_semantics=("parallel",),  # shards row-tiles across TCs on v7x megacore
            vmem_limit_bytes=vmem_limit),
        cost_estimate=cost,
    )(atac_p, rna_p, s0, s1, packed)

    return full[:n_pairs], reduced[:n_pairs]


# ---------------- pure-JAX f32 reference (mirrors the PyTorch module) ----------------
def ref_forward(atac_x, rna_x, atac_idx, rna_idx, pair_idx, S_0, S_1,
                params, num_layers):
    def gcn(x, S, W, b, idx):
        return x @ S * W[idx] + b[idx]

    atac_out = gcn(atac_x, S_0, params["atac_W"][0], params["atac_b"][0], atac_idx)
    rna_out = gcn(rna_x, S_0, params["rna_W"][0], params["rna_b"][0], rna_idx)
    rna_r_out = gcn(rna_x, S_0, params["rna_r_W"][0], params["rna_r_b"][0], rna_idx)
    atac_list, rna_list, rna_r_list = [atac_out], [rna_out], [rna_r_out]
    for n in range(1, num_layers):
        atac_out = gcn(jnp.tanh(atac_out), S_1, params["atac_W"][n], params["atac_b"][n], atac_idx)
        rna_out = gcn(jnp.tanh(rna_out), S_1, params["rna_W"][n], params["rna_b"][n], rna_idx)
        rna_r_out = gcn(jnp.tanh(rna_r_out), S_1, params["rna_r_W"][n], params["rna_r_b"][n], rna_idx)
        atac_list.append(atac_out); rna_list.append(rna_out); rna_r_list.append(rna_r_out)
    atac_m = jnp.mean(jnp.stack(atac_list, 0), 0)
    rna_m = jnp.mean(jnp.stack(rna_list, 0), 0)
    rna_r_m = jnp.mean(jnp.stack(rna_r_list, 0), 0)
    full = jnp.exp(rna_m + atac_m * params["C_a"][pair_idx])
    reduced = jnp.exp(rna_r_m)
    return full, reduced


def _xavier_normal(key, shape):
    fan_in, fan_out = shape[1], shape[0]
    std = (2.0 / (fan_in + fan_out)) ** 0.5
    return std * jax.random.normal(key, shape, dtype=jnp.float32)


if __name__ == "__main__":
    # small deterministic problem; n_pairs deliberately NOT a multiple of tile_rows
    num_layers = 3
    n_pairs, T = 600, 128
    n_peaks, n_genes = 10, 6

    key = jax.random.PRNGKey(0)
    ks = jax.random.split(key, 16)

    atac_x = jax.random.normal(ks[0], (n_pairs, T), dtype=jnp.float32)
    rna_x = jax.random.normal(ks[1], (n_pairs, T), dtype=jnp.float32)
    # scale S so exp() stays in a sane range
    S_0 = jax.random.normal(ks[2], (T, T), dtype=jnp.float32) / jnp.sqrt(T)
    S_1 = jax.random.normal(ks[3], (T, T), dtype=jnp.float32) / jnp.sqrt(T)
    atac_idx = jax.random.randint(ks[4], (n_pairs,), 0, n_peaks)
    rna_idx = jax.random.randint(ks[5], (n_pairs,), 0, n_genes)
    pair_idx = jnp.arange(n_pairs)

    pkeys = jax.random.split(ks[6], 6 * num_layers + 1)
    params = {
        "atac_W": [_xavier_normal(pkeys[6 * n + 0], (n_peaks, 1)) for n in range(num_layers)],
        "atac_b": [_xavier_normal(pkeys[6 * n + 1], (n_peaks, 1)) for n in range(num_layers)],
        "rna_W": [_xavier_normal(pkeys[6 * n + 2], (n_genes, 1)) for n in range(num_layers)],
        "rna_b": [_xavier_normal(pkeys[6 * n + 3], (n_genes, 1)) for n in range(num_layers)],
        "rna_r_W": [_xavier_normal(pkeys[6 * n + 4], (n_genes, 1)) for n in range(num_layers)],
        "rna_r_b": [_xavier_normal(pkeys[6 * n + 5], (n_genes, 1)) for n in range(num_layers)],
        "C_a": _xavier_normal(pkeys[-1], (n_pairs, 1)),
    }

    # tile_rows=512 -> n_tiles=2 here (even split for the v7x 2-TC megacore).
    full, reduced = graph_granger_forward(
        atac_x, rna_x, atac_idx, rna_idx, pair_idx, S_0, S_1, params,
        num_layers=num_layers, tile_rows=512)
    jax.block_until_ready((full, reduced))

    full_ref, reduced_ref = ref_forward(
        atac_x, rna_x, atac_idx, rna_idx, pair_idx, S_0, S_1, params, num_layers)

    # bf16 MXU operands (+ bf16 tanh on v6e/v7x) vs f32 reference -> relaxed tolerance
    assert jnp.allclose(full, full_ref, rtol=3e-2, atol=1e-3), "full_output mismatch"
    assert jnp.allclose(reduced, reduced_ref, rtol=3e-2, atol=1e-3), "reduced_output mismatch"
    print("KERNEL_OK")
</pallas_src>

<mosaic_0001>
module attributes {stable_mosaic.version = 11 : i64} {
  func.func @_granger_kernel(%arg0: i32, %arg1: memref<512x128xbf16, #tpu.memory_space<vmem>>, %arg2: memref<512x128xbf16, #tpu.memory_space<vmem>>, %arg3: memref<128x128xbf16, #tpu.memory_space<vmem>>, %arg4: memref<128x128xbf16, #tpu.memory_space<vmem>>, %arg5: memref<512x19xf32, #tpu.memory_space<vmem>>, %arg6: memref<512x128xf32, #tpu.memory_space<vmem>>, %arg7: memref<512x128xf32, #tpu.memory_space<vmem>>) attributes {dimension_semantics = [#tpu.dimension_semantics<parallel>], iteration_bounds = array<i64: 2>, scalar_prefetch = 0 : i64, scratch_operands = 0 : i64, tpu.core_type = #tpu.core_type<tc>, window_params = [{transform_indices = @transform_0, window_bounds = array<i64: 512, 128>}, {transform_indices = @transform_1, window_bounds = array<i64: 512, 128>}, {pipeline_mode = #tpu.pipeline_mode<synchronous>, transform_indices = @transform_2, window_bounds = array<i64: 128, 128>}, {pipeline_mode = #tpu.pipeline_mode<synchronous>, transform_indices = @transform_3, window_bounds = array<i64: 128, 128>}, {transform_indices = @transform_4, window_bounds = array<i64: 512, 19>}, {transform_indices = @transform_5, window_bounds = array<i64: 512, 128>}, {transform_indices = @transform_6, window_bounds = array<i64: 512, 128>}]} {
    %c0 = arith.constant 0 : index
    %c0_0 = arith.constant 0 : index
    %0 = vector.load %arg5[%c0, %c0_0] : memref<512x19xf32, #tpu.memory_space<vmem>>, vector<512x19xf32>
    %1 = vector.extract_strided_slice %0 {offsets = [0, 0], sizes = [512, 1], strides = [1, 1]} : vector<512x19xf32> to vector<512x1xf32>
    %2 = vector.extract_strided_slice %0 {offsets = [0, 1], sizes = [512, 1], strides = [1, 1]} : vector<512x19xf32> to vector<512x1xf32>
    %3 = vector.extract_strided_slice %0 {offsets = [0, 2], sizes = [512, 1], strides = [1, 1]} : vector<512x19xf32> to vector<512x1xf32>
    %4 = vector.extract_strided_slice %0 {offsets = [0, 3], sizes = [512, 1], strides = [1, 1]} : vector<512x19xf32> to vector<512x1xf32>
    %5 = vector.extract_strided_slice %0 {offsets = [0, 4], sizes = [512, 1], strides = [1, 1]} : vector<512x19xf32> to vector<512x1xf32>
    %6 = vector.extract_strided_slice %0 {offsets = [0, 5], sizes = [512, 1], strides = [1, 1]} : vector<512x19xf32> to vector<512x1xf32>
    %7 = vector.extract_strided_slice %0 {offsets = [0, 6], sizes = [512, 1], strides = [1, 1]} : vector<512x19xf32> to vector<512x1xf32>
    %8 = vector.extract_strided_slice %0 {offsets = [0, 7], sizes = [512, 1], strides = [1, 1]} : vector<512x19xf32> to vector<512x1xf32>
    %9 = vector.extract_strided_slice %0 {offsets = [0, 8], sizes = [512, 1], strides = [1, 1]} : vector<512x19xf32> to vector<512x1xf32>
    %10 = vector.extract_strided_slice %0 {offsets = [0, 9], sizes = [512, 1], strides = [1, 1]} : vector<512x19xf32> to vector<512x1xf32>
    %11 = vector.extract_strided_slice %0 {offsets = [0, 10], sizes = [512, 1], strides = [1, 1]} : vector<512x19xf32> to vector<512x1xf32>
    %12 = vector.extract_strided_slice %0 {offsets = [0, 11], sizes = [512, 1], strides = [1, 1]} : vector<512x19xf32> to vector<512x1xf32>
    %13 = vector.extract_strided_slice %0 {offsets = [0, 12], sizes = [512, 1], strides = [1, 1]} : vector<512x19xf32> to vector<512x1xf32>
    %14 = vector.extract_strided_slice %0 {offsets = [0, 13], sizes = [512, 1], strides = [1, 1]} : vector<512x19xf32> to vector<512x1xf32>
    %15 = vector.extract_strided_slice %0 {offsets = [0, 14], sizes = [512, 1], strides = [1, 1]} : vector<512x19xf32> to vector<512x1xf32>
    %16 = vector.extract_strided_slice %0 {offsets = [0, 15], sizes = [512, 1], strides = [1, 1]} : vector<512x19xf32> to vector<512x1xf32>
    %17 = vector.extract_strided_slice %0 {offsets = [0, 16], sizes = [512, 1], strides = [1, 1]} : vector<512x19xf32> to vector<512x1xf32>
    %18 = vector.extract_strided_slice %0 {offsets = [0, 17], sizes = [512, 1], strides = [1, 1]} : vector<512x19xf32> to vector<512x1xf32>
    %19 = vector.extract_strided_slice %0 {offsets = [0, 18], sizes = [512, 1], strides = [1, 1]} : vector<512x19xf32> to vector<512x1xf32>
    %c0_1 = arith.constant 0 : index
    %c0_2 = arith.constant 0 : index
    %20 = vector.load %arg3[%c0_1, %c0_2] : memref<128x128xbf16, #tpu.memory_space<vmem>>, vector<128x128xbf16>
    %c0_3 = arith.constant 0 : index
    %c0_4 = arith.constant 0 : index
    %21 = vector.load %arg4[%c0_3, %c0_4] : memref<128x128xbf16, #tpu.memory_space<vmem>>, vector<128x128xbf16>
    %c0_5 = arith.constant 0 : index
    %c0_6 = arith.constant 0 : index
    %22 = vector.load %arg1[%c0_5, %c0_6] : memref<512x128xbf16, #tpu.memory_space<vmem>>, vector<512x128xbf16>
    %cst = arith.constant dense<0.000000e+00> : vector<512x128xf32>
    %23 = tpu.matmul %22, %20, %cst {dimension_numbers = #tpu.dot_dimension_numbers<[1], [0], [0], [1], [0, 0, 1, 1], [], []>} : vector<512x128xbf16>, vector<128x128xbf16>, vector<512x128xf32> -> vector<512x128xf32>
    %c0_7 = arith.constant 0 : index
    %c0_8 = arith.constant 0 : index
    %24 = vector.load %arg2[%c0_7, %c0_8] : memref<512x128xbf16, #tpu.memory_space<vmem>>, vector<512x128xbf16>
    %cst_9 = arith.constant dense<0.000000e+00> : vector<512x128xf32>
    %25 = tpu.matmul %24, %20, %cst_9 {dimension_numbers = #tpu.dot_dimension_numbers<[1], [0], [0], [1], [0, 0, 1, 1], [], []>} : vector<512x128xbf16>, vector<128x128xbf16>, vector<512x128xf32> -> vector<512x128xf32>
    %26 = vector.broadcast %1 : vector<512x1xf32> to vector<512x128xf32>
    %27 = arith.mulf %23, %26 : vector<512x128xf32>
    %28 = vector.broadcast %4 : vector<512x1xf32> to vector<512x128xf32>
    %29 = arith.addf %27, %28 : vector<512x128xf32>
    %30 = vector.broadcast %7 : vector<512x1xf32> to vector<512x128xf32>
    %31 = arith.mulf %25, %30 : vector<512x128xf32>
    %32 = vector.broadcast %10 : vector<512x1xf32> to vector<512x128xf32>
    %33 = arith.addf %31, %32 : vector<512x128xf32>
    %34 = vector.broadcast %13 : vector<512x1xf32> to vector<512x128xf32>
    %35 = arith.mulf %25, %34 : vector<512x128xf32>
    %36 = vector.broadcast %16 : vector<512x1xf32> to vector<512x128xf32>
    %37 = arith.addf %35, %36 : vector<512x128xf32>
    %38 = arith.truncf %29 : vector<512x128xf32> to vector<512x128xbf16>
    %39 = math.tanh %38 : vector<512x128xbf16>
    %40 = arith.truncf %33 : vector<512x128xf32> to vector<512x128xbf16>
    %41 = math.tanh %40 : vector<512x128xbf16>
    %42 = arith.truncf %37 : vector<512x128xf32> to vector<512x128xbf16>
    %43 = math.tanh %42 : vector<512x128xbf16>
    %cst_10 = arith.constant dense<0.000000e+00> : vector<512x128xf32>
    %44 = tpu.matmul %39, %21, %cst_10 {dimension_numbers = #tpu.dot_dimension_numbers<[1], [0], [0], [1], [0, 0, 1, 1], [], []>} : vector<512x128xbf16>, vector<128x128xbf16>, vector<512x128xf32> -> vector<512x128xf32>
    %45 = vector.broadcast %2 : vector<512x1xf32> to vector<512x128xf32>
    %46 = arith.mulf %44, %45 : vector<512x128xf32>
    %47 = vector.broadcast %5 : vector<512x1xf32> to vector<512x128xf32>
    %48 = arith.addf %46, %47 : vector<512x128xf32>
    %cst_11 = arith.constant dense<0.000000e+00> : vector<512x128xf32>
    %49 = tpu.matmul %41, %21, %cst_11 {dimension_numbers = #tpu.dot_dimension_numbers<[1], [0], [0], [1], [0, 0, 1, 1], [], []>} : vector<512x128xbf16>, vector<128x128xbf16>, vector<512x128xf32> -> vector<512x128xf32>
    %50 = vector.broadcast %8 : vector<512x1xf32> to vector<512x128xf32>
    %51 = arith.mulf %49, %50 : vector<512x128xf32>
    %52 = vector.broadcast %11 : vector<512x1xf32> to vector<512x128xf32>
    %53 = arith.addf %51, %52 : vector<512x128xf32>
    %cst_12 = arith.constant dense<0.000000e+00> : vector<512x128xf32>
    %54 = tpu.matmul %43, %21, %cst_12 {dimension_numbers = #tpu.dot_dimension_numbers<[1], [0], [0], [1], [0, 0, 1, 1], [], []>} : vector<512x128xbf16>, vector<128x128xbf16>, vector<512x128xf32> -> vector<512x128xf32>
    %55 = vector.broadcast %14 : vector<512x1xf32> to vector<512x128xf32>
    %56 = arith.mulf %54, %55 : vector<512x128xf32>
    %57 = vector.broadcast %17 : vector<512x1xf32> to vector<512x128xf32>
    %58 = arith.addf %56, %57 : vector<512x128xf32>
    %59 = arith.addf %29, %48 : vector<512x128xf32>
    %60 = arith.addf %33, %53 : vector<512x128xf32>
    %61 = arith.addf %37, %58 : vector<512x128xf32>
    %62 = arith.truncf %48 : vector<512x128xf32> to vector<512x128xbf16>
    %63 = math.tanh %62 : vector<512x128xbf16>
    %64 = arith.truncf %53 : vector<512x128xf32> to vector<512x128xbf16>
    %65 = math.tanh %64 : vector<512x128xbf16>
    %66 = arith.truncf %58 : vector<512x128xf32> to vector<512x128xbf16>
    %67 = math.tanh %66 : vector<512x128xbf16>
    %cst_13 = arith.constant dense<0.000000e+00> : vector<512x128xf32>
    %68 = tpu.matmul %63, %21, %cst_13 {dimension_numbers = #tpu.dot_dimension_numbers<[1], [0], [0], [1], [0, 0, 1, 1], [], []>} : vector<512x128xbf16>, vector<128x128xbf16>, vector<512x128xf32> -> vector<512x128xf32>
    %69 = vector.broadcast %3 : vector<512x1xf32> to vector<512x128xf32>
    %70 = arith.mulf %68, %69 : vector<512x128xf32>
    %71 = vector.broadcast %6 : vector<512x1xf32> to vector<512x128xf32>
    %72 = arith.addf %70, %71 : vector<512x128xf32>
    %cst_14 = arith.constant dense<0.000000e+00> : vector<512x128xf32>
    %73 = tpu.matmul %65, %21, %cst_14 {dimension_numbers = #tpu.dot_dimension_numbers<[1], [0], [0], [1], [0, 0, 1, 1], [], []>} : vector<512x128xbf16>, vector<128x128xbf16>, vector<512x128xf32> -> vector<512x128xf32>
    %74 = vector.broadcast %9 : vector<512x1xf32> to vector<512x128xf32>
    %75 = arith.mulf %73, %74 : vector<512x128xf32>
    %76 = vector.broadcast %12 : vector<512x1xf32> to vector<512x128xf32>
    %77 = arith.addf %75, %76 : vector<512x128xf32>
    %cst_15 = arith.constant dense<0.000000e+00> : vector<512x128xf32>
    %78 = tpu.matmul %67, %21, %cst_15 {dimension_numbers = #tpu.dot_dimension_numbers<[1], [0], [0], [1], [0, 0, 1, 1], [], []>} : vector<512x128xbf16>, vector<128x128xbf16>, vector<512x128xf32> -> vector<512x128xf32>
    %79 = vector.broadcast %15 : vector<512x1xf32> to vector<512x128xf32>
    %80 = arith.mulf %78, %79 : vector<512x128xf32>
    %81 = vector.broadcast %18 : vector<512x1xf32> to vector<512x128xf32>
    %82 = arith.addf %80, %81 : vector<512x128xf32>
    %83 = arith.addf %59, %72 : vector<512x128xf32>
    %84 = arith.addf %60, %77 : vector<512x128xf32>
    %85 = arith.addf %61, %82 : vector<512x128xf32>
    %86 = vector.broadcast %19 : vector<512x1xf32> to vector<512x128xf32>
    %87 = arith.mulf %83, %86 : vector<512x128xf32>
    %88 = arith.addf %84, %87 : vector<512x128xf32>
    %cst_16 = arith.constant 0.333333343 : f32
    %89 = vector.broadcast %cst_16 : f32 to vector<512x128xf32>
    %90 = arith.mulf %88, %89 : vector<512x128xf32>
    %91 = math.exp %90 : vector<512x128xf32>
    %c0_17 = arith.constant 0 : index
    %c0_18 = arith.constant 0 : index
    %92 = vector.load %arg6[%c0_17, %c0_18] : memref<512x128xf32, #tpu.memory_space<vmem>>, vector<512x128xf32>
    tpu.vector_store %arg6[%c0_17, %c0_18], %91 {strides = array<i32>} : memref<512x128xf32, #tpu.memory_space<vmem>>, vector<512x128xf32>,
    %cst_19 = arith.constant 0.333333343 : f32
    %93 = vector.broadcast %cst_19 : f32 to vector<512x128xf32>
    %94 = arith.mulf %85, %93 : vector<512x128xf32>
    %95 = math.exp %94 : vector<512x128xf32>
    %c0_20 = arith.constant 0 : index
    %c0_21 = arith.constant 0 : index
    %96 = vector.load %arg7[%c0_20, %c0_21] : memref<512x128xf32, #tpu.memory_space<vmem>>, vector<512x128xf32>
    tpu.vector_store %arg7[%c0_20, %c0_21], %95 {strides = array<i32>} : memref<512x128xf32, #tpu.memory_space<vmem>>, vector<512x128xf32>,
    return
  }
  func.func @transform_0(%arg0: i32) -> (i32, i32) {
    %c0_i32 = arith.constant 0 : i32
    %c0_i32_0 = arith.constant 0 : i32
    return %arg0, %c0_i32 : i32, i32
  }
  func.func @transform_1(%arg0: i32) -> (i32, i32) {
    %c0_i32 = arith.constant 0 : i32
    %c0_i32_0 = arith.constant 0 : i32
    return %arg0, %c0_i32 : i32, i32
  }
  func.func @transform_2(%arg0: i32) -> (i32, i32) {
    %c0_i32 = arith.constant 0 : i32
    %c0_i32_0 = arith.constant 0 : i32
    %c0_i32_1 = arith.constant 0 : i32
    return %c0_i32, %c0_i32_0 : i32, i32
  }
  func.func @transform_3(%arg0: i32) -> (i32, i32) {
    %c0_i32 = arith.constant 0 : i32
    %c0_i32_0 = arith.constant 0 : i32
    %c0_i32_1 = arith.constant 0 : i32
    return %c0_i32, %c0_i32_0 : i32, i32
  }
  func.func @transform_4(%arg0: i32) -> (i32, i32) {
    %c0_i32 = arith.constant 0 : i32
    %c0_i32_0 = arith.constant 0 : i32
    return %arg0, %c0_i32 : i32, i32
  }
  func.func @transform_5(%arg0: i32) -> (i32, i32) {
    %c0_i32 = arith.constant 0 : i32
    %c0_i32_0 = arith.constant 0 : i32
    return %arg0, %c0_i32 : i32, i32
  }
  func.func @transform_6(%arg0: i32) -> (i32, i32) {
    %c0_i32 = arith.constant 0 : i32
    %c0_i32_0 = arith.constant 0 : i32
    return %arg0, %c0_i32 : i32, i32
  }
}

</mosaic_0001>

<llo_original>
// kernel: tpu_custom_call.1
$region0: #{tpu_custom_call.1}
  #allocation0 [shape = 'u32[]', space=smem, size = 0x4, offset = 0x4, fixed_abs, tag = 'smem constant byte address 0x4 - core index']
  #allocation1 [shape = 'u32[72,128]{1,0:T(1,128)}', space=vmem, size = 0x9000, scoped, tag = 'internal scratch']
  %s0 = inlined_call_operand.vmem [shape: bf16[1024,128], index: 0, kind: input, shape index: {}]
  %s1 = inlined_call_operand.vmem [shape: bf16[1024,128], index: 1, kind: input, shape index: {}]
  %s2 = inlined_call_operand.vmem [shape: bf16[128,128], index: 2, kind: input, shape index: {}]
  %s3 = inlined_call_operand.vmem [shape: bf16[128,128], index: 3, kind: input, shape index: {}]
  %s4 = inlined_call_operand.vmem [shape: f32[1024,19], index: 4, kind: input, shape index: {}]
  %s5 = inlined_call_operand.hbm [shape: f32[1024,128], index: 5, kind: output, shape index: {0}]
  %s6 = inlined_call_operand.hbm [shape: f32[1024,128], index: 6, kind: output, shape index: {1}]
  %7 = xla_tuple %s5, %s6
  %s8 = sld [smem:[#allocation0]]
  $region61: #{tpu_custom_call.1} parent=0
    _
  %s10 = ssub.s32 1, %s8
  %s11 = scalar_select 0, %s10, %s8
  $region1: #{tpu_custom_call.1} parent=0
    #allocation2 [shape = 'u8[524288]{0}', space=vmem, size = 0x80000, scoped, tag = 'output window, operand 0']
    #allocation3 [shape = 's32[2]{0}', space=sflag, size = 0x8, scoped, tag = 'scoped memory for tpu_custom_call.1']
    #allocation4 [shape = 'u8[524288]{0}', space=vmem, size = 0x80000, scoped, tag = 'output window, operand 1']
    #allocation5 [shape = 's32[2]{0}', space=sflag, size = 0x8, scoped, tag = 'scoped memory for tpu_custom_call.1']
    %12 = vsyncpa [#allocation3], 0
    %s13 = scalar_lea.sflag [#allocation3], 1
    %14 = vsyncpa %s13, 0
    %15 = vsyncpa [#allocation5], 0
    %s16 = scalar_lea.sflag [#allocation5], 1
    %17 = vsyncpa %s16, 0
    loop: start=0, step=1, limit=4
    $region2: #{tpu_custom_call.1} parent=1 // loop_pre_header
      _
    $region3: #{tpu_custom_call.1} parent=1 // loop_header
      %s19 = sphi 0, %s23
      %p20 = scmp.ge.s32.totalorder %s19, 4
      %s29 = sphi 0, %s31
      %s32 = sphi 0, %s29
      %s33 = sphi 0, %s32
      %s49 = sphi 0, %s33
      %s55 = sphi 0, %s57
      %s58 = sphi 0, %s55
      %s59 = sphi 0, %s58
      %s75 = sphi 0, %s59
      %s79 = sphi 0, %s79
      %s81 = sphi 0, %s79
      %s82 = sphi 0, %s81
      %s96 = sphi 0, %s82
      %s100 = sphi 0, %s100
      %s102 = sphi 0, %s100
      %s103 = sphi 0, %s102
      %s117 = sphi 0, %s103
      %s123 = sphi 0, %s125
      %s126 = sphi 0, %s123
      %s127 = sphi 0, %s126
      %s143 = sphi 0, %s127
      %s149 = sphi 0, %s151
      %s152 = sphi 0, %s149
      %s153 = sphi 0, %s152
      %s169 = sphi 0, %s153
      %s175 = sphi 0, %s177
      %s178 = sphi 0, %s175
      %s179 = sphi 0, %s178
      %s195 = sphi 0, %s179
    $region4: #{tpu_custom_call.1} parent=1 // loop_header_branch
      %22 = sbr.rel (%p20) target = $region8
    $region5: #{tpu_custom_call.1} parent=1 // loop_body
      %s24 = ssub.s32 %s19, 1
      %s25 = ssub.s32 %s19, 2
      %s26 = sadd.s32 %s19, 1
      %s27 = ssub.s32 %s19, %s26
      %p28 = scmp.eq.s32.totalorder %s27, 0
      %s30 = sadd.s32 %s29, 1
      %s31 = scalar_select %p28, %s29, %s30
      %p34 = pneg %p28
      %p35 = scmp.eq.s32.totalorder %s19, 1
      %p36 = por %p34, %p35
      %p37 = scmp.ne.s32.totalorder %s29, %s32
      %p38 = scmp.eq.s32.totalorder %s19, 0
      %p39 = por %p37, %p38
      %p40 = scmp.ne.s32.totalorder %s29, %s32
      %p41 = scmp.eq.s32.totalorder %s24, 1
      %p42 = por %p40, %p41
      %p43 = scmp.ne.s32.totalorder %s32, %s33
      %p44 = scmp.eq.s32.totalorder %s24, 0
      %p45 = por %p43, %p44
      %p46 = scmp.ne.s32.totalorder %s32, %s33
      %p47 = scmp.eq.s32.totalorder %s25, 1
      %p48 = por %p46, %p47
      %p50 = scmp.ne.s32.totalorder %s33, %s49
      %p51 = scmp.eq.s32.totalorder %s25, 0
      %p52 = por %p50, %p51
      %s53 = ssub.s32 %s19, %s26
      %p54 = scmp.eq.s32.totalorder %s53, 0
      %s56 = sadd.s32 %s55, 1
      %s57 = scalar_select %p54, %s55, %s56
      %p60 = pneg %p54
      %p61 = scmp.eq.s32.totalorder %s19, 1
      %p62 = por %p60, %p61
      %p63 = scmp.ne.s32.totalorder %s55, %s58
      %p64 = scmp.eq.s32.totalorder %s19, 0
      %p65 = por %p63, %p64
      %p66 = scmp.ne.s32.totalorder %s55, %s58
      %p67 = scmp.eq.s32.totalorder %s24, 1
      %p68 = por %p66, %p67
      %p69 = scmp.ne.s32.totalorder %s58, %s59
      %p70 = scmp.eq.s32.totalorder %s24, 0
      %p71 = por %p69, %p70
      %p72 = scmp.ne.s32.totalorder %s58, %s59
      %p73 = scmp.eq.s32.totalorder %s25, 1
      %p74 = por %p72, %p73
      %p76 = scmp.ne.s32.totalorder %s59, %s75
      %p77 = scmp.eq.s32.totalorder %s25, 0
      %p78 = por %p76, %p77
      %s80 = sadd.s32 %s79, 1
      %p83 = scmp.eq.s32.totalorder %s19, 1
      %p84 = scmp.ne.s32.totalorder %s79, %s81
      %p85 = scmp.eq.s32.totalorder %s19, 0
      %p86 = por %p84, %p85
      %p87 = scmp.ne.s32.totalorder %s79, %s81
      %p88 = scmp.eq.s32.totalorder %s24, 1
      %p89 = por %p87, %p88
      %p90 = scmp.ne.s32.totalorder %s81, %s82
      %p91 = scmp.eq.s32.totalorder %s24, 0
      %p92 = por %p90, %p91
      %p93 = scmp.ne.s32.totalorder %s81, %s82
      %p94 = scmp.eq.s32.totalorder %s25, 1
      %p95 = por %p93, %p94
      %p97 = scmp.ne.s32.totalorder %s82, %s96
      %p98 = scmp.eq.s32.totalorder %s25, 0
      %p99 = por %p97, %p98
      %s101 = sadd.s32 %s100, 1
      %p104 = scmp.eq.s32.totalorder %s19, 1
      %p105 = scmp.ne.s32.totalorder %s100, %s102
      %p106 = scmp.eq.s32.totalorder %s19, 0
      %p107 = por %p105, %p106
      %p108 = scmp.ne.s32.totalorder %s100, %s102
      %p109 = scmp.eq.s32.totalorder %s24, 1
      %p110 = por %p108, %p109
      %p111 = scmp.ne.s32.totalorder %s102, %s103
      %p112 = scmp.eq.s32.totalorder %s24, 0
      %p113 = por %p111, %p112
      %p114 = scmp.ne.s32.totalorder %s102, %s103
      %p115 = scmp.eq.s32.totalorder %s25, 1
      %p116 = por %p114, %p115
      %p118 = scmp.ne.s32.totalorder %s103, %s117
      %p119 = scmp.eq.s32.totalorder %s25, 0
      %p120 = por %p118, %p119
      %s121 = ssub.s32 %s19, %s26
      %p122 = scmp.eq.s32.totalorder %s121, 0
      %s124 = sadd.s32 %s123, 1
      %s125 = scalar_select %p122, %s123, %s124
      %p128 = pneg %p122
      %p129 = scmp.eq.s32.totalorder %s19, 1
      %p130 = por %p128, %p129
      %p131 = scmp.ne.s32.totalorder %s123, %s126
      %p132 = scmp.eq.s32.totalorder %s19, 0
      %p133 = por %p131, %p132
      %p134 = scmp.ne.s32.totalorder %s123, %s126
      %p135 = scmp.eq.s32.totalorder %s24, 1
      %p136 = por %p134, %p135
      %p137 = scmp.ne.s32.totalorder %s126, %s127
      %p138 = scmp.eq.s32.totalorder %s24, 0
      %p139 = por %p137, %p138
      %p140 = scmp.ne.s32.totalorder %s126, %s127
      %p141 = scmp.eq.s32.totalorder %s25, 1
      %p142 = por %p140, %p141
      %p144 = scmp.ne.s32.totalorder %s127, %s143
      %p145 = scmp.eq.s32.totalorder %s25, 0
      %p146 = por %p144, %p145
      %s147 = ssub.s32 %s19, %s26
      %p148 = scmp.eq.s32.totalorder %s147, 0
      %s150 = sadd.s32 %s149, 1
      %s151 = scalar_select %p148, %s149, %s150
      %p154 = pneg %p148
      %p155 = scmp.eq.s32.totalorder %s19, 1
      %p156 = por %p154, %p155
      %p157 = scmp.ne.s32.totalorder %s149, %s152
      %p158 = scmp.eq.s32.totalorder %s19, 0
      %p159 = por %p157, %p158
      %p160 = scmp.ne.s32.totalorder %s149, %s152
      %p161 = scmp.eq.s32.totalorder %s24, 1
      %p162 = por %p160, %p161
      %p163 = scmp.ne.s32.totalorder %s152, %s153
      %p164 = scmp.eq.s32.totalorder %s24, 0
      %p165 = por %p163, %p164
      %p166 = scmp.ne.s32.totalorder %s152, %s153
      %p167 = scmp.eq.s32.totalorder %s25, 1
      %p168 = por %p166, %p167
      %p170 = scmp.ne.s32.totalorder %s153, %s169
      %p171 = scmp.eq.s32.totalorder %s25, 0
      %p172 = por %p170, %p171
      %s173 = ssub.s32 %s19, %s26
      %p174 = scmp.eq.s32.totalorder %s173, 0
      %s176 = sadd.s32 %s175, 1
      %s177 = scalar_select %p174, %s175, %s176
      %p180 = pneg %p174
      %p181 = scmp.eq.s32.totalorder %s19, 1
      %p182 = por %p180, %p181
      %p183 = scmp.ne.s32.totalorder %s175, %s178
      %p184 = scmp.eq.s32.totalorder %s19, 0
      %p185 = por %p183, %p184
      %p186 = scmp.ne.s32.totalorder %s175, %s178
      %p187 = scmp.eq.s32.totalorder %s24, 1
      %p188 = por %p186, %p187
      %p189 = scmp.ne.s32.totalorder %s178, %s179
      %p190 = scmp.eq.s32.totalorder %s24, 0
      %p191 = por %p189, %p190
      %p192 = scmp.ne.s32.totalorder %s178, %s179
      %p193 = scmp.eq.s32.totalorder %s25, 1
      %p194 = por %p192, %p193
      %p196 = scmp.ne.s32.totalorder %s179, %s195
      %p197 = scmp.eq.s32.totalorder %s25, 0
      %p198 = por %p196, %p197
      %p199 = scmp.le.s32.totalorder 1, %s19
      %p200 = scmp.lt.s32.totalorder %s19, 3
      %p201 = pnand %p199, %p200
      %p202 = pneg %p201
      // Predicated region
      $region9: #{tpu_custom_call.1} parent=5 // pred_check
        _
      $region10: #{tpu_custom_call.1} parent=5 // pred_check_branch
        %204 = sbr.rel (%p201) target = $region12
      $region11: #{tpu_custom_call.1} parent=5 // pred_region
        %s205 = ssub.s32 %s19, 1
        // Predicated region
        $region13: #{tpu_custom_call.1} parent=11 // pred_check
          %p206 = pneg %p92
        $region14: #{tpu_custom_call.1} parent=11 // pred_check_branch
          %208 = sbr.rel (%p206) target = $region16
        $region15: #{tpu_custom_call.1} parent=11 // pred_region
          _
        $region16: #{tpu_custom_call.1} parent=11 // pred_fallthru
          _
        // Predicated region
        $region17: #{tpu_custom_call.1} parent=11 // pred_check
          %p209 = pneg %p113
        $region18: #{tpu_custom_call.1} parent=11 // pred_check_branch
          %211 = sbr.rel (%p209) target = $region20
        $region19: #{tpu_custom_call.1} parent=11 // pred_region
          _
        $region20: #{tpu_custom_call.1} parent=11 // pred_fallthru
          _
      $region12: #{tpu_custom_call.1} parent=5 // pred_fallthru
        _
      %p212 = scmp.lt.s32.totalorder %s19, 2
      // Predicated region
      $region21: #{tpu_custom_call.1} parent=5 // pred_check
        %p213 = pneg %p212
      $region22: #{tpu_custom_call.1} parent=5 // pred_check_branch
        %215 = sbr.rel (%p213) target = $region24
      $region23: #{tpu_custom_call.1} parent=5 // pred_region
        // Predicated region
        $region25: #{tpu_custom_call.1} parent=23 // pred_check
          %p216 = pneg %p39
        $region26: #{tpu_custom_call.1} parent=23 // pred_check_branch
          %218 = sbr.rel (%p216) target = $region28
        $region27: #{tpu_custom_call.1} parent=23 // pred_region
          %s219 = smul.u32 64, %s19
          %p220 = scmp.lt.s32.totalorder %s219, 127
          %s221 = scalar_select %p220, %s219, 127
          %s222 = smul.addr %s221, 4
          %s223 = scalar_lea.vmem %s0, %s222
          %s224 = smul.u32 64, %s19
        $region28: #{tpu_custom_call.1} parent=23 // pred_fallthru
          _
        // Predicated region
        $region29: #{tpu_custom_call.1} parent=23 // pred_check
          %p225 = pneg %p65
        $region30: #{tpu_custom_call.1} parent=23 // pred_check_branch
          %227 = sbr.rel (%p225) target = $region32
        $region31: #{tpu_custom_call.1} parent=23 // pred_region
          %s228 = smul.u32 64, %s19
          %p229 = scmp.lt.s32.totalorder %s228, 127
          %s230 = scalar_select %p229, %s228, 127
          %s231 = smul.addr %s230, 4
          %s232 = scalar_lea.vmem %s1, %s231
          %s233 = smul.u32 64, %s19
        $region32: #{tpu_custom_call.1} parent=23 // pred_fallthru
          _
        // Predicated region
        $region33: #{tpu_custom_call.1} parent=23 // pred_check
          %p234 = pneg %p133
        $region34: #{tpu_custom_call.1} parent=23 // pred_check_branch
          %236 = sbr.rel (%p234) target = $region36
        $region35: #{tpu_custom_call.1} parent=23 // pred_region
          %s237 = smul.u32 64, %s19
          %p238 = scmp.lt.s32.totalorder %s237, 127
          %s239 = scalar_select %p238, %s237, 127
          %s240 = smul.addr %s239, 8
          %s241 = scalar_lea.vmem %s4, %s240
          %s242 = smul.u32 64, %s19
        $region36: #{tpu_custom_call.1} parent=23 // pred_fallthru
          _
      $region24: #{tpu_custom_call.1} parent=5 // pred_fallthru
        _
      %p243 = scmp.le.s32.totalorder 1, %s19
      %p244 = scmp.lt.s32.totalorder %s19, 3
      %p245 = pnand %p243, %p244
      %p246 = pneg %p245
      // Predicated region
      $region37: #{tpu_custom_call.1} parent=5 // pred_check
        _
      $region38: #{tpu_custom_call.1} parent=5 // pred_check_branch
        %248 = sbr.rel (%p245) target = $region40
      $region39: #{tpu_custom_call.1} parent=5 // pred_region
        %s249 = ssub.s32 %s19, 1
        %s250 = smul.u32 64, %s24
        %p251 = scmp.lt.s32.totalorder %s250, 127
        %s252 = scalar_select %p251, %s250, 127
        %s253 = smul.addr %s252, 4
        %s254 = scalar_lea.vmem %s0, %s253
        %p255 = pneg %p45
        %p256 = pneg %p42
        %s257 = smul.u32 64, %s24
        %p258 = scmp.lt.s32.totalorder %s257, 127
        %s259 = scalar_select %p258, %s257, 127
        %s260 = smul.addr %s259, 4
        %s261 = scalar_lea.vmem %s1, %s260
        %p262 = pneg %p71
        %p263 = pneg %p68
        %p264 = pneg %p92
        %p265 = pneg %p89
        %p266 = pneg %p113
        %p267 = pneg %p110
        %s268 = smul.u32 64, %s24
        %p269 = scmp.lt.s32.totalorder %s268, 127
        %s270 = scalar_select %p269, %s268, 127
        %s271 = smul.addr %s270, 8
        %s272 = scalar_lea.vmem %s4, %s271
        %p273 = pneg %p139
        %p274 = pneg %p136
        %p275 = pneg %p165
        %p276 = pneg %p162
        %s277 = sand.u32 %s152, 1
        %s278 = scalar_lea.sflag [#allocation3], %s277
        %s279 = sand.u32 %s152, 1
        %s280 = smul.addr %s279, 512
        %s281 = scalar_lea.vmem [#allocation2], %s280
        %p282 = pneg %p191
        %p283 = pneg %p188
        %s284 = sand.u32 %s178, 1
        %s285 = scalar_lea.sflag [#allocation5], %s284
        %s286 = sand.u32 %s178, 1
        %s287 = smul.addr %s286, 512
        %s288 = scalar_lea.vmem [#allocation4], %s287
        %s289 = smul.u32 64, %s24
        %p290 = scmp.lt.s32.totalorder %s289, 127
        %s291 = scalar_select %p290, %s289, 127
        %s292 = smul.addr %s291, 4
        %s293 = scalar_lea.vmem %s0, %s292
        %s294 = smul.u32 64, %s24
        %s295 = smul.u32 64, %s24
        %p296 = scmp.lt.s32.totalorder %s295, 127
        %s297 = scalar_select %p296, %s295, 127
        %s298 = smul.addr %s297, 4
        %s299 = scalar_lea.vmem %s1, %s298
        %s300 = smul.u32 64, %s24
        %s301 = smul.u32 64, %s24
        %p302 = scmp.lt.s32.totalorder %s301, 127
        %s303 = scalar_select %p302, %s301, 127
        %s304 = smul.addr %s303, 8
        %s305 = scalar_lea.vmem %s4, %s304
        %s306 = smul.u32 64, %s24
        %s307 = smul.u32 64, %s24
        %s308 = smul.u32 64, %s24
        %v309 = vld [vmem:[%s305] sm:$0xff]
        %v310 = vld [vmem:[%s305 + $0x8] sm:$0xff]
        %v311 = vld [vmem:[%s305 + $0x10] sm:$0xff]
        %v312 = vld [vmem:[%s305 + $0x18] sm:$0xff]
        %v313 = vld [vmem:[%s305 + $0x20] sm:$0xff]
        %v314 = vld [vmem:[%s305 + $0x28] sm:$0xff]
        %v315 = vld [vmem:[%s305 + $0x30] sm:$0xff]
        %v316 = vld [vmem:[%s305 + $0x38] sm:$0xff]
        %v317 = vld [vmem:[%s305 + $0x40] sm:$0xff]
        %v318 = vld [vmem:[%s305 + $0x48] sm:$0xff]
        %v319 = vld [vmem:[%s305 + $0x50] sm:$0xff]
        %v320 = vld [vmem:[%s305 + $0x58] sm:$0xff]
        %v321 = vld [vmem:[%s305 + $0x60] sm:$0xff]
        %v322 = vld [vmem:[%s305 + $0x68] sm:$0xff]
        %v323 = vld [vmem:[%s305 + $0x70] sm:$0xff]
        %v324 = vld [vmem:[%s305 + $0x78] sm:$0xff]
        %v325 = vld [vmem:[%s305 + $0x80] sm:$0xff]
        %v326 = vld [vmem:[%s305 + $0x88] sm:$0xff]
        %v327 = vld [vmem:[%s305 + $0x90] sm:$0xff]
        %v328 = vld [vmem:[%s305 + $0x98] sm:$0xff]
        %v329 = vld [vmem:[%s305 + $0xa0] sm:$0xff]
        %v330 = vld [vmem:[%s305 + $0xa8] sm:$0xff]
        %v331 = vld [vmem:[%s305 + $0xb0] sm:$0xff]
        %v332 = vld [vmem:[%s305 + $0xb8] sm:$0xff]
        %v333 = vld [vmem:[%s305 + $0xc0] sm:$0xff]
        %v334 = vld [vmem:[%s305 + $0xc8] sm:$0xff]
        %v335 = vld [vmem:[%s305 + $0xd0] sm:$0xff]
        %v336 = vld [vmem:[%s305 + $0xd8] sm:$0xff]
        %v337 = vld [vmem:[%s305 + $0xe0] sm:$0xff]
        %v338 = vld [vmem:[%s305 + $0xe8] sm:$0xff]
        %v339 = vld [vmem:[%s305 + $0xf0] sm:$0xff]
        %v340 = vld [vmem:[%s305 + $0xf8] sm:$0xff]
        %v341 = vld [vmem:[%s305 + $0x100] sm:$0xff]
        %v342 = vld [vmem:[%s305 + $0x108] sm:$0xff]
        %v343 = vld [vmem:[%s305 + $0x110] sm:$0xff]
        %v344 = vld [vmem:[%s305 + $0x118] sm:$0xff]
        %v345 = vld [vmem:[%s305 + $0x120] sm:$0xff]
        %v346 = vld [vmem:[%s305 + $0x128] sm:$0xff]
        %v347 = vld [vmem:[%s305 + $0x130] sm:$0xff]
        %v348 = vld [vmem:[%s305 + $0x138] sm:$0xff]
        %v349 = vld [vmem:[%s305 + $0x140] sm:$0xff]
        %v350 = vld [vmem:[%s305 + $0x148] sm:$0xff]
        %v351 = vld [vmem:[%s305 + $0x150] sm:$0xff]
        %v352 = vld [vmem:[%s305 + $0x158] sm:$0xff]
        %v353 = vld [vmem:[%s305 + $0x160] sm:$0xff]
        %v354 = vld [vmem:[%s305 + $0x168] sm:$0xff]
        %v355 = vld [vmem:[%s305 + $0x170] sm:$0xff]
        %v356 = vld [vmem:[%s305 + $0x178] sm:$0xff]
        %v357 = vld [vmem:[%s305 + $0x180] sm:$0xff]
        %v358 = vld [vmem:[%s305 + $0x188] sm:$0xff]
        %v359 = vld [vmem:[%s305 + $0x190] sm:$0xff]
        %v360 = vld [vmem:[%s305 + $0x198] sm:$0xff]
        %v361 = vld [vmem:[%s305 + $0x1a0] sm:$0xff]
        %v362 = vld [vmem:[%s305 + $0x1a8] sm:$0xff]
        %v363 = vld [vmem:[%s305 + $0x1b0] sm:$0xff]
        %v364 = vld [vmem:[%s305 + $0x1b8] sm:$0xff]
        %v365 = vld [vmem:[%s305 + $0x1c0] sm:$0xff]
        %v366 = vld [vmem:[%s305 + $0x1c8] sm:$0xff]
        %v367 = vld [vmem:[%s305 + $0x1d0] sm:$0xff]
        %v368 = vld [vmem:[%s305 + $0x1d8] sm:$0xff]
        %v369 = vld [vmem:[%s305 + $0x1e0] sm:$0xff]
        %v370 = vld [vmem:[%s305 + $0x1e8] sm:$0xff]
        %v371 = vld [vmem:[%s305 + $0x1f0] sm:$0xff]
        %v372 = vld [vmem:[%s305 + $0x1f8] sm:$0xff]
        %v373 = vld [vmem:[%s2] sm:$0xf]
        %v374 = vld [vmem:[%s2 + $0x4] sm:$0xf]
        %v375 = vld [vmem:[%s2 + $0x8] sm:$0xf]
        %v376 = vld [vmem:[%s2 + $0xc] sm:$0xf]
        %v377 = vld [vmem:[%s2 + $0x10] sm:$0xf]
        %v378 = vld [vmem:[%s2 + $0x14] sm:$0xf]
        %v379 = vld [vmem:[%s2 + $0x18] sm:$0xf]
        %v380 = vld [vmem:[%s2 + $0x1c] sm:$0xf]
        %v381 = vld [vmem:[%s2 + $0x20] sm:$0xf]
        %v382 = vld [vmem:[%s2 + $0x24] sm:$0xf]
        %v383 = vld [vmem:[%s2 + $0x28] sm:$0xf]
        %v384 = vld [vmem:[%s2 + $0x2c] sm:$0xf]
        %v385 = vld [vmem:[%s2 + $0x30] sm:$0xf]
        %v386 = vld [vmem:[%s2 + $0x34] sm:$0xf]
        %v387 = vld [vmem:[%s2 + $0x38] sm:$0xf]
        %v388 = vld [vmem:[%s2 + $0x3c] sm:$0xf]
        %v389 = vld [vmem:[%s3] sm:$0xf]
        %v390 = vld [vmem:[%s3 + $0x4] sm:$0xf]
        %v391 = vld [vmem:[%s3 + $0x8] sm:$0xf]
        %v392 = vld [vmem:[%s3 + $0xc] sm:$0xf]
        %v393 = vld [vmem:[%s3 + $0x10] sm:$0xf]
        %v394 = vld [vmem:[%s3 + $0x14] sm:$0xf]
        %v395 = vld [vmem:[%s3 + $0x18] sm:$0xf]
        %v396 = vld [vmem:[%s3 + $0x1c] sm:$0xf]
        %v397 = vld [vmem:[%s3 + $0x20] sm:$0xf]
        %v398 = vld [vmem:[%s3 + $0x24] sm:$0xf]
        %v399 = vld [vmem:[%s3 + $0x28] sm:$0xf]
        %v400 = vld [vmem:[%s3 + $0x2c] sm:$0xf]
        %v401 = vld [vmem:[%s3 + $0x30] sm:$0xf]
        %v402 = vld [vmem:[%s3 + $0x34] sm:$0xf]
        %v403 = vld [vmem:[%s3 + $0x38] sm:$0xf]
        %v404 = vld [vmem:[%s3 + $0x3c] sm:$0xf]
        %v405 = vld [vmem:[%s293] sm:$0xf]
        %v406 = vld [vmem:[%s293 + $0x4] sm:$0xf]
        %v407 = vld [vmem:[%s293 + $0x8] sm:$0xf]
        %v408 = vld [vmem:[%s293 + $0xc] sm:$0xf]
        %v409 = vld [vmem:[%s293 + $0x10] sm:$0xf]
        %v410 = vld [vmem:[%s293 + $0x14] sm:$0xf]
        %v411 = vld [vmem:[%s293 + $0x18] sm:$0xf]
        %v412 = vld [vmem:[%s293 + $0x1c] sm:$0xf]
        %v413 = vld [vmem:[%s293 + $0x20] sm:$0xf]
        %v414 = vld [vmem:[%s293 + $0x24] sm:$0xf]
        %v415 = vld [vmem:[%s293 + $0x28] sm:$0xf]
        %v416 = vld [vmem:[%s293 + $0x2c] sm:$0xf]
        %v417 = vld [vmem:[%s293 + $0x30] sm:$0xf]
        %v418 = vld [vmem:[%s293 + $0x34] sm:$0xf]
        %v419 = vld [vmem:[%s293 + $0x38] sm:$0xf]
        %v420 = vld [vmem:[%s293 + $0x3c] sm:$0xf]
        %v421 = vld [vmem:[%s293 + $0x40] sm:$0xf]
        %v422 = vld [vmem:[%s293 + $0x44] sm:$0xf]
        %v423 = vld [vmem:[%s293 + $0x48] sm:$0xf]
        %v424 = vld [vmem:[%s293 + $0x4c] sm:$0xf]
        %v425 = vld [vmem:[%s293 + $0x50] sm:$0xf]
        %v426 = vld [vmem:[%s293 + $0x54] sm:$0xf]
        %v427 = vld [vmem:[%s293 + $0x58] sm:$0xf]
        %v428 = vld [vmem:[%s293 + $0x5c] sm:$0xf]
        %v429 = vld [vmem:[%s293 + $0x60] sm:$0xf]
        %v430 = vld [vmem:[%s293 + $0x64] sm:$0xf]
        %v431 = vld [vmem:[%s293 + $0x68] sm:$0xf]
        %v432 = vld [vmem:[%s293 + $0x6c] sm:$0xf]
        %v433 = vld [vmem:[%s293 + $0x70] sm:$0xf]
        %v434 = vld [vmem:[%s293 + $0x74] sm:$0xf]
        %v435 = vld [vmem:[%s293 + $0x78] sm:$0xf]
        %v436 = vld [vmem:[%s293 + $0x7c] sm:$0xf]
        %v437 = vld [vmem:[%s293 + $0x80] sm:$0xf]
        %v438 = vld [vmem:[%s293 + $0x84] sm:$0xf]
        %v439 = vld [vmem:[%s293 + $0x88] sm:$0xf]
        %v440 = vld [vmem:[%s293 + $0x8c] sm:$0xf]
        %v441 = vld [vmem:[%s293 + $0x90] sm:$0xf]
        %v442 = vld [vmem:[%s293 + $0x94] sm:$0xf]
        %v443 = vld [vmem:[%s293 + $0x98] sm:$0xf]
        %v444 = vld [vmem:[%s293 + $0x9c] sm:$0xf]
        %v445 = vld [vmem:[%s293 + $0xa0] sm:$0xf]
        %v446 = vld [vmem:[%s293 + $0xa4] sm:$0xf]
        %v447 = vld [vmem:[%s293 + $0xa8] sm:$0xf]
        %v448 = vld [vmem:[%s293 + $0xac] sm:$0xf]
        %v449 = vld [vmem:[%s293 + $0xb0] sm:$0xf]
        %v450 = vld [vmem:[%s293 + $0xb4] sm:$0xf]
        %v451 = vld [vmem:[%s293 + $0xb8] sm:$0xf]
        %v452 = vld [vmem:[%s293 + $0xbc] sm:$0xf]
        %v453 = vld [vmem:[%s293 + $0xc0] sm:$0xf]
        %v454 = vld [vmem:[%s293 + $0xc4] sm:$0xf]
        %v455 = vld [vmem:[%s293 + $0xc8] sm:$0xf]
        %v456 = vld [vmem:[%s293 + $0xcc] sm:$0xf]
        %v457 = vld [vmem:[%s293 + $0xd0] sm:$0xf]
        %v458 = vld [vmem:[%s293 + $0xd4] sm:$0xf]
        %v459 = vld [vmem:[%s293 + $0xd8] sm:$0xf]
        %v460 = vld [vmem:[%s293 + $0xdc] sm:$0xf]
        %v461 = vld [vmem:[%s293 + $0xe0] sm:$0xf]
        %v462 = vld [vmem:[%s293 + $0xe4] sm:$0xf]
        %v463 = vld [vmem:[%s293 + $0xe8] sm:$0xf]
        %v464 = vld [vmem:[%s293 + $0xec] sm:$0xf]
        %v465 = vld [vmem:[%s293 + $0xf0] sm:$0xf]
        %v466 = vld [vmem:[%s293 + $0xf4] sm:$0xf]
        %v467 = vld [vmem:[%s293 + $0xf8] sm:$0xf]
        %v468 = vld [vmem:[%s293 + $0xfc] sm:$0xf]
        %v533 = vunpack.c.l.b16 %v405
        %v534 = vunpack.c.l.b16 %v406
        %v535 = vunpack.c.l.b16 %v407
        %v536 = vunpack.c.l.b16 %v408
        %v537 = vunpack.c.l.b16 %v409
        %v538 = vunpack.c.l.b16 %v410
        %v539 = vunpack.c.l.b16 %v411
        %v540 = vunpack.c.l.b16 %v412
        %v541 = vunpack.c.l.b16 %v413
        %v542 = vunpack.c.l.b16 %v414
        %v543 = vunpack.c.l.b16 %v415
        %v544 = vunpack.c.l.b16 %v416
        %v545 = vunpack.c.l.b16 %v417
        %v546 = vunpack.c.l.b16 %v418
        %v547 = vunpack.c.l.b16 %v419
        %v548 = vunpack.c.l.b16 %v420
        %v549 = vunpack.c.l.b16 %v421
        %v550 = vunpack.c.l.b16 %v422
        %v551 = vunpack.c.l.b16 %v423
        %v552 = vunpack.c.l.b16 %v424
        %v553 = vunpack.c.l.b16 %v425
        %v554 = vunpack.c.l.b16 %v426
        %v555 = vunpack.c.l.b16 %v427
        %v556 = vunpack.c.l.b16 %v428
        %v557 = vunpack.c.l.b16 %v429
        %v558 = vunpack.c.l.b16 %v430
        %v559 = vunpack.c.l.b16 %v431
        %v560 = vunpack.c.l.b16 %v432
        %v561 = vunpack.c.l.b16 %v433
        %v562 = vunpack.c.l.b16 %v434
        %v563 = vunpack.c.l.b16 %v435
        %v564 = vunpack.c.l.b16 %v436
        %v565 = vunpack.c.l.b16 %v437
        %v566 = vunpack.c.l.b16 %v438
        %v567 = vunpack.c.l.b16 %v439
        %v568 = vunpack.c.l.b16 %v440
        %v569 = vunpack.c.l.b16 %v441
        %v570 = vunpack.c.l.b16 %v442
        %v571 = vunpack.c.l.b16 %v443
        %v572 = vunpack.c.l.b16 %v444
        %v573 = vunpack.c.l.b16 %v445
        %v574 = vunpack.c.l.b16 %v446
        %v575 = vunpack.c.l.b16 %v447
        %v576 = vunpack.c.l.b16 %v448
        %v577 = vunpack.c.l.b16 %v449
        %v578 = vunpack.c.l.b16 %v450
        %v579 = vunpack.c.l.b16 %v451
        %v580 = vunpack.c.l.b16 %v452
        %v581 = vunpack.c.l.b16 %v453
        %v582 = vunpack.c.l.b16 %v454
        %v583 = vunpack.c.l.b16 %v455
        %v584 = vunpack.c.l.b16 %v456
        %v585 = vunpack.c.l.b16 %v457
        %v586 = vunpack.c.l.b16 %v458
        %v587 = vunpack.c.l.b16 %v459
        %v588 = vunpack.c.l.b16 %v460
        %v589 = vunpack.c.l.b16 %v461
        %v590 = vunpack.c.l.b16 %v462
        %v591 = vunpack.c.l.b16 %v463
        %v592 = vunpack.c.l.b16 %v464
        %v593 = vunpack.c.l.b16 %v465
        %v594 = vunpack.c.l.b16 %v466
        %v595 = vunpack.c.l.b16 %v467
        %v596 = vunpack.c.l.b16 %v468
        %v597 = vpack.c.b16 %v534, %v533
        %v598 = vpack.c.b16 %v536, %v535
        %v599 = vpack.c.b16 %v538, %v537
        %v600 = vpack.c.b16 %v540, %v539
        %v601 = vpack.c.b16 %v542, %v541
        %v602 = vpack.c.b16 %v544, %v543
        %v603 = vpack.c.b16 %v546, %v545
        %v604 = vpack.c.b16 %v548, %v547
        %v605 = vpack.c.b16 %v550, %v549
        %v606 = vpack.c.b16 %v552, %v551
        %v607 = vpack.c.b16 %v554, %v553
        %v608 = vpack.c.b16 %v556, %v555
        %v609 = vpack.c.b16 %v558, %v557
        %v610 = vpack.c.b16 %v560, %v559
        %v611 = vpack.c.b16 %v562, %v561
        %v612 = vpack.c.b16 %v564, %v563
        %v613 = vpack.c.b16 %v566, %v565
        %v614 = vpack.c.b16 %v568, %v567
        %v615 = vpack.c.b16 %v570, %v569
        %v616 = vpack.c.b16 %v572, %v571
        %v617 = vpack.c.b16 %v574, %v573
        %v618 = vpack.c.b16 %v576, %v575
        %v619 = vpack.c.b16 %v578, %v577
        %v620 = vpack.c.b16 %v580, %v579
        %v621 = vpack.c.b16 %v582, %v581
        %v622 = vpack.c.b16 %v584, %v583
        %v623 = vpack.c.b16 %v586, %v585
        %v624 = vpack.c.b16 %v588, %v587
        %v625 = vpack.c.b16 %v590, %v589
        %v626 = vpack.c.b16 %v592, %v591
        %v627 = vpack.c.b16 %v594, %v593
        %v628 = vpack.c.b16 %v596, %v595
        %v677 = vunpack.c.l.b16 %v373
        %v678 = vunpack.c.l.b16 %v374
        %v679 = vunpack.c.l.b16 %v375
        %v680 = vunpack.c.l.b16 %v376
        %v681 = vunpack.c.l.b16 %v377
        %v682 = vunpack.c.l.b16 %v378
        %v683 = vunpack.c.l.b16 %v379
        %v684 = vunpack.c.l.b16 %v380
        %v685 = vunpack.c.l.b16 %v381
        %v686 = vunpack.c.l.b16 %v382
        %v687 = vunpack.c.l.b16 %v383
        %v688 = vunpack.c.l.b16 %v384
        %v689 = vunpack.c.l.b16 %v385
        %v690 = vunpack.c.l.b16 %v386
        %v691 = vunpack.c.l.b16 %v387
        %v692 = vunpack.c.l.b16 %v388
        %v693 = vpack.c.b16 %v678, %v677
        %v694 = vpack.c.b16 %v680, %v679
        %v695 = vpack.c.b16 %v682, %v681
        %v696 = vpack.c.b16 %v684, %v683
        %v697 = vpack.c.b16 %v686, %v685
        %v698 = vpack.c.b16 %v688, %v687
        %v699 = vpack.c.b16 %v690, %v689
        %v700 = vpack.c.b16 %v692, %v691
        %709 = vmatpush.bf16.msra.mxu0 %v700
        %710 = vmatpush.bf16.msra.mxu0 %v699
        %711 = vmatpush.bf16.msra.mxu0 %v698
        %712 = vmatpush.bf16.msra.mxu0 %v697
        %713 = vmatpush.bf16.msra.mxu0 %v696
        %714 = vmatpush.bf16.msra.mxu0 %v695
        %715 = vmatpush.bf16.msra.mxu0 %v694
        %716 = vmatpush.bf16.msra.mxu0 %v693
        %717 = vmatmul.bf16.gmra.mxu0 %v597
        %v718 = vpop.f32.mrf.mxu0
        %v719 = vadd.f32 0.0, %v718
        %v720 = vpop.f32.mrf.mxu0
        %v721 = vadd.f32 0.0, %v720
        %722 = vmatmul.bf16.gmra.mxu0 %v598
        %v723 = vpop.f32.mrf.mxu0
        %v724 = vadd.f32 0.0, %v723
        %v725 = vpop.f32.mrf.mxu0
        %v726 = vadd.f32 0.0, %v725
        %727 = vmatmul.bf16.gmra.mxu0 %v599
        %v728 = vpop.f32.mrf.mxu0
        %v729 = vadd.f32 0.0, %v728
        %v730 = vpop.f32.mrf.mxu0
        %v731 = vadd.f32 0.0, %v730
        %732 = vmatmul.bf16.gmra.mxu0 %v600
        %v733 = vpop.f32.mrf.mxu0
        %v734 = vadd.f32 0.0, %v733
        %v735 = vpop.f32.mrf.mxu0
        %v736 = vadd.f32 0.0, %v735
        %737 = vmatmul.bf16.gmra.mxu0 %v601
        %v738 = vpop.f32.mrf.mxu0
        %v739 = vadd.f32 0.0, %v738
        %v740 = vpop.f32.mrf.mxu0
        %v741 = vadd.f32 0.0, %v740
        %742 = vmatmul.bf16.gmra.mxu0 %v602
        %v743 = vpop.f32.mrf.mxu0
        %v744 = vadd.f32 0.0, %v743
        %v745 = vpop.f32.mrf.mxu0
        %v746 = vadd.f32 0.0, %v745
        %747 = vmatmul.bf16.gmra.mxu0 %v603
        %v748 = vpop.f32.mrf.mxu0
        %v749 = vadd.f32 0.0, %v748
        %v750 = vpop.f32.mrf.mxu0
        %v751 = vadd.f32 0.0, %v750
        %752 = vmatmul.bf16.gmra.mxu0 %v604
        %v753 = vpop.f32.mrf.mxu0
        %v754 = vadd.f32 0.0, %v753
        %v755 = vpop.f32.mrf.mxu0
        %v756 = vadd.f32 0.0, %v755
        %757 = vmatmul.bf16.gmra.mxu0 %v605
        %v758 = vpop.f32.mrf.mxu0
        %v759 = vadd.f32 0.0, %v758
        %v760 = vpop.f32.mrf.mxu0
        %v761 = vadd.f32 0.0, %v760
        %762 = vmatmul.bf16.gmra.mxu0 %v606
        %v763 = vpop.f32.mrf.mxu0
        %v764 = vadd.f32 0.0, %v763
        %v765 = vpop.f32.mrf.mxu0
        %v766 = vadd.f32 0.0, %v765
        %767 = vmatmul.bf16.gmra.mxu0 %v607
        %v768 = vpop.f32.mrf.mxu0
        %v769 = vadd.f32 0.0, %v768
        %v770 = vpop.f32.mrf.mxu0
        %v771 = vadd.f32 0.0, %v770
        %772 = vmatmul.bf16.gmra.mxu0 %v608
        %v773 = vpop.f32.mrf.mxu0
        %v774 = vadd.f32 0.0, %v773
        %v775 = vpop.f32.mrf.mxu0
        %v776 = vadd.f32 0.0, %v775
        %777 = vmatmul.bf16.gmra.mxu0 %v609
        %v778 = vpop.f32.mrf.mxu0
        %v779 = vadd.f32 0.0, %v778
        %v780 = vpop.f32.mrf.mxu0
        %v781 = vadd.f32 0.0, %v780
        %782 = vmatmul.bf16.gmra.mxu0 %v610
        %v783 = vpop.f32.mrf.mxu0
        %v784 = vadd.f32 0.0, %v783
        %v785 = vpop.f32.mrf.mxu0
        %v786 = vadd.f32 0.0, %v785
        %787 = vmatmul.bf16.gmra.mxu0 %v611
        %v788 = vpop.f32.mrf.mxu0
        %v789 = vadd.f32 0.0, %v788
        %v790 = vpop.f32.mrf.mxu0
        %v791 = vadd.f32 0.0, %v790
        %792 = vmatmul.bf16.gmra.mxu0 %v612
        %v793 = vpop.f32.mrf.mxu0
        %v794 = vadd.f32 0.0, %v793
        %v795 = vpop.f32.mrf.mxu0
        %v796 = vadd.f32 0.0, %v795
        %797 = vmatmul.bf16.gmra.mxu0 %v613
        %v798 = vpop.f32.mrf.mxu0
        %v799 = vadd.f32 0.0, %v798
        %v800 = vpop.f32.mrf.mxu0
        %v801 = vadd.f32 0.0, %v800
        %802 = vmatmul.bf16.gmra.mxu0 %v614
        %v803 = vpop.f32.mrf.mxu0
        %v804 = vadd.f32 0.0, %v803
        %v805 = vpop.f32.mrf.mxu0
        %v806 = vadd.f32 0.0, %v805
        %807 = vmatmul.bf16.gmra.mxu0 %v615
        %v808 = vpop.f32.mrf.mxu0
        %v809 = vadd.f32 0.0, %v808
        %v810 = vpop.f32.mrf.mxu0
        %v811 = vadd.f32 0.0, %v810
        %812 = vmatmul.bf16.gmra.mxu0 %v616
        %v813 = vpop.f32.mrf.mxu0
        %v814 = vadd.f32 0.0, %v813
        %v815 = vpop.f32.mrf.mxu0
        %v816 = vadd.f32 0.0, %v815
        %817 = vmatmul.bf16.gmra.mxu0 %v617
        %v818 = vpop.f32.mrf.mxu0
        %v819 = vadd.f32 0.0, %v818
        %v820 = vpop.f32.mrf.mxu0
        %v821 = vadd.f32 0.0, %v820
        %822 = vmatmul.bf16.gmra.mxu0 %v618
        %v823 = vpop.f32.mrf.mxu0
        %v824 = vadd.f32 0.0, %v823
        %v825 = vpop.f32.mrf.mxu0
        %v826 = vadd.f32 0.0, %v825
        %827 = vmatmul.bf16.gmra.mxu0 %v619
        %v828 = vpop.f32.mrf.mxu0
        %v829 = vadd.f32 0.0, %v828
        %v830 = vpop.f32.mrf.mxu0
        %v831 = vadd.f32 0.0, %v830
        %832 = vmatmul.bf16.gmra.mxu0 %v620
        %v833 = vpop.f32.mrf.mxu0
        %v834 = vadd.f32 0.0, %v833
        %v835 = vpop.f32.mrf.mxu0
        %v836 = vadd.f32 0.0, %v835
        %837 = vmatmul.bf16.gmra.mxu0 %v621
        %v838 = vpop.f32.mrf.mxu0
        %v839 = vadd.f32 0.0, %v838
        %v840 = vpop.f32.mrf.mxu0
        %v841 = vadd.f32 0.0, %v840
        %842 = vmatmul.bf16.gmra.mxu0 %v622
        %v843 = vpop.f32.mrf.mxu0
        %v844 = vadd.f32 0.0, %v843
        %v845 = vpop.f32.mrf.mxu0
        %v846 = vadd.f32 0.0, %v845
        %847 = vmatmul.bf16.gmra.mxu0 %v623
        %v848 = vpop.f32.mrf.mxu0
        %v849 = vadd.f32 0.0, %v848
        %v850 = vpop.f32.mrf.mxu0
        %v851 = vadd.f32 0.0, %v850
        %852 = vmatmul.bf16.gmra.mxu0 %v624
        %v853 = vpop.f32.mrf.mxu0
        %v854 = vadd.f32 0.0, %v853
        %v855 = vpop.f32.mrf.mxu0
        %v856 = vadd.f32 0.0, %v855
        %857 = vmatmul.bf16.gmra.mxu0 %v625
        %v858 = vpop.f32.mrf.mxu0
        %v859 = vadd.f32 0.0, %v858
        %v860 = vpop.f32.mrf.mxu0
        %v861 = vadd.f32 0.0, %v860
        %862 = vmatmul.bf16.gmra.mxu0 %v626
        %v863 = vpop.f32.mrf.mxu0
        %v864 = vadd.f32 0.0, %v863
        %v865 = vpop.f32.mrf.mxu0
        %v866 = vadd.f32 0.0, %v865
        %867 = vmatmul.bf16.gmra.mxu0 %v627
        %v868 = vpop.f32.mrf.mxu0
        %v869 = vadd.f32 0.0, %v868
        %v870 = vpop.f32.mrf.mxu0
        %v871 = vadd.f32 0.0, %v870
        %872 = vmatmul.bf16.gmra.mxu0 %v628
        %v873 = vpop.f32.mrf.mxu0
        %v874 = vadd.f32 0.0, %v873
        %v875 = vpop.f32.mrf.mxu0
        %v876 = vadd.f32 0.0, %v875
        %877 = vdwg.mxu0
        %v878 = vld [vmem:[%s299] sm:$0xf]
        %v879 = vld [vmem:[%s299 + $0x4] sm:$0xf]
        %v880 = vld [vmem:[%s299 + $0x8] sm:$0xf]
        %v881 = vld [vmem:[%s299 + $0xc] sm:$0xf]
        %v882 = vld [vmem:[%s299 + $0x10] sm:$0xf]
        %v883 = vld [vmem:[%s299 + $0x14] sm:$0xf]
        %v884 = vld [vmem:[%s299 + $0x18] sm:$0xf]
        %v885 = vld [vmem:[%s299 + $0x1c] sm:$0xf]
        %v886 = vld [vmem:[%s299 + $0x20] sm:$0xf]
        %v887 = vld [vmem:[%s299 + $0x24] sm:$0xf]
        %v888 = vld [vmem:[%s299 + $0x28] sm:$0xf]
        %v889 = vld [vmem:[%s299 + $0x2c] sm:$0xf]
        %v890 = vld [vmem:[%s299 + $0x30] sm:$0xf]
        %v891 = vld [vmem:[%s299 + $0x34] sm:$0xf]
        %v892 = vld [vmem:[%s299 + $0x38] sm:$0xf]
        %v893 = vld [vmem:[%s299 + $0x3c] sm:$0xf]
        %v894 = vld [vmem:[%s299 + $0x40] sm:$0xf]
        %v895 = vld [vmem:[%s299 + $0x44] sm:$0xf]
        %v896 = vld [vmem:[%s299 + $0x48] sm:$0xf]
        %v897 = vld [vmem:[%s299 + $0x4c] sm:$0xf]
        %v898 = vld [vmem:[%s299 + $0x50] sm:$0xf]
        %v899 = vld [vmem:[%s299 + $0x54] sm:$0xf]
        %v900 = vld [vmem:[%s299 + $0x58] sm:$0xf]
        %v901 = vld [vmem:[%s299 + $0x5c] sm:$0xf]
        %v902 = vld [vmem:[%s299 + $0x60] sm:$0xf]
        %v903 = vld [vmem:[%s299 + $0x64] sm:$0xf]
        %v904 = vld [vmem:[%s299 + $0x68] sm:$0xf]
        %v905 = vld [vmem:[%s299 + $0x6c] sm:$0xf]
        %v906 = vld [vmem:[%s299 + $0x70] sm:$0xf]
        %v907 = vld [vmem:[%s299 + $0x74] sm:$0xf]
        %v908 = vld [vmem:[%s299 + $0x78] sm:$0xf]
        %v909 = vld [vmem:[%s299 + $0x7c] sm:$0xf]
        %v910 = vld [vmem:[%s299 + $0x80] sm:$0xf]
        %v911 = vld [vmem:[%s299 + $0x84] sm:$0xf]
        %v912 = vld [vmem:[%s299 + $0x88] sm:$0xf]
        %v913 = vld [vmem:[%s299 + $0x8c] sm:$0xf]
        %v914 = vld [vmem:[%s299 + $0x90] sm:$0xf]
        %v915 = vld [vmem:[%s299 + $0x94] sm:$0xf]
        %v916 = vld [vmem:[%s299 + $0x98] sm:$0xf]
        %v917 = vld [vmem:[%s299 + $0x9c] sm:$0xf]
        %v918 = vld [vmem:[%s299 + $0xa0] sm:$0xf]
        %v919 = vld [vmem:[%s299 + $0xa4] sm:$0xf]
        %v920 = vld [vmem:[%s299 + $0xa8] sm:$0xf]
        %v921 = vld [vmem:[%s299 + $0xac] sm:$0xf]
        %v922 = vld [vmem:[%s299 + $0xb0] sm:$0xf]
        %v923 = vld [vmem:[%s299 + $0xb4] sm:$0xf]
        %v924 = vld [vmem:[%s299 + $0xb8] sm:$0xf]
        %v925 = vld [vmem:[%s299 + $0xbc] sm:$0xf]
        %v926 = vld [vmem:[%s299 + $0xc0] sm:$0xf]
        %v927 = vld [vmem:[%s299 + $0xc4] sm:$0xf]
        %v928 = vld [vmem:[%s299 + $0xc8] sm:$0xf]
        %v929 = vld [vmem:[%s299 + $0xcc] sm:$0xf]
        %v930 = vld [vmem:[%s299 + $0xd0] sm:$0xf]
        %v931 = vld [vmem:[%s299 + $0xd4] sm:$0xf]
        %v932 = vld [vmem:[%s299 + $0xd8] sm:$0xf]
        %v933 = vld [vmem:[%s299 + $0xdc] sm:$0xf]
        %v934 = vld [vmem:[%s299 + $0xe0] sm:$0xf]
        %v935 = vld [vmem:[%s299 + $0xe4] sm:$0xf]
        %v936 = vld [vmem:[%s299 + $0xe8] sm:$0xf]
        %v937 = vld [vmem:[%s299 + $0xec] sm:$0xf]
        %v938 = vld [vmem:[%s299 + $0xf0] sm:$0xf]
        %v939 = vld [vmem:[%s299 + $0xf4] sm:$0xf]
        %v940 = vld [vmem:[%s299 + $0xf8] sm:$0xf]
        %v941 = vld [vmem:[%s299 + $0xfc] sm:$0xf]
        %v1006 = vunpack.c.l.b16 %v878
        %v1007 = vunpack.c.l.b16 %v879
        %v1008 = vunpack.c.l.b16 %v880
        %v1009 = vunpack.c.l.b16 %v881
        %v1010 = vunpack.c.l.b16 %v882
        %v1011 = vunpack.c.l.b16 %v883
        %v1012 = vunpack.c.l.b16 %v884
        %v1013 = vunpack.c.l.b16 %v885
        %v1014 = vunpack.c.l.b16 %v886
        %v1015 = vunpack.c.l.b16 %v887
        %v1016 = vunpack.c.l.b16 %v888
        %v1017 = vunpack.c.l.b16 %v889
        %v1018 = vunpack.c.l.b16 %v890
        %v1019 = vunpack.c.l.b16 %v891
        %v1020 = vunpack.c.l.b16 %v892
        %v1021 = vunpack.c.l.b16 %v893
        %v1022 = vunpack.c.l.b16 %v894
        %v1023 = vunpack.c.l.b16 %v895
        %v1024 = vunpack.c.l.b16 %v896
        %v1025 = vunpack.c.l.b16 %v897
        %v1026 = vunpack.c.l.b16 %v898
        %v1027 = vunpack.c.l.b16 %v899
        %v1028 = vunpack.c.l.b16 %v900
        %v1029 = vunpack.c.l.b16 %v901
        %v1030 = vunpack.c.l.b16 %v902
        %v1031 = vunpack.c.l.b16 %v903
        %v1032 = vunpack.c.l.b16 %v904
        %v1033 = vunpack.c.l.b16 %v905
        %v1034 = vunpack.c.l.b16 %v906
        %v1035 = vunpack.c.l.b16 %v907
        %v1036 = vunpack.c.l.b16 %v908
        %v1037 = vunpack.c.l.b16 %v909
        %v1038 = vunpack.c.l.b16 %v910
        %v1039 = vunpack.c.l.b16 %v911
        %v1040 = vunpack.c.l.b16 %v912
        %v1041 = vunpack.c.l.b16 %v913
        %v1042 = vunpack.c.l.b16 %v914
        %v1043 = vunpack.c.l.b16 %v915
        %v1044 = vunpack.c.l.b16 %v916
        %v1045 = vunpack.c.l.b16 %v917
        %v1046 = vunpack.c.l.b16 %v918
        %v1047 = vunpack.c.l.b16 %v919
        %v1048 = vunpack.c.l.b16 %v920
        %v1049 = vunpack.c.l.b16 %v921
        %v1050 = vunpack.c.l.b16 %v922
        %v1051 = vunpack.c.l.b16 %v923
        %v1052 = vunpack.c.l.b16 %v924
        %v1053 = vunpack.c.l.b16 %v925
        %v1054 = vunpack.c.l.b16 %v926
        %v1055 = vunpack.c.l.b16 %v927
        %v1056 = vunpack.c.l.b16 %v928
        %v1057 = vunpack.c.l.b16 %v929
        %v1058 = vunpack.c.l.b16 %v930
        %v1059 = vunpack.c.l.b16 %v931
        %v1060 = vunpack.c.l.b16 %v932
        %v1061 = vunpack.c.l.b16 %v933
        %v1062 = vunpack.c.l.b16 %v934
        %v1063 = vunpack.c.l.b16 %v935
        %v1064 = vunpack.c.l.b16 %v936
        %v1065 = vunpack.c.l.b16 %v937
        %v1066 = vunpack.c.l.b16 %v938
        %v1067 = vunpack.c.l.b16 %v939
        %v1068 = vunpack.c.l.b16 %v940
        %v1069 = vunpack.c.l.b16 %v941
        %v1070 = vpack.c.b16 %v1007, %v1006
        %v1071 = vpack.c.b16 %v1009, %v1008
        %v1072 = vpack.c.b16 %v1011, %v1010
        %v1073 = vpack.c.b16 %v1013, %v1012
        %v1074 = vpack.c.b16 %v1015, %v1014
        %v1075 = vpack.c.b16 %v1017, %v1016
        %v1076 = vpack.c.b16 %v1019, %v1018
        %v1077 = vpack.c.b16 %v1021, %v1020
        %v1078 = vpack.c.b16 %v1023, %v1022
        %v1079 = vpack.c.b16 %v1025, %v1024
        %v1080 = vpack.c.b16 %v1027, %v1026
        %v1081 = vpack.c.b16 %v1029, %v1028
        %v1082 = vpack.c.b16 %v1031, %v1030
        %v1083 = vpack.c.b16 %v1033, %v1032
        %v1084 = vpack.c.b16 %v1035, %v1034
        %v1085 = vpack.c.b16 %v1037, %v1036
        %v1086 = vpack.c.b16 %v1039, %v1038
        %v1087 = vpack.c.b16 %v1041, %v1040
        %v1088 = vpack.c.b16 %v1043, %v1042
        %v1089 = vpack.c.b16 %v1045, %v1044
        %v1090 = vpack.c.b16 %v1047, %v1046
        %v1091 = vpack.c.b16 %v1049, %v1048
        %v1092 = vpack.c.b16 %v1051, %v1050
        %v1093 = vpack.c.b16 %v1053, %v1052
        %v1094 = vpack.c.b16 %v1055, %v1054
        %v1095 = vpack.c.b16 %v1057, %v1056
        %v1096 = vpack.c.b16 %v1059, %v1058
        %v1097 = vpack.c.b16 %v1061, %v1060
        %v1098 = vpack.c.b16 %v1063, %v1062
        %v1099 = vpack.c.b16 %v1065, %v1064
        %v1100 = vpack.c.b16 %v1067, %v1066
        %v1101 = vpack.c.b16 %v1069, %v1068
        %1134 = vmatpush.bf16.msra.mxu0 %v700
        %1135 = vmatpush.bf16.msra.mxu0 %v699
        %1136 = vmatpush.bf16.msra.mxu0 %v698
        %1137 = vmatpush.bf16.msra.mxu0 %v697
        %1138 = vmatpush.bf16.msra.mxu0 %v696
        %1139 = vmatpush.bf16.msra.mxu0 %v695
        %1140 = vmatpush.bf16.msra.mxu0 %v694
        %1141 = vmatpush.bf16.msra.mxu0 %v693
        %1142 = vmatmul.bf16.gmra.mxu0 %v1070
        %v1143 = vpop.f32.mrf.mxu0
        %v1144 = vadd.f32 0.0, %v1143
        %v1145 = vpop.f32.mrf.mxu0
        %v1146 = vadd.f32 0.0, %v1145
        %1147 = vmatmul.bf16.gmra.mxu0 %v1071
        %v1148 = vpop.f32.mrf.mxu0
        %v1149 = vadd.f32 0.0, %v1148
        %v1150 = vpop.f32.mrf.mxu0
        %v1151 = vadd.f32 0.0, %v1150
        %1152 = vmatmul.bf16.gmra.mxu0 %v1072
        %v1153 = vpop.f32.mrf.mxu0
        %v1154 = vadd.f32 0.0, %v1153
        %v1155 = vpop.f32.mrf.mxu0
        %v1156 = vadd.f32 0.0, %v1155
        %1157 = vmatmul.bf16.gmra.mxu0 %v1073
        %v1158 = vpop.f32.mrf.mxu0
        %v1159 = vadd.f32 0.0, %v1158
        %v1160 = vpop.f32.mrf.mxu0
        %v1161 = vadd.f32 0.0, %v1160
        %1162 = vmatmul.bf16.gmra.mxu0 %v1074
        %v1163 = vpop.f32.mrf.mxu0
        %v1164 = vadd.f32 0.0, %v1163
        %v1165 = vpop.f32.mrf.mxu0
        %v1166 = vadd.f32 0.0, %v1165
        %1167 = vmatmul.bf16.gmra.mxu0 %v1075
        %v1168 = vpop.f32.mrf.mxu0
        %v1169 = vadd.f32 0.0, %v1168
        %v1170 = vpop.f32.mrf.mxu0
        %v1171 = vadd.f32 0.0, %v1170
        %1172 = vmatmul.bf16.gmra.mxu0 %v1076
        %v1173 = vpop.f32.mrf.mxu0
        %v1174 = vadd.f32 0.0, %v1173
        %v1175 = vpop.f32.mrf.mxu0
        %v1176 = vadd.f32 0.0, %v1175
        %1177 = vmatmul.bf16.gmra.mxu0 %v1077
        %v1178 = vpop.f32.mrf.mxu0
        %v1179 = vadd.f32 0.0, %v1178
        %v1180 = vpop.f32.mrf.mxu0
        %v1181 = vadd.f32 0.0, %v1180
        %1182 = vmatmul.bf16.gmra.mxu0 %v1078
        %v1183 = vpop.f32.mrf.mxu0
        %v1184 = vadd.f32 0.0, %v1183
        %v1185 = vpop.f32.mrf.mxu0
        %v1186 = vadd.f32 0.0, %v1185
        %1187 = vmatmul.bf16.gmra.mxu0 %v1079
        %v1188 = vpop.f32.mrf.mxu0
        %v1189 = vadd.f32 0.0, %v1188
        %v1190 = vpop.f32.mrf.mxu0
        %v1191 = vadd.f32 0.0, %v1190
        %1192 = vmatmul.bf16.gmra.mxu0 %v1080
        %v1193 = vpop.f32.mrf.mxu0
        %v1194 = vadd.f32 0.0, %v1193
        %v1195 = vpop.f32.mrf.mxu0
        %v1196 = vadd.f32 0.0, %v1195
        %1197 = vmatmul.bf16.gmra.mxu0 %v1081
        %v1198 = vpop.f32.mrf.mxu0
        %v1199 = vadd.f32 0.0, %v1198
        %v1200 = vpop.f32.mrf.mxu0
        %v1201 = vadd.f32 0.0, %v1200
        %1202 = vmatmul.bf16.gmra.mxu0 %v1082
        %v1203 = vpop.f32.mrf.mxu0
        %v1204 = vadd.f32 0.0, %v1203
        %v1205 = vpop.f32.mrf.mxu0
        %v1206 = vadd.f32 0.0, %v1205
        %1207 = vmatmul.bf16.gmra.mxu0 %v1083
        %v1208 = vpop.f32.mrf.mxu0
        %v1209 = vadd.f32 0.0, %v1208
        %v1210 = vpop.f32.mrf.mxu0
        %v1211 = vadd.f32 0.0, %v1210
        %1212 = vmatmul.bf16.gmra.mxu0 %v1084
        %v1213 = vpop.f32.mrf.mxu0
        %v1214 = vadd.f32 0.0, %v1213
        %v1215 = vpop.f32.mrf.mxu0
        %v1216 = vadd.f32 0.0, %v1215
        %1217 = vmatmul.bf16.gmra.mxu0 %v1085
        %v1218 = vpop.f32.mrf.mxu0
        %v1219 = vadd.f32 0.0, %v1218
        %v1220 = vpop.f32.mrf.mxu0
        %v1221 = vadd.f32 0.0, %v1220
        %1222 = vmatmul.bf16.gmra.mxu0 %v1086
        %v1223 = vpop.f32.mrf.mxu0
        %v1224 = vadd.f32 0.0, %v1223
        %v1225 = vpop.f32.mrf.mxu0
        %v1226 = vadd.f32 0.0, %v1225
        %1227 = vmatmul.bf16.gmra.mxu0 %v1087
        %v1228 = vpop.f32.mrf.mxu0
        %v1229 = vadd.f32 0.0, %v1228
        %v1230 = vpop.f32.mrf.mxu0
        %v1231 = vadd.f32 0.0, %v1230
        %1232 = vmatmul.bf16.gmra.mxu0 %v1088
        %v1233 = vpop.f32.mrf.mxu0
        %v1234 = vadd.f32 0.0, %v1233
        %v1235 = vpop.f32.mrf.mxu0
        %v1236 = vadd.f32 0.0, %v1235
        %1237 = vmatmul.bf16.gmra.mxu0 %v1089
        %v1238 = vpop.f32.mrf.mxu0
        %v1239 = vadd.f32 0.0, %v1238
        %v1240 = vpop.f32.mrf.mxu0
        %v1241 = vadd.f32 0.0, %v1240
        %1242 = vmatmul.bf16.gmra.mxu0 %v1090
        %v1243 = vpop.f32.mrf.mxu0
        %v1244 = vadd.f32 0.0, %v1243
        %v1245 = vpop.f32.mrf.mxu0
        %v1246 = vadd.f32 0.0, %v1245
        %1247 = vmatmul.bf16.gmra.mxu0 %v1091
        %v1248 = vpop.f32.mrf.mxu0
        %v1249 = vadd.f32 0.0, %v1248
        %v1250 = vpop.f32.mrf.mxu0
        %v1251 = vadd.f32 0.0, %v1250
        %1252 = vmatmul.bf16.gmra.mxu0 %v1092
        %v1253 = vpop.f32.mrf.mxu0
        %v1254 = vadd.f32 0.0, %v1253
        %v1255 = vpop.f32.mrf.mxu0
        %v1256 = vadd.f32 0.0, %v1255
        %1257 = vmatmul.bf16.gmra.mxu0 %v1093
        %v1258 = vpop.f32.mrf.mxu0
        %v1259 = vadd.f32 0.0, %v1258
        %v1260 = vpop.f32.mrf.mxu0
        %v1261 = vadd.f32 0.0, %v1260
        %1262 = vmatmul.bf16.gmra.mxu0 %v1094
        %v1263 = vpop.f32.mrf.mxu0
        %v1264 = vadd.f32 0.0, %v1263
        %v1265 = vpop.f32.mrf.mxu0
        %v1266 = vadd.f32 0.0, %v1265
        %1267 = vmatmul.bf16.gmra.mxu0 %v1095
        %v1268 = vpop.f32.mrf.mxu0
        %v1269 = vadd.f32 0.0, %v1268
        %v1270 = vpop.f32.mrf.mxu0
        %v1271 = vadd.f32 0.0, %v1270
        %1272 = vmatmul.bf16.gmra.mxu0 %v1096
        %v1273 = vpop.f32.mrf.mxu0
        %v1274 = vadd.f32 0.0, %v1273
        %v1275 = vpop.f32.mrf.mxu0
        %v1276 = vadd.f32 0.0, %v1275
        %1277 = vmatmul.bf16.gmra.mxu0 %v1097
        %v1278 = vpop.f32.mrf.mxu0
        %v1279 = vadd.f32 0.0, %v1278
        %v1280 = vpop.f32.mrf.mxu0
        %v1281 = vadd.f32 0.0, %v1280
        %1282 = vmatmul.bf16.gmra.mxu0 %v1098
        %v1283 = vpop.f32.mrf.mxu0
        %v1284 = vadd.f32 0.0, %v1283
        %v1285 = vpop.f32.mrf.mxu0
        %v1286 = vadd.f32 0.0, %v1285
        %1287 = vmatmul.bf16.gmra.mxu0 %v1099
        %v1288 = vpop.f32.mrf.mxu0
        %v1289 = vadd.f32 0.0, %v1288
        %v1290 = vpop.f32.mrf.mxu0
        %v1291 = vadd.f32 0.0, %v1290
        %1292 = vmatmul.bf16.gmra.mxu0 %v1100
        %v1293 = vpop.f32.mrf.mxu0
        %v1294 = vadd.f32 0.0, %v1293
        %v1295 = vpop.f32.mrf.mxu0
        %v1296 = vadd.f32 0.0, %v1295
        %1297 = vmatmul.bf16.gmra.mxu0 %v1101
        %v1298 = vpop.f32.mrf.mxu0
        %v1299 = vadd.f32 0.0, %v1298
        %v1300 = vpop.f32.mrf.mxu0
        %v1301 = vadd.f32 0.0, %v1300
        %1302 = vdwg.mxu0
        %1304 = vset.pattern.permute.xlu0 0
        %1305 = vperm.xlu0 %1304, %v309
        %v1306 = vpop.permute.xlu0 %1305
        %1309 = vset.pattern.permute.xlu0 0
        %1310 = vperm.xlu0 %1309, %v310
        %v1311 = vpop.permute.xlu0 %1310
        %1314 = vset.pattern.permute.xlu0 0
        %1315 = vperm.xlu0 %1314, %v311
        %v1316 = vpop.permute.xlu0 %1315
        %1319 = vset.pattern.permute.xlu0 0
        %1320 = vperm.xlu0 %1319, %v312
        %v1321 = vpop.permute.xlu0 %1320
        %1324 = vset.pattern.permute.xlu0 0
        %1325 = vperm.xlu0 %1324, %v313
        %v1326 = vpop.permute.xlu0 %1325
        %1329 = vset.pattern.permute.xlu0 0
        %1330 = vperm.xlu0 %1329, %v314
        %v1331 = vpop.permute.xlu0 %1330
        %1334 = vset.pattern.permute.xlu0 0
        %1335 = vperm.xlu0 %1334, %v315
        %v1336 = vpop.permute.xlu0 %1335
        %1339 = vset.pattern.permute.xlu0 0
        %1340 = vperm.xlu0 %1339, %v316
        %v1341 = vpop.permute.xlu0 %1340
        %1344 = vset.pattern.permute.xlu0 0
        %1345 = vperm.xlu0 %1344, %v317
        %v1346 = vpop.permute.xlu0 %1345
        %1349 = vset.pattern.permute.xlu0 0
        %1350 = vperm.xlu0 %1349, %v318
        %v1351 = vpop.permute.xlu0 %1350
        %1354 = vset.pattern.permute.xlu0 0
        %1355 = vperm.xlu0 %1354, %v319
        %v1356 = vpop.permute.xlu0 %1355
        %1359 = vset.pattern.permute.xlu0 0
        %1360 = vperm.xlu0 %1359, %v320
        %v1361 = vpop.permute.xlu0 %1360
        %1364 = vset.pattern.permute.xlu0 0
        %1365 = vperm.xlu0 %1364, %v321
        %v1366 = vpop.permute.xlu0 %1365
        %1369 = vset.pattern.permute.xlu0 0
        %1370 = vperm.xlu0 %1369, %v322
        %v1371 = vpop.permute.xlu0 %1370
        %1374 = vset.pattern.permute.xlu0 0
        %1375 = vperm.xlu0 %1374, %v323
        %v1376 = vpop.permute.xlu0 %1375
        %1379 = vset.pattern.permute.xlu0 0
        %1380 = vperm.xlu0 %1379, %v324
        %v1381 = vpop.permute.xlu0 %1380
        %1384 = vset.pattern.permute.xlu0 0
        %1385 = vperm.xlu0 %1384, %v325
        %v1386 = vpop.permute.xlu0 %1385
        %1389 = vset.pattern.permute.xlu0 0
        %1390 = vperm.xlu0 %1389, %v326
        %v1391 = vpop.permute.xlu0 %1390
        %1394 = vset.pattern.permute.xlu0 0
        %1395 = vperm.xlu0 %1394, %v327
        %v1396 = vpop.permute.xlu0 %1395
        %1399 = vset.pattern.permute.xlu0 0
        %1400 = vperm.xlu0 %1399, %v328
        %v1401 = vpop.permute.xlu0 %1400
        %1404 = vset.pattern.permute.xlu0 0
        %1405 = vperm.xlu0 %1404, %v329
        %v1406 = vpop.permute.xlu0 %1405
        %1409 = vset.pattern.permute.xlu0 0
        %1410 = vperm.xlu0 %1409, %v330
        %v1411 = vpop.permute.xlu0 %1410
        %1414 = vset.pattern.permute.xlu0 0
        %1415 = vperm.xlu0 %1414, %v331
        %v1416 = vpop.permute.xlu0 %1415
        %1419 = vset.pattern.permute.xlu0 0
        %1420 = vperm.xlu0 %1419, %v332
        %v1421 = vpop.permute.xlu0 %1420
        %1424 = vset.pattern.permute.xlu0 0
        %1425 = vperm.xlu0 %1424, %v333
        %v1426 = vpop.permute.xlu0 %1425
        %1429 = vset.pattern.permute.xlu0 0
        %1430 = vperm.xlu0 %1429, %v334
        %v1431 = vpop.permute.xlu0 %1430
        %1434 = vset.pattern.permute.xlu0 0
        %1435 = vperm.xlu0 %1434, %v335
        %v1436 = vpop.permute.xlu0 %1435
        %1439 = vset.pattern.permute.xlu0 0
        %1440 = vperm.xlu0 %1439, %v336
        %v1441 = vpop.permute.xlu0 %1440
        %1444 = vset.pattern.permute.xlu0 0
        %1445 = vperm.xlu0 %1444, %v337
        %v1446 = vpop.permute.xlu0 %1445
        %1449 = vset.pattern.permute.xlu0 0
        %1450 = vperm.xlu0 %1449, %v338
        %v1451 = vpop.permute.xlu0 %1450
        %1454 = vset.pattern.permute.xlu0 0
        %1455 = vperm.xlu0 %1454, %v339
        %v1456 = vpop.permute.xlu0 %1455
        %1459 = vset.pattern.permute.xlu0 0
        %1460 = vperm.xlu0 %1459, %v340
        %v1461 = vpop.permute.xlu0 %1460
        %1464 = vset.pattern.permute.xlu0 0
        %1465 = vperm.xlu0 %1464, %v341
        %v1466 = vpop.permute.xlu0 %1465
        %1469 = vset.pattern.permute.xlu0 0
        %1470 = vperm.xlu0 %1469, %v342
        %v1471 = vpop.permute.xlu0 %1470
        %1474 = vset.pattern.permute.xlu0 0
        %1475 = vperm.xlu0 %1474, %v343
        %v1476 = vpop.permute.xlu0 %1475
        %1479 = vset.pattern.permute.xlu0 0
        %1480 = vperm.xlu0 %1479, %v344
        %v1481 = vpop.permute.xlu0 %1480
        %1484 = vset.pattern.permute.xlu0 0
        %1485 = vperm.xlu0 %1484, %v345
        %v1486 = vpop.permute.xlu0 %1485
        %1489 = vset.pattern.permute.xlu0 0
        %1490 = vperm.xlu0 %1489, %v346
        %v1491 = vpop.permute.xlu0 %1490
        %1494 = vset.pattern.permute.xlu0 0
        %1495 = vperm.xlu0 %1494, %v347
        %v1496 = vpop.permute.xlu0 %1495
        %1499 = vset.pattern.permute.xlu0 0
        %1500 = vperm.xlu0 %1499, %v348
        %v1501 = vpop.permute.xlu0 %1500
        %1504 = vset.pattern.permute.xlu0 0
        %1505 = vperm.xlu0 %1504, %v349
        %v1506 = vpop.permute.xlu0 %1505
        %1509 = vset.pattern.permute.xlu0 0
        %1510 = vperm.xlu0 %1509, %v350
        %v1511 = vpop.permute.xlu0 %1510
        %1514 = vset.pattern.permute.xlu0 0
        %1515 = vperm.xlu0 %1514, %v351
        %v1516 = vpop.permute.xlu0 %1515
        %1519 = vset.pattern.permute.xlu0 0
        %1520 = vperm.xlu0 %1519, %v352
        %v1521 = vpop.permute.xlu0 %1520
        %1524 = vset.pattern.permute.xlu0 0
        %1525 = vperm.xlu0 %1524, %v353
        %v1526 = vpop.permute.xlu0 %1525
        %1529 = vset.pattern.permute.xlu0 0
        %1530 = vperm.xlu0 %1529, %v354
        %v1531 = vpop.permute.xlu0 %1530
        %1534 = vset.pattern.permute.xlu0 0
        %1535 = vperm.xlu0 %1534, %v355
        %v1536 = vpop.permute.xlu0 %1535
        %1539 = vset.pattern.permute.xlu0 0
        %1540 = vperm.xlu0 %1539, %v356
        %v1541 = vpop.permute.xlu0 %1540
        %1544 = vset.pattern.permute.xlu0 0
        %1545 = vperm.xlu0 %1544, %v357
        %v1546 = vpop.permute.xlu0 %1545
        %1549 = vset.pattern.permute.xlu0 0
        %1550 = vperm.xlu0 %1549, %v358
        %v1551 = vpop.permute.xlu0 %1550
        %1554 = vset.pattern.permute.xlu0 0
        %1555 = vperm.xlu0 %1554, %v359
        %v1556 = vpop.permute.xlu0 %1555
        %1559 = vset.pattern.permute.xlu0 0
        %1560 = vperm.xlu0 %1559, %v360
        %v1561 = vpop.permute.xlu0 %1560
        %1564 = vset.pattern.permute.xlu0 0
        %1565 = vperm.xlu0 %1564, %v361
        %v1566 = vpop.permute.xlu0 %1565
        %1569 = vset.pattern.permute.xlu0 0
        %1570 = vperm.xlu0 %1569, %v362
        %v1571 = vpop.permute.xlu0 %1570
        %1574 = vset.pattern.permute.xlu0 0
        %1575 = vperm.xlu0 %1574, %v363
        %v1576 = vpop.permute.xlu0 %1575
        %1579 = vset.pattern.permute.xlu0 0
        %1580 = vperm.xlu0 %1579, %v364
        %v1581 = vpop.permute.xlu0 %1580
        %1584 = vset.pattern.permute.xlu0 0
        %1585 = vperm.xlu0 %1584, %v365
        %v1586 = vpop.permute.xlu0 %1585
        %1589 = vset.pattern.permute.xlu0 0
        %1590 = vperm.xlu0 %1589, %v366
        %v1591 = vpop.permute.xlu0 %1590
        %1594 = vset.pattern.permute.xlu0 0
        %1595 = vperm.xlu0 %1594, %v367
        %v1596 = vpop.permute.xlu0 %1595
        %1599 = vset.pattern.permute.xlu0 0
        %1600 = vperm.xlu0 %1599, %v368
        %v1601 = vpop.permute.xlu0 %1600
        %1604 = vset.pattern.permute.xlu0 0
        %1605 = vperm.xlu0 %1604, %v369
        %v1606 = vpop.permute.xlu0 %1605
        %1609 = vset.pattern.permute.xlu0 0
        %1610 = vperm.xlu0 %1609, %v370
        %v1611 = vpop.permute.xlu0 %1610
        %1614 = vset.pattern.permute.xlu0 0
        %1615 = vperm.xlu0 %1614, %v371
        %v1616 = vpop.permute.xlu0 %1615
        %1619 = vset.pattern.permute.xlu0 0
        %1620 = vperm.xlu0 %1619, %v372
        %v1621 = vpop.permute.xlu0 %1620
        %v1623 = vmul.f32 %v719, %v1306
        %v1624 = vmul.f32 %v721, %v1311
        %v1625 = vmul.f32 %v724, %v1316
        %v1626 = vmul.f32 %v726, %v1321
        %v1627 = vmul.f32 %v729, %v1326
        %v1628 = vmul.f32 %v731, %v1331
        %v1629 = vmul.f32 %v734, %v1336
        %v1630 = vmul.f32 %v736, %v1341
        %v1631 = vmul.f32 %v739, %v1346
        %v1632 = vmul.f32 %v741, %v1351
        %v1633 = vmul.f32 %v744, %v1356
        %v1634 = vmul.f32 %v746, %v1361
        %v1635 = vmul.f32 %v749, %v1366
        %v1636 = vmul.f32 %v751, %v1371
        %v1637 = vmul.f32 %v754, %v1376
        %v1638 = vmul.f32 %v756, %v1381
        %v1639 = vmul.f32 %v759, %v1386
        %v1640 = vmul.f32 %v761, %v1391
        %v1641 = vmul.f32 %v764, %v1396
        %v1642 = vmul.f32 %v766, %v1401
        %v1643 = vmul.f32 %v769, %v1406
        %v1644 = vmul.f32 %v771, %v1411
        %v1645 = vmul.f32 %v774, %v1416
        %v1646 = vmul.f32 %v776, %v1421
        %v1647 = vmul.f32 %v779, %v1426
        %v1648 = vmul.f32 %v781, %v1431
        %v1649 = vmul.f32 %v784, %v1436
        %v1650 = vmul.f32 %v786, %v1441
        %v1651 = vmul.f32 %v789, %v1446
        %v1652 = vmul.f32 %v791, %v1451
        %v1653 = vmul.f32 %v794, %v1456
        %v1654 = vmul.f32 %v796, %v1461
        %v1655 = vmul.f32 %v799, %v1466
        %v1656 = vmul.f32 %v801, %v1471
        %v1657 = vmul.f32 %v804, %v1476
        %v1658 = vmul.f32 %v806, %v1481
        %v1659 = vmul.f32 %v809, %v1486
        %v1660 = vmul.f32 %v811, %v1491
        %v1661 = vmul.f32 %v814, %v1496
        %v1662 = vmul.f32 %v816, %v1501
        %v1663 = vmul.f32 %v819, %v1506
        %v1664 = vmul.f32 %v821, %v1511
        %v1665 = vmul.f32 %v824, %v1516
        %v1666 = vmul.f32 %v826, %v1521
        %v1667 = vmul.f32 %v829, %v1526
        %v1668 = vmul.f32 %v831, %v1531
        %v1669 = vmul.f32 %v834, %v1536
        %v1670 = vmul.f32 %v836, %v1541
        %v1671 = vmul.f32 %v839, %v1546
        %v1672 = vmul.f32 %v841, %v1551
        %v1673 = vmul.f32 %v844, %v1556
        %v1674 = vmul.f32 %v846, %v1561
        %v1675 = vmul.f32 %v849, %v1566
        %v1676 = vmul.f32 %v851, %v1571
        %v1677 = vmul.f32 %v854, %v1576
        %v1678 = vmul.f32 %v856, %v1581
        %v1679 = vmul.f32 %v859, %v1586
        %v1680 = vmul.f32 %v861, %v1591
        %v1681 = vmul.f32 %v864, %v1596
        %v1682 = vmul.f32 %v866, %v1601
        %v1683 = vmul.f32 %v869, %v1606
        %v1684 = vmul.f32 %v871, %v1611
        %v1685 = vmul.f32 %v874, %v1616
        %v1686 = vmul.f32 %v876, %v1621
        %1687 = vset.pattern.permute.xlu0 3
        %1688 = vperm.xlu0 %1687, %v309
        %v1689 = vpop.permute.xlu0 %1688
        %1691 = vset.pattern.permute.xlu0 3
        %1692 = vperm.xlu0 %1691, %v310
        %v1693 = vpop.permute.xlu0 %1692
        %1695 = vset.pattern.permute.xlu0 3
        %1696 = vperm.xlu0 %1695, %v311
        %v1697 = vpop.permute.xlu0 %1696
        %1699 = vset.pattern.permute.xlu0 3
        %1700 = vperm.xlu0 %1699, %v312
        %v1701 = vpop.permute.xlu0 %1700
        %1703 = vset.pattern.permute.xlu0 3
        %1704 = vperm.xlu0 %1703, %v313
        %v1705 = vpop.permute.xlu0 %1704
        %1707 = vset.pattern.permute.xlu0 3
        %1708 = vperm.xlu0 %1707, %v314
        %v1709 = vpop.permute.xlu0 %1708
        %1711 = vset.pattern.permute.xlu0 3
        %1712 = vperm.xlu0 %1711, %v315
        %v1713 = vpop.permute.xlu0 %1712
        %1715 = vset.pattern.permute.xlu0 3
        %1716 = vperm.xlu0 %1715, %v316
        %v1717 = vpop.permute.xlu0 %1716
        %1719 = vset.pattern.permute.xlu0 3
        %1720 = vperm.xlu0 %1719, %v317
        %v1721 = vpop.permute.xlu0 %1720
        %1723 = vset.pattern.permute.xlu0 3
        %1724 = vperm.xlu0 %1723, %v318
        %v1725 = vpop.permute.xlu0 %1724
        %1727 = vset.pattern.permute.xlu0 3
        %1728 = vperm.xlu0 %1727, %v319
        %v1729 = vpop.permute.xlu0 %1728
        %1731 = vset.pattern.permute.xlu0 3
        %1732 = vperm.xlu0 %1731, %v320
        %v1733 = vpop.permute.xlu0 %1732
        %1735 = vset.pattern.permute.xlu0 3
        %1736 = vperm.xlu0 %1735, %v321
        %v1737 = vpop.permute.xlu0 %1736
        %1739 = vset.pattern.permute.xlu0 3
        %1740 = vperm.xlu0 %1739, %v322
        %v1741 = vpop.permute.xlu0 %1740
        %1743 = vset.pattern.permute.xlu0 3
        %1744 = vperm.xlu0 %1743, %v323
        %v1745 = vpop.permute.xlu0 %1744
        %1747 = vset.pattern.permute.xlu0 3
        %1748 = vperm.xlu0 %1747, %v324
        %v1749 = vpop.permute.xlu0 %1748
        %1751 = vset.pattern.permute.xlu0 3
        %1752 = vperm.xlu0 %1751, %v325
        %v1753 = vpop.permute.xlu0 %1752
        %1755 = vset.pattern.permute.xlu0 3
        %1756 = vperm.xlu0 %1755, %v326
        %v1757 = vpop.permute.xlu0 %1756
        %1759 = vset.pattern.permute.xlu0 3
        %1760 = vperm.xlu0 %1759, %v327
        %v1761 = vpop.permute.xlu0 %1760
        %1763 = vset.pattern.permute.xlu0 3
        %1764 = vperm.xlu0 %1763, %v328
        %v1765 = vpop.permute.xlu0 %1764
        %1767 = vset.pattern.permute.xlu0 3
        %1768 = vperm.xlu0 %1767, %v329
        %v1769 = vpop.permute.xlu0 %1768
        %1771 = vset.pattern.permute.xlu0 3
        %1772 = vperm.xlu0 %1771, %v330
        %v1773 = vpop.permute.xlu0 %1772
        %1775 = vset.pattern.permute.xlu0 3
        %1776 = vperm.xlu0 %1775, %v331
        %v1777 = vpop.permute.xlu0 %1776
        %1779 = vset.pattern.permute.xlu0 3
        %1780 = vperm.xlu0 %1779, %v332
        %v1781 = vpop.permute.xlu0 %1780
        %1783 = vset.pattern.permute.xlu0 3
        %1784 = vperm.xlu0 %1783, %v333
        %v1785 = vpop.permute.xlu0 %1784
        %1787 = vset.pattern.permute.xlu0 3
        %1788 = vperm.xlu0 %1787, %v334
        %v1789 = vpop.permute.xlu0 %1788
        %1791 = vset.pattern.permute.xlu0 3
        %1792 = vperm.xlu0 %1791, %v335
        %v1793 = vpop.permute.xlu0 %1792
        %1795 = vset.pattern.permute.xlu0 3
        %1796 = vperm.xlu0 %1795, %v336
        %v1797 = vpop.permute.xlu0 %1796
        %1799 = vset.pattern.permute.xlu0 3
        %1800 = vperm.xlu0 %1799, %v337
        %v1801 = vpop.permute.xlu0 %1800
        %1803 = vset.pattern.permute.xlu0 3
        %1804 = vperm.xlu0 %1803, %v338
        %v1805 = vpop.permute.xlu0 %1804
        %1807 = vset.pattern.permute.xlu0 3
        %1808 = vperm.xlu0 %1807, %v339
        %v1809 = vpop.permute.xlu0 %1808
        %1811 = vset.pattern.permute.xlu0 3
        %1812 = vperm.xlu0 %1811, %v340
        %v1813 = vpop.permute.xlu0 %1812
        %1815 = vset.pattern.permute.xlu0 3
        %1816 = vperm.xlu0 %1815, %v341
        %v1817 = vpop.permute.xlu0 %1816
        %1819 = vset.pattern.permute.xlu0 3
        %1820 = vperm.xlu0 %1819, %v342
        %v1821 = vpop.permute.xlu0 %1820
        %1823 = vset.pattern.permute.xlu0 3
        %1824 = vperm.xlu0 %1823, %v343
        %v1825 = vpop.permute.xlu0 %1824
        %1827 = vset.pattern.permute.xlu0 3
        %1828 = vperm.xlu0 %1827, %v344
        %v1829 = vpop.permute.xlu0 %1828
        %1831 = vset.pattern.permute.xlu0 3
        %1832 = vperm.xlu0 %1831, %v345
        %v1833 = vpop.permute.xlu0 %1832
        %1835 = vset.pattern.permute.xlu0 3
        %1836 = vperm.xlu0 %1835, %v346
        %v1837 = vpop.permute.xlu0 %1836
        %1839 = vset.pattern.permute.xlu0 3
        %1840 = vperm.xlu0 %1839, %v347
        %v1841 = vpop.permute.xlu0 %1840
        %1843 = vset.pattern.permute.xlu0 3
        %1844 = vperm.xlu0 %1843, %v348
        %v1845 = vpop.permute.xlu0 %1844
        %1847 = vset.pattern.permute.xlu0 3
        %1848 = vperm.xlu0 %1847, %v349
        %v1849 = vpop.permute.xlu0 %1848
        %1851 = vset.pattern.permute.xlu0 3
        %1852 = vperm.xlu0 %1851, %v350
        %v1853 = vpop.permute.xlu0 %1852
        %1855 = vset.pattern.permute.xlu0 3
        %1856 = vperm.xlu0 %1855, %v351
        %v1857 = vpop.permute.xlu0 %1856
        %1859 = vset.pattern.permute.xlu0 3
        %1860 = vperm.xlu0 %1859, %v352
        %v1861 = vpop.permute.xlu0 %1860
        %1863 = vset.pattern.permute.xlu0 3
        %1864 = vperm.xlu0 %1863, %v353
        %v1865 = vpop.permute.xlu0 %1864
        %1867 = vset.pattern.permute.xlu0 3
        %1868 = vperm.xlu0 %1867, %v354
        %v1869 = vpop.permute.xlu0 %1868
        %1871 = vset.pattern.permute.xlu0 3
        %1872 = vperm.xlu0 %1871, %v355
        %v1873 = vpop.permute.xlu0 %1872
        %1875 = vset.pattern.permute.xlu0 3
        %1876 = vperm.xlu0 %1875, %v356
        %v1877 = vpop.permute.xlu0 %1876
        %1879 = vset.pattern.permute.xlu0 3
        %1880 = vperm.xlu0 %1879, %v357
        %v1881 = vpop.permute.xlu0 %1880
        %1883 = vset.pattern.permute.xlu0 3
        %1884 = vperm.xlu0 %1883, %v358
        %v1885 = vpop.permute.xlu0 %1884
        %1887 = vset.pattern.permute.xlu0 3
        %1888 = vperm.xlu0 %1887, %v359
        %v1889 = vpop.permute.xlu0 %1888
        %1891 = vset.pattern.permute.xlu0 3
        %1892 = vperm.xlu0 %1891, %v360
        %v1893 = vpop.permute.xlu0 %1892
        %1895 = vset.pattern.permute.xlu0 3
        %1896 = vperm.xlu0 %1895, %v361
        %v1897 = vpop.permute.xlu0 %1896
        %1899 = vset.pattern.permute.xlu0 3
        %1900 = vperm.xlu0 %1899, %v362
        %v1901 = vpop.permute.xlu0 %1900
        %1903 = vset.pattern.permute.xlu0 3
        %1904 = vperm.xlu0 %1903, %v363
        %v1905 = vpop.permute.xlu0 %1904
        %1907 = vset.pattern.permute.xlu0 3
        %1908 = vperm.xlu0 %1907, %v364
        %v1909 = vpop.permute.xlu0 %1908
        %1911 = vset.pattern.permute.xlu0 3
        %1912 = vperm.xlu0 %1911, %v365
        %v1913 = vpop.permute.xlu0 %1912
        %1915 = vset.pattern.permute.xlu0 3
        %1916 = vperm.xlu0 %1915, %v366
        %v1917 = vpop.permute.xlu0 %1916
        %1919 = vset.pattern.permute.xlu0 3
        %1920 = vperm.xlu0 %1919, %v367
        %v1921 = vpop.permute.xlu0 %1920
        %1923 = vset.pattern.permute.xlu0 3
        %1924 = vperm.xlu0 %1923, %v368
        %v1925 = vpop.permute.xlu0 %1924
        %1927 = vset.pattern.permute.xlu0 3
        %1928 = vperm.xlu0 %1927, %v369
        %v1929 = vpop.permute.xlu0 %1928
        %1931 = vset.pattern.permute.xlu0 3
        %1932 = vperm.xlu0 %1931, %v370
        %v1933 = vpop.permute.xlu0 %1932
        %1935 = vset.pattern.permute.xlu0 3
        %1936 = vperm.xlu0 %1935, %v371
        %v1937 = vpop.permute.xlu0 %1936
        %1939 = vset.pattern.permute.xlu0 3
        %1940 = vperm.xlu0 %1939, %v372
        %v1941 = vpop.permute.xlu0 %1940
        %v1943 = vadd.f32 %v1623, %v1689
        %v1944 = vadd.f32 %v1624, %v1693
        %v1945 = vadd.f32 %v1625, %v1697
        %v1946 = vadd.f32 %v1626, %v1701
        %v1947 = vadd.f32 %v1627, %v1705
        %v1948 = vadd.f32 %v1628, %v1709
        %v1949 = vadd.f32 %v1629, %v1713
        %v1950 = vadd.f32 %v1630, %v1717
        %v1951 = vadd.f32 %v1631, %v1721
        %v1952 = vadd.f32 %v1632, %v1725
        %v1953 = vadd.f32 %v1633, %v1729
        %v1954 = vadd.f32 %v1634, %v1733
        %v1955 = vadd.f32 %v1635, %v1737
        %v1956 = vadd.f32 %v1636, %v1741
        %v1957 = vadd.f32 %v1637, %v1745
        %v1958 = vadd.f32 %v1638, %v1749
        %v1959 = vadd.f32 %v1639, %v1753
        %v1960 = vadd.f32 %v1640, %v1757
        %v1961 = vadd.f32 %v1641, %v1761
        %v1962 = vadd.f32 %v1642, %v1765
        %v1963 = vadd.f32 %v1643, %v1769
        %v1964 = vadd.f32 %v1644, %v1773
        %v1965 = vadd.f32 %v1645, %v1777
        %v1966 = vadd.f32 %v1646, %v1781
        %v1967 = vadd.f32 %v1647, %v1785
        %v1968 = vadd.f32 %v1648, %v1789
        %v1969 = vadd.f32 %v1649, %v1793
        %v1970 = vadd.f32 %v1650, %v1797
        %v1971 = vadd.f32 %v1651, %v1801
        %v1972 = vadd.f32 %v1652, %v1805
        %v1973 = vadd.f32 %v1653, %v1809
        %v1974 = vadd.f32 %v1654, %v1813
        %v1975 = vadd.f32 %v1655, %v1817
        %v1976 = vadd.f32 %v1656, %v1821
        %v1977 = vadd.f32 %v1657, %v1825
        %v1978 = vadd.f32 %v1658, %v1829
        %v1979 = vadd.f32 %v1659, %v1833
        %v1980 = vadd.f32 %v1660, %v1837
        %v1981 = vadd.f32 %v1661, %v1841
        %v1982 = vadd.f32 %v1662, %v1845
        %v1983 = vadd.f32 %v1663, %v1849
        %v1984 = vadd.f32 %v1664, %v1853
        %v1985 = vadd.f32 %v1665, %v1857
        %v1986 = vadd.f32 %v1666, %v1861
        %v1987 = vadd.f32 %v1667, %v1865
        %v1988 = vadd.f32 %v1668, %v1869
        %v1989 = vadd.f32 %v1669, %v1873
        %v1990 = vadd.f32 %v1670, %v1877
        %v1991 = vadd.f32 %v1671, %v1881
        %v1992 = vadd.f32 %v1672, %v1885
        %v1993 = vadd.f32 %v1673, %v1889
        %v1994 = vadd.f32 %v1674, %v1893
        %v1995 = vadd.f32 %v1675, %v1897
        %v1996 = vadd.f32 %v1676, %v1901
        %v1997 = vadd.f32 %v1677, %v1905
        %v1998 = vadd.f32 %v1678, %v1909
        %v1999 = vadd.f32 %v1679, %v1913
        %v2000 = vadd.f32 %v1680, %v1917
        %v2001 = vadd.f32 %v1681, %v1921
        %v2002 = vadd.f32 %v1682, %v1925
        %v2003 = vadd.f32 %v1683, %v1929
        %v2004 = vadd.f32 %v1684, %v1933
        %v2005 = vadd.f32 %v1685, %v1937
        %v2006 = vadd.f32 %v1686, %v1941
        %2007 = vset.pattern.permute.xlu0 6
        %2008 = vperm.xlu0 %2007, %v309
        %v2009 = vpop.permute.xlu0 %2008
        %2011 = vset.pattern.permute.xlu0 6
        %2012 = vperm.xlu0 %2011, %v310
        %v2013 = vpop.permute.xlu0 %2012
        %2015 = vset.pattern.permute.xlu0 6
        %2016 = vperm.xlu0 %2015, %v311
        %v2017 = vpop.permute.xlu0 %2016
        %2019 = vset.pattern.permute.xlu0 6
        %2020 = vperm.xlu0 %2019, %v312
        %v2021 = vpop.permute.xlu0 %2020
        %2023 = vset.pattern.permute.xlu0 6
        %2024 = vperm.xlu0 %2023, %v313
        %v2025 = vpop.permute.xlu0 %2024
        %2027 = vset.pattern.permute.xlu0 6
        %2028 = vperm.xlu0 %2027, %v314
        %v2029 = vpop.permute.xlu0 %2028
        %2031 = vset.pattern.permute.xlu0 6
        %2032 = vperm.xlu0 %2031, %v315
        %v2033 = vpop.permute.xlu0 %2032
        %2035 = vset.pattern.permute.xlu0 6
        %2036 = vperm.xlu0 %2035, %v316
        %v2037 = vpop.permute.xlu0 %2036
        %2039 = vset.pattern.permute.xlu0 6
        %2040 = vperm.xlu0 %2039, %v317
        %v2041 = vpop.permute.xlu0 %2040
        %2043 = vset.pattern.permute.xlu0 6
        %2044 = vperm.xlu0 %2043, %v318
        %v2045 = vpop.permute.xlu0 %2044
        %2047 = vset.pattern.permute.xlu0 6
        %2048 = vperm.xlu0 %2047, %v319
        %v2049 = vpop.permute.xlu0 %2048
        %2051 = vset.pattern.permute.xlu0 6
        %2052 = vperm.xlu0 %2051, %v320
        %v2053 = vpop.permute.xlu0 %2052
        %2055 = vset.pattern.permute.xlu0 6
        %2056 = vperm.xlu0 %2055, %v321
        %v2057 = vpop.permute.xlu0 %2056
        %2059 = vset.pattern.permute.xlu0 6
        %2060 = vperm.xlu0 %2059, %v322
        %v2061 = vpop.permute.xlu0 %2060
        %2063 = vset.pattern.permute.xlu0 6
        %2064 = vperm.xlu0 %2063, %v323
        %v2065 = vpop.permute.xlu0 %2064
        %2067 = vset.pattern.permute.xlu0 6
        %2068 = vperm.xlu0 %2067, %v324
        %v2069 = vpop.permute.xlu0 %2068
        %2071 = vset.pattern.permute.xlu0 6
        %2072 = vperm.xlu0 %2071, %v325
        %v2073 = vpop.permute.xlu0 %2072
        %2075 = vset.pattern.permute.xlu0 6
        %2076 = vperm.xlu0 %2075, %v326
        %v2077 = vpop.permute.xlu0 %2076
        %2079 = vset.pattern.permute.xlu0 6
        %2080 = vperm.xlu0 %2079, %v327
        %v2081 = vpop.permute.xlu0 %2080
        %2083 = vset.pattern.permute.xlu0 6
        %2084 = vperm.xlu0 %2083, %v328
        %v2085 = vpop.permute.xlu0 %2084
        %2087 = vset.pattern.permute.xlu0 6
        %2088 = vperm.xlu0 %2087, %v329
        %v2089 = vpop.permute.xlu0 %2088
        %2091 = vset.pattern.permute.xlu0 6
        %2092 = vperm.xlu0 %2091, %v330
        %v2093 = vpop.permute.xlu0 %2092
        %2095 = vset.pattern.permute.xlu0 6
        %2096 = vperm.xlu0 %2095, %v331
        %v2097 = vpop.permute.xlu0 %2096
        %2099 = vset.pattern.permute.xlu0 6
        %2100 = vperm.xlu0 %2099, %v332
        %v2101 = vpop.permute.xlu0 %2100
        %2103 = vset.pattern.permute.xlu0 6
        %2104 = vperm.xlu0 %2103, %v333
        %v2105 = vpop.permute.xlu0 %2104
        %2107 = vset.pattern.permute.xlu0 6
        %2108 = vperm.xlu0 %2107, %v334
        %v2109 = vpop.permute.xlu0 %2108
        %2111 = vset.pattern.permute.xlu0 6
        %2112 = vperm.xlu0 %2111, %v335
        %v2113 = vpop.permute.xlu0 %2112
        %2115 = vset.pattern.permute.xlu0 6
        %2116 = vperm.xlu0 %2115, %v336
        %v2117 = vpop.permute.xlu0 %2116
        %2119 = vset.pattern.permute.xlu0 6
        %2120 = vperm.xlu0 %2119, %v337
        %v2121 = vpop.permute.xlu0 %2120
        %2123 = vset.pattern.permute.xlu0 6
        %2124 = vperm.xlu0 %2123, %v338
        %v2125 = vpop.permute.xlu0 %2124
        %2127 = vset.pattern.permute.xlu0 6
        %2128 = vperm.xlu0 %2127, %v339
        %v2129 = vpop.permute.xlu0 %2128
        %2131 = vset.pattern.permute.xlu0 6
        %2132 = vperm.xlu0 %2131, %v340
        %v2133 = vpop.permute.xlu0 %2132
        %2135 = vset.pattern.permute.xlu0 6
        %2136 = vperm.xlu0 %2135, %v341
        %v2137 = vpop.permute.xlu0 %2136
        %2139 = vset.pattern.permute.xlu0 6
        %2140 = vperm.xlu0 %2139, %v342
        %v2141 = vpop.permute.xlu0 %2140
        %2143 = vset.pattern.permute.xlu0 6
        %2144 = vperm.xlu0 %2143, %v343
        %v2145 = vpop.permute.xlu0 %2144
        %2147 = vset.pattern.permute.xlu0 6
        %2148 = vperm.xlu0 %2147, %v344
        %v2149 = vpop.permute.xlu0 %2148
        %2151 = vset.pattern.permute.xlu0 6
        %2152 = vperm.xlu0 %2151, %v345
        %v2153 = vpop.permute.xlu0 %2152
        %2155 = vset.pattern.permute.xlu0 6
        %2156 = vperm.xlu0 %2155, %v346
        %v2157 = vpop.permute.xlu0 %2156
        %2159 = vset.pattern.permute.xlu0 6
        %2160 = vperm.xlu0 %2159, %v347
        %v2161 = vpop.permute.xlu0 %2160
        %2163 = vset.pattern.permute.xlu0 6
        %2164 = vperm.xlu0 %2163, %v348
        %v2165 = vpop.permute.xlu0 %2164
        %2167 = vset.pattern.permute.xlu0 6
        %2168 = vperm.xlu0 %2167, %v349
        %v2169 = vpop.permute.xlu0 %2168
        %2171 = vset.pattern.permute.xlu0 6
        %2172 = vperm.xlu0 %2171, %v350
        %v2173 = vpop.permute.xlu0 %2172
        %2175 = vset.pattern.permute.xlu0 6
        %2176 = vperm.xlu0 %2175, %v351
        %v2177 = vpop.permute.xlu0 %2176
        %2179 = vset.pattern.permute.xlu0 6
        %2180 = vperm.xlu0 %2179, %v352
        %v2181 = vpop.permute.xlu0 %2180
        %2183 = vset.pattern.permute.xlu0 6
        %2184 = vperm.xlu0 %2183, %v353
        %v2185 = vpop.permute.xlu0 %2184
        %2187 = vset.pattern.permute.xlu0 6
        %2188 = vperm.xlu0 %2187, %v354
        %v2189 = vpop.permute.xlu0 %2188
        %2191 = vset.pattern.permute.xlu0 6
        %2192 = vperm.xlu0 %2191, %v355
        %v2193 = vpop.permute.xlu0 %2192
        %2195 = vset.pattern.permute.xlu0 6
        %2196 = vperm.xlu0 %2195, %v356
        %v2197 = vpop.permute.xlu0 %2196
        %2199 = vset.pattern.permute.xlu0 6
        %2200 = vperm.xlu0 %2199, %v357
        %v2201 = vpop.permute.xlu0 %2200
        %2203 = vset.pattern.permute.xlu0 6
        %2204 = vperm.xlu0 %2203, %v358
        %v2205 = vpop.permute.xlu0 %2204
        %2207 = vset.pattern.permute.xlu0 6
        %2208 = vperm.xlu0 %2207, %v359
        %v2209 = vpop.permute.xlu0 %2208
        %2211 = vset.pattern.permute.xlu0 6
        %2212 = vperm.xlu0 %2211, %v360
        %v2213 = vpop.permute.xlu0 %2212
        %2215 = vset.pattern.permute.xlu0 6
        %2216 = vperm.xlu0 %2215, %v361
        %v2217 = vpop.permute.xlu0 %2216
        %2219 = vset.pattern.permute.xlu0 6
        %2220 = vperm.xlu0 %2219, %v362
        %v2221 = vpop.permute.xlu0 %2220
        %2223 = vset.pattern.permute.xlu0 6
        %2224 = vperm.xlu0 %2223, %v363
        %v2225 = vpop.permute.xlu0 %2224
        %2227 = vset.pattern.permute.xlu0 6
        %2228 = vperm.xlu0 %2227, %v364
        %v2229 = vpop.permute.xlu0 %2228
        %2231 = vset.pattern.permute.xlu0 6
        %2232 = vperm.xlu0 %2231, %v365
        %v2233 = vpop.permute.xlu0 %2232
        %2235 = vset.pattern.permute.xlu0 6
        %2236 = vperm.xlu0 %2235, %v366
        %v2237 = vpop.permute.xlu0 %2236
        %2239 = vset.pattern.permute.xlu0 6
        %2240 = vperm.xlu0 %2239, %v367
        %v2241 = vpop.permute.xlu0 %2240
        %2243 = vset.pattern.permute.xlu0 6
        %2244 = vperm.xlu0 %2243, %v368
        %v2245 = vpop.permute.xlu0 %2244
        %2247 = vset.pattern.permute.xlu0 6
        %2248 = vperm.xlu0 %2247, %v369
        %v2249 = vpop.permute.xlu0 %2248
        %2251 = vset.pattern.permute.xlu0 6
        %2252 = vperm.xlu0 %2251, %v370
        %v2253 = vpop.permute.xlu0 %2252
        %2255 = vset.pattern.permute.xlu0 6
        %2256 = vperm.xlu0 %2255, %v371
        %v2257 = vpop.permute.xlu0 %2256
        %2259 = vset.pattern.permute.xlu0 6
        %2260 = vperm.xlu0 %2259, %v372
        %v2261 = vpop.permute.xlu0 %2260
        %v2263 = vmul.f32 %v1144, %v2009
        %v2264 = vmul.f32 %v1146, %v2013
        %v2265 = vmul.f32 %v1149, %v2017
        %v2266 = vmul.f32 %v1151, %v2021
        %v2267 = vmul.f32 %v1154, %v2025
        %v2268 = vmul.f32 %v1156, %v2029
        %v2269 = vmul.f32 %v1159, %v2033
        %v2270 = vmul.f32 %v1161, %v2037
        %v2271 = vmul.f32 %v1164, %v2041
        %v2272 = vmul.f32 %v1166, %v2045
        %v2273 = vmul.f32 %v1169, %v2049
        %v2274 = vmul.f32 %v1171, %v2053
        %v2275 = vmul.f32 %v1174, %v2057
        %v2276 = vmul.f32 %v1176, %v2061
        %v2277 = vmul.f32 %v1179, %v2065
        %v2278 = vmul.f32 %v1181, %v2069
        %v2279 = vmul.f32 %v1184, %v2073
        %v2280 = vmul.f32 %v1186, %v2077
        %v2281 = vmul.f32 %v1189, %v2081
        %v2282 = vmul.f32 %v1191, %v2085
        %v2283 = vmul.f32 %v1194, %v2089
        %v2284 = vmul.f32 %v1196, %v2093
        %v2285 = vmul.f32 %v1199, %v2097
        %v2286 = vmul.f32 %v1201, %v2101
        %v2287 = vmul.f32 %v1204, %v2105
        %v2288 = vmul.f32 %v1206, %v2109
        %v2289 = vmul.f32 %v1209, %v2113
        %v2290 = vmul.f32 %v1211, %v2117
        %v2291 = vmul.f32 %v1214, %v2121
        %v2292 = vmul.f32 %v1216, %v2125
        %v2293 = vmul.f32 %v1219, %v2129
        %v2294 = vmul.f32 %v1221, %v2133
        %v2295 = vmul.f32 %v1224, %v2137
        %v2296 = vmul.f32 %v1226, %v2141
        %v2297 = vmul.f32 %v1229, %v2145
        %v2298 = vmul.f32 %v1231, %v2149
        %v2299 = vmul.f32 %v1234, %v2153
        %v2300 = vmul.f32 %v1236, %v2157
        %v2301 = vmul.f32 %v1239, %v2161
        %v2302 = vmul.f32 %v1241, %v2165
        %v2303 = vmul.f32 %v1244, %v2169
        %v2304 = vmul.f32 %v1246, %v2173
        %v2305 = vmul.f32 %v1249, %v2177
        %v2306 = vmul.f32 %v1251, %v2181
        %v2307 = vmul.f32 %v1254, %v2185
        %v2308 = vmul.f32 %v1256, %v2189
        %v2309 = vmul.f32 %v1259, %v2193
        %v2310 = vmul.f32 %v1261, %v2197
        %v2311 = vmul.f32 %v1264, %v2201
        %v2312 = vmul.f32 %v1266, %v2205
        %v2313 = vmul.f32 %v1269, %v2209
        %v2314 = vmul.f32 %v1271, %v2213
        %v2315 = vmul.f32 %v1274, %v2217
        %v2316 = vmul.f32 %v1276, %v2221
        %v2317 = vmul.f32 %v1279, %v2225
        %v2318 = vmul.f32 %v1281, %v2229
        %v2319 = vmul.f32 %v1284, %v2233
        %v2320 = vmul.f32 %v1286, %v2237
        %v2321 = vmul.f32 %v1289, %v2241
        %v2322 = vmul.f32 %v1291, %v2245
        %v2323 = vmul.f32 %v1294, %v2249
        %v2324 = vmul.f32 %v1296, %v2253
        %v2325 = vmul.f32 %v1299, %v2257
        %v2326 = vmul.f32 %v1301, %v2261
        %2327 = vset.pattern.permute.xlu0 9
        %2328 = vperm.xlu0 %2327, %v309
        %v2329 = vpop.permute.xlu0 %2328
        %2331 = vset.pattern.permute.xlu0 9
        %2332 = vperm.xlu0 %2331, %v310
        %v2333 = vpop.permute.xlu0 %2332
        %2335 = vset.pattern.permute.xlu0 9
        %2336 = vperm.xlu0 %2335, %v311
        %v2337 = vpop.permute.xlu0 %2336
        %2339 = vset.pattern.permute.xlu0 9
        %2340 = vperm.xlu0 %2339, %v312
        %v2341 = vpop.permute.xlu0 %2340
        %2343 = vset.pattern.permute.xlu0 9
        %2344 = vperm.xlu0 %2343, %v313
        %v2345 = vpop.permute.xlu0 %2344
        %2347 = vset.pattern.permute.xlu0 9
        %2348 = vperm.xlu0 %2347, %v314
        %v2349 = vpop.permute.xlu0 %2348
        %2351 = vset.pattern.permute.xlu0 9
        %2352 = vperm.xlu0 %2351, %v315
        %v2353 = vpop.permute.xlu0 %2352
        %2355 = vset.pattern.permute.xlu0 9
        %2356 = vperm.xlu0 %2355, %v316
        %v2357 = vpop.permute.xlu0 %2356
        %2359 = vset.pattern.permute.xlu0 9
        %2360 = vperm.xlu0 %2359, %v317
        %v2361 = vpop.permute.xlu0 %2360
        %2363 = vset.pattern.permute.xlu0 9
        %2364 = vperm.xlu0 %2363, %v318
        %v2365 = vpop.permute.xlu0 %2364
        %2367 = vset.pattern.permute.xlu0 9
        %2368 = vperm.xlu0 %2367, %v319
        %v2369 = vpop.permute.xlu0 %2368
        %2371 = vset.pattern.permute.xlu0 9
        %2372 = vperm.xlu0 %2371, %v320
        %v2373 = vpop.permute.xlu0 %2372
        %2375 = vset.pattern.permute.xlu0 9
        %2376 = vperm.xlu0 %2375, %v321
        %v2377 = vpop.permute.xlu0 %2376
        %2379 = vset.pattern.permute.xlu0 9
        %2380 = vperm.xlu0 %2379, %v322
        %v2381 = vpop.permute.xlu0 %2380
        %2383 = vset.pattern.permute.xlu0 9
        %2384 = vperm.xlu0 %2383, %v323
        %v2385 = vpop.permute.xlu0 %2384
        %2387 = vset.pattern.permute.xlu0 9
        %2388 = vperm.xlu0 %2387, %v324
        %v2389 = vpop.permute.xlu0 %2388
        %2391 = vset.pattern.permute.xlu0 9
        %2392 = vperm.xlu0 %2391, %v325
        %v2393 = vpop.permute.xlu0 %2392
        %2395 = vset.pattern.permute.xlu0 9
        %2396 = vperm.xlu0 %2395, %v326
        %v2397 = vpop.permute.xlu0 %2396
        %2399 = vset.pattern.permute.xlu0 9
        %2400 = vperm.xlu0 %2399, %v327
        %v2401 = vpop.permute.xlu0 %2400
        %2403 = vset.pattern.permute.xlu0 9
        %2404 = vperm.xlu0 %2403, %v328
        %v2405 = vpop.permute.xlu0 %2404
        %2407 = vset.pattern.permute.xlu0 9
        %2408 = vperm.xlu0 %2407, %v329
        %v2409 = vpop.permute.xlu0 %2408
        %2411 = vset.pattern.permute.xlu0 9
        %2412 = vperm.xlu0 %2411, %v330
        %v2413 = vpop.permute.xlu0 %2412
        %2415 = vset.pattern.permute.xlu0 9
        %2416 = vperm.xlu0 %2415, %v331
        %v2417 = vpop.permute.xlu0 %2416
        %2419 = vset.pattern.permute.xlu0 9
        %2420 = vperm.xlu0 %2419, %v332
        %v2421 = vpop.permute.xlu0 %2420
        %2423 = vset.pattern.permute.xlu0 9
        %2424 = vperm.xlu0 %2423, %v333
        %v2425 = vpop.permute.xlu0 %2424
        %2427 = vset.pattern.permute.xlu0 9
        %2428 = vperm.xlu0 %2427, %v334
        %v2429 = vpop.permute.xlu0 %2428
        %2431 = vset.pattern.permute.xlu0 9
        %2432 = vperm.xlu0 %2431, %v335
        %v2433 = vpop.permute.xlu0 %2432
        %2435 = vset.pattern.permute.xlu0 9
        %2436 = vperm.xlu0 %2435, %v336
        %v2437 = vpop.permute.xlu0 %2436
        %2439 = vset.pattern.permute.xlu0 9
        %2440 = vperm.xlu0 %2439, %v337
        %v2441 = vpop.permute.xlu0 %2440
        %2443 = vset.pattern.permute.xlu0 9
        %2444 = vperm.xlu0 %2443, %v338
        %v2445 = vpop.permute.xlu0 %2444
        %2447 = vset.pattern.permute.xlu0 9
        %2448 = vperm.xlu0 %2447, %v339
        %v2449 = vpop.permute.xlu0 %2448
        %2451 = vset.pattern.permute.xlu0 9
        %2452 = vperm.xlu0 %2451, %v340
        %v2453 = vpop.permute.xlu0 %2452
        %2455 = vset.pattern.permute.xlu0 9
        %2456 = vperm.xlu0 %2455, %v341
        %v2457 = vpop.permute.xlu0 %2456
        %2459 = vset.pattern.permute.xlu0 9
        %2460 = vperm.xlu0 %2459, %v342
        %v2461 = vpop.permute.xlu0 %2460
        %2463 = vset.pattern.permute.xlu0 9
        %2464 = vperm.xlu0 %2463, %v343
        %v2465 = vpop.permute.xlu0 %2464
        %2467 = vset.pattern.permute.xlu0 9
        %2468 = vperm.xlu0 %2467, %v344
        %v2469 = vpop.permute.xlu0 %2468
        %2471 = vset.pattern.permute.xlu0 9
        %2472 = vperm.xlu0 %2471, %v345
        %v2473 = vpop.permute.xlu0 %2472
        %2475 = vset.pattern.permute.xlu0 9
        %2476 = vperm.xlu0 %2475, %v346
        %v2477 = vpop.permute.xlu0 %2476
        %2479 = vset.pattern.permute.xlu0 9
        %2480 = vperm.xlu0 %2479, %v347
        %v2481 = vpop.permute.xlu0 %2480
        %2483 = vset.pattern.permute.xlu0 9
        %2484 = vperm.xlu0 %2483, %v348
        %v2485 = vpop.permute.xlu0 %2484
        %2487 = vset.pattern.permute.xlu0 9
        %2488 = vperm.xlu0 %2487, %v349
        %v2489 = vpop.permute.xlu0 %2488
        %2491 = vset.pattern.permute.xlu0 9
        %2492 = vperm.xlu0 %2491, %v350
        %v2493 = vpop.permute.xlu0 %2492
        %2495 = vset.pattern.permute.xlu0 9
        %2496 = vperm.xlu0 %2495, %v351
        %v2497 = vpop.permute.xlu0 %2496
        %2499 = vset.pattern.permute.xlu0 9
        %2500 = vperm.xlu0 %2499, %v352
        %v2501 = vpop.permute.xlu0 %2500
        %2503 = vset.pattern.permute.xlu0 9
        %2504 = vperm.xlu0 %2503, %v353
        %v2505 = vpop.permute.xlu0 %2504
        %2507 = vset.pattern.permute.xlu0 9
        %2508 = vperm.xlu0 %2507, %v354
        %v2509 = vpop.permute.xlu0 %2508
        %2511 = vset.pattern.permute.xlu0 9
        %2512 = vperm.xlu0 %2511, %v355
        %v2513 = vpop.permute.xlu0 %2512
        %2515 = vset.pattern.permute.xlu0 9
        %2516 = vperm.xlu0 %2515, %v356
        %v2517 = vpop.permute.xlu0 %2516
        %2519 = vset.pattern.permute.xlu0 9
        %2520 = vperm.xlu0 %2519, %v357
        %v2521 = vpop.permute.xlu0 %2520
        %2523 = vset.pattern.permute.xlu0 9
        %2524 = vperm.xlu0 %2523, %v358
        %v2525 = vpop.permute.xlu0 %2524
        %2527 = vset.pattern.permute.xlu0 9
        %2528 = vperm.xlu0 %2527, %v359
        %v2529 = vpop.permute.xlu0 %2528
        %2531 = vset.pattern.permute.xlu0 9
        %2532 = vperm.xlu0 %2531, %v360
        %v2533 = vpop.permute.xlu0 %2532
        %2535 = vset.pattern.permute.xlu0 9
        %2536 = vperm.xlu0 %2535, %v361
        %v2537 = vpop.permute.xlu0 %2536
        %2539 = vset.pattern.permute.xlu0 9
        %2540 = vperm.xlu0 %2539, %v362
        %v2541 = vpop.permute.xlu0 %2540
        %2543 = vset.pattern.permute.xlu0 9
        %2544 = vperm.xlu0 %2543, %v363
        %v2545 = vpop.permute.xlu0 %2544
        %2547 = vset.pattern.permute.xlu0 9
        %2548 = vperm.xlu0 %2547, %v364
        %v2549 = vpop.permute.xlu0 %2548
        %2551 = vset.pattern.permute.xlu0 9
        %2552 = vperm.xlu0 %2551, %v365
        %v2553 = vpop.permute.xlu0 %2552
        %2555 = vset.pattern.permute.xlu0 9
        %2556 = vperm.xlu0 %2555, %v366
        %v2557 = vpop.permute.xlu0 %2556
        %2559 = vset.pattern.permute.xlu0 9
        %2560 = vperm.xlu0 %2559, %v367
        %v2561 = vpop.permute.xlu0 %2560
        %2563 = vset.pattern.permute.xlu0 9
        %2564 = vperm.xlu0 %2563, %v368
        %v2565 = vpop.permute.xlu0 %2564
        %2567 = vset.pattern.permute.xlu0 9
        %2568 = vperm.xlu0 %2567, %v369
        %v2569 = vpop.permute.xlu0 %2568
        %2571 = vset.pattern.permute.xlu0 9
        %2572 = vperm.xlu0 %2571, %v370
        %v2573 = vpop.permute.xlu0 %2572
        %2575 = vset.pattern.permute.xlu0 9
        %2576 = vperm.xlu0 %2575, %v371
        %v2577 = vpop.permute.xlu0 %2576
        %2579 = vset.pattern.permute.xlu0 9
        %2580 = vperm.xlu0 %2579, %v372
        %v2581 = vpop.permute.xlu0 %2580
        %v2583 = vadd.f32 %v2263, %v2329
        %v2584 = vadd.f32 %v2264, %v2333
        %v2585 = vadd.f32 %v2265, %v2337
        %v2586 = vadd.f32 %v2266, %v2341
        %v2587 = vadd.f32 %v2267, %v2345
        %v2588 = vadd.f32 %v2268, %v2349
        %v2589 = vadd.f32 %v2269, %v2353
        %v2590 = vadd.f32 %v2270, %v2357
        %v2591 = vadd.f32 %v2271, %v2361
        %v2592 = vadd.f32 %v2272, %v2365
        %v2593 = vadd.f32 %v2273, %v2369
        %v2594 = vadd.f32 %v2274, %v2373
        %v2595 = vadd.f32 %v2275, %v2377
        %v2596 = vadd.f32 %v2276, %v2381
        %v2597 = vadd.f32 %v2277, %v2385
        %v2598 = vadd.f32 %v2278, %v2389
        %v2599 = vadd.f32 %v2279, %v2393
        %v2600 = vadd.f32 %v2280, %v2397
        %v2601 = vadd.f32 %v2281, %v2401
        %v2602 = vadd.f32 %v2282, %v2405
        %v2603 = vadd.f32 %v2283, %v2409
        %v2604 = vadd.f32 %v2284, %v2413
        %v2605 = vadd.f32 %v2285, %v2417
        %v2606 = vadd.f32 %v2286, %v2421
        %v2607 = vadd.f32 %v2287, %v2425
        %v2608 = vadd.f32 %v2288, %v2429
        %v2609 = vadd.f32 %v2289, %v2433
        %v2610 = vadd.f32 %v2290, %v2437
        %v2611 = vadd.f32 %v2291, %v2441
        %v2612 = vadd.f32 %v2292, %v2445
        %v2613 = vadd.f32 %v2293, %v2449
        %v2614 = vadd.f32 %v2294, %v2453
        %v2615 = vadd.f32 %v2295, %v2457
        %v2616 = vadd.f32 %v2296, %v2461
        %v2617 = vadd.f32 %v2297, %v2465
        %v2618 = vadd.f32 %v2298, %v2469
        %v2619 = vadd.f32 %v2299, %v2473
        %v2620 = vadd.f32 %v2300, %v2477
        %v2621 = vadd.f32 %v2301, %v2481
        %v2622 = vadd.f32 %v2302, %v2485
        %v2623 = vadd.f32 %v2303, %v2489
        %v2624 = vadd.f32 %v2304, %v2493
        %v2625 = vadd.f32 %v2305, %v2497
        %v2626 = vadd.f32 %v2306, %v2501
        %v2627 = vadd.f32 %v2307, %v2505
        %v2628 = vadd.f32 %v2308, %v2509
        %v2629 = vadd.f32 %v2309, %v2513
        %v2630 = vadd.f32 %v2310, %v2517
        %v2631 = vadd.f32 %v2311, %v2521
        %v2632 = vadd.f32 %v2312, %v2525
        %v2633 = vadd.f32 %v2313, %v2529
        %v2634 = vadd.f32 %v2314, %v2533
        %v2635 = vadd.f32 %v2315, %v2537
        %v2636 = vadd.f32 %v2316, %v2541
        %v2637 = vadd.f32 %v2317, %v2545
        %v2638 = vadd.f32 %v2318, %v2549
        %v2639 = vadd.f32 %v2319, %v2553
        %v2640 = vadd.f32 %v2320, %v2557
        %v2641 = vadd.f32 %v2321, %v2561
        %v2642 = vadd.f32 %v2322, %v2565
        %v2643 = vadd.f32 %v2323, %v2569
        %v2644 = vadd.f32 %v2324, %v2573
        %v2645 = vadd.f32 %v2325, %v2577
        %v2646 = vadd.f32 %v2326, %v2581
        %2647 = vset.pattern.permute.xlu0 12
        %2648 = vperm.xlu0 %2647, %v309
        %v2649 = vpop.permute.xlu0 %2648
        %2651 = vset.pattern.permute.xlu0 12
        %2652 = vperm.xlu0 %2651, %v310
        %v2653 = vpop.permute.xlu0 %2652
        %2655 = vset.pattern.permute.xlu0 12
        %2656 = vperm.xlu0 %2655, %v311
        %v2657 = vpop.permute.xlu0 %2656
        %2659 = vset.pattern.permute.xlu0 12
        %2660 = vperm.xlu0 %2659, %v312
        %v2661 = vpop.permute.xlu0 %2660
        %2663 = vset.pattern.permute.xlu0 12
        %2664 = vperm.xlu0 %2663, %v313
        %v2665 = vpop.permute.xlu0 %2664
        %2667 = vset.pattern.permute.xlu0 12
        %2668 = vperm.xlu0 %2667, %v314
        %v2669 = vpop.permute.xlu0 %2668
        %2671 = vset.pattern.permute.xlu0 12
        %2672 = vperm.xlu0 %2671, %v315
        %v2673 = vpop.permute.xlu0 %2672
        %2675 = vset.pattern.permute.xlu0 12
        %2676 = vperm.xlu0 %2675, %v316
        %v2677 = vpop.permute.xlu0 %2676
        %2679 = vset.pattern.permute.xlu0 12
        %2680 = vperm.xlu0 %2679, %v317
        %v2681 = vpop.permute.xlu0 %2680
        %2683 = vset.pattern.permute.xlu0 12
        %2684 = vperm.xlu0 %2683, %v318
        %v2685 = vpop.permute.xlu0 %2684
        %2687 = vset.pattern.permute.xlu0 12
        %2688 = vperm.xlu0 %2687, %v319
        %v2689 = vpop.permute.xlu0 %2688
        %2691 = vset.pattern.permute.xlu0 12
        %2692 = vperm.xlu0 %2691, %v320
        %v2693 = vpop.permute.xlu0 %2692
        %2695 = vset.pattern.permute.xlu0 12
        %2696 = vperm.xlu0 %2695, %v321
        %v2697 = vpop.permute.xlu0 %2696
        %2699 = vset.pattern.permute.xlu0 12
        %2700 = vperm.xlu0 %2699, %v322
        %v2701 = vpop.permute.xlu0 %2700
        %2703 = vset.pattern.permute.xlu0 12
        %2704 = vperm.xlu0 %2703, %v323
        %v2705 = vpop.permute.xlu0 %2704
        %2707 = vset.pattern.permute.xlu0 12
        %2708 = vperm.xlu0 %2707, %v324
        %v2709 = vpop.permute.xlu0 %2708
        %2711 = vset.pattern.permute.xlu0 12
        %2712 = vperm.xlu0 %2711, %v325
        %v2713 = vpop.permute.xlu0 %2712
        %2715 = vset.pattern.permute.xlu0 12
        %2716 = vperm.xlu0 %2715, %v326
        %v2717 = vpop.permute.xlu0 %2716
        %2719 = vset.pattern.permute.xlu0 12
        %2720 = vperm.xlu0 %2719, %v327
        %v2721 = vpop.permute.xlu0 %2720
        %2723 = vset.pattern.permute.xlu0 12
        %2724 = vperm.xlu0 %2723, %v328
        %v2725 = vpop.permute.xlu0 %2724
        %2727 = vset.pattern.permute.xlu0 12
        %2728 = vperm.xlu0 %2727, %v329
        %v2729 = vpop.permute.xlu0 %2728
        %2731 = vset.pattern.permute.xlu0 12
        %2732 = vperm.xlu0 %2731, %v330
        %v2733 = vpop.permute.xlu0 %2732
        %2735 = vset.pattern.permute.xlu0 12
        %2736 = vperm.xlu0 %2735, %v331
        %v2737 = vpop.permute.xlu0 %2736
        %2739 = vset.pattern.permute.xlu0 12
        %2740 = vperm.xlu0 %2739, %v332
        %v2741 = vpop.permute.xlu0 %2740
        %2743 = vset.pattern.permute.xlu0 12
        %2744 = vperm.xlu0 %2743, %v333
        %v2745 = vpop.permute.xlu0 %2744
        %2747 = vset.pattern.permute.xlu0 12
        %2748 = vperm.xlu0 %2747, %v334
        %v2749 = vpop.permute.xlu0 %2748
        %2751 = vset.pattern.permute.xlu0 12
        %2752 = vperm.xlu0 %2751, %v335
        %v2753 = vpop.permute.xlu0 %2752
        %2755 = vset.pattern.permute.xlu0 12
        %2756 = vperm.xlu0 %2755, %v336
        %v2757 = vpop.permute.xlu0 %2756
        %2759 = vset.pattern.permute.xlu0 12
        %2760 = vperm.xlu0 %2759, %v337
        %v2761 = vpop.permute.xlu0 %2760
        %2763 = vset.pattern.permute.xlu0 12
        %2764 = vperm.xlu0 %2763, %v338
        %v2765 = vpop.permute.xlu0 %2764
        %2767 = vset.pattern.permute.xlu0 12
        %2768 = vperm.xlu0 %2767, %v339
        %v2769 = vpop.permute.xlu0 %2768
        %2771 = vset.pattern.permute.xlu0 12
        %2772 = vperm.xlu0 %2771, %v340
        %v2773 = vpop.permute.xlu0 %2772
        %2775 = vset.pattern.permute.xlu0 12
        %2776 = vperm.xlu0 %2775, %v341
        %v2777 = vpop.permute.xlu0 %2776
        %2779 = vset.pattern.permute.xlu0 12
        %2780 = vperm.xlu0 %2779, %v342
        %v2781 = vpop.permute.xlu0 %2780
        %2783 = vset.pattern.permute.xlu0 12
        %2784 = vperm.xlu0 %2783, %v343
        %v2785 = vpop.permute.xlu0 %2784
        %2787 = vset.pattern.permute.xlu0 12
        %2788 = vperm.xlu0 %2787, %v344
        %v2789 = vpop.permute.xlu0 %2788
        %2791 = vset.pattern.permute.xlu0 12
        %2792 = vperm.xlu0 %2791, %v345
        %v2793 = vpop.permute.xlu0 %2792
        %2795 = vset.pattern.permute.xlu0 12
        %2796 = vperm.xlu0 %2795, %v346
        %v2797 = vpop.permute.xlu0 %2796
        %2799 = vset.pattern.permute.xlu0 12
        %2800 = vperm.xlu0 %2799, %v347
        %v2801 = vpop.permute.xlu0 %2800
        %2803 = vset.pattern.permute.xlu0 12
        %2804 = vperm.xlu0 %2803, %v348
        %v2805 = vpop.permute.xlu0 %2804
        %2807 = vset.pattern.permute.xlu0 12
        %2808 = vperm.xlu0 %2807, %v349
        %v2809 = vpop.permute.xlu0 %2808
        %2811 = vset.pattern.permute.xlu0 12
        %2812 = vperm.xlu0 %2811, %v350
        %v2813 = vpop.permute.xlu0 %2812
        %2815 = vset.pattern.permute.xlu0 12
        %2816 = vperm.xlu0 %2815, %v351
        %v2817 = vpop.permute.xlu0 %2816
        %2819 = vset.pattern.permute.xlu0 12
        %2820 = vperm.xlu0 %2819, %v352
        %v2821 = vpop.permute.xlu0 %2820
        %2823 = vset.pattern.permute.xlu0 12
        %2824 = vperm.xlu0 %2823, %v353
        %v2825 = vpop.permute.xlu0 %2824
        %2827 = vset.pattern.permute.xlu0 12
        %2828 = vperm.xlu0 %2827, %v354
        %v2829 = vpop.permute.xlu0 %2828
        %2831 = vset.pattern.permute.xlu0 12
        %2832 = vperm.xlu0 %2831, %v355
        %v2833 = vpop.permute.xlu0 %2832
        %2835 = vset.pattern.permute.xlu0 12
        %2836 = vperm.xlu0 %2835, %v356
        %v2837 = vpop.permute.xlu0 %2836
        %2839 = vset.pattern.permute.xlu0 12
        %2840 = vperm.xlu0 %2839, %v357
        %v2841 = vpop.permute.xlu0 %2840
        %2843 = vset.pattern.permute.xlu0 12
        %2844 = vperm.xlu0 %2843, %v358
        %v2845 = vpop.permute.xlu0 %2844
        %2847 = vset.pattern.permute.xlu0 12
        %2848 = vperm.xlu0 %2847, %v359
        %v2849 = vpop.permute.xlu0 %2848
        %2851 = vset.pattern.permute.xlu0 12
        %2852 = vperm.xlu0 %2851, %v360
        %v2853 = vpop.permute.xlu0 %2852
        %2855 = vset.pattern.permute.xlu0 12
        %2856 = vperm.xlu0 %2855, %v361
        %v2857 = vpop.permute.xlu0 %2856
        %2859 = vset.pattern.permute.xlu0 12
        %2860 = vperm.xlu0 %2859, %v362
        %v2861 = vpop.permute.xlu0 %2860
        %2863 = vset.pattern.permute.xlu0 12
        %2864 = vperm.xlu0 %2863, %v363
        %v2865 = vpop.permute.xlu0 %2864
        %2867 = vset.pattern.permute.xlu0 12
        %2868 = vperm.xlu0 %2867, %v364
        %v2869 = vpop.permute.xlu0 %2868
        %2871 = vset.pattern.permute.xlu0 12
        %2872 = vperm.xlu0 %2871, %v365
        %v2873 = vpop.permute.xlu0 %2872
        %2875 = vset.pattern.permute.xlu0 12
        %2876 = vperm.xlu0 %2875, %v366
        %v2877 = vpop.permute.xlu0 %2876
        %2879 = vset.pattern.permute.xlu0 12
        %2880 = vperm.xlu0 %2879, %v367
        %v2881 = vpop.permute.xlu0 %2880
        %2883 = vset.pattern.permute.xlu0 12
        %2884 = vperm.xlu0 %2883, %v368
        %v2885 = vpop.permute.xlu0 %2884
        %2887 = vset.pattern.permute.xlu0 12
        %2888 = vperm.xlu0 %2887, %v369
        %v2889 = vpop.permute.xlu0 %2888
        %2891 = vset.pattern.permute.xlu0 12
        %2892 = vperm.xlu0 %2891, %v370
        %v2893 = vpop.permute.xlu0 %2892
        %2895 = vset.pattern.permute.xlu0 12
        %2896 = vperm.xlu0 %2895, %v371
        %v2897 = vpop.permute.xlu0 %2896
        %2899 = vset.pattern.permute.xlu0 12
        %2900 = vperm.xlu0 %2899, %v372
        %v2901 = vpop.permute.xlu0 %2900
        %v2903 = vmul.f32 %v1144, %v2649
        %v2904 = vmul.f32 %v1146, %v2653
        %v2905 = vmul.f32 %v1149, %v2657
        %v2906 = vmul.f32 %v1151, %v2661
        %v2907 = vmul.f32 %v1154, %v2665
        %v2908 = vmul.f32 %v1156, %v2669
        %v2909 = vmul.f32 %v1159, %v2673
        %v2910 = vmul.f32 %v1161, %v2677
        %v2911 = vmul.f32 %v1164, %v2681
        %v2912 = vmul.f32 %v1166, %v2685
        %v2913 = vmul.f32 %v1169, %v2689
        %v2914 = vmul.f32 %v1171, %v2693
        %v2915 = vmul.f32 %v1174, %v2697
        %v2916 = vmul.f32 %v1176, %v2701
        %v2917 = vmul.f32 %v1179, %v2705
        %v2918 = vmul.f32 %v1181, %v2709
        %v2919 = vmul.f32 %v1184, %v2713
        %v2920 = vmul.f32 %v1186, %v2717
        %v2921 = vmul.f32 %v1189, %v2721
        %v2922 = vmul.f32 %v1191, %v2725
        %v2923 = vmul.f32 %v1194, %v2729
        %v2924 = vmul.f32 %v1196, %v2733
        %v2925 = vmul.f32 %v1199, %v2737
        %v2926 = vmul.f32 %v1201, %v2741
        %v2927 = vmul.f32 %v1204, %v2745
        %v2928 = vmul.f32 %v1206, %v2749
        %v2929 = vmul.f32 %v1209, %v2753
        %v2930 = vmul.f32 %v1211, %v2757
        %v2931 = vmul.f32 %v1214, %v2761
        %v2932 = vmul.f32 %v1216, %v2765
        %v2933 = vmul.f32 %v1219, %v2769
        %v2934 = vmul.f32 %v1221, %v2773
        %v2935 = vmul.f32 %v1224, %v2777
        %v2936 = vmul.f32 %v1226, %v2781
        %v2937 = vmul.f32 %v1229, %v2785
        %v2938 = vmul.f32 %v1231, %v2789
        %v2939 = vmul.f32 %v1234, %v2793
        %v2940 = vmul.f32 %v1236, %v2797
        %v2941 = vmul.f32 %v1239, %v2801
        %v2942 = vmul.f32 %v1241, %v2805
        %v2943 = vmul.f32 %v1244, %v2809
        %v2944 = vmul.f32 %v1246, %v2813
        %v2945 = vmul.f32 %v1249, %v2817
        %v2946 = vmul.f32 %v1251, %v2821
        %v2947 = vmul.f32 %v1254, %v2825
        %v2948 = vmul.f32 %v1256, %v2829
        %v2949 = vmul.f32 %v1259, %v2833
        %v2950 = vmul.f32 %v1261, %v2837
        %v2951 = vmul.f32 %v1264, %v2841
        %v2952 = vmul.f32 %v1266, %v2845
        %v2953 = vmul.f32 %v1269, %v2849
        %v2954 = vmul.f32 %v1271, %v2853
        %v2955 = vmul.f32 %v1274, %v2857
        %v2956 = vmul.f32 %v1276, %v2861
        %v2957 = vmul.f32 %v1279, %v2865
        %v2958 = vmul.f32 %v1281, %v2869
        %v2959 = vmul.f32 %v1284, %v2873
        %v2960 = vmul.f32 %v1286, %v2877
        %v2961 = vmul.f32 %v1289, %v2881
        %v2962 = vmul.f32 %v1291, %v2885
        %v2963 = vmul.f32 %v1294, %v2889
        %v2964 = vmul.f32 %v1296, %v2893
        %v2965 = vmul.f32 %v1299, %v2897
        %v2966 = vmul.f32 %v1301, %v2901
        %2967 = vset.pattern.permute.xlu0 15
        %2968 = vperm.xlu0 %2967, %v309
        %v2969 = vpop.permute.xlu0 %2968
        %2971 = vset.pattern.permute.xlu0 15
        %2972 = vperm.xlu0 %2971, %v310
        %v2973 = vpop.permute.xlu0 %2972
        %2975 = vset.pattern.permute.xlu0 15
        %2976 = vperm.xlu0 %2975, %v311
        %v2977 = vpop.permute.xlu0 %2976
        %2979 = vset.pattern.permute.xlu0 15
        %2980 = vperm.xlu0 %2979, %v312
        %v2981 = vpop.permute.xlu0 %2980
        %2983 = vset.pattern.permute.xlu0 15
        %2984 = vperm.xlu0 %2983, %v313
        %v2985 = vpop.permute.xlu0 %2984
        %2987 = vset.pattern.permute.xlu0 15
        %2988 = vperm.xlu0 %2987, %v314
        %v2989 = vpop.permute.xlu0 %2988
        %2991 = vset.pattern.permute.xlu0 15
        %2992 = vperm.xlu0 %2991, %v315
        %v2993 = vpop.permute.xlu0 %2992
        %2995 = vset.pattern.permute.xlu0 15
        %2996 = vperm.xlu0 %2995, %v316
        %v2997 = vpop.permute.xlu0 %2996
        %2999 = vset.pattern.permute.xlu0 15
        %3000 = vperm.xlu0 %2999, %v317
        %v3001 = vpop.permute.xlu0 %3000
        %3003 = vset.pattern.permute.xlu0 15
        %3004 = vperm.xlu0 %3003, %v318
        %v3005 = vpop.permute.xlu0 %3004
        %3007 = vset.pattern.permute.xlu0 15
        %3008 = vperm.xlu0 %3007, %v319
        %v3009 = vpop.permute.xlu0 %3008
        %3011 = vset.pattern.permute.xlu0 15
        %3012 = vperm.xlu0 %3011, %v320
        %v3013 = vpop.permute.xlu0 %3012
        %3015 = vset.pattern.permute.xlu0 15
        %3016 = vperm.xlu0 %3015, %v321
        %v3017 = vpop.permute.xlu0 %3016
        %3019 = vset.pattern.permute.xlu0 15
        %3020 = vperm.xlu0 %3019, %v322
        %v3021 = vpop.permute.xlu0 %3020
        %3023 = vset.pattern.permute.xlu0 15
        %3024 = vperm.xlu0 %3023, %v323
        %v3025 = vpop.permute.xlu0 %3024
        %3027 = vset.pattern.permute.xlu0 15
        %3028 = vperm.xlu0 %3027, %v324
        %v3029 = vpop.permute.xlu0 %3028
        %3031 = vset.pattern.permute.xlu0 15
        %3032 = vperm.xlu0 %3031, %v325
        %v3033 = vpop.permute.xlu0 %3032
        %3035 = vset.pattern.permute.xlu0 15
        %3036 = vperm.xlu0 %3035, %v326
        %v3037 = vpop.permute.xlu0 %3036
        %3039 = vset.pattern.permute.xlu0 15
        %3040 = vperm.xlu0 %3039, %v327
        %v3041 = vpop.permute.xlu0 %3040
        %3043 = vset.pattern.permute.xlu0 15
        %3044 = vperm.xlu0 %3043, %v328
        %v3045 = vpop.permute.xlu0 %3044
        %3047 = vset.pattern.permute.xlu0 15
        %3048 = vperm.xlu0 %3047, %v329
        %v3049 = vpop.permute.xlu0 %3048
        %3051 = vset.pattern.permute.xlu0 15
        %3052 = vperm.xlu0 %3051, %v330
        %v3053 = vpop.permute.xlu0 %3052
        %3055 = vset.pattern.permute.xlu0 15
        %3056 = vperm.xlu0 %3055, %v331
        %v3057 = vpop.permute.xlu0 %3056
        %3059 = vset.pattern.permute.xlu0 15
        %3060 = vperm.xlu0 %3059, %v332
        %v3061 = vpop.permute.xlu0 %3060
        %3063 = vset.pattern.permute.xlu0 15
        %3064 = vperm.xlu0 %3063, %v333
        %v3065 = vpop.permute.xlu0 %3064
        %3067 = vset.pattern.permute.xlu0 15
        %3068 = vperm.xlu0 %3067, %v334
        %v3069 = vpop.permute.xlu0 %3068
        %3071 = vset.pattern.permute.xlu0 15
        %3072 = vperm.xlu0 %3071, %v335
        %v3073 = vpop.permute.xlu0 %3072
        %3075 = vset.pattern.permute.xlu0 15
        %3076 = vperm.xlu0 %3075, %v336
        %v3077 = vpop.permute.xlu0 %3076
        %3079 = vset.pattern.permute.xlu0 15
        %3080 = vperm.xlu0 %3079, %v337
        %v3081 = vpop.permute.xlu0 %3080
        %3083 = vset.pattern.permute.xlu0 15
        %3084 = vperm.xlu0 %3083, %v338
        %v3085 = vpop.permute.xlu0 %3084
        %3087 = vset.pattern.permute.xlu0 15
        %3088 = vperm.xlu0 %3087, %v339
        %v3089 = vpop.permute.xlu0 %3088
        %3091 = vset.pattern.permute.xlu0 15
        %3092 = vperm.xlu0 %3091, %v340
        %v3093 = vpop.permute.xlu0 %3092
        %3095 = vset.pattern.permute.xlu0 15
        %3096 = vperm.xlu0 %3095, %v341
        %v3097 = vpop.permute.xlu0 %3096
        %3099 = vset.pattern.permute.xlu0 15
        %3100 = vperm.xlu0 %3099, %v342
        %v3101 = vpop.permute.xlu0 %3100
        %3103 = vset.pattern.permute.xlu0 15
        %3104 = vperm.xlu0 %3103, %v343
        %v3105 = vpop.permute.xlu0 %3104
        %3107 = vset.pattern.permute.xlu0 15
        %3108 = vperm.xlu0 %3107, %v344
        %v3109 = vpop.permute.xlu0 %3108
        %3111 = vset.pattern.permute.xlu0 15
        %3112 = vperm.xlu0 %3111, %v345
        %v3113 = vpop.permute.xlu0 %3112
        %3115 = vset.pattern.permute.xlu0 15
        %3116 = vperm.xlu0 %3115, %v346
        %v3117 = vpop.permute.xlu0 %3116
        %3119 = vset.pattern.permute.xlu0 15
        %3120 = vperm.xlu0 %3119, %v347
        %v3121 = vpop.permute.xlu0 %3120
        %3123 = vset.pattern.permute.xlu0 15
        %3124 = vperm.xlu0 %3123, %v348
        %v3125 = vpop.permute.xlu0 %3124
        %3127 = vset.pattern.permute.xlu0 15
        %3128 = vperm.xlu0 %3127, %v349
        %v3129 = vpop.permute.xlu0 %3128
        %3131 = vset.pattern.permute.xlu0 15
        %3132 = vperm.xlu0 %3131, %v350
        %v3133 = vpop.permute.xlu0 %3132
        %3135 = vset.pattern.permute.xlu0 15
        %3136 = vperm.xlu0 %3135, %v351
        %v3137 = vpop.permute.xlu0 %3136
        %3139 = vset.pattern.permute.xlu0 15
        %3140 = vperm.xlu0 %3139, %v352
        %v3141 = vpop.permute.xlu0 %3140
        %3143 = vset.pattern.permute.xlu0 15
        %3144 = vperm.xlu0 %3143, %v353
        %v3145 = vpop.permute.xlu0 %3144
        %3147 = vset.pattern.permute.xlu0 15
        %3148 = vperm.xlu0 %3147, %v354
        %v3149 = vpop.permute.xlu0 %3148
        %3151 = vset.pattern.permute.xlu0 15
        %3152 = vperm.xlu0 %3151, %v355
        %v3153 = vpop.permute.xlu0 %3152
        %3155 = vset.pattern.permute.xlu0 15
        %3156 = vperm.xlu0 %3155, %v356
        %v3157 = vpop.permute.xlu0 %3156
        %3159 = vset.pattern.permute.xlu0 15
        %3160 = vperm.xlu0 %3159, %v357
        %v3161 = vpop.permute.xlu0 %3160
        %3163 = vset.pattern.permute.xlu0 15
        %3164 = vperm.xlu0 %3163, %v358
        %v3165 = vpop.permute.xlu0 %3164
        %3167 = vset.pattern.permute.xlu0 15
        %3168 = vperm.xlu0 %3167, %v359
        %v3169 = vpop.permute.xlu0 %3168
        %3171 = vset.pattern.permute.xlu0 15
        %3172 = vperm.xlu0 %3171, %v360
        %v3173 = vpop.permute.xlu0 %3172
        %3175 = vset.pattern.permute.xlu0 15
        %3176 = vperm.xlu0 %3175, %v361
        %v3177 = vpop.permute.xlu0 %3176
        %3179 = vset.pattern.permute.xlu0 15
        %3180 = vperm.xlu0 %3179, %v362
        %v3181 = vpop.permute.xlu0 %3180
        %3183 = vset.pattern.permute.xlu0 15
        %3184 = vperm.xlu0 %3183, %v363
        %v3185 = vpop.permute.xlu0 %3184
        %3187 = vset.pattern.permute.xlu0 15
        %3188 = vperm.xlu0 %3187, %v364
        %v3189 = vpop.permute.xlu0 %3188
        %3191 = vset.pattern.permute.xlu0 15
        %3192 = vperm.xlu0 %3191, %v365
        %v3193 = vpop.permute.xlu0 %3192
        %3195 = vset.pattern.permute.xlu0 15
        %3196 = vperm.xlu0 %3195, %v366
        %v3197 = vpop.permute.xlu0 %3196
        %3199 = vset.pattern.permute.xlu0 15
        %3200 = vperm.xlu0 %3199, %v367
        %v3201 = vpop.permute.xlu0 %3200
        %3203 = vset.pattern.permute.xlu0 15
        %3204 = vperm.xlu0 %3203, %v368
        %v3205 = vpop.permute.xlu0 %3204
        %3207 = vset.pattern.permute.xlu0 15
        %3208 = vperm.xlu0 %3207, %v369
        %v3209 = vpop.permute.xlu0 %3208
        %3211 = vset.pattern.permute.xlu0 15
        %3212 = vperm.xlu0 %3211, %v370
        %v3213 = vpop.permute.xlu0 %3212
        %3215 = vset.pattern.permute.xlu0 15
        %3216 = vperm.xlu0 %3215, %v371
        %v3217 = vpop.permute.xlu0 %3216
        %3219 = vset.pattern.permute.xlu0 15
        %3220 = vperm.xlu0 %3219, %v372
        %v3221 = vpop.permute.xlu0 %3220
        %v3223 = vadd.f32 %v2903, %v2969
        %v3224 = vadd.f32 %v2904, %v2973
        %v3225 = vadd.f32 %v2905, %v2977
        %v3226 = vadd.f32 %v2906, %v2981
        %v3227 = vadd.f32 %v2907, %v2985
        %v3228 = vadd.f32 %v2908, %v2989
        %v3229 = vadd.f32 %v2909, %v2993
        %v3230 = vadd.f32 %v2910, %v2997
        %v3231 = vadd.f32 %v2911, %v3001
        %v3232 = vadd.f32 %v2912, %v3005
        %v3233 = vadd.f32 %v2913, %v3009
        %v3234 = vadd.f32 %v2914, %v3013
        %v3235 = vadd.f32 %v2915, %v3017
        %v3236 = vadd.f32 %v2916, %v3021
        %v3237 = vadd.f32 %v2917, %v3025
        %v3238 = vadd.f32 %v2918, %v3029
        %v3239 = vadd.f32 %v2919, %v3033
        %v3240 = vadd.f32 %v2920, %v3037
        %v3241 = vadd.f32 %v2921, %v3041
        %v3242 = vadd.f32 %v2922, %v3045
        %v3243 = vadd.f32 %v2923, %v3049
        %v3244 = vadd.f32 %v2924, %v3053
        %v3245 = vadd.f32 %v2925, %v3057
        %v3246 = vadd.f32 %v2926, %v3061
        %v3247 = vadd.f32 %v2927, %v3065
        %v3248 = vadd.f32 %v2928, %v3069
        %v3249 = vadd.f32 %v2929, %v3073
        %v3250 = vadd.f32 %v2930, %v3077
        %v3251 = vadd.f32 %v2931, %v3081
        %v3252 = vadd.f32 %v2932, %v3085
        %v3253 = vadd.f32 %v2933, %v3089
        %v3254 = vadd.f32 %v2934, %v3093
        %v3255 = vadd.f32 %v2935, %v3097
        %v3256 = vadd.f32 %v2936, %v3101
        %v3257 = vadd.f32 %v2937, %v3105
        %v3258 = vadd.f32 %v2938, %v3109
        %v3259 = vadd.f32 %v2939, %v3113
        %v3260 = vadd.f32 %v2940, %v3117
        %v3261 = vadd.f32 %v2941, %v3121
        %v3262 = vadd.f32 %v2942, %v3125
        %v3263 = vadd.f32 %v2943, %v3129
        %v3264 = vadd.f32 %v2944, %v3133
        %v3265 = vadd.f32 %v2945, %v3137
        %v3266 = vadd.f32 %v2946, %v3141
        %v3267 = vadd.f32 %v2947, %v3145
        %v3268 = vadd.f32 %v2948, %v3149
        %v3269 = vadd.f32 %v2949, %v3153
        %v3270 = vadd.f32 %v2950, %v3157
        %v3271 = vadd.f32 %v2951, %v3161
        %v3272 = vadd.f32 %v2952, %v3165
        %v3273 = vadd.f32 %v2953, %v3169
        %v3274 = vadd.f32 %v2954, %v3173
        %v3275 = vadd.f32 %v2955, %v3177
        %v3276 = vadd.f32 %v2956, %v3181
        %v3277 = vadd.f32 %v2957, %v3185
        %v3278 = vadd.f32 %v2958, %v3189
        %v3279 = vadd.f32 %v2959, %v3193
        %v3280 = vadd.f32 %v2960, %v3197
        %v3281 = vadd.f32 %v2961, %v3201
        %v3282 = vadd.f32 %v2962, %v3205
        %v3283 = vadd.f32 %v2963, %v3209
        %v3284 = vadd.f32 %v2964, %v3213
        %v3285 = vadd.f32 %v2965, %v3217
        %v3286 = vadd.f32 %v2966, %v3221
        %v3287 = vpack.c.bf16 %v1944, %v1943
        %v3288 = vpack.c.bf16 %v1946, %v1945
        %v3289 = vpack.c.bf16 %v1948, %v1947
        %v3290 = vpack.c.bf16 %v1950, %v1949
        %v3291 = vpack.c.bf16 %v1952, %v1951
        %v3292 = vpack.c.bf16 %v1954, %v1953
        %v3293 = vpack.c.bf16 %v1956, %v1955
        %v3294 = vpack.c.bf16 %v1958, %v1957
        %v3295 = vpack.c.bf16 %v1960, %v1959
        %v3296 = vpack.c.bf16 %v1962, %v1961
        %v3297 = vpack.c.bf16 %v1964, %v1963
        %v3298 = vpack.c.bf16 %v1966, %v1965
        %v3299 = vpack.c.bf16 %v1968, %v1967
        %v3300 = vpack.c.bf16 %v1970, %v1969
        %v3301 = vpack.c.bf16 %v1972, %v1971
        %v3302 = vpack.c.bf16 %v1974, %v1973
        %v3303 = vpack.c.bf16 %v1976, %v1975
        %v3304 = vpack.c.bf16 %v1978, %v1977
        %v3305 = vpack.c.bf16 %v1980, %v1979
        %v3306 = vpack.c.bf16 %v1982, %v1981
        %v3307 = vpack.c.bf16 %v1984, %v1983
        %v3308 = vpack.c.bf16 %v1986, %v1985
        %v3309 = vpack.c.bf16 %v1988, %v1987
        %v3310 = vpack.c.bf16 %v1990, %v1989
        %v3311 = vpack.c.bf16 %v1992, %v1991
        %v3312 = vpack.c.bf16 %v1994, %v1993
        %v3313 = vpack.c.bf16 %v1996, %v1995
        %v3314 = vpack.c.bf16 %v1998, %v1997
        %v3315 = vpack.c.bf16 %v2000, %v1999
        %v3316 = vpack.c.bf16 %v2002, %v2001
        %v3317 = vpack.c.bf16 %v2004, %v2003
        %v3318 = vpack.c.bf16 %v2006, %v2005
        %v3319 = vunpack.c.l.bf16 %v3287
        %v3320 = vunpack.c.h.bf16 %v3287
        %v3321 = vunpack.c.l.bf16 %v3288
        %v3322 = vunpack.c.h.bf16 %v3288
        %v3323 = vunpack.c.l.bf16 %v3289
        %v3324 = vunpack.c.h.bf16 %v3289
        %v3325 = vunpack.c.l.bf16 %v3290
        %v3326 = vunpack.c.h.bf16 %v3290
        %v3327 = vunpack.c.l.bf16 %v3291
        %v3328 = vunpack.c.h.bf16 %v3291
        %v3329 = vunpack.c.l.bf16 %v3292
        %v3330 = vunpack.c.h.bf16 %v3292
        %v3331 = vunpack.c.l.bf16 %v3293
        %v3332 = vunpack.c.h.bf16 %v3293
        %v3333 = vunpack.c.l.bf16 %v3294
        %v3334 = vunpack.c.h.bf16 %v3294
        %v3335 = vunpack.c.l.bf16 %v3295
        %v3336 = vunpack.c.h.bf16 %v3295
        %v3337 = vunpack.c.l.bf16 %v3296
        %v3338 = vunpack.c.h.bf16 %v3296
        %v3339 = vunpack.c.l.bf16 %v3297
        %v3340 = vunpack.c.h.bf16 %v3297
        %v3341 = vunpack.c.l.bf16 %v3298
        %v3342 = vunpack.c.h.bf16 %v3298
        %v3343 = vunpack.c.l.bf16 %v3299
        %v3344 = vunpack.c.h.bf16 %v3299
        %v3345 = vunpack.c.l.bf16 %v3300
        %v3346 = vunpack.c.h.bf16 %v3300
        %v3347 = vunpack.c.l.bf16 %v3301
        %v3348 = vunpack.c.h.bf16 %v3301
        %v3349 = vunpack.c.l.bf16 %v3302
        %v3350 = vunpack.c.h.bf16 %v3302
        %v3351 = vunpack.c.l.bf16 %v3303
        %v3352 = vunpack.c.h.bf16 %v3303
        %v3353 = vunpack.c.l.bf16 %v3304
        %v3354 = vunpack.c.h.bf16 %v3304
        %v3355 = vunpack.c.l.bf16 %v3305
        %v3356 = vunpack.c.h.bf16 %v3305
        %v3357 = vunpack.c.l.bf16 %v3306
        %v3358 = vunpack.c.h.bf16 %v3306
        %v3359 = vunpack.c.l.bf16 %v3307
        %v3360 = vunpack.c.h.bf16 %v3307
        %v3361 = vunpack.c.l.bf16 %v3308
        %v3362 = vunpack.c.h.bf16 %v3308
        %v3363 = vunpack.c.l.bf16 %v3309
        %v3364 = vunpack.c.h.bf16 %v3309
        %v3365 = vunpack.c.l.bf16 %v3310
        %v3366 = vunpack.c.h.bf16 %v3310
        %v3367 = vunpack.c.l.bf16 %v3311
        %v3368 = vunpack.c.h.bf16 %v3311
        %v3369 = vunpack.c.l.bf16 %v3312
        %v3370 = vunpack.c.h.bf16 %v3312
        %v3371 = vunpack.c.l.bf16 %v3313
        %v3372 = vunpack.c.h.bf16 %v3313
        %v3373 = vunpack.c.l.bf16 %v3314
        %v3374 = vunpack.c.h.bf16 %v3314
        %v3375 = vunpack.c.l.bf16 %v3315
        %v3376 = vunpack.c.h.bf16 %v3315
        %v3377 = vunpack.c.l.bf16 %v3316
        %v3378 = vunpack.c.h.bf16 %v3316
        %v3379 = vunpack.c.l.bf16 %v3317
        %v3380 = vunpack.c.h.bf16 %v3317
        %v3381 = vunpack.c.l.bf16 %v3318
        %v3382 = vunpack.c.h.bf16 %v3318
        %v3383 = vtanh.pop %v3319
        %v3384 = vtanh.pop %v3320
        %v3385 = vtanh.pop %v3321
        %v3386 = vtanh.pop %v3322
        %v3387 = vtanh.pop %v3323
        %v3388 = vtanh.pop %v3324
        %v3389 = vtanh.pop %v3325
        %v3390 = vtanh.pop %v3326
        %v3391 = vtanh.pop %v3327
        %v3392 = vtanh.pop %v3328
        %v3393 = vtanh.pop %v3329
        %v3394 = vtanh.pop %v3330
        %v3395 = vtanh.pop %v3331
        %v3396 = vtanh.pop %v3332
        %v3397 = vtanh.pop %v3333
        %v3398 = vtanh.pop %v3334
        %v3399 = vtanh.pop %v3335
        %v3400 = vtanh.pop %v3336
        %v3401 = vtanh.pop %v3337
        %v3402 = vtanh.pop %v3338
        %v3403 = vtanh.pop %v3339
        %v3404 = vtanh.pop %v3340
        %v3405 = vtanh.pop %v3341
        %v3406 = vtanh.pop %v3342
        %v3407 = vtanh.pop %v3343
        %v3408 = vtanh.pop %v3344
        %v3409 = vtanh.pop %v3345
        %v3410 = vtanh.pop %v3346
        %v3411 = vtanh.pop %v3347
        %v3412 = vtanh.pop %v3348
        %v3413 = vtanh.pop %v3349
        %v3414 = vtanh.pop %v3350
        %v3415 = vtanh.pop %v3351
        %v3416 = vtanh.pop %v3352
        %v3417 = vtanh.pop %v3353
        %v3418 = vtanh.pop %v3354
        %v3419 = vtanh.pop %v3355
        %v3420 = vtanh.pop %v3356
        %v3421 = vtanh.pop %v3357
        %v3422 = vtanh.pop %v3358
        %v3423 = vtanh.pop %v3359
        %v3424 = vtanh.pop %v3360
        %v3425 = vtanh.pop %v3361
        %v3426 = vtanh.pop %v3362
        %v3427 = vtanh.pop %v3363
        %v3428 = vtanh.pop %v3364
        %v3429 = vtanh.pop %v3365
        %v3430 = vtanh.pop %v3366
        %v3431 = vtanh.pop %v3367
        %v3432 = vtanh.pop %v3368
        %v3433 = vtanh.pop %v3369
        %v3434 = vtanh.pop %v3370
        %v3435 = vtanh.pop %v3371
        %v3436 = vtanh.pop %v3372
        %v3437 = vtanh.pop %v3373
        %v3438 = vtanh.pop %v3374
        %v3439 = vtanh.pop %v3375
        %v3440 = vtanh.pop %v3376
        %v3441 = vtanh.pop %v3377
        %v3442 = vtanh.pop %v3378
        %v3443 = vtanh.pop %v3379
        %v3444 = vtanh.pop %v3380
        %v3445 = vtanh.pop %v3381
        %v3446 = vtanh.pop %v3382
        %v3447 = vpack.c.bf16 %v3384, %v3383
        %v3448 = vpack.c.bf16 %v3386, %v3385
        %v3449 = vpack.c.bf16 %v3388, %v3387
        %v3450 = vpack.c.bf16 %v3390, %v3389
        %v3451 = vpack.c.bf16 %v3392, %v3391
        %v3452 = vpack.c.bf16 %v3394, %v3393
        %v3453 = vpack.c.bf16 %v3396, %v3395
        %v3454 = vpack.c.bf16 %v3398, %v3397
        %v3455 = vpack.c.bf16 %v3400, %v3399
        %v3456 = vpack.c.bf16 %v3402, %v3401
        %v3457 = vpack.c.bf16 %v3404, %v3403
        %v3458 = vpack.c.bf16 %v3406, %v3405
        %v3459 = vpack.c.bf16 %v3408, %v3407
        %v3460 = vpack.c.bf16 %v3410, %v3409
        %v3461 = vpack.c.bf16 %v3412, %v3411
        %v3462 = vpack.c.bf16 %v3414, %v3413
        %v3463 = vpack.c.bf16 %v3416, %v3415
        %v3464 = vpack.c.bf16 %v3418, %v3417
        %v3465 = vpack.c.bf16 %v3420, %v3419
        %v3466 = vpack.c.bf16 %v3422, %v3421
        %v3467 = vpack.c.bf16 %v3424, %v3423
        %v3468 = vpack.c.bf16 %v3426, %v3425
        %v3469 = vpack.c.bf16 %v3428, %v3427
        %v3470 = vpack.c.bf16 %v3430, %v3429
        %v3471 = vpack.c.bf16 %v3432, %v3431
        %v3472 = vpack.c.bf16 %v3434, %v3433
        %v3473 = vpack.c.bf16 %v3436, %v3435
        %v3474 = vpack.c.bf16 %v3438, %v3437
        %v3475 = vpack.c.bf16 %v3440, %v3439
        %v3476 = vpack.c.bf16 %v3442, %v3441
        %v3477 = vpack.c.bf16 %v3444, %v3443
        %v3478 = vpack.c.bf16 %v3446, %v3445
        %v3479 = vpack.c.bf16 %v2584, %v2583
        %v3480 = vpack.c.bf16 %v2586, %v2585
        %v3481 = vpack.c.bf16 %v2588, %v2587
        %v3482 = vpack.c.bf16 %v2590, %v2589
        %v3483 = vpack.c.bf16 %v2592, %v2591
        %v3484 = vpack.c.bf16 %v2594, %v2593
        %v3485 = vpack.c.bf16 %v2596, %v2595
        %v3486 = vpack.c.bf16 %v2598, %v2597
        %v3487 = vpack.c.bf16 %v2600, %v2599
        %v3488 = vpack.c.bf16 %v2602, %v2601
        %v3489 = vpack.c.bf16 %v2604, %v2603
        %v3490 = vpack.c.bf16 %v2606, %v2605
        %v3491 = vpack.c.bf16 %v2608, %v2607
        %v3492 = vpack.c.bf16 %v2610, %v2609
        %v3493 = vpack.c.bf16 %v2612, %v2611
        %v3494 = vpack.c.bf16 %v2614, %v2613
        %v3495 = vpack.c.bf16 %v2616, %v2615
        %v3496 = vpack.c.bf16 %v2618, %v2617
        %v3497 = vpack.c.bf16 %v2620, %v2619
        %v3498 = vpack.c.bf16 %v2622, %v2621
        %v3499 = vpack.c.bf16 %v2624, %v2623
        %v3500 = vpack.c.bf16 %v2626, %v2625
        %v3501 = vpack.c.bf16 %v2628, %v2627
        %v3502 = vpack.c.bf16 %v2630, %v2629
        %v3503 = vpack.c.bf16 %v2632, %v2631
        %v3504 = vpack.c.bf16 %v2634, %v2633
        %v3505 = vpack.c.bf16 %v2636, %v2635
        %v3506 = vpack.c.bf16 %v2638, %v2637
        %v3507 = vpack.c.bf16 %v2640, %v2639
        %v3508 = vpack.c.bf16 %v2642, %v2641
        %v3509 = vpack.c.bf16 %v2644, %v2643
        %v3510 = vpack.c.bf16 %v2646, %v2645
        %v3511 = vunpack.c.l.bf16 %v3479
        %v3512 = vunpack.c.h.bf16 %v3479
        %v3513 = vunpack.c.l.bf16 %v3480
        %v3514 = vunpack.c.h.bf16 %v3480
        %v3515 = vunpack.c.l.bf16 %v3481
        %v3516 = vunpack.c.h.bf16 %v3481
        %v3517 = vunpack.c.l.bf16 %v3482
        %v3518 = vunpack.c.h.bf16 %v3482
        %v3519 = vunpack.c.l.bf16 %v3483
        %v3520 = vunpack.c.h.bf16 %v3483
        %v3521 = vunpack.c.l.bf16 %v3484
        %v3522 = vunpack.c.h.bf16 %v3484
        %v3523 = vunpack.c.l.bf16 %v3485
        %v3524 = vunpack.c.h.bf16 %v3485
        %v3525 = vunpack.c.l.bf16 %v3486
        %v3526 = vunpack.c.h.bf16 %v3486
        %v3527 = vunpack.c.l.bf16 %v3487
        %v3528 = vunpack.c.h.bf16 %v3487
        %v3529 = vunpack.c.l.bf16 %v3488
        %v3530 = vunpack.c.h.bf16 %v3488
        %v3531 = vunpack.c.l.bf16 %v3489
        %v3532 = vunpack.c.h.bf16 %v3489
        %v3533 = vunpack.c.l.bf16 %v3490
        %v3534 = vunpack.c.h.bf16 %v3490
        %v3535 = vunpack.c.l.bf16 %v3491
        %v3536 = vunpack.c.h.bf16 %v3491
        %v3537 = vunpack.c.l.bf16 %v3492
        %v3538 = vunpack.c.h.bf16 %v3492
        %v3539 = vunpack.c.l.bf16 %v3493
        %v3540 = vunpack.c.h.bf16 %v3493
        %v3541 = vunpack.c.l.bf16 %v3494
        %v3542 = vunpack.c.h.bf16 %v3494
        %v3543 = vunpack.c.l.bf16 %v3495
        %v3544 = vunpack.c.h.bf16 %v3495
        %v3545 = vunpack.c.l.bf16 %v3496
        %v3546 = vunpack.c.h.bf16 %v3496
        %v3547 = vunpack.c.l.bf16 %v3497
        %v3548 = vunpack.c.h.bf16 %v3497
        %v3549 = vunpack.c.l.bf16 %v3498
        %v3550 = vunpack.c.h.bf16 %v3498
        %v3551 = vunpack.c.l.bf16 %v3499
        %v3552 = vunpack.c.h.bf16 %v3499
        %v3553 = vunpack.c.l.bf16 %v3500
        %v3554 = vunpack.c.h.bf16 %v3500
        %v3555 = vunpack.c.l.bf16 %v3501
        %v3556 = vunpack.c.h.bf16 %v3501
        %v3557 = vunpack.c.l.bf16 %v3502
        %v3558 = vunpack.c.h.bf16 %v3502
        %v3559 = vunpack.c.l.bf16 %v3503
        %v3560 = vunpack.c.h.bf16 %v3503
        %v3561 = vunpack.c.l.bf16 %v3504
        %v3562 = vunpack.c.h.bf16 %v3504
        %v3563 = vunpack.c.l.bf16 %v3505
        %v3564 = vunpack.c.h.bf16 %v3505
        %v3565 = vunpack.c.l.bf16 %v3506
        %v3566 = vunpack.c.h.bf16 %v3506
        %v3567 = vunpack.c.l.bf16 %v3507
        %v3568 = vunpack.c.h.bf16 %v3507
        %v3569 = vunpack.c.l.bf16 %v3508
        %v3570 = vunpack.c.h.bf16 %v3508
        %v3571 = vunpack.c.l.bf16 %v3509
        %v3572 = vunpack.c.h.bf16 %v3509
        %v3573 = vunpack.c.l.bf16 %v3510
        %v3574 = vunpack.c.h.bf16 %v3510
        %v3575 = vtanh.pop %v3511
        %v3576 = vtanh.pop %v3512
        %v3577 = vtanh.pop %v3513
        %v3578 = vtanh.pop %v3514
        %v3579 = vtanh.pop %v3515
        %v3580 = vtanh.pop %v3516
        %v3581 = vtanh.pop %v3517
        %v3582 = vtanh.pop %v3518
        %v3583 = vtanh.pop %v3519
        %v3584 = vtanh.pop %v3520
        %v3585 = vtanh.pop %v3521
        %v3586 = vtanh.pop %v3522
        %v3587 = vtanh.pop %v3523
        %v3588 = vtanh.pop %v3524
        %v3589 = vtanh.pop %v3525
        %v3590 = vtanh.pop %v3526
        %v3591 = vtanh.pop %v3527
        %v3592 = vtanh.pop %v3528
        %v3593 = vtanh.pop %v3529
        %v3594 = vtanh.pop %v3530
        %v3595 = vtanh.pop %v3531
        %v3596 = vtanh.pop %v3532
        %v3597 = vtanh.pop %v3533
        %v3598 = vtanh.pop %v3534
        %v3599 = vtanh.pop %v3535
        %v3600 = vtanh.pop %v3536
        %v3601 = vtanh.pop %v3537
        %v3602 = vtanh.pop %v3538
        %v3603 = vtanh.pop %v3539
        %v3604 = vtanh.pop %v3540
        %v3605 = vtanh.pop %v3541
        %v3606 = vtanh.pop %v3542
        %v3607 = vtanh.pop %v3543
        %v3608 = vtanh.pop %v3544
        %v3609 = vtanh.pop %v3545
        %v3610 = vtanh.pop %v3546
        %v3611 = vtanh.pop %v3547
        %v3612 = vtanh.pop %v3548
        %v3613 = vtanh.pop %v3549
        %v3614 = vtanh.pop %v3550
        %v3615 = vtanh.pop %v3551
        %v3616 = vtanh.pop %v3552
        %v3617 = vtanh.pop %v3553
        %v3618 = vtanh.pop %v3554
        %v3619 = vtanh.pop %v3555
        %v3620 = vtanh.pop %v3556
        %v3621 = vtanh.pop %v3557
        %v3622 = vtanh.pop %v3558
        %v3623 = vtanh.pop %v3559
        %v3624 = vtanh.pop %v3560
        %v3625 = vtanh.pop %v3561
        %v3626 = vtanh.pop %v3562
        %v3627 = vtanh.pop %v3563
        %v3628 = vtanh.pop %v3564
        %v3629 = vtanh.pop %v3565
        %v3630 = vtanh.pop %v3566
        %v3631 = vtanh.pop %v3567
        %v3632 = vtanh.pop %v3568
        %v3633 = vtanh.pop %v3569
        %v3634 = vtanh.pop %v3570
        %v3635 = vtanh.pop %v3571
        %v3636 = vtanh.pop %v3572
        %v3637 = vtanh.pop %v3573
        %v3638 = vtanh.pop %v3574
        %v3639 = vpack.c.bf16 %v3576, %v3575
        %v3640 = vpack.c.bf16 %v3578, %v3577
        %v3641 = vpack.c.bf16 %v3580, %v3579
        %v3642 = vpack.c.bf16 %v3582, %v3581
        %v3643 = vpack.c.bf16 %v3584, %v3583
        %v3644 = vpack.c.bf16 %v3586, %v3585
        %v3645 = vpack.c.bf16 %v3588, %v3587
        %v3646 = vpack.c.bf16 %v3590, %v3589
        %v3647 = vpack.c.bf16 %v3592, %v3591
        %v3648 = vpack.c.bf16 %v3594, %v3593
        %v3649 = vpack.c.bf16 %v3596, %v3595
        %v3650 = vpack.c.bf16 %v3598, %v3597
        %v3651 = vpack.c.bf16 %v3600, %v3599
        %v3652 = vpack.c.bf16 %v3602, %v3601
        %v3653 = vpack.c.bf16 %v3604, %v3603
        %v3654 = vpack.c.bf16 %v3606, %v3605
        %v3655 = vpack.c.bf16 %v3608, %v3607
        %v3656 = vpack.c.bf16 %v3610, %v3609
        %v3657 = vpack.c.bf16 %v3612, %v3611
        %v3658 = vpack.c.bf16 %v3614, %v3613
        %v3659 = vpack.c.bf16 %v3616, %v3615
        %v3660 = vpack.c.bf16 %v3618, %v3617
        %v3661 = vpack.c.bf16 %v3620, %v3619
        %v3662 = vpack.c.bf16 %v3622, %v3621
        %v3663 = vpack.c.bf16 %v3624, %v3623
        %v3664 = vpack.c.bf16 %v3626, %v3625
        %v3665 = vpack.c.bf16 %v3628, %v3627
        %v3666 = vpack.c.bf16 %v3630, %v3629
        %v3667 = vpack.c.bf16 %v3632, %v3631
        %v3668 = vpack.c.bf16 %v3634, %v3633
        %v3669 = vpack.c.bf16 %v3636, %v3635
        %v3670 = vpack.c.bf16 %v3638, %v3637
        %v3671 = vpack.c.bf16 %v3224, %v3223
        %v3672 = vpack.c.bf16 %v3226, %v3225
        %v3673 = vpack.c.bf16 %v3228, %v3227
        %v3674 = vpack.c.bf16 %v3230, %v3229
        %v3675 = vpack.c.bf16 %v3232, %v3231
        %v3676 = vpack.c.bf16 %v3234, %v3233
        %v3677 = vpack.c.bf16 %v3236, %v3235
        %v3678 = vpack.c.bf16 %v3238, %v3237
        %v3679 = vpack.c.bf16 %v3240, %v3239
        %v3680 = vpack.c.bf16 %v3242, %v3241
        %v3681 = vpack.c.bf16 %v3244, %v3243
        %v3682 = vpack.c.bf16 %v3246, %v3245
        %v3683 = vpack.c.bf16 %v3248, %v3247
        %v3684 = vpack.c.bf16 %v3250, %v3249
        %v3685 = vpack.c.bf16 %v3252, %v3251
        %v3686 = vpack.c.bf16 %v3254, %v3253
        %v3687 = vpack.c.bf16 %v3256, %v3255
        %v3688 = vpack.c.bf16 %v3258, %v3257
        %v3689 = vpack.c.bf16 %v3260, %v3259
        %v3690 = vpack.c.bf16 %v3262, %v3261
        %v3691 = vpack.c.bf16 %v3264, %v3263
        %v3692 = vpack.c.bf16 %v3266, %v3265
        %v3693 = vpack.c.bf16 %v3268, %v3267
        %v3694 = vpack.c.bf16 %v3270, %v3269
        %v3695 = vpack.c.bf16 %v3272, %v3271
        %v3696 = vpack.c.bf16 %v3274, %v3273
        %v3697 = vpack.c.bf16 %v3276, %v3275
        %v3698 = vpack.c.bf16 %v3278, %v3277
        %v3699 = vpack.c.bf16 %v3280, %v3279
        %v3700 = vpack.c.bf16 %v3282, %v3281
        %v3701 = vpack.c.bf16 %v3284, %v3283
        %v3702 = vpack.c.bf16 %v3286, %v3285
        %v3703 = vunpack.c.l.bf16 %v3671
        %v3704 = vunpack.c.h.bf16 %v3671
        %v3705 = vunpack.c.l.bf16 %v3672
        %v3706 = vunpack.c.h.bf16 %v3672
        %v3707 = vunpack.c.l.bf16 %v3673
        %v3708 = vunpack.c.h.bf16 %v3673
        %v3709 = vunpack.c.l.bf16 %v3674
        %v3710 = vunpack.c.h.bf16 %v3674
        %v3711 = vunpack.c.l.bf16 %v3675
        %v3712 = vunpack.c.h.bf16 %v3675
        %v3713 = vunpack.c.l.bf16 %v3676
        %v3714 = vunpack.c.h.bf16 %v3676
        %v3715 = vunpack.c.l.bf16 %v3677
        %v3716 = vunpack.c.h.bf16 %v3677
        %v3717 = vunpack.c.l.bf16 %v3678
        %v3718 = vunpack.c.h.bf16 %v3678
        %v3719 = vunpack.c.l.bf16 %v3679
        %v3720 = vunpack.c.h.bf16 %v3679
        %v3721 = vunpack.c.l.bf16 %v3680
        %v3722 = vunpack.c.h.bf16 %v3680
        %v3723 = vunpack.c.l.bf16 %v3681
        %v3724 = vunpack.c.h.bf16 %v3681
        %v3725 = vunpack.c.l.bf16 %v3682
        %v3726 = vunpack.c.h.bf16 %v3682
        %v3727 = vunpack.c.l.bf16 %v3683
        %v3728 = vunpack.c.h.bf16 %v3683
        %v3729 = vunpack.c.l.bf16 %v3684
        %v3730 = vunpack.c.h.bf16 %v3684
        %v3731 = vunpack.c.l.bf16 %v3685
        %v3732 = vunpack.c.h.bf16 %v3685
        %v3733 = vunpack.c.l.bf16 %v3686
        %v3734 = vunpack.c.h.bf16 %v3686
        %v3735 = vunpack.c.l.bf16 %v3687
        %v3736 = vunpack.c.h.bf16 %v3687
        %v3737 = vunpack.c.l.bf16 %v3688
        %v3738 = vunpack.c.h.bf16 %v3688
        %v3739 = vunpack.c.l.bf16 %v3689
        %v3740 = vunpack.c.h.bf16 %v3689
        %v3741 = vunpack.c.l.bf16 %v3690
        %v3742 = vunpack.c.h.bf16 %v3690
        %v3743 = vunpack.c.l.bf16 %v3691
        %v3744 = vunpack.c.h.bf16 %v3691
        %v3745 = vunpack.c.l.bf16 %v3692
        %v3746 = vunpack.c.h.bf16 %v3692
        %v3747 = vunpack.c.l.bf16 %v3693
        %v3748 = vunpack.c.h.bf16 %v3693
        %v3749 = vunpack.c.l.bf16 %v3694
        %v3750 = vunpack.c.h.bf16 %v3694
        %v3751 = vunpack.c.l.bf16 %v3695
        %v3752 = vunpack.c.h.bf16 %v3695
        %v3753 = vunpack.c.l.bf16 %v3696
        %v3754 = vunpack.c.h.bf16 %v3696
        %v3755 = vunpack.c.l.bf16 %v3697
        %v3756 = vunpack.c.h.bf16 %v3697
        %v3757 = vunpack.c.l.bf16 %v3698
        %v3758 = vunpack.c.h.bf16 %v3698
        %v3759 = vunpack.c.l.bf16 %v3699
        %v3760 = vunpack.c.h.bf16 %v3699
        %v3761 = vunpack.c.l.bf16 %v3700
        %v3762 = vunpack.c.h.bf16 %v3700
        %v3763 = vunpack.c.l.bf16 %v3701
        %v3764 = vunpack.c.h.bf16 %v3701
        %v3765 = vunpack.c.l.bf16 %v3702
        %v3766 = vunpack.c.h.bf16 %v3702
        %v3767 = vtanh.pop %v3703
        %v3768 = vtanh.pop %v3704
        %v3769 = vtanh.pop %v3705
        %v3770 = vtanh.pop %v3706
        %v3771 = vtanh.pop %v3707
        %v3772 = vtanh.pop %v3708
        %v3773 = vtanh.pop %v3709
        %v3774 = vtanh.pop %v3710
        %v3775 = vtanh.pop %v3711
        %v3776 = vtanh.pop %v3712
        %v3777 = vtanh.pop %v3713
        %v3778 = vtanh.pop %v3714
        %v3779 = vtanh.pop %v3715
        %v3780 = vtanh.pop %v3716
        %v3781 = vtanh.pop %v3717
        %v3782 = vtanh.pop %v3718
        %v3783 = vtanh.pop %v3719
        %v3784 = vtanh.pop %v3720
        %v3785 = vtanh.pop %v3721
        %v3786 = vtanh.pop %v3722
        %v3787 = vtanh.pop %v3723
        %v3788 = vtanh.pop %v3724
        %v3789 = vtanh.pop %v3725
        %v3790 = vtanh.pop %v3726
        %v3791 = vtanh.pop %v3727
        %v3792 = vtanh.pop %v3728
        %v3793 = vtanh.pop %v3729
        %v3794 = vtanh.pop %v3730
        %v3795 = vtanh.pop %v3731
        %v3796 = vtanh.pop %v3732
        %v3797 = vtanh.pop %v3733
        %v3798 = vtanh.pop %v3734
        %v3799 = vtanh.pop %v3735
        %v3800 = vtanh.pop %v3736
        %v3801 = vtanh.pop %v3737
        %v3802 = vtanh.pop %v3738
        %v3803 = vtanh.pop %v3739
        %v3804 = vtanh.pop %v3740
        %v3805 = vtanh.pop %v3741
        %v3806 = vtanh.pop %v3742
        %v3807 = vtanh.pop %v3743
        %v3808 = vtanh.pop %v3744
        %v3809 = vtanh.pop %v3745
        %v3810 = vtanh.pop %v3746
        %v3811 = vtanh.pop %v3747
        %v3812 = vtanh.pop %v3748
        %v3813 = vtanh.pop %v3749
        %v3814 = vtanh.pop %v3750
        %v3815 = vtanh.pop %v3751
        %v3816 = vtanh.pop %v3752
        %v3817 = vtanh.pop %v3753
        %v3818 = vtanh.pop %v3754
        %v3819 = vtanh.pop %v3755
        %v3820 = vtanh.pop %v3756
        %v3821 = vtanh.pop %v3757
        %v3822 = vtanh.pop %v3758
        %v3823 = vtanh.pop %v3759
        %v3824 = vtanh.pop %v3760
        %v3825 = vtanh.pop %v3761
        %v3826 = vtanh.pop %v3762
        %v3827 = vtanh.pop %v3763
        %v3828 = vtanh.pop %v3764
        %v3829 = vtanh.pop %v3765
        %v3830 = vtanh.pop %v3766
        %v3831 = vpack.c.bf16 %v3768, %v3767
        %v3832 = vpack.c.bf16 %v3770, %v3769
        %v3833 = vpack.c.bf16 %v3772, %v3771
        %v3834 = vpack.c.bf16 %v3774, %v3773
        %v3835 = vpack.c.bf16 %v3776, %v3775
        %v3836 = vpack.c.bf16 %v3778, %v3777
        %v3837 = vpack.c.bf16 %v3780, %v3779
        %v3838 = vpack.c.bf16 %v3782, %v3781
        %v3839 = vpack.c.bf16 %v3784, %v3783
        %v3840 = vpack.c.bf16 %v3786, %v3785
        %v3841 = vpack.c.bf16 %v3788, %v3787
        %v3842 = vpack.c.bf16 %v3790, %v3789
        %v3843 = vpack.c.bf16 %v3792, %v3791
        %v3844 = vpack.c.bf16 %v3794, %v3793
        %v3845 = vpack.c.bf16 %v3796, %v3795
        %v3846 = vpack.c.bf16 %v3798, %v3797
        %v3847 = vpack.c.bf16 %v3800, %v3799
        %v3848 = vpack.c.bf16 %v3802, %v3801
        %v3849 = vpack.c.bf16 %v3804, %v3803
        %v3850 = vpack.c.bf16 %v3806, %v3805
        %v3851 = vpack.c.bf16 %v3808, %v3807
        %v3852 = vpack.c.bf16 %v3810, %v3809
        %v3853 = vpack.c.bf16 %v3812, %v3811
        %v3854 = vpack.c.bf16 %v3814, %v3813
        %v3855 = vpack.c.bf16 %v3816, %v3815
        %v3856 = vpack.c.bf16 %v3818, %v3817
        %v3857 = vpack.c.bf16 %v3820, %v3819
        %v3858 = vpack.c.bf16 %v3822, %v3821
        %v3859 = vpack.c.bf16 %v3824, %v3823
        %v3860 = vpack.c.bf16 %v3826, %v3825
        %v3861 = vpack.c.bf16 %v3828, %v3827
        %v3862 = vpack.c.bf16 %v3830, %v3829
        %v3879 = vunpack.c.l.b16 %v389
        %v3880 = vunpack.c.l.b16 %v390
        %v3881 = vunpack.c.l.b16 %v391
        %v3882 = vunpack.c.l.b16 %v392
        %v3883 = vunpack.c.l.b16 %v393
        %v3884 = vunpack.c.l.b16 %v394
        %v3885 = vunpack.c.l.b16 %v395
        %v3886 = vunpack.c.l.b16 %v396
        %v3887 = vunpack.c.l.b16 %v397
        %v3888 = vunpack.c.l.b16 %v398
        %v3889 = vunpack.c.l.b16 %v399
        %v3890 = vunpack.c.l.b16 %v400
        %v3891 = vunpack.c.l.b16 %v401
        %v3892 = vunpack.c.l.b16 %v402
        %v3893 = vunpack.c.l.b16 %v403
        %v3894 = vunpack.c.l.b16 %v404
        %v3895 = vpack.c.b16 %v3880, %v3879
        %v3896 = vpack.c.b16 %v3882, %v3881
        %v3897 = vpack.c.b16 %v3884, %v3883
        %v3898 = vpack.c.b16 %v3886, %v3885
        %v3899 = vpack.c.b16 %v3888, %v3887
        %v3900 = vpack.c.b16 %v3890, %v3889
        %v3901 = vpack.c.b16 %v3892, %v3891
        %v3902 = vpack.c.b16 %v3894, %v3893
        %3911 = vmatpush.bf16.msra.mxu0 %v3902
        %3912 = vmatpush.bf16.msra.mxu0 %v3901
        %3913 = vmatpush.bf16.msra.mxu0 %v3900
        %3914 = vmatpush.bf16.msra.mxu0 %v3899
        %3915 = vmatpush.bf16.msra.mxu0 %v3898
        %3916 = vmatpush.bf16.msra.mxu0 %v3897
        %3917 = vmatpush.bf16.msra.mxu0 %v3896
        %3918 = vmatpush.bf16.msra.mxu0 %v3895
        %3919 = vmatmul.bf16.gmra.mxu0 %v3447
        %v3920 = vpop.f32.mrf.mxu0
        %v3921 = vadd.f32 0.0, %v3920
        %v3922 = vpop.f32.mrf.mxu0
        %v3923 = vadd.f32 0.0, %v3922
        %3924 = vmatmul.bf16.gmra.mxu0 %v3448
        %v3925 = vpop.f32.mrf.mxu0
        %v3926 = vadd.f32 0.0, %v3925
        %v3927 = vpop.f32.mrf.mxu0
        %v3928 = vadd.f32 0.0, %v3927
        %3929 = vmatmul.bf16.gmra.mxu0 %v3449
        %v3930 = vpop.f32.mrf.mxu0
        %v3931 = vadd.f32 0.0, %v3930
        %v3932 = vpop.f32.mrf.mxu0
        %v3933 = vadd.f32 0.0, %v3932
        %3934 = vmatmul.bf16.gmra.mxu0 %v3450
        %v3935 = vpop.f32.mrf.mxu0
        %v3936 = vadd.f32 0.0, %v3935
        %v3937 = vpop.f32.mrf.mxu0
        %v3938 = vadd.f32 0.0, %v3937
        %3939 = vmatmul.bf16.gmra.mxu0 %v3451
        %v3940 = vpop.f32.mrf.mxu0
        %v3941 = vadd.f32 0.0, %v3940
        %v3942 = vpop.f32.mrf.mxu0
        %v3943 = vadd.f32 0.0, %v3942
        %3944 = vmatmul.bf16.gmra.mxu0 %v3452
        %v3945 = vpop.f32.mrf.mxu0
        %v3946 = vadd.f32 0.0, %v3945
        %v3947 = vpop.f32.mrf.mxu0
        %v3948 = vadd.f32 0.0, %v3947
        %3949 = vmatmul.bf16.gmra.mxu0 %v3453
        %v3950 = vpop.f32.mrf.mxu0
        %v3951 = vadd.f32 0.0, %v3950
        %v3952 = vpop.f32.mrf.mxu0
        %v3953 = vadd.f32 0.0, %v3952
        %3954 = vmatmul.bf16.gmra.mxu0 %v3454
        %v3955 = vpop.f32.mrf.mxu0
        %v3956 = vadd.f32 0.0, %v3955
        %v3957 = vpop.f32.mrf.mxu0
        %v3958 = vadd.f32 0.0, %v3957
        %3959 = vmatmul.bf16.gmra.mxu0 %v3455
        %v3960 = vpop.f32.mrf.mxu0
        %v3961 = vadd.f32 0.0, %v3960
        %v3962 = vpop.f32.mrf.mxu0
        %v3963 = vadd.f32 0.0, %v3962
        %3964 = vmatmul.bf16.gmra.mxu0 %v3456
        %v3965 = vpop.f32.mrf.mxu0
        %v3966 = vadd.f32 0.0, %v3965
        %v3967 = vpop.f32.mrf.mxu0
        %v3968 = vadd.f32 0.0, %v3967
        %3969 = vmatmul.bf16.gmra.mxu0 %v3457
        %v3970 = vpop.f32.mrf.mxu0
        %v3971 = vadd.f32 0.0, %v3970
        %v3972 = vpop.f32.mrf.mxu0
        %v3973 = vadd.f32 0.0, %v3972
        %3974 = vmatmul.bf16.gmra.mxu0 %v3458
        %v3975 = vpop.f32.mrf.mxu0
        %v3976 = vadd.f32 0.0, %v3975
        %v3977 = vpop.f32.mrf.mxu0
        %v3978 = vadd.f32 0.0, %v3977
        %3979 = vmatmul.bf16.gmra.mxu0 %v3459
        %v3980 = vpop.f32.mrf.mxu0
        %v3981 = vadd.f32 0.0, %v3980
        %v3982 = vpop.f32.mrf.mxu0
        %v3983 = vadd.f32 0.0, %v3982
        %3984 = vmatmul.bf16.gmra.mxu0 %v3460
        %v3985 = vpop.f32.mrf.mxu0
        %v3986 = vadd.f32 0.0, %v3985
        %v3987 = vpop.f32.mrf.mxu0
        %v3988 = vadd.f32 0.0, %v3987
        %3989 = vmatmul.bf16.gmra.mxu0 %v3461
        %v3990 = vpop.f32.mrf.mxu0
        %v3991 = vadd.f32 0.0, %v3990
        %v3992 = vpop.f32.mrf.mxu0
        %v3993 = vadd.f32 0.0, %v3992
        %3994 = vmatmul.bf16.gmra.mxu0 %v3462
        %v3995 = vpop.f32.mrf.mxu0
        %v3996 = vadd.f32 0.0, %v3995
        %v3997 = vpop.f32.mrf.mxu0
        %v3998 = vadd.f32 0.0, %v3997
        %3999 = vmatmul.bf16.gmra.mxu0 %v3463
        %v4000 = vpop.f32.mrf.mxu0
        %v4001 = vadd.f32 0.0, %v4000
        %v4002 = vpop.f32.mrf.mxu0
        %v4003 = vadd.f32 0.0, %v4002
        %4004 = vmatmul.bf16.gmra.mxu0 %v3464
        %v4005 = vpop.f32.mrf.mxu0
        %v4006 = vadd.f32 0.0, %v4005
        %v4007 = vpop.f32.mrf.mxu0
        %v4008 = vadd.f32 0.0, %v4007
        %4009 = vmatmul.bf16.gmra.mxu0 %v3465
        %v4010 = vpop.f32.mrf.mxu0
        %v4011 = vadd.f32 0.0, %v4010
        %v4012 = vpop.f32.mrf.mxu0
        %v4013 = vadd.f32 0.0, %v4012
        %4014 = vmatmul.bf16.gmra.mxu0 %v3466
        %v4015 = vpop.f32.mrf.mxu0
        %v4016 = vadd.f32 0.0, %v4015
        %v4017 = vpop.f32.mrf.mxu0
        %v4018 = vadd.f32 0.0, %v4017
        %4019 = vmatmul.bf16.gmra.mxu0 %v3467
        %v4020 = vpop.f32.mrf.mxu0
        %v4021 = vadd.f32 0.0, %v4020
        %v4022 = vpop.f32.mrf.mxu0
        %v4023 = vadd.f32 0.0, %v4022
        %4024 = vmatmul.bf16.gmra.mxu0 %v3468
        %v4025 = vpop.f32.mrf.mxu0
        %v4026 = vadd.f32 0.0, %v4025
        %v4027 = vpop.f32.mrf.mxu0
        %v4028 = vadd.f32 0.0, %v4027
        %4029 = vmatmul.bf16.gmra.mxu0 %v3469
        %v4030 = vpop.f32.mrf.mxu0
        %v4031 = vadd.f32 0.0, %v4030
        %v4032 = vpop.f32.mrf.mxu0
        %v4033 = vadd.f32 0.0, %v4032
        %4034 = vmatmul.bf16.gmra.mxu0 %v3470
        %v4035 = vpop.f32.mrf.mxu0
        %v4036 = vadd.f32 0.0, %v4035
        %v4037 = vpop.f32.mrf.mxu0
        %v4038 = vadd.f32 0.0, %v4037
        %4039 = vmatmul.bf16.gmra.mxu0 %v3471
        %v4040 = vpop.f32.mrf.mxu0
        %v4041 = vadd.f32 0.0, %v4040
        %v4042 = vpop.f32.mrf.mxu0
        %v4043 = vadd.f32 0.0, %v4042
        %4044 = vmatmul.bf16.gmra.mxu0 %v3472
        %v4045 = vpop.f32.mrf.mxu0
        %v4046 = vadd.f32 0.0, %v4045
        %v4047 = vpop.f32.mrf.mxu0
        %v4048 = vadd.f32 0.0, %v4047
        %4049 = vmatmul.bf16.gmra.mxu0 %v3473
        %v4050 = vpop.f32.mrf.mxu0
        %v4051 = vadd.f32 0.0, %v4050
        %v4052 = vpop.f32.mrf.mxu0
        %v4053 = vadd.f32 0.0, %v4052
        %4054 = vmatmul.bf16.gmra.mxu0 %v3474
        %v4055 = vpop.f32.mrf.mxu0
        %v4056 = vadd.f32 0.0, %v4055
        %v4057 = vpop.f32.mrf.mxu0
        %v4058 = vadd.f32 0.0, %v4057
        %4059 = vmatmul.bf16.gmra.mxu0 %v3475
        %v4060 = vpop.f32.mrf.mxu0
        %v4061 = vadd.f32 0.0, %v4060
        %v4062 = vpop.f32.mrf.mxu0
        %v4063 = vadd.f32 0.0, %v4062
        %4064 = vmatmul.bf16.gmra.mxu0 %v3476
        %v4065 = vpop.f32.mrf.mxu0
        %v4066 = vadd.f32 0.0, %v4065
        %v4067 = vpop.f32.mrf.mxu0
        %v4068 = vadd.f32 0.0, %v4067
        %4069 = vmatmul.bf16.gmra.mxu0 %v3477
        %v4070 = vpop.f32.mrf.mxu0
        %v4071 = vadd.f32 0.0, %v4070
        %v4072 = vpop.f32.mrf.mxu0
        %v4073 = vadd.f32 0.0, %v4072
        %4074 = vmatmul.bf16.gmra.mxu0 %v3478
        %v4075 = vpop.f32.mrf.mxu0
        %v4076 = vadd.f32 0.0, %v4075
        %v4077 = vpop.f32.mrf.mxu0
        %v4078 = vadd.f32 0.0, %v4077
        %4079 = vdwg.mxu0
        %4080 = vset.pattern.permute.xlu0 1
        %4081 = vperm.xlu0 %4080, %v309
        %v4082 = vpop.permute.xlu0 %4081
        %4084 = vset.pattern.permute.xlu0 1
        %4085 = vperm.xlu0 %4084, %v310
        %v4086 = vpop.permute.xlu0 %4085
        %4088 = vset.pattern.permute.xlu0 1
        %4089 = vperm.xlu0 %4088, %v311
        %v4090 = vpop.permute.xlu0 %4089
        %4092 = vset.pattern.permute.xlu0 1
        %4093 = vperm.xlu0 %4092, %v312
        %v4094 = vpop.permute.xlu0 %4093
        %4096 = vset.pattern.permute.xlu0 1
        %4097 = vperm.xlu0 %4096, %v313
        %v4098 = vpop.permute.xlu0 %4097
        %4100 = vset.pattern.permute.xlu0 1
        %4101 = vperm.xlu0 %4100, %v314
        %v4102 = vpop.permute.xlu0 %4101
        %4104 = vset.pattern.permute.xlu0 1
        %4105 = vperm.xlu0 %4104, %v315
        %v4106 = vpop.permute.xlu0 %4105
        %4108 = vset.pattern.permute.xlu0 1
        %4109 = vperm.xlu0 %4108, %v316
        %v4110 = vpop.permute.xlu0 %4109
        %4112 = vset.pattern.permute.xlu0 1
        %4113 = vperm.xlu0 %4112, %v317
        %v4114 = vpop.permute.xlu0 %4113
        %4116 = vset.pattern.permute.xlu0 1
        %4117 = vperm.xlu0 %4116, %v318
        %v4118 = vpop.permute.xlu0 %4117
        %4120 = vset.pattern.permute.xlu0 1
        %4121 = vperm.xlu0 %4120, %v319
        %v4122 = vpop.permute.xlu0 %4121
        %4124 = vset.pattern.permute.xlu0 1
        %4125 = vperm.xlu0 %4124, %v320
        %v4126 = vpop.permute.xlu0 %4125
        %4128 = vset.pattern.permute.xlu0 1
        %4129 = vperm.xlu0 %4128, %v321
        %v4130 = vpop.permute.xlu0 %4129
        %4132 = vset.pattern.permute.xlu0 1
        %4133 = vperm.xlu0 %4132, %v322
        %v4134 = vpop.permute.xlu0 %4133
        %4136 = vset.pattern.permute.xlu0 1
        %4137 = vperm.xlu0 %4136, %v323
        %v4138 = vpop.permute.xlu0 %4137
        %4140 = vset.pattern.permute.xlu0 1
        %4141 = vperm.xlu0 %4140, %v324
        %v4142 = vpop.permute.xlu0 %4141
        %4144 = vset.pattern.permute.xlu0 1
        %4145 = vperm.xlu0 %4144, %v325
        %v4146 = vpop.permute.xlu0 %4145
        %4148 = vset.pattern.permute.xlu0 1
        %4149 = vperm.xlu0 %4148, %v326
        %v4150 = vpop.permute.xlu0 %4149
        %4152 = vset.pattern.permute.xlu0 1
        %4153 = vperm.xlu0 %4152, %v327
        %v4154 = vpop.permute.xlu0 %4153
        %4156 = vset.pattern.permute.xlu0 1
        %4157 = vperm.xlu0 %4156, %v328
        %v4158 = vpop.permute.xlu0 %4157
        %4160 = vset.pattern.permute.xlu0 1
        %4161 = vperm.xlu0 %4160, %v329
        %v4162 = vpop.permute.xlu0 %4161
        %4164 = vset.pattern.permute.xlu0 1
        %4165 = vperm.xlu0 %4164, %v330
        %v4166 = vpop.permute.xlu0 %4165
        %4168 = vset.pattern.permute.xlu0 1
        %4169 = vperm.xlu0 %4168, %v331
        %v4170 = vpop.permute.xlu0 %4169
        %4172 = vset.pattern.permute.xlu0 1
        %4173 = vperm.xlu0 %4172, %v332
        %v4174 = vpop.permute.xlu0 %4173
        %4176 = vset.pattern.permute.xlu0 1
        %4177 = vperm.xlu0 %4176, %v333
        %v4178 = vpop.permute.xlu0 %4177
        %4180 = vset.pattern.permute.xlu0 1
        %4181 = vperm.xlu0 %4180, %v334
        %v4182 = vpop.permute.xlu0 %4181
        %4184 = vset.pattern.permute.xlu0 1
        %4185 = vperm.xlu0 %4184, %v335
        %v4186 = vpop.permute.xlu0 %4185
        %4188 = vset.pattern.permute.xlu0 1
        %4189 = vperm.xlu0 %4188, %v336
        %v4190 = vpop.permute.xlu0 %4189
        %4192 = vset.pattern.permute.xlu0 1
        %4193 = vperm.xlu0 %4192, %v337
        %v4194 = vpop.permute.xlu0 %4193
        %4196 = vset.pattern.permute.xlu0 1
        %4197 = vperm.xlu0 %4196, %v338
        %v4198 = vpop.permute.xlu0 %4197
        %4200 = vset.pattern.permute.xlu0 1
        %4201 = vperm.xlu0 %4200, %v339
        %v4202 = vpop.permute.xlu0 %4201
        %4204 = vset.pattern.permute.xlu0 1
        %4205 = vperm.xlu0 %4204, %v340
        %v4206 = vpop.permute.xlu0 %4205
        %4208 = vset.pattern.permute.xlu0 1
        %4209 = vperm.xlu0 %4208, %v341
        %v4210 = vpop.permute.xlu0 %4209
        %4212 = vset.pattern.permute.xlu0 1
        %4213 = vperm.xlu0 %4212, %v342
        %v4214 = vpop.permute.xlu0 %4213
        %4216 = vset.pattern.permute.xlu0 1
        %4217 = vperm.xlu0 %4216, %v343
        %v4218 = vpop.permute.xlu0 %4217
        %4220 = vset.pattern.permute.xlu0 1
        %4221 = vperm.xlu0 %4220, %v344
        %v4222 = vpop.permute.xlu0 %4221
        %4224 = vset.pattern.permute.xlu0 1
        %4225 = vperm.xlu0 %4224, %v345
        %v4226 = vpop.permute.xlu0 %4225
        %4228 = vset.pattern.permute.xlu0 1
        %4229 = vperm.xlu0 %4228, %v346
        %v4230 = vpop.permute.xlu0 %4229
        %4232 = vset.pattern.permute.xlu0 1
        %4233 = vperm.xlu0 %4232, %v347
        %v4234 = vpop.permute.xlu0 %4233
        %4236 = vset.pattern.permute.xlu0 1
        %4237 = vperm.xlu0 %4236, %v348
        %v4238 = vpop.permute.xlu0 %4237
        %4240 = vset.pattern.permute.xlu0 1
        %4241 = vperm.xlu0 %4240, %v349
        %v4242 = vpop.permute.xlu0 %4241
        %4244 = vset.pattern.permute.xlu0 1
        %4245 = vperm.xlu0 %4244, %v350
        %v4246 = vpop.permute.xlu0 %4245
        %4248 = vset.pattern.permute.xlu0 1
        %4249 = vperm.xlu0 %4248, %v351
        %v4250 = vpop.permute.xlu0 %4249
        %4252 = vset.pattern.permute.xlu0 1
        %4253 = vperm.xlu0 %4252, %v352
        %v4254 = vpop.permute.xlu0 %4253
        %4256 = vset.pattern.permute.xlu0 1
        %4257 = vperm.xlu0 %4256, %v353
        %v4258 = vpop.permute.xlu0 %4257
        %4260 = vset.pattern.permute.xlu0 1
        %4261 = vperm.xlu0 %4260, %v354
        %v4262 = vpop.permute.xlu0 %4261
        %4264 = vset.pattern.permute.xlu0 1
        %4265 = vperm.xlu0 %4264, %v355
        %v4266 = vpop.permute.xlu0 %4265
        %4268 = vset.pattern.permute.xlu0 1
        %4269 = vperm.xlu0 %4268, %v356
        %v4270 = vpop.permute.xlu0 %4269
        %4272 = vset.pattern.permute.xlu0 1
        %4273 = vperm.xlu0 %4272, %v357
        %v4274 = vpop.permute.xlu0 %4273
        %4276 = vset.pattern.permute.xlu0 1
        %4277 = vperm.xlu0 %4276, %v358
        %v4278 = vpop.permute.xlu0 %4277
        %4280 = vset.pattern.permute.xlu0 1
        %4281 = vperm.xlu0 %4280, %v359
        %v4282 = vpop.permute.xlu0 %4281
        %4284 = vset.pattern.permute.xlu0 1
        %4285 = vperm.xlu0 %4284, %v360
        %v4286 = vpop.permute.xlu0 %4285
        %4288 = vset.pattern.permute.xlu0 1
        %4289 = vperm.xlu0 %4288, %v361
        %v4290 = vpop.permute.xlu0 %4289
        %4292 = vset.pattern.permute.xlu0 1
        %4293 = vperm.xlu0 %4292, %v362
        %v4294 = vpop.permute.xlu0 %4293
        %4296 = vset.pattern.permute.xlu0 1
        %4297 = vperm.xlu0 %4296, %v363
        %v4298 = vpop.permute.xlu0 %4297
        %4300 = vset.pattern.permute.xlu0 1
        %4301 = vperm.xlu0 %4300, %v364
        %v4302 = vpop.permute.xlu0 %4301
        %4304 = vset.pattern.permute.xlu0 1
        %4305 = vperm.xlu0 %4304, %v365
        %v4306 = vpop.permute.xlu0 %4305
        %4308 = vset.pattern.permute.xlu0 1
        %4309 = vperm.xlu0 %4308, %v366
        %v4310 = vpop.permute.xlu0 %4309
        %4312 = vset.pattern.permute.xlu0 1
        %4313 = vperm.xlu0 %4312, %v367
        %v4314 = vpop.permute.xlu0 %4313
        %4316 = vset.pattern.permute.xlu0 1
        %4317 = vperm.xlu0 %4316, %v368
        %v4318 = vpop.permute.xlu0 %4317
        %4320 = vset.pattern.permute.xlu0 1
        %4321 = vperm.xlu0 %4320, %v369
        %v4322 = vpop.permute.xlu0 %4321
        %4324 = vset.pattern.permute.xlu0 1
        %4325 = vperm.xlu0 %4324, %v370
        %v4326 = vpop.permute.xlu0 %4325
        %4328 = vset.pattern.permute.xlu0 1
        %4329 = vperm.xlu0 %4328, %v371
        %v4330 = vpop.permute.xlu0 %4329
        %4332 = vset.pattern.permute.xlu0 1
        %4333 = vperm.xlu0 %4332, %v372
        %v4334 = vpop.permute.xlu0 %4333
        %v4336 = vmul.f32 %v3921, %v4082
        %v4337 = vmul.f32 %v3923, %v4086
        %v4338 = vmul.f32 %v3926, %v4090
        %v4339 = vmul.f32 %v3928, %v4094
        %v4340 = vmul.f32 %v3931, %v4098
        %v4341 = vmul.f32 %v3933, %v4102
        %v4342 = vmul.f32 %v3936, %v4106
        %v4343 = vmul.f32 %v3938, %v4110
        %v4344 = vmul.f32 %v3941, %v4114
        %v4345 = vmul.f32 %v3943, %v4118
        %v4346 = vmul.f32 %v3946, %v4122
        %v4347 = vmul.f32 %v3948, %v4126
        %v4348 = vmul.f32 %v3951, %v4130
        %v4349 = vmul.f32 %v3953, %v4134
        %v4350 = vmul.f32 %v3956, %v4138
        %v4351 = vmul.f32 %v3958, %v4142
        %v4352 = vmul.f32 %v3961, %v4146
        %v4353 = vmul.f32 %v3963, %v4150
        %v4354 = vmul.f32 %v3966, %v4154
        %v4355 = vmul.f32 %v3968, %v4158
        %v4356 = vmul.f32 %v3971, %v4162
        %v4357 = vmul.f32 %v3973, %v4166
        %v4358 = vmul.f32 %v3976, %v4170
        %v4359 = vmul.f32 %v3978, %v4174
        %v4360 = vmul.f32 %v3981, %v4178
        %v4361 = vmul.f32 %v3983, %v4182
        %v4362 = vmul.f32 %v3986, %v4186
        %v4363 = vmul.f32 %v3988, %v4190
        %v4364 = vmul.f32 %v3991, %v4194
        %v4365 = vmul.f32 %v3993, %v4198
        %v4366 = vmul.f32 %v3996, %v4202
        %v4367 = vmul.f32 %v3998, %v4206
        %v4368 = vmul.f32 %v4001, %v4210
        %v4369 = vmul.f32 %v4003, %v4214
        %v4370 = vmul.f32 %v4006, %v4218
        %v4371 = vmul.f32 %v4008, %v4222
        %v4372 = vmul.f32 %v4011, %v4226
        %v4373 = vmul.f32 %v4013, %v4230
        %v4374 = vmul.f32 %v4016, %v4234
        %v4375 = vmul.f32 %v4018, %v4238
        %v4376 = vmul.f32 %v4021, %v4242
        %v4377 = vmul.f32 %v4023, %v4246
        %v4378 = vmul.f32 %v4026, %v4250
        %v4379 = vmul.f32 %v4028, %v4254
        %v4380 = vmul.f32 %v4031, %v4258
        %v4381 = vmul.f32 %v4033, %v4262
        %v4382 = vmul.f32 %v4036, %v4266
        %v4383 = vmul.f32 %v4038, %v4270
        %v4384 = vmul.f32 %v4041, %v4274
        %v4385 = vmul.f32 %v4043, %v4278
        %v4386 = vmul.f32 %v4046, %v4282
        %v4387 = vmul.f32 %v4048, %v4286
        %v4388 = vmul.f32 %v4051, %v4290
        %v4389 = vmul.f32 %v4053, %v4294
        %v4390 = vmul.f32 %v4056, %v4298
        %v4391 = vmul.f32 %v4058, %v4302
        %v4392 = vmul.f32 %v4061, %v4306
        %v4393 = vmul.f32 %v4063, %v4310
        %v4394 = vmul.f32 %v4066, %v4314
        %v4395 = vmul.f32 %v4068, %v4318
        %v4396 = vmul.f32 %v4071, %v4322
        %v4397 = vmul.f32 %v4073, %v4326
        %v4398 = vmul.f32 %v4076, %v4330
        %v4399 = vmul.f32 %v4078, %v4334
        %4400 = vset.pattern.permute.xlu0 4
        %4401 = vperm.xlu0 %4400, %v309
        %v4402 = vpop.permute.xlu0 %4401
        %4404 = vset.pattern.permute.xlu0 4
        %4405 = vperm.xlu0 %4404, %v310
        %v4406 = vpop.permute.xlu0 %4405
        %4408 = vset.pattern.permute.xlu0 4
        %4409 = vperm.xlu0 %4408, %v311
        %v4410 = vpop.permute.xlu0 %4409
        %4412 = vset.pattern.permute.xlu0 4
        %4413 = vperm.xlu0 %4412, %v312
        %v4414 = vpop.permute.xlu0 %4413
        %4416 = vset.pattern.permute.xlu0 4
        %4417 = vperm.xlu0 %4416, %v313
        %v4418 = vpop.permute.xlu0 %4417
        %4420 = vset.pattern.permute.xlu0 4
        %4421 = vperm.xlu0 %4420, %v314
        %v4422 = vpop.permute.xlu0 %4421
        %4424 = vset.pattern.permute.xlu0 4
        %4425 = vperm.xlu0 %4424, %v315
        %v4426 = vpop.permute.xlu0 %4425
        %4428 = vset.pattern.permute.xlu0 4
        %4429 = vperm.xlu0 %4428, %v316
        %v4430 = vpop.permute.xlu0 %4429
        %4432 = vset.pattern.permute.xlu0 4
        %4433 = vperm.xlu0 %4432, %v317
        %v4434 = vpop.permute.xlu0 %4433
        %4436 = vset.pattern.permute.xlu0 4
        %4437 = vperm.xlu0 %4436, %v318
        %v4438 = vpop.permute.xlu0 %4437
        %4440 = vset.pattern.permute.xlu0 4
        %4441 = vperm.xlu0 %4440, %v319
        %v4442 = vpop.permute.xlu0 %4441
        %4444 = vset.pattern.permute.xlu0 4
        %4445 = vperm.xlu0 %4444, %v320
        %v4446 = vpop.permute.xlu0 %4445
        %4448 = vset.pattern.permute.xlu0 4
        %4449 = vperm.xlu0 %4448, %v321
        %v4450 = vpop.permute.xlu0 %4449
        %4452 = vset.pattern.permute.xlu0 4
        %4453 = vperm.xlu0 %4452, %v322
        %v4454 = vpop.permute.xlu0 %4453
        %4456 = vset.pattern.permute.xlu0 4
        %4457 = vperm.xlu0 %4456, %v323
        %v4458 = vpop.permute.xlu0 %4457
        %4460 = vset.pattern.permute.xlu0 4
        %4461 = vperm.xlu0 %4460, %v324
        %v4462 = vpop.permute.xlu0 %4461
        %4464 = vset.pattern.permute.xlu0 4
        %4465 = vperm.xlu0 %4464, %v325
        %v4466 = vpop.permute.xlu0 %4465
        %4468 = vset.pattern.permute.xlu0 4
        %4469 = vperm.xlu0 %4468, %v326
        %v4470 = vpop.permute.xlu0 %4469
        %4472 = vset.pattern.permute.xlu0 4
        %4473 = vperm.xlu0 %4472, %v327
        %v4474 = vpop.permute.xlu0 %4473
        %4476 = vset.pattern.permute.xlu0 4
        %4477 = vperm.xlu0 %4476, %v328
        %v4478 = vpop.permute.xlu0 %4477
        %4480 = vset.pattern.permute.xlu0 4
        %4481 = vperm.xlu0 %4480, %v329
        %v4482 = vpop.permute.xlu0 %4481
        %4484 = vset.pattern.permute.xlu0 4
        %4485 = vperm.xlu0 %4484, %v330
        %v4486 = vpop.permute.xlu0 %4485
        %4488 = vset.pattern.permute.xlu0 4
        %4489 = vperm.xlu0 %4488, %v331
        %v4490 = vpop.permute.xlu0 %4489
        %4492 = vset.pattern.permute.xlu0 4
        %4493 = vperm.xlu0 %4492, %v332
        %v4494 = vpop.permute.xlu0 %4493
        %4496 = vset.pattern.permute.xlu0 4
        %4497 = vperm.xlu0 %4496, %v333
        %v4498 = vpop.permute.xlu0 %4497
        %4500 = vset.pattern.permute.xlu0 4
        %4501 = vperm.xlu0 %4500, %v334
        %v4502 = vpop.permute.xlu0 %4501
        %4504 = vset.pattern.permute.xlu0 4
        %4505 = vperm.xlu0 %4504, %v335
        %v4506 = vpop.permute.xlu0 %4505
        %4508 = vset.pattern.permute.xlu0 4
        %4509 = vperm.xlu0 %4508, %v336
        %v4510 = vpop.permute.xlu0 %4509
        %4512 = vset.pattern.permute.xlu0 4
        %4513 = vperm.xlu0 %4512, %v337
        %v4514 = vpop.permute.xlu0 %4513
        %4516 = vset.pattern.permute.xlu0 4
        %4517 = vperm.xlu0 %4516, %v338
        %v4518 = vpop.permute.xlu0 %4517
        %4520 = vset.pattern.permute.xlu0 4
        %4521 = vperm.xlu0 %4520, %v339
        %v4522 = vpop.permute.xlu0 %4521
        %4524 = vset.pattern.permute.xlu0 4
        %4525 = vperm.xlu0 %4524, %v340
        %v4526 = vpop.permute.xlu0 %4525
        %4528 = vset.pattern.permute.xlu0 4
        %4529 = vperm.xlu0 %4528, %v341
        %v4530 = vpop.permute.xlu0 %4529
        %4532 = vset.pattern.permute.xlu0 4
        %4533 = vperm.xlu0 %4532, %v342
        %v4534 = vpop.permute.xlu0 %4533
        %4536 = vset.pattern.permute.xlu0 4
        %4537 = vperm.xlu0 %4536, %v343
        %v4538 = vpop.permute.xlu0 %4537
        %4540 = vset.pattern.permute.xlu0 4
        %4541 = vperm.xlu0 %4540, %v344
        %v4542 = vpop.permute.xlu0 %4541
        %4544 = vset.pattern.permute.xlu0 4
        %4545 = vperm.xlu0 %4544, %v345
        %v4546 = vpop.permute.xlu0 %4545
        %4548 = vset.pattern.permute.xlu0 4
        %4549 = vperm.xlu0 %4548, %v346
        %v4550 = vpop.permute.xlu0 %4549
        %4552 = vset.pattern.permute.xlu0 4
        %4553 = vperm.xlu0 %4552, %v347
        %v4554 = vpop.permute.xlu0 %4553
        %4556 = vset.pattern.permute.xlu0 4
        %4557 = vperm.xlu0 %4556, %v348
        %v4558 = vpop.permute.xlu0 %4557
        %4560 = vset.pattern.permute.xlu0 4
        %4561 = vperm.xlu0 %4560, %v349
        %v4562 = vpop.permute.xlu0 %4561
        %4564 = vset.pattern.permute.xlu0 4
        %4565 = vperm.xlu0 %4564, %v350
        %v4566 = vpop.permute.xlu0 %4565
        %4568 = vset.pattern.permute.xlu0 4
        %4569 = vperm.xlu0 %4568, %v351
        %v4570 = vpop.permute.xlu0 %4569
        %4572 = vset.pattern.permute.xlu0 4
        %4573 = vperm.xlu0 %4572, %v352
        %v4574 = vpop.permute.xlu0 %4573
        %4576 = vset.pattern.permute.xlu0 4
        %4577 = vperm.xlu0 %4576, %v353
        %v4578 = vpop.permute.xlu0 %4577
        %4580 = vset.pattern.permute.xlu0 4
        %4581 = vperm.xlu0 %4580, %v354
        %v4582 = vpop.permute.xlu0 %4581
        %4584 = vset.pattern.permute.xlu0 4
        %4585 = vperm.xlu0 %4584, %v355
        %v4586 = vpop.permute.xlu0 %4585
        %4588 = vset.pattern.permute.xlu0 4
        %4589 = vperm.xlu0 %4588, %v356
        %v4590 = vpop.permute.xlu0 %4589
        %4592 = vset.pattern.permute.xlu0 4
        %4593 = vperm.xlu0 %4592, %v357
        %v4594 = vpop.permute.xlu0 %4593
        %4596 = vset.pattern.permute.xlu0 4
        %4597 = vperm.xlu0 %4596, %v358
        %v4598 = vpop.permute.xlu0 %4597
        %4600 = vset.pattern.permute.xlu0 4
        %4601 = vperm.xlu0 %4600, %v359
        %v4602 = vpop.permute.xlu0 %4601
        %4604 = vset.pattern.permute.xlu0 4
        %4605 = vperm.xlu0 %4604, %v360
        %v4606 = vpop.permute.xlu0 %4605
        %4608 = vset.pattern.permute.xlu0 4
        %4609 = vperm.xlu0 %4608, %v361
        %v4610 = vpop.permute.xlu0 %4609
        %4612 = vset.pattern.permute.xlu0 4
        %4613 = vperm.xlu0 %4612, %v362
        %v4614 = vpop.permute.xlu0 %4613
        %4616 = vset.pattern.permute.xlu0 4
        %4617 = vperm.xlu0 %4616, %v363
        %v4618 = vpop.permute.xlu0 %4617
        %4620 = vset.pattern.permute.xlu0 4
        %4621 = vperm.xlu0 %4620, %v364
        %v4622 = vpop.permute.xlu0 %4621
        %4624 = vset.pattern.permute.xlu0 4
        %4625 = vperm.xlu0 %4624, %v365
        %v4626 = vpop.permute.xlu0 %4625
        %4628 = vset.pattern.permute.xlu0 4
        %4629 = vperm.xlu0 %4628, %v366
        %v4630 = vpop.permute.xlu0 %4629
        %4632 = vset.pattern.permute.xlu0 4
        %4633 = vperm.xlu0 %4632, %v367
        %v4634 = vpop.permute.xlu0 %4633
        %4636 = vset.pattern.permute.xlu0 4
        %4637 = vperm.xlu0 %4636, %v368
        %v4638 = vpop.permute.xlu0 %4637
        %4640 = vset.pattern.permute.xlu0 4
        %4641 = vperm.xlu0 %4640, %v369
        %v4642 = vpop.permute.xlu0 %4641
        %4644 = vset.pattern.permute.xlu0 4
        %4645 = vperm.xlu0 %4644, %v370
        %v4646 = vpop.permute.xlu0 %4645
        %4648 = vset.pattern.permute.xlu0 4
        %4649 = vperm.xlu0 %4648, %v371
        %v4650 = vpop.permute.xlu0 %4649
        %4652 = vset.pattern.permute.xlu0 4
        %4653 = vperm.xlu0 %4652, %v372
        %v4654 = vpop.permute.xlu0 %4653
        %v4656 = vadd.f32 %v4336, %v4402
        %v4657 = vadd.f32 %v4337, %v4406
        %v4658 = vadd.f32 %v4338, %v4410
        %v4659 = vadd.f32 %v4339, %v4414
        %v4660 = vadd.f32 %v4340, %v4418
        %v4661 = vadd.f32 %v4341, %v4422
        %v4662 = vadd.f32 %v4342, %v4426
        %v4663 = vadd.f32 %v4343, %v4430
        %v4664 = vadd.f32 %v4344, %v4434
        %v4665 = vadd.f32 %v4345, %v4438
        %v4666 = vadd.f32 %v4346, %v4442
        %v4667 = vadd.f32 %v4347, %v4446
        %v4668 = vadd.f32 %v4348, %v4450
        %v4669 = vadd.f32 %v4349, %v4454
        %v4670 = vadd.f32 %v4350, %v4458
        %v4671 = vadd.f32 %v4351, %v4462
        %v4672 = vadd.f32 %v4352, %v4466
        %v4673 = vadd.f32 %v4353, %v4470
        %v4674 = vadd.f32 %v4354, %v4474
        %v4675 = vadd.f32 %v4355, %v4478
        %v4676 = vadd.f32 %v4356, %v4482
        %v4677 = vadd.f32 %v4357, %v4486
        %v4678 = vadd.f32 %v4358, %v4490
        %v4679 = vadd.f32 %v4359, %v4494
        %v4680 = vadd.f32 %v4360, %v4498
        %v4681 = vadd.f32 %v4361, %v4502
        %v4682 = vadd.f32 %v4362, %v4506
        %v4683 = vadd.f32 %v4363, %v4510
        %v4684 = vadd.f32 %v4364, %v4514
        %v4685 = vadd.f32 %v4365, %v4518
        %v4686 = vadd.f32 %v4366, %v4522
        %v4687 = vadd.f32 %v4367, %v4526
        %v4688 = vadd.f32 %v4368, %v4530
        %v4689 = vadd.f32 %v4369, %v4534
        %v4690 = vadd.f32 %v4370, %v4538
        %v4691 = vadd.f32 %v4371, %v4542
        %v4692 = vadd.f32 %v4372, %v4546
        %v4693 = vadd.f32 %v4373, %v4550
        %v4694 = vadd.f32 %v4374, %v4554
        %v4695 = vadd.f32 %v4375, %v4558
        %v4696 = vadd.f32 %v4376, %v4562
        %v4697 = vadd.f32 %v4377, %v4566
        %v4698 = vadd.f32 %v4378, %v4570
        %v4699 = vadd.f32 %v4379, %v4574
        %v4700 = vadd.f32 %v4380, %v4578
        %v4701 = vadd.f32 %v4381, %v4582
        %v4702 = vadd.f32 %v4382, %v4586
        %v4703 = vadd.f32 %v4383, %v4590
        %v4704 = vadd.f32 %v4384, %v4594
        %v4705 = vadd.f32 %v4385, %v4598
        %v4706 = vadd.f32 %v4386, %v4602
        %v4707 = vadd.f32 %v4387, %v4606
        %v4708 = vadd.f32 %v4388, %v4610
        %v4709 = vadd.f32 %v4389, %v4614
        %v4710 = vadd.f32 %v4390, %v4618
        %v4711 = vadd.f32 %v4391, %v4622
        %v4712 = vadd.f32 %v4392, %v4626
        %v4713 = vadd.f32 %v4393, %v4630
        %v4714 = vadd.f32 %v4394, %v4634
        %v4715 = vadd.f32 %v4395, %v4638
        %v4716 = vadd.f32 %v4396, %v4642
        %v4717 = vadd.f32 %v4397, %v4646
        %v4718 = vadd.f32 %v4398, %v4650
        %v4719 = vadd.f32 %v4399, %v4654
        %4720 = vmatpush.bf16.msra.mxu0 %v3902
        %4721 = vmatpush.bf16.msra.mxu0 %v3901
        %4722 = vmatpush.bf16.msra.mxu0 %v3900
        %4723 = vmatpush.bf16.msra.mxu0 %v3899
        %4724 = vmatpush.bf16.msra.mxu0 %v3898
        %4725 = vmatpush.bf16.msra.mxu0 %v3897
        %4726 = vmatpush.bf16.msra.mxu0 %v3896
        %4727 = vmatpush.bf16.msra.mxu0 %v3895
        %4728 = vmatmul.bf16.gmra.mxu0 %v3639
        %v4729 = vpop.f32.mrf.mxu0
        %v4730 = vadd.f32 0.0, %v4729
        %v4731 = vpop.f32.mrf.mxu0
        %v4732 = vadd.f32 0.0, %v4731
        %4733 = vmatmul.bf16.gmra.mxu0 %v3640
        %v4734 = vpop.f32.mrf.mxu0
        %v4735 = vadd.f32 0.0, %v4734
        %v4736 = vpop.f32.mrf.mxu0
        %v4737 = vadd.f32 0.0, %v4736
        %4738 = vmatmul.bf16.gmra.mxu0 %v3641
        %v4739 = vpop.f32.mrf.mxu0
        %v4740 = vadd.f32 0.0, %v4739
        %v4741 = vpop.f32.mrf.mxu0
        %v4742 = vadd.f32 0.0, %v4741
        %4743 = vmatmul.bf16.gmra.mxu0 %v3642
        %v4744 = vpop.f32.mrf.mxu0
        %v4745 = vadd.f32 0.0, %v4744
        %v4746 = vpop.f32.mrf.mxu0
        %v4747 = vadd.f32 0.0, %v4746
        %4748 = vmatmul.bf16.gmra.mxu0 %v3643
        %v4749 = vpop.f32.mrf.mxu0
        %v4750 = vadd.f32 0.0, %v4749
        %v4751 = vpop.f32.mrf.mxu0
        %v4752 = vadd.f32 0.0, %v4751
        %4753 = vmatmul.bf16.gmra.mxu0 %v3644
        %v4754 = vpop.f32.mrf.mxu0
        %v4755 = vadd.f32 0.0, %v4754
        %v4756 = vpop.f32.mrf.mxu0
        %v4757 = vadd.f32 0.0, %v4756
        %4758 = vmatmul.bf16.gmra.mxu0 %v3645
        %v4759 = vpop.f32.mrf.mxu0
        %v4760 = vadd.f32 0.0, %v4759
        %v4761 = vpop.f32.mrf.mxu0
        %v4762 = vadd.f32 0.0, %v4761
        %4763 = vmatmul.bf16.gmra.mxu0 %v3646
        %v4764 = vpop.f32.mrf.mxu0
        %v4765 = vadd.f32 0.0, %v4764
        %v4766 = vpop.f32.mrf.mxu0
        %v4767 = vadd.f32 0.0, %v4766
        %4768 = vmatmul.bf16.gmra.mxu0 %v3647
        %v4769 = vpop.f32.mrf.mxu0
        %v4770 = vadd.f32 0.0, %v4769
        %v4771 = vpop.f32.mrf.mxu0
        %v4772 = vadd.f32 0.0, %v4771
        %4773 = vmatmul.bf16.gmra.mxu0 %v3648
        %v4774 = vpop.f32.mrf.mxu0
        %v4775 = vadd.f32 0.0, %v4774
        %v4776 = vpop.f32.mrf.mxu0
        %v4777 = vadd.f32 0.0, %v4776
        %4778 = vmatmul.bf16.gmra.mxu0 %v3649
        %v4779 = vpop.f32.mrf.mxu0
        %v4780 = vadd.f32 0.0, %v4779
        %v4781 = vpop.f32.mrf.mxu0
        %v4782 = vadd.f32 0.0, %v4781
        %4783 = vmatmul.bf16.gmra.mxu0 %v3650
        %v4784 = vpop.f32.mrf.mxu0
        %v4785 = vadd.f32 0.0, %v4784
        %v4786 = vpop.f32.mrf.mxu0
        %v4787 = vadd.f32 0.0, %v4786
        %4788 = vmatmul.bf16.gmra.mxu0 %v3651
        %v4789 = vpop.f32.mrf.mxu0
        %v4790 = vadd.f32 0.0, %v4789
        %v4791 = vpop.f32.mrf.mxu0
        %v4792 = vadd.f32 0.0, %v4791
        %4793 = vmatmul.bf16.gmra.mxu0 %v3652
        %v4794 = vpop.f32.mrf.mxu0
        %v4795 = vadd.f32 0.0, %v4794
        %v4796 = vpop.f32.mrf.mxu0
        %v4797 = vadd.f32 0.0, %v4796
        %4798 = vmatmul.bf16.gmra.mxu0 %v3653
        %v4799 = vpop.f32.mrf.mxu0
        %v4800 = vadd.f32 0.0, %v4799
        %v4801 = vpop.f32.mrf.mxu0
        %v4802 = vadd.f32 0.0, %v4801
        %4803 = vmatmul.bf16.gmra.mxu0 %v3654
        %v4804 = vpop.f32.mrf.mxu0
        %v4805 = vadd.f32 0.0, %v4804
        %v4806 = vpop.f32.mrf.mxu0
        %v4807 = vadd.f32 0.0, %v4806
        %4808 = vmatmul.bf16.gmra.mxu0 %v3655
        %v4809 = vpop.f32.mrf.mxu0
        %v4810 = vadd.f32 0.0, %v4809
        %v4811 = vpop.f32.mrf.mxu0
        %v4812 = vadd.f32 0.0, %v4811
        %4813 = vmatmul.bf16.gmra.mxu0 %v3656
        %v4814 = vpop.f32.mrf.mxu0
        %v4815 = vadd.f32 0.0, %v4814
        %v4816 = vpop.f32.mrf.mxu0
        %v4817 = vadd.f32 0.0, %v4816
        %4818 = vmatmul.bf16.gmra.mxu0 %v3657
        %v4819 = vpop.f32.mrf.mxu0
        %v4820 = vadd.f32 0.0, %v4819
        %v4821 = vpop.f32.mrf.mxu0
        %v4822 = vadd.f32 0.0, %v4821
        %4823 = vmatmul.bf16.gmra.mxu0 %v3658
        %v4824 = vpop.f32.mrf.mxu0
        %v4825 = vadd.f32 0.0, %v4824
        %v4826 = vpop.f32.mrf.mxu0
        %v4827 = vadd.f32 0.0, %v4826
        %4828 = vmatmul.bf16.gmra.mxu0 %v3659
        %v4829 = vpop.f32.mrf.mxu0
        %v4830 = vadd.f32 0.0, %v4829
        %v4831 = vpop.f32.mrf.mxu0
        %v4832 = vadd.f32 0.0, %v4831
        %4833 = vmatmul.bf16.gmra.mxu0 %v3660
        %v4834 = vpop.f32.mrf.mxu0
        %v4835 = vadd.f32 0.0, %v4834
        %v4836 = vpop.f32.mrf.mxu0
        %v4837 = vadd.f32 0.0, %v4836
        %4838 = vmatmul.bf16.gmra.mxu0 %v3661
        %v4839 = vpop.f32.mrf.mxu0
        %v4840 = vadd.f32 0.0, %v4839
        %v4841 = vpop.f32.mrf.mxu0
        %v4842 = vadd.f32 0.0, %v4841
        %4843 = vmatmul.bf16.gmra.mxu0 %v3662
        %v4844 = vpop.f32.mrf.mxu0
        %v4845 = vadd.f32 0.0, %v4844
        %v4846 = vpop.f32.mrf.mxu0
        %v4847 = vadd.f32 0.0, %v4846
        %4848 = vmatmul.bf16.gmra.mxu0 %v3663
        %v4849 = vpop.f32.mrf.mxu0
        %v4850 = vadd.f32 0.0, %v4849
        %v4851 = vpop.f32.mrf.mxu0
        %v4852 = vadd.f32 0.0, %v4851
        %4853 = vmatmul.bf16.gmra.mxu0 %v3664
        %v4854 = vpop.f32.mrf.mxu0
        %v4855 = vadd.f32 0.0, %v4854
        %v4856 = vpop.f32.mrf.mxu0
        %v4857 = vadd.f32 0.0, %v4856
        %4858 = vmatmul.bf16.gmra.mxu0 %v3665
        %v4859 = vpop.f32.mrf.mxu0
        %v4860 = vadd.f32 0.0, %v4859
        %v4861 = vpop.f32.mrf.mxu0
        %v4862 = vadd.f32 0.0, %v4861
        %4863 = vmatmul.bf16.gmra.mxu0 %v3666
        %v4864 = vpop.f32.mrf.mxu0
        %v4865 = vadd.f32 0.0, %v4864
        %v4866 = vpop.f32.mrf.mxu0
        %v4867 = vadd.f32 0.0, %v4866
        %4868 = vmatmul.bf16.gmra.mxu0 %v3667
        %v4869 = vpop.f32.mrf.mxu0
        %v4870 = vadd.f32 0.0, %v4869
        %v4871 = vpop.f32.mrf.mxu0
        %v4872 = vadd.f32 0.0, %v4871
        %4873 = vmatmul.bf16.gmra.mxu0 %v3668
        %v4874 = vpop.f32.mrf.mxu0
        %v4875 = vadd.f32 0.0, %v4874
        %v4876 = vpop.f32.mrf.mxu0
        %v4877 = vadd.f32 0.0, %v4876
        %4878 = vmatmul.bf16.gmra.mxu0 %v3669
        %v4879 = vpop.f32.mrf.mxu0
        %v4880 = vadd.f32 0.0, %v4879
        %v4881 = vpop.f32.mrf.mxu0
        %v4882 = vadd.f32 0.0, %v4881
        %4883 = vmatmul.bf16.gmra.mxu0 %v3670
        %v4884 = vpop.f32.mrf.mxu0
        %v4885 = vadd.f32 0.0, %v4884
        %v4886 = vpop.f32.mrf.mxu0
        %v4887 = vadd.f32 0.0, %v4886
        %4888 = vdwg.mxu0
        %4889 = vset.pattern.permute.xlu0 7
        %4890 = vperm.xlu0 %4889, %v309
        %v4891 = vpop.permute.xlu0 %4890
        %4893 = vset.pattern.permute.xlu0 7
        %4894 = vperm.xlu0 %4893, %v310
        %v4895 = vpop.permute.xlu0 %4894
        %4897 = vset.pattern.permute.xlu0 7
        %4898 = vperm.xlu0 %4897, %v311
        %v4899 = vpop.permute.xlu0 %4898
        %4901 = vset.pattern.permute.xlu0 7
        %4902 = vperm.xlu0 %4901, %v312
        %v4903 = vpop.permute.xlu0 %4902
        %4905 = vset.pattern.permute.xlu0 7
        %4906 = vperm.xlu0 %4905, %v313
        %v4907 = vpop.permute.xlu0 %4906
        %4909 = vset.pattern.permute.xlu0 7
        %4910 = vperm.xlu0 %4909, %v314
        %v4911 = vpop.permute.xlu0 %4910
        %4913 = vset.pattern.permute.xlu0 7
        %4914 = vperm.xlu0 %4913, %v315
        %v4915 = vpop.permute.xlu0 %4914
        %4917 = vset.pattern.permute.xlu0 7
        %4918 = vperm.xlu0 %4917, %v316
        %v4919 = vpop.permute.xlu0 %4918
        %4921 = vset.pattern.permute.xlu0 7
        %4922 = vperm.xlu0 %4921, %v317
        %v4923 = vpop.permute.xlu0 %4922
        %4925 = vset.pattern.permute.xlu0 7
        %4926 = vperm.xlu0 %4925, %v318
        %v4927 = vpop.permute.xlu0 %4926
        %4929 = vset.pattern.permute.xlu0 7
        %4930 = vperm.xlu0 %4929, %v319
        %v4931 = vpop.permute.xlu0 %4930
        %4933 = vset.pattern.permute.xlu0 7
        %4934 = vperm.xlu0 %4933, %v320
        %v4935 = vpop.permute.xlu0 %4934
        %4937 = vset.pattern.permute.xlu0 7
        %4938 = vperm.xlu0 %4937, %v321
        %v4939 = vpop.permute.xlu0 %4938
        %4941 = vset.pattern.permute.xlu0 7
        %4942 = vperm.xlu0 %4941, %v322
        %v4943 = vpop.permute.xlu0 %4942
        %4945 = vset.pattern.permute.xlu0 7
        %4946 = vperm.xlu0 %4945, %v323
        %v4947 = vpop.permute.xlu0 %4946
        %4949 = vset.pattern.permute.xlu0 7
        %4950 = vperm.xlu0 %4949, %v324
        %v4951 = vpop.permute.xlu0 %4950
        %4953 = vset.pattern.permute.xlu0 7
        %4954 = vperm.xlu0 %4953, %v325
        %v4955 = vpop.permute.xlu0 %4954
        %4957 = vset.pattern.permute.xlu0 7
        %4958 = vperm.xlu0 %4957, %v326
        %v4959 = vpop.permute.xlu0 %4958
        %4961 = vset.pattern.permute.xlu0 7
        %4962 = vperm.xlu0 %4961, %v327
        %v4963 = vpop.permute.xlu0 %4962
        %4965 = vset.pattern.permute.xlu0 7
        %4966 = vperm.xlu0 %4965, %v328
        %v4967 = vpop.permute.xlu0 %4966
        %4969 = vset.pattern.permute.xlu0 7
        %4970 = vperm.xlu0 %4969, %v329
        %v4971 = vpop.permute.xlu0 %4970
        %4973 = vset.pattern.permute.xlu0 7
        %4974 = vperm.xlu0 %4973, %v330
        %v4975 = vpop.permute.xlu0 %4974
        %4977 = vset.pattern.permute.xlu0 7
        %4978 = vperm.xlu0 %4977, %v331
        %v4979 = vpop.permute.xlu0 %4978
        %4981 = vset.pattern.permute.xlu0 7
        %4982 = vperm.xlu0 %4981, %v332
        %v4983 = vpop.permute.xlu0 %4982
        %4985 = vset.pattern.permute.xlu0 7
        %4986 = vperm.xlu0 %4985, %v333
        %v4987 = vpop.permute.xlu0 %4986
        %4989 = vset.pattern.permute.xlu0 7
        %4990 = vperm.xlu0 %4989, %v334
        %v4991 = vpop.permute.xlu0 %4990
        %4993 = vset.pattern.permute.xlu0 7
        %4994 = vperm.xlu0 %4993, %v335
        %v4995 = vpop.permute.xlu0 %4994
        %4997 = vset.pattern.permute.xlu0 7
        %4998 = vperm.xlu0 %4997, %v336
        %v4999 = vpop.permute.xlu0 %4998
        %5001 = vset.pattern.permute.xlu0 7
        %5002 = vperm.xlu0 %5001, %v337
        %v5003 = vpop.permute.xlu0 %5002
        %5005 = vset.pattern.permute.xlu0 7
        %5006 = vperm.xlu0 %5005, %v338
        %v5007 = vpop.permute.xlu0 %5006
        %5009 = vset.pattern.permute.xlu0 7
        %5010 = vperm.xlu0 %5009, %v339
        %v5011 = vpop.permute.xlu0 %5010
        %5013 = vset.pattern.permute.xlu0 7
        %5014 = vperm.xlu0 %5013, %v340
        %v5015 = vpop.permute.xlu0 %5014
        %5017 = vset.pattern.permute.xlu0 7
        %5018 = vperm.xlu0 %5017, %v341
        %v5019 = vpop.permute.xlu0 %5018
        %5021 = vset.pattern.permute.xlu0 7
        %5022 = vperm.xlu0 %5021, %v342
        %v5023 = vpop.permute.xlu0 %5022
        %5025 = vset.pattern.permute.xlu0 7
        %5026 = vperm.xlu0 %5025, %v343
        %v5027 = vpop.permute.xlu0 %5026
        %5029 = vset.pattern.permute.xlu0 7
        %5030 = vperm.xlu0 %5029, %v344
        %v5031 = vpop.permute.xlu0 %5030
        %5033 = vset.pattern.permute.xlu0 7
        %5034 = vperm.xlu0 %5033, %v345
        %v5035 = vpop.permute.xlu0 %5034
        %5037 = vset.pattern.permute.xlu0 7
        %5038 = vperm.xlu0 %5037, %v346
        %v5039 = vpop.permute.xlu0 %5038
        %5041 = vset.pattern.permute.xlu0 7
        %5042 = vperm.xlu0 %5041, %v347
        %v5043 = vpop.permute.xlu0 %5042
        %5045 = vset.pattern.permute.xlu0 7
        %5046 = vperm.xlu0 %5045, %v348
        %v5047 = vpop.permute.xlu0 %5046
        %5049 = vset.pattern.permute.xlu0 7
        %5050 = vperm.xlu0 %5049, %v349
        %v5051 = vpop.permute.xlu0 %5050
        %5053 = vset.pattern.permute.xlu0 7
        %5054 = vperm.xlu0 %5053, %v350
        %v5055 = vpop.permute.xlu0 %5054
        %5057 = vset.pattern.permute.xlu0 7
        %5058 = vperm.xlu0 %5057, %v351
        %v5059 = vpop.permute.xlu0 %5058
        %5061 = vset.pattern.permute.xlu0 7
        %5062 = vperm.xlu0 %5061, %v352
        %v5063 = vpop.permute.xlu0 %5062
        %5065 = vset.pattern.permute.xlu0 7
        %5066 = vperm.xlu0 %5065, %v353
        %v5067 = vpop.permute.xlu0 %5066
        %5069 = vset.pattern.permute.xlu0 7
        %5070 = vperm.xlu0 %5069, %v354
        %v5071 = vpop.permute.xlu0 %5070
        %5073 = vset.pattern.permute.xlu0 7
        %5074 = vperm.xlu0 %5073, %v355
        %v5075 = vpop.permute.xlu0 %5074
        %5077 = vset.pattern.permute.xlu0 7
        %5078 = vperm.xlu0 %5077, %v356
        %v5079 = vpop.permute.xlu0 %5078
        %5081 = vset.pattern.permute.xlu0 7
        %5082 = vperm.xlu0 %5081, %v357
        %v5083 = vpop.permute.xlu0 %5082
        %5085 = vset.pattern.permute.xlu0 7
        %5086 = vperm.xlu0 %5085, %v358
        %v5087 = vpop.permute.xlu0 %5086
        %5089 = vset.pattern.permute.xlu0 7
        %5090 = vperm.xlu0 %5089, %v359
        %v5091 = vpop.permute.xlu0 %5090
        %5093 = vset.pattern.permute.xlu0 7
        %5094 = vperm.xlu0 %5093, %v360
        %v5095 = vpop.permute.xlu0 %5094
        %5097 = vset.pattern.permute.xlu0 7
        %5098 = vperm.xlu0 %5097, %v361
        %v5099 = vpop.permute.xlu0 %5098
        %5101 = vset.pattern.permute.xlu0 7
        %5102 = vperm.xlu0 %5101, %v362
        %v5103 = vpop.permute.xlu0 %5102
        %5105 = vset.pattern.permute.xlu0 7
        %5106 = vperm.xlu0 %5105, %v363
        %v5107 = vpop.permute.xlu0 %5106
        %5109 = vset.pattern.permute.xlu0 7
        %5110 = vperm.xlu0 %5109, %v364
        %v5111 = vpop.permute.xlu0 %5110
        %5113 = vset.pattern.permute.xlu0 7
        %5114 = vperm.xlu0 %5113, %v365
        %v5115 = vpop.permute.xlu0 %5114
        %5117 = vset.pattern.permute.xlu0 7
        %5118 = vperm.xlu0 %5117, %v366
        %v5119 = vpop.permute.xlu0 %5118
        %5121 = vset.pattern.permute.xlu0 7
        %5122 = vperm.xlu0 %5121, %v367
        %v5123 = vpop.permute.xlu0 %5122
        %5125 = vset.pattern.permute.xlu0 7
        %5126 = vperm.xlu0 %5125, %v368
        %v5127 = vpop.permute.xlu0 %5126
        %5129 = vset.pattern.permute.xlu0 7
        %5130 = vperm.xlu0 %5129, %v369
        %v5131 = vpop.permute.xlu0 %5130
        %5133 = vset.pattern.permute.xlu0 7
        %5134 = vperm.xlu0 %5133, %v370
        %v5135 = vpop.permute.xlu0 %5134
        %5137 = vset.pattern.permute.xlu0 7
        %5138 = vperm.xlu0 %5137, %v371
        %v5139 = vpop.permute.xlu0 %5138
        %5141 = vset.pattern.permute.xlu0 7
        %5142 = vperm.xlu0 %5141, %v372
        %v5143 = vpop.permute.xlu0 %5142
        %v5145 = vmul.f32 %v4730, %v4891
        %v5146 = vmul.f32 %v4732, %v4895
        %v5147 = vmul.f32 %v4735, %v4899
        %v5148 = vmul.f32 %v4737, %v4903
        %v5149 = vmul.f32 %v4740, %v4907
        %v5150 = vmul.f32 %v4742, %v4911
        %v5151 = vmul.f32 %v4745, %v4915
        %v5152 = vmul.f32 %v4747, %v4919
        %v5153 = vmul.f32 %v4750, %v4923
        %v5154 = vmul.f32 %v4752, %v4927
        %v5155 = vmul.f32 %v4755, %v4931
        %v5156 = vmul.f32 %v4757, %v4935
        %v5157 = vmul.f32 %v4760, %v4939
        %v5158 = vmul.f32 %v4762, %v4943
        %v5159 = vmul.f32 %v4765, %v4947
        %v5160 = vmul.f32 %v4767, %v4951
        %v5161 = vmul.f32 %v4770, %v4955
        %v5162 = vmul.f32 %v4772, %v4959
        %v5163 = vmul.f32 %v4775, %v4963
        %v5164 = vmul.f32 %v4777, %v4967
        %v5165 = vmul.f32 %v4780, %v4971
        %v5166 = vmul.f32 %v4782, %v4975
        %v5167 = vmul.f32 %v4785, %v4979
        %v5168 = vmul.f32 %v4787, %v4983
        %v5169 = vmul.f32 %v4790, %v4987
        %v5170 = vmul.f32 %v4792, %v4991
        %v5171 = vmul.f32 %v4795, %v4995
        %v5172 = vmul.f32 %v4797, %v4999
        %v5173 = vmul.f32 %v4800, %v5003
        %v5174 = vmul.f32 %v4802, %v5007
        %v5175 = vmul.f32 %v4805, %v5011
        %v5176 = vmul.f32 %v4807, %v5015
        %v5177 = vmul.f32 %v4810, %v5019
        %v5178 = vmul.f32 %v4812, %v5023
        %v5179 = vmul.f32 %v4815, %v5027
        %v5180 = vmul.f32 %v4817, %v5031
        %v5181 = vmul.f32 %v4820, %v5035
        %v5182 = vmul.f32 %v4822, %v5039
        %v5183 = vmul.f32 %v4825, %v5043
        %v5184 = vmul.f32 %v4827, %v5047
        %v5185 = vmul.f32 %v4830, %v5051
        %v5186 = vmul.f32 %v4832, %v5055
        %v5187 = vmul.f32 %v4835, %v5059
        %v5188 = vmul.f32 %v4837, %v5063
        %v5189 = vmul.f32 %v4840, %v5067
        %v5190 = vmul.f32 %v4842, %v5071
        %v5191 = vmul.f32 %v4845, %v5075
        %v5192 = vmul.f32 %v4847, %v5079
        %v5193 = vmul.f32 %v4850, %v5083
        %v5194 = vmul.f32 %v4852, %v5087
        %v5195 = vmul.f32 %v4855, %v5091
        %v5196 = vmul.f32 %v4857, %v5095
        %v5197 = vmul.f32 %v4860, %v5099
        %v5198 = vmul.f32 %v4862, %v5103
        %v5199 = vmul.f32 %v4865, %v5107
        %v5200 = vmul.f32 %v4867, %v5111
        %v5201 = vmul.f32 %v4870, %v5115
        %v5202 = vmul.f32 %v4872, %v5119
        %v5203 = vmul.f32 %v4875, %v5123
        %v5204 = vmul.f32 %v4877, %v5127
        %v5205 = vmul.f32 %v4880, %v5131
        %v5206 = vmul.f32 %v4882, %v5135
        %v5207 = vmul.f32 %v4885, %v5139
        %v5208 = vmul.f32 %v4887, %v5143
        %5209 = vset.pattern.permute.xlu0 10
        %5210 = vperm.xlu0 %5209, %v309
        %v5211 = vpop.permute.xlu0 %5210
        %5213 = vset.pattern.permute.xlu0 10
        %5214 = vperm.xlu0 %5213, %v310
        %v5215 = vpop.permute.xlu0 %5214
        %5217 = vset.pattern.permute.xlu0 10
        %5218 = vperm.xlu0 %5217, %v311
        %v5219 = vpop.permute.xlu0 %5218
        %5221 = vset.pattern.permute.xlu0 10
        %5222 = vperm.xlu0 %5221, %v312
        %v5223 = vpop.permute.xlu0 %5222
        %5225 = vset.pattern.permute.xlu0 10
        %5226 = vperm.xlu0 %5225, %v313
        %v5227 = vpop.permute.xlu0 %5226
        %5229 = vset.pattern.permute.xlu0 10
        %5230 = vperm.xlu0 %5229, %v314
        %v5231 = vpop.permute.xlu0 %5230
        %5233 = vset.pattern.permute.xlu0 10
        %5234 = vperm.xlu0 %5233, %v315
        %v5235 = vpop.permute.xlu0 %5234
        %5237 = vset.pattern.permute.xlu0 10
        %5238 = vperm.xlu0 %5237, %v316
        %v5239 = vpop.permute.xlu0 %5238
        %5241 = vset.pattern.permute.xlu0 10
        %5242 = vperm.xlu0 %5241, %v317
        %v5243 = vpop.permute.xlu0 %5242
        %5245 = vset.pattern.permute.xlu0 10
        %5246 = vperm.xlu0 %5245, %v318
        %v5247 = vpop.permute.xlu0 %5246
        %5249 = vset.pattern.permute.xlu0 10
        %5250 = vperm.xlu0 %5249, %v319
        %v5251 = vpop.permute.xlu0 %5250
        %5253 = vset.pattern.permute.xlu0 10
        %5254 = vperm.xlu0 %5253, %v320
        %v5255 = vpop.permute.xlu0 %5254
        %5257 = vset.pattern.permute.xlu0 10
        %5258 = vperm.xlu0 %5257, %v321
        %v5259 = vpop.permute.xlu0 %5258
        %5261 = vset.pattern.permute.xlu0 10
        %5262 = vperm.xlu0 %5261, %v322
        %v5263 = vpop.permute.xlu0 %5262
        %5265 = vset.pattern.permute.xlu0 10
        %5266 = vperm.xlu0 %5265, %v323
        %v5267 = vpop.permute.xlu0 %5266
        %5269 = vset.pattern.permute.xlu0 10
        %5270 = vperm.xlu0 %5269, %v324
        %v5271 = vpop.permute.xlu0 %5270
        %5273 = vset.pattern.permute.xlu0 10
        %5274 = vperm.xlu0 %5273, %v325
        %v5275 = vpop.permute.xlu0 %5274
        %5277 = vset.pattern.permute.xlu0 10
        %5278 = vperm.xlu0 %5277, %v326
        %v5279 = vpop.permute.xlu0 %5278
        %5281 = vset.pattern.permute.xlu0 10
        %5282 = vperm.xlu0 %5281, %v327
        %v5283 = vpop.permute.xlu0 %5282
        %5285 = vset.pattern.permute.xlu0 10
        %5286 = vperm.xlu0 %5285, %v328
        %v5287 = vpop.permute.xlu0 %5286
        %5289 = vset.pattern.permute.xlu0 10
        %5290 = vperm.xlu0 %5289, %v329
        %v5291 = vpop.permute.xlu0 %5290
        %5293 = vset.pattern.permute.xlu0 10
        %5294 = vperm.xlu0 %5293, %v330
        %v5295 = vpop.permute.xlu0 %5294
        %5297 = vset.pattern.permute.xlu0 10
        %5298 = vperm.xlu0 %5297, %v331
        %v5299 = vpop.permute.xlu0 %5298
        %5301 = vset.pattern.permute.xlu0 10
        %5302 = vperm.xlu0 %5301, %v332
        %v5303 = vpop.permute.xlu0 %5302
        %5305 = vset.pattern.permute.xlu0 10
        %5306 = vperm.xlu0 %5305, %v333
        %v5307 = vpop.permute.xlu0 %5306
        %5309 = vset.pattern.permute.xlu0 10
        %5310 = vperm.xlu0 %5309, %v334
        %v5311 = vpop.permute.xlu0 %5310
        %5313 = vset.pattern.permute.xlu0 10
        %5314 = vperm.xlu0 %5313, %v335
        %v5315 = vpop.permute.xlu0 %5314
        %5317 = vset.pattern.permute.xlu0 10
        %5318 = vperm.xlu0 %5317, %v336
        %v5319 = vpop.permute.xlu0 %5318
        %5321 = vset.pattern.permute.xlu0 10
        %5322 = vperm.xlu0 %5321, %v337
        %v5323 = vpop.permute.xlu0 %5322
        %5325 = vset.pattern.permute.xlu0 10
        %5326 = vperm.xlu0 %5325, %v338
        %v5327 = vpop.permute.xlu0 %5326
        %5329 = vset.pattern.permute.xlu0 10
        %5330 = vperm.xlu0 %5329, %v339
        %v5331 = vpop.permute.xlu0 %5330
        %5333 = vset.pattern.permute.xlu0 10
        %5334 = vperm.xlu0 %5333, %v340
        %v5335 = vpop.permute.xlu0 %5334
        %5337 = vset.pattern.permute.xlu0 10
        %5338 = vperm.xlu0 %5337, %v341
        %v5339 = vpop.permute.xlu0 %5338
        %5341 = vset.pattern.permute.xlu0 10
        %5342 = vperm.xlu0 %5341, %v342
        %v5343 = vpop.permute.xlu0 %5342
        %5345 = vset.pattern.permute.xlu0 10
        %5346 = vperm.xlu0 %5345, %v343
        %v5347 = vpop.permute.xlu0 %5346
        %5349 = vset.pattern.permute.xlu0 10
        %5350 = vperm.xlu0 %5349, %v344
        %v5351 = vpop.permute.xlu0 %5350
        %5353 = vset.pattern.permute.xlu0 10
        %5354 = vperm.xlu0 %5353, %v345
        %v5355 = vpop.permute.xlu0 %5354
        %5357 = vset.pattern.permute.xlu0 10
        %5358 = vperm.xlu0 %5357, %v346
        %v5359 = vpop.permute.xlu0 %5358
        %5361 = vset.pattern.permute.xlu0 10
        %5362 = vperm.xlu0 %5361, %v347
        %v5363 = vpop.permute.xlu0 %5362
        %5365 = vset.pattern.permute.xlu0 10
        %5366 = vperm.xlu0 %5365, %v348
        %v5367 = vpop.permute.xlu0 %5366
        %5369 = vset.pattern.permute.xlu0 10
        %5370 = vperm.xlu0 %5369, %v349
        %v5371 = vpop.permute.xlu0 %5370
        %5373 = vset.pattern.permute.xlu0 10
        %5374 = vperm.xlu0 %5373, %v350
        %v5375 = vpop.permute.xlu0 %5374
        %5377 = vset.pattern.permute.xlu0 10
        %5378 = vperm.xlu0 %5377, %v351
        %v5379 = vpop.permute.xlu0 %5378
        %5381 = vset.pattern.permute.xlu0 10
        %5382 = vperm.xlu0 %5381, %v352
        %v5383 = vpop.permute.xlu0 %5382
        %5385 = vset.pattern.permute.xlu0 10
        %5386 = vperm.xlu0 %5385, %v353
        %v5387 = vpop.permute.xlu0 %5386
        %5389 = vset.pattern.permute.xlu0 10
        %5390 = vperm.xlu0 %5389, %v354
        %v5391 = vpop.permute.xlu0 %5390
        %5393 = vset.pattern.permute.xlu0 10
        %5394 = vperm.xlu0 %5393, %v355
        %v5395 = vpop.permute.xlu0 %5394
        %5397 = vset.pattern.permute.xlu0 10
        %5398 = vperm.xlu0 %5397, %v356
        %v5399 = vpop.permute.xlu0 %5398
        %5401 = vset.pattern.permute.xlu0 10
        %5402 = vperm.xlu0 %5401, %v357
        %v5403 = vpop.permute.xlu0 %5402
        %5405 = vset.pattern.permute.xlu0 10
        %5406 = vperm.xlu0 %5405, %v358
        %v5407 = vpop.permute.xlu0 %5406
        %5409 = vset.pattern.permute.xlu0 10
        %5410 = vperm.xlu0 %5409, %v359
        %v5411 = vpop.permute.xlu0 %5410
        %5413 = vset.pattern.permute.xlu0 10
        %5414 = vperm.xlu0 %5413, %v360
        %v5415 = vpop.permute.xlu0 %5414
        %5417 = vset.pattern.permute.xlu0 10
        %5418 = vperm.xlu0 %5417, %v361
        %v5419 = vpop.permute.xlu0 %5418
        %5421 = vset.pattern.permute.xlu0 10
        %5422 = vperm.xlu0 %5421, %v362
        %v5423 = vpop.permute.xlu0 %5422
        %5425 = vset.pattern.permute.xlu0 10
        %5426 = vperm.xlu0 %5425, %v363
        %v5427 = vpop.permute.xlu0 %5426
        %5429 = vset.pattern.permute.xlu0 10
        %5430 = vperm.xlu0 %5429, %v364
        %v5431 = vpop.permute.xlu0 %5430
        %5433 = vset.pattern.permute.xlu0 10
        %5434 = vperm.xlu0 %5433, %v365
        %v5435 = vpop.permute.xlu0 %5434
        %5437 = vset.pattern.permute.xlu0 10
        %5438 = vperm.xlu0 %5437, %v366
        %v5439 = vpop.permute.xlu0 %5438
        %5441 = vset.pattern.permute.xlu0 10
        %5442 = vperm.xlu0 %5441, %v367
        %v5443 = vpop.permute.xlu0 %5442
        %5445 = vset.pattern.permute.xlu0 10
        %5446 = vperm.xlu0 %5445, %v368
        %v5447 = vpop.permute.xlu0 %5446
        %5449 = vset.pattern.permute.xlu0 10
        %5450 = vperm.xlu0 %5449, %v369
        %v5451 = vpop.permute.xlu0 %5450
        %5453 = vset.pattern.permute.xlu0 10
        %5454 = vperm.xlu0 %5453, %v370
        %v5455 = vpop.permute.xlu0 %5454
        %5457 = vset.pattern.permute.xlu0 10
        %5458 = vperm.xlu0 %5457, %v371
        %v5459 = vpop.permute.xlu0 %5458
        %5461 = vset.pattern.permute.xlu0 10
        %5462 = vperm.xlu0 %5461, %v372
        %v5463 = vpop.permute.xlu0 %5462
        %v5465 = vadd.f32 %v5145, %v5211
        %v5466 = vadd.f32 %v5146, %v5215
        %v5467 = vadd.f32 %v5147, %v5219
        %v5468 = vadd.f32 %v5148, %v5223
        %v5469 = vadd.f32 %v5149, %v5227
        %v5470 = vadd.f32 %v5150, %v5231
        %v5471 = vadd.f32 %v5151, %v5235
        %v5472 = vadd.f32 %v5152, %v5239
        %v5473 = vadd.f32 %v5153, %v5243
        %v5474 = vadd.f32 %v5154, %v5247
        %v5475 = vadd.f32 %v5155, %v5251
        %v5476 = vadd.f32 %v5156, %v5255
        %v5477 = vadd.f32 %v5157, %v5259
        %v5478 = vadd.f32 %v5158, %v5263
        %v5479 = vadd.f32 %v5159, %v5267
        %v5480 = vadd.f32 %v5160, %v5271
        %v5481 = vadd.f32 %v5161, %v5275
        %v5482 = vadd.f32 %v5162, %v5279
        %v5483 = vadd.f32 %v5163, %v5283
        %v5484 = vadd.f32 %v5164, %v5287
        %v5485 = vadd.f32 %v5165, %v5291
        %v5486 = vadd.f32 %v5166, %v5295
        %v5487 = vadd.f32 %v5167, %v5299
        %v5488 = vadd.f32 %v5168, %v5303
        %v5489 = vadd.f32 %v5169, %v5307
        %v5490 = vadd.f32 %v5170, %v5311
        %v5491 = vadd.f32 %v5171, %v5315
        %v5492 = vadd.f32 %v5172, %v5319
        %v5493 = vadd.f32 %v5173, %v5323
        %v5494 = vadd.f32 %v5174, %v5327
        %v5495 = vadd.f32 %v5175, %v5331
        %v5496 = vadd.f32 %v5176, %v5335
        %v5497 = vadd.f32 %v5177, %v5339
        %v5498 = vadd.f32 %v5178, %v5343
        %v5499 = vadd.f32 %v5179, %v5347
        %v5500 = vadd.f32 %v5180, %v5351
        %v5501 = vadd.f32 %v5181, %v5355
        %v5502 = vadd.f32 %v5182, %v5359
        %v5503 = vadd.f32 %v5183, %v5363
        %v5504 = vadd.f32 %v5184, %v5367
        %v5505 = vadd.f32 %v5185, %v5371
        %v5506 = vadd.f32 %v5186, %v5375
        %v5507 = vadd.f32 %v5187, %v5379
        %v5508 = vadd.f32 %v5188, %v5383
        %v5509 = vadd.f32 %v5189, %v5387
        %v5510 = vadd.f32 %v5190, %v5391
        %v5511 = vadd.f32 %v5191, %v5395
        %v5512 = vadd.f32 %v5192, %v5399
        %v5513 = vadd.f32 %v5193, %v5403
        %v5514 = vadd.f32 %v5194, %v5407
        %v5515 = vadd.f32 %v5195, %v5411
        %v5516 = vadd.f32 %v5196, %v5415
        %v5517 = vadd.f32 %v5197, %v5419
        %v5518 = vadd.f32 %v5198, %v5423
        %v5519 = vadd.f32 %v5199, %v5427
        %v5520 = vadd.f32 %v5200, %v5431
        %v5521 = vadd.f32 %v5201, %v5435
        %v5522 = vadd.f32 %v5202, %v5439
        %v5523 = vadd.f32 %v5203, %v5443
        %v5524 = vadd.f32 %v5204, %v5447
        %v5525 = vadd.f32 %v5205, %v5451
        %v5526 = vadd.f32 %v5206, %v5455
        %v5527 = vadd.f32 %v5207, %v5459
        %v5528 = vadd.f32 %v5208, %v5463
        %5529 = vmatpush.bf16.msra.mxu0 %v3902
        %5530 = vmatpush.bf16.msra.mxu0 %v3901
        %5531 = vmatpush.bf16.msra.mxu0 %v3900
        %5532 = vmatpush.bf16.msra.mxu0 %v3899
        %5533 = vmatpush.bf16.msra.mxu0 %v3898
        %5534 = vmatpush.bf16.msra.mxu0 %v3897
        %5535 = vmatpush.bf16.msra.mxu0 %v3896
        %5536 = vmatpush.bf16.msra.mxu0 %v3895
        %5537 = vmatmul.bf16.gmra.mxu0 %v3831
        %v5538 = vpop.f32.mrf.mxu0
        %v5539 = vadd.f32 0.0, %v5538
        %v5540 = vpop.f32.mrf.mxu0
        %v5541 = vadd.f32 0.0, %v5540
        %5542 = vmatmul.bf16.gmra.mxu0 %v3832
        %v5543 = vpop.f32.mrf.mxu0
        %v5544 = vadd.f32 0.0, %v5543
        %v5545 = vpop.f32.mrf.mxu0
        %v5546 = vadd.f32 0.0, %v5545
        %5547 = vmatmul.bf16.gmra.mxu0 %v3833
        %v5548 = vpop.f32.mrf.mxu0
        %v5549 = vadd.f32 0.0, %v5548
        %v5550 = vpop.f32.mrf.mxu0
        %v5551 = vadd.f32 0.0, %v5550
        %5552 = vmatmul.bf16.gmra.mxu0 %v3834
        %v5553 = vpop.f32.mrf.mxu0
        %v5554 = vadd.f32 0.0, %v5553
        %v5555 = vpop.f32.mrf.mxu0
        %v5556 = vadd.f32 0.0, %v5555
        %5557 = vmatmul.bf16.gmra.mxu0 %v3835
        %v5558 = vpop.f32.mrf.mxu0
        %v5559 = vadd.f32 0.0, %v5558
        %v5560 = vpop.f32.mrf.mxu0
        %v5561 = vadd.f32 0.0, %v5560
        %5562 = vmatmul.bf16.gmra.mxu0 %v3836
        %v5563 = vpop.f32.mrf.mxu0
        %v5564 = vadd.f32 0.0, %v5563
        %v5565 = vpop.f32.mrf.mxu0
        %v5566 = vadd.f32 0.0, %v5565
        %5567 = vmatmul.bf16.gmra.mxu0 %v3837
        %v5568 = vpop.f32.mrf.mxu0
        %v5569 = vadd.f32 0.0, %v5568
        %v5570 = vpop.f32.mrf.mxu0
        %v5571 = vadd.f32 0.0, %v5570
        %5572 = vmatmul.bf16.gmra.mxu0 %v3838
        %v5573 = vpop.f32.mrf.mxu0
        %v5574 = vadd.f32 0.0, %v5573
        %v5575 = vpop.f32.mrf.mxu0
        %v5576 = vadd.f32 0.0, %v5575
        %5577 = vmatmul.bf16.gmra.mxu0 %v3839
        %v5578 = vpop.f32.mrf.mxu0
        %v5579 = vadd.f32 0.0, %v5578
        %v5580 = vpop.f32.mrf.mxu0
        %v5581 = vadd.f32 0.0, %v5580
        %5582 = vmatmul.bf16.gmra.mxu0 %v3840
        %v5583 = vpop.f32.mrf.mxu0
        %v5584 = vadd.f32 0.0, %v5583
        %v5585 = vpop.f32.mrf.mxu0
        %v5586 = vadd.f32 0.0, %v5585
        %5587 = vmatmul.bf16.gmra.mxu0 %v3841
        %v5588 = vpop.f32.mrf.mxu0
        %v5589 = vadd.f32 0.0, %v5588
        %v5590 = vpop.f32.mrf.mxu0
        %v5591 = vadd.f32 0.0, %v5590
        %5592 = vmatmul.bf16.gmra.mxu0 %v3842
        %v5593 = vpop.f32.mrf.mxu0
        %v5594 = vadd.f32 0.0, %v5593
        %v5595 = vpop.f32.mrf.mxu0
        %v5596 = vadd.f32 0.0, %v5595
        %5597 = vmatmul.bf16.gmra.mxu0 %v3843
        %v5598 = vpop.f32.mrf.mxu0
        %v5599 = vadd.f32 0.0, %v5598
        %v5600 = vpop.f32.mrf.mxu0
        %v5601 = vadd.f32 0.0, %v5600
        %5602 = vmatmul.bf16.gmra.mxu0 %v3844
        %v5603 = vpop.f32.mrf.mxu0
        %v5604 = vadd.f32 0.0, %v5603
        %v5605 = vpop.f32.mrf.mxu0
        %v5606 = vadd.f32 0.0, %v5605
        %5607 = vmatmul.bf16.gmra.mxu0 %v3845
        %v5608 = vpop.f32.mrf.mxu0
        %v5609 = vadd.f32 0.0, %v5608
        %v5610 = vpop.f32.mrf.mxu0
        %v5611 = vadd.f32 0.0, %v5610
        %5612 = vmatmul.bf16.gmra.mxu0 %v3846
        %v5613 = vpop.f32.mrf.mxu0
        %v5614 = vadd.f32 0.0, %v5613
        %v5615 = vpop.f32.mrf.mxu0
        %v5616 = vadd.f32 0.0, %v5615
        %5617 = vmatmul.bf16.gmra.mxu0 %v3847
        %v5618 = vpop.f32.mrf.mxu0
        %v5619 = vadd.f32 0.0, %v5618
        %v5620 = vpop.f32.mrf.mxu0
        %v5621 = vadd.f32 0.0, %v5620
        %5622 = vmatmul.bf16.gmra.mxu0 %v3848
        %v5623 = vpop.f32.mrf.mxu0
        %v5624 = vadd.f32 0.0, %v5623
        %v5625 = vpop.f32.mrf.mxu0
        %v5626 = vadd.f32 0.0, %v5625
        %5627 = vmatmul.bf16.gmra.mxu0 %v3849
        %v5628 = vpop.f32.mrf.mxu0
        %v5629 = vadd.f32 0.0, %v5628
        %v5630 = vpop.f32.mrf.mxu0
        %v5631 = vadd.f32 0.0, %v5630
        %5632 = vmatmul.bf16.gmra.mxu0 %v3850
        %v5633 = vpop.f32.mrf.mxu0
        %v5634 = vadd.f32 0.0, %v5633
        %v5635 = vpop.f32.mrf.mxu0
        %v5636 = vadd.f32 0.0, %v5635
        %5637 = vmatmul.bf16.gmra.mxu0 %v3851
        %v5638 = vpop.f32.mrf.mxu0
        %v5639 = vadd.f32 0.0, %v5638
        %v5640 = vpop.f32.mrf.mxu0
        %v5641 = vadd.f32 0.0, %v5640
        %5642 = vmatmul.bf16.gmra.mxu0 %v3852
        %v5643 = vpop.f32.mrf.mxu0
        %v5644 = vadd.f32 0.0, %v5643
        %v5645 = vpop.f32.mrf.mxu0
        %v5646 = vadd.f32 0.0, %v5645
        %5647 = vmatmul.bf16.gmra.mxu0 %v3853
        %v5648 = vpop.f32.mrf.mxu0
        %v5649 = vadd.f32 0.0, %v5648
        %v5650 = vpop.f32.mrf.mxu0
        %v5651 = vadd.f32 0.0, %v5650
        %5652 = vmatmul.bf16.gmra.mxu0 %v3854
        %v5653 = vpop.f32.mrf.mxu0
        %v5654 = vadd.f32 0.0, %v5653
        %v5655 = vpop.f32.mrf.mxu0
        %v5656 = vadd.f32 0.0, %v5655
        %5657 = vmatmul.bf16.gmra.mxu0 %v3855
        %v5658 = vpop.f32.mrf.mxu0
        %v5659 = vadd.f32 0.0, %v5658
        %v5660 = vpop.f32.mrf.mxu0
        %v5661 = vadd.f32 0.0, %v5660
        %5662 = vmatmul.bf16.gmra.mxu0 %v3856
        %v5663 = vpop.f32.mrf.mxu0
        %v5664 = vadd.f32 0.0, %v5663
        %v5665 = vpop.f32.mrf.mxu0
        %v5666 = vadd.f32 0.0, %v5665
        %5667 = vmatmul.bf16.gmra.mxu0 %v3857
        %v5668 = vpop.f32.mrf.mxu0
        %v5669 = vadd.f32 0.0, %v5668
        %v5670 = vpop.f32.mrf.mxu0
        %v5671 = vadd.f32 0.0, %v5670
        %5672 = vmatmul.bf16.gmra.mxu0 %v3858
        %v5673 = vpop.f32.mrf.mxu0
        %v5674 = vadd.f32 0.0, %v5673
        %v5675 = vpop.f32.mrf.mxu0
        %v5676 = vadd.f32 0.0, %v5675
        %5677 = vmatmul.bf16.gmra.mxu0 %v3859
        %v5678 = vpop.f32.mrf.mxu0
        %v5679 = vadd.f32 0.0, %v5678
        %v5680 = vpop.f32.mrf.mxu0
        %v5681 = vadd.f32 0.0, %v5680
        %5682 = vmatmul.bf16.gmra.mxu0 %v3860
        %v5683 = vpop.f32.mrf.mxu0
        %v5684 = vadd.f32 0.0, %v5683
        %v5685 = vpop.f32.mrf.mxu0
        %v5686 = vadd.f32 0.0, %v5685
        %5687 = vmatmul.bf16.gmra.mxu0 %v3861
        %v5688 = vpop.f32.mrf.mxu0
        %v5689 = vadd.f32 0.0, %v5688
        %v5690 = vpop.f32.mrf.mxu0
        %v5691 = vadd.f32 0.0, %v5690
        %5692 = vmatmul.bf16.gmra.mxu0 %v3862
        %v5693 = vpop.f32.mrf.mxu0
        %v5694 = vadd.f32 0.0, %v5693
        %v5695 = vpop.f32.mrf.mxu0
        %v5696 = vadd.f32 0.0, %v5695
        %5697 = vdwg.mxu0
        %5698 = vset.pattern.permute.xlu0 13
        %5699 = vperm.xlu0 %5698, %v309
        %v5700 = vpop.permute.xlu0 %5699
        %5702 = vset.pattern.permute.xlu0 13
        %5703 = vperm.xlu0 %5702, %v310
        %v5704 = vpop.permute.xlu0 %5703
        %5706 = vset.pattern.permute.xlu0 13
        %5707 = vperm.xlu0 %5706, %v311
        %v5708 = vpop.permute.xlu0 %5707
        %5710 = vset.pattern.permute.xlu0 13
        %5711 = vperm.xlu0 %5710, %v312
        %v5712 = vpop.permute.xlu0 %5711
        %5714 = vset.pattern.permute.xlu0 13
        %5715 = vperm.xlu0 %5714, %v313
        %v5716 = vpop.permute.xlu0 %5715
        %5718 = vset.pattern.permute.xlu0 13
        %5719 = vperm.xlu0 %5718, %v314
        %v5720 = vpop.permute.xlu0 %5719
        %5722 = vset.pattern.permute.xlu0 13
        %5723 = vperm.xlu0 %5722, %v315
        %v5724 = vpop.permute.xlu0 %5723
        %5726 = vset.pattern.permute.xlu0 13
        %5727 = vperm.xlu0 %5726, %v316
        %v5728 = vpop.permute.xlu0 %5727
        %5730 = vset.pattern.permute.xlu0 13
        %5731 = vperm.xlu0 %5730, %v317
        %v5732 = vpop.permute.xlu0 %5731
        %5734 = vset.pattern.permute.xlu0 13
        %5735 = vperm.xlu0 %5734, %v318
        %v5736 = vpop.permute.xlu0 %5735
        %5738 = vset.pattern.permute.xlu0 13
        %5739 = vperm.xlu0 %5738, %v319
        %v5740 = vpop.permute.xlu0 %5739
        %5742 = vset.pattern.permute.xlu0 13
        %5743 = vperm.xlu0 %5742, %v320
        %v5744 = vpop.permute.xlu0 %5743
        %5746 = vset.pattern.permute.xlu0 13
        %5747 = vperm.xlu0 %5746, %v321
        %v5748 = vpop.permute.xlu0 %5747
        %5750 = vset.pattern.permute.xlu0 13
        %5751 = vperm.xlu0 %5750, %v322
        %v5752 = vpop.permute.xlu0 %5751
        %5754 = vset.pattern.permute.xlu0 13
        %5755 = vperm.xlu0 %5754, %v323
        %v5756 = vpop.permute.xlu0 %5755
        %5758 = vset.pattern.permute.xlu0 13
        %5759 = vperm.xlu0 %5758, %v324
        %v5760 = vpop.permute.xlu0 %5759
        %5762 = vset.pattern.permute.xlu0 13
        %5763 = vperm.xlu0 %5762, %v325
        %v5764 = vpop.permute.xlu0 %5763
        %5766 = vset.pattern.permute.xlu0 13
        %5767 = vperm.xlu0 %5766, %v326
        %v5768 = vpop.permute.xlu0 %5767
        %5770 = vset.pattern.permute.xlu0 13
        %5771 = vperm.xlu0 %5770, %v327
        %v5772 = vpop.permute.xlu0 %5771
        %5774 = vset.pattern.permute.xlu0 13
        %5775 = vperm.xlu0 %5774, %v328
        %v5776 = vpop.permute.xlu0 %5775
        %5778 = vset.pattern.permute.xlu0 13
        %5779 = vperm.xlu0 %5778, %v329
        %v5780 = vpop.permute.xlu0 %5779
        %5782 = vset.pattern.permute.xlu0 13
        %5783 = vperm.xlu0 %5782, %v330
        %v5784 = vpop.permute.xlu0 %5783
        %5786 = vset.pattern.permute.xlu0 13
        %5787 = vperm.xlu0 %5786, %v331
        %v5788 = vpop.permute.xlu0 %5787
        %5790 = vset.pattern.permute.xlu0 13
        %5791 = vperm.xlu0 %5790, %v332
        %v5792 = vpop.permute.xlu0 %5791
        %5794 = vset.pattern.permute.xlu0 13
        %5795 = vperm.xlu0 %5794, %v333
        %v5796 = vpop.permute.xlu0 %5795
        %5798 = vset.pattern.permute.xlu0 13
        %5799 = vperm.xlu0 %5798, %v334
        %v5800 = vpop.permute.xlu0 %5799
        %5802 = vset.pattern.permute.xlu0 13
        %5803 = vperm.xlu0 %5802, %v335
        %v5804 = vpop.permute.xlu0 %5803
        %5806 = vset.pattern.permute.xlu0 13
        %5807 = vperm.xlu0 %5806, %v336
        %v5808 = vpop.permute.xlu0 %5807
        %5810 = vset.pattern.permute.xlu0 13
        %5811 = vperm.xlu0 %5810, %v337
        %v5812 = vpop.permute.xlu0 %5811
        %5814 = vset.pattern.permute.xlu0 13
        %5815 = vperm.xlu0 %5814, %v338
        %v5816 = vpop.permute.xlu0 %5815
        %5818 = vset.pattern.permute.xlu0 13
        %5819 = vperm.xlu0 %5818, %v339
        %v5820 = vpop.permute.xlu0 %5819
        %5822 = vset.pattern.permute.xlu0 13
        %5823 = vperm.xlu0 %5822, %v340
        %v5824 = vpop.permute.xlu0 %5823
        %5826 = vset.pattern.permute.xlu0 13
        %5827 = vperm.xlu0 %5826, %v341
        %v5828 = vpop.permute.xlu0 %5827
        %5830 = vset.pattern.permute.xlu0 13
        %5831 = vperm.xlu0 %5830, %v342
        %v5832 = vpop.permute.xlu0 %5831
        %5834 = vset.pattern.permute.xlu0 13
        %5835 = vperm.xlu0 %5834, %v343
        %v5836 = vpop.permute.xlu0 %5835
        %5838 = vset.pattern.permute.xlu0 13
        %5839 = vperm.xlu0 %5838, %v344
        %v5840 = vpop.permute.xlu0 %5839
        %5842 = vset.pattern.permute.xlu0 13
        %5843 = vperm.xlu0 %5842, %v345
        %v5844 = vpop.permute.xlu0 %5843
        %5846 = vset.pattern.permute.xlu0 13
        %5847 = vperm.xlu0 %5846, %v346
        %v5848 = vpop.permute.xlu0 %5847
        %5850 = vset.pattern.permute.xlu0 13
        %5851 = vperm.xlu0 %5850, %v347
        %v5852 = vpop.permute.xlu0 %5851
        %5854 = vset.pattern.permute.xlu0 13
        %5855 = vperm.xlu0 %5854, %v348
        %v5856 = vpop.permute.xlu0 %5855
        %5858 = vset.pattern.permute.xlu0 13
        %5859 = vperm.xlu0 %5858, %v349
        %v5860 = vpop.permute.xlu0 %5859
        %5862 = vset.pattern.permute.xlu0 13
        %5863 = vperm.xlu0 %5862, %v350
        %v5864 = vpop.permute.xlu0 %5863
        %5866 = vset.pattern.permute.xlu0 13
        %5867 = vperm.xlu0 %5866, %v351
        %v5868 = vpop.permute.xlu0 %5867
        %5870 = vset.pattern.permute.xlu0 13
        %5871 = vperm.xlu0 %5870, %v352
        %v5872 = vpop.permute.xlu0 %5871
        %5874 = vset.pattern.permute.xlu0 13
        %5875 = vperm.xlu0 %5874, %v353
        %v5876 = vpop.permute.xlu0 %5875
        %5878 = vset.pattern.permute.xlu0 13
        %5879 = vperm.xlu0 %5878, %v354
        %v5880 = vpop.permute.xlu0 %5879
        %5882 = vset.pattern.permute.xlu0 13
        %5883 = vperm.xlu0 %5882, %v355
        %v5884 = vpop.permute.xlu0 %5883
        %5886 = vset.pattern.permute.xlu0 13
        %5887 = vperm.xlu0 %5886, %v356
        %v5888 = vpop.permute.xlu0 %5887
        %5890 = vset.pattern.permute.xlu0 13
        %5891 = vperm.xlu0 %5890, %v357
        %v5892 = vpop.permute.xlu0 %5891
        %5894 = vset.pattern.permute.xlu0 13
        %5895 = vperm.xlu0 %5894, %v358
        %v5896 = vpop.permute.xlu0 %5895
        %5898 = vset.pattern.permute.xlu0 13
        %5899 = vperm.xlu0 %5898, %v359
        %v5900 = vpop.permute.xlu0 %5899
        %5902 = vset.pattern.permute.xlu0 13
        %5903 = vperm.xlu0 %5902, %v360
        %v5904 = vpop.permute.xlu0 %5903
        %5906 = vset.pattern.permute.xlu0 13
        %5907 = vperm.xlu0 %5906, %v361
        %v5908 = vpop.permute.xlu0 %5907
        %5910 = vset.pattern.permute.xlu0 13
        %5911 = vperm.xlu0 %5910, %v362
        %v5912 = vpop.permute.xlu0 %5911
        %5914 = vset.pattern.permute.xlu0 13
        %5915 = vperm.xlu0 %5914, %v363
        %v5916 = vpop.permute.xlu0 %5915
        %5918 = vset.pattern.permute.xlu0 13
        %5919 = vperm.xlu0 %5918, %v364
        %v5920 = vpop.permute.xlu0 %5919
        %5922 = vset.pattern.permute.xlu0 13
        %5923 = vperm.xlu0 %5922, %v365
        %v5924 = vpop.permute.xlu0 %5923
        %5926 = vset.pattern.permute.xlu0 13
        %5927 = vperm.xlu0 %5926, %v366
        %v5928 = vpop.permute.xlu0 %5927
        %5930 = vset.pattern.permute.xlu0 13
        %5931 = vperm.xlu0 %5930, %v367
        %v5932 = vpop.permute.xlu0 %5931
        %5934 = vset.pattern.permute.xlu0 13
        %5935 = vperm.xlu0 %5934, %v368
        %v5936 = vpop.permute.xlu0 %5935
        %5938 = vset.pattern.permute.xlu0 13
        %5939 = vperm.xlu0 %5938, %v369
        %v5940 = vpop.permute.xlu0 %5939
        %5942 = vset.pattern.permute.xlu0 13
        %5943 = vperm.xlu0 %5942, %v370
        %v5944 = vpop.permute.xlu0 %5943
        %5946 = vset.pattern.permute.xlu0 13
        %5947 = vperm.xlu0 %5946, %v371
        %v5948 = vpop.permute.xlu0 %5947
        %5950 = vset.pattern.permute.xlu0 13
        %5951 = vperm.xlu0 %5950, %v372
        %v5952 = vpop.permute.xlu0 %5951
        %v5954 = vmul.f32 %v5539, %v5700
        %v5955 = vmul.f32 %v5541, %v5704
        %v5956 = vmul.f32 %v5544, %v5708
        %v5957 = vmul.f32 %v5546, %v5712
        %v5958 = vmul.f32 %v5549, %v5716
        %v5959 = vmul.f32 %v5551, %v5720
        %v5960 = vmul.f32 %v5554, %v5724
        %v5961 = vmul.f32 %v5556, %v5728
        %v5962 = vmul.f32 %v5559, %v5732
        %v5963 = vmul.f32 %v5561, %v5736
        %v5964 = vmul.f32 %v5564, %v5740
        %v5965 = vmul.f32 %v5566, %v5744
        %v5966 = vmul.f32 %v5569, %v5748
        %v5967 = vmul.f32 %v5571, %v5752
        %v5968 = vmul.f32 %v5574, %v5756
        %v5969 = vmul.f32 %v5576, %v5760
        %v5970 = vmul.f32 %v5579, %v5764
        %v5971 = vmul.f32 %v5581, %v5768
        %v5972 = vmul.f32 %v5584, %v5772
        %v5973 = vmul.f32 %v5586, %v5776
        %v5974 = vmul.f32 %v5589, %v5780
        %v5975 = vmul.f32 %v5591, %v5784
        %v5976 = vmul.f32 %v5594, %v5788
        %v5977 = vmul.f32 %v5596, %v5792
        %v5978 = vmul.f32 %v5599, %v5796
        %v5979 = vmul.f32 %v5601, %v5800
        %v5980 = vmul.f32 %v5604, %v5804
        %v5981 = vmul.f32 %v5606, %v5808
        %v5982 = vmul.f32 %v5609, %v5812
        %v5983 = vmul.f32 %v5611, %v5816
        %v5984 = vmul.f32 %v5614, %v5820
        %v5985 = vmul.f32 %v5616, %v5824
        %v5986 = vmul.f32 %v5619, %v5828
        %v5987 = vmul.f32 %v5621, %v5832
        %v5988 = vmul.f32 %v5624, %v5836
        %v5989 = vmul.f32 %v5626, %v5840
        %v5990 = vmul.f32 %v5629, %v5844
        %v5991 = vmul.f32 %v5631, %v5848
        %v5992 = vmul.f32 %v5634, %v5852
        %v5993 = vmul.f32 %v5636, %v5856
        %v5994 = vmul.f32 %v5639, %v5860
        %v5995 = vmul.f32 %v5641, %v5864
        %v5996 = vmul.f32 %v5644, %v5868
        %v5997 = vmul.f32 %v5646, %v5872
        %v5998 = vmul.f32 %v5649, %v5876
        %v5999 = vmul.f32 %v5651, %v5880
        %v6000 = vmul.f32 %v5654, %v5884
        %v6001 = vmul.f32 %v5656, %v5888
        %v6002 = vmul.f32 %v5659, %v5892
        %v6003 = vmul.f32 %v5661, %v5896
        %v6004 = vmul.f32 %v5664, %v5900
        %v6005 = vmul.f32 %v5666, %v5904
        %v6006 = vmul.f32 %v5669, %v5908
        %v6007 = vmul.f32 %v5671, %v5912
        %v6008 = vmul.f32 %v5674, %v5916
        %v6009 = vmul.f32 %v5676, %v5920
        %v6010 = vmul.f32 %v5679, %v5924
        %v6011 = vmul.f32 %v5681, %v5928
        %v6012 = vmul.f32 %v5684, %v5932
        %v6013 = vmul.f32 %v5686, %v5936
        %v6014 = vmul.f32 %v5689, %v5940
        %v6015 = vmul.f32 %v5691, %v5944
        %v6016 = vmul.f32 %v5694, %v5948
        %v6017 = vmul.f32 %v5696, %v5952
        %6018 = vset.pattern.permute.xlu0 16
        %6019 = vperm.xlu0 %6018, %v309
        %v6020 = vpop.permute.xlu0 %6019
        %6022 = vset.pattern.permute.xlu0 16
        %6023 = vperm.xlu0 %6022, %v310
        %v6024 = vpop.permute.xlu0 %6023
        %6026 = vset.pattern.permute.xlu0 16
        %6027 = vperm.xlu0 %6026, %v311
        %v6028 = vpop.permute.xlu0 %6027
        %6030 = vset.pattern.permute.xlu0 16
        %6031 = vperm.xlu0 %6030, %v312
        %v6032 = vpop.permute.xlu0 %6031
        %6034 = vset.pattern.permute.xlu0 16
        %6035 = vperm.xlu0 %6034, %v313
        %v6036 = vpop.permute.xlu0 %6035
        %6038 = vset.pattern.permute.xlu0 16
        %6039 = vperm.xlu0 %6038, %v314
        %v6040 = vpop.permute.xlu0 %6039
        %6042 = vset.pattern.permute.xlu0 16
        %6043 = vperm.xlu0 %6042, %v315
        %v6044 = vpop.permute.xlu0 %6043
        %6046 = vset.pattern.permute.xlu0 16
        %6047 = vperm.xlu0 %6046, %v316
        %v6048 = vpop.permute.xlu0 %6047
        %6050 = vset.pattern.permute.xlu0 16
        %6051 = vperm.xlu0 %6050, %v317
        %v6052 = vpop.permute.xlu0 %6051
        %6054 = vset.pattern.permute.xlu0 16
        %6055 = vperm.xlu0 %6054, %v318
        %v6056 = vpop.permute.xlu0 %6055
        %6058 = vset.pattern.permute.xlu0 16
        %6059 = vperm.xlu0 %6058, %v319
        %v6060 = vpop.permute.xlu0 %6059
        %6062 = vset.pattern.permute.xlu0 16
        %6063 = vperm.xlu0 %6062, %v320
        %v6064 = vpop.permute.xlu0 %6063
        %6066 = vset.pattern.permute.xlu0 16
        %6067 = vperm.xlu0 %6066, %v321
        %v6068 = vpop.permute.xlu0 %6067
        %6070 = vset.pattern.permute.xlu0 16
        %6071 = vperm.xlu0 %6070, %v322
        %v6072 = vpop.permute.xlu0 %6071
        %6074 = vset.pattern.permute.xlu0 16
        %6075 = vperm.xlu0 %6074, %v323
        %v6076 = vpop.permute.xlu0 %6075
        %6078 = vset.pattern.permute.xlu0 16
        %6079 = vperm.xlu0 %6078, %v324
        %v6080 = vpop.permute.xlu0 %6079
        %6082 = vset.pattern.permute.xlu0 16
        %6083 = vperm.xlu0 %6082, %v325
        %v6084 = vpop.permute.xlu0 %6083
        %6086 = vset.pattern.permute.xlu0 16
        %6087 = vperm.xlu0 %6086, %v326
        %v6088 = vpop.permute.xlu0 %6087
        %6090 = vset.pattern.permute.xlu0 16
        %6091 = vperm.xlu0 %6090, %v327
        %v6092 = vpop.permute.xlu0 %6091
        %6094 = vset.pattern.permute.xlu0 16
        %6095 = vperm.xlu0 %6094, %v328
        %v6096 = vpop.permute.xlu0 %6095
        %6098 = vset.pattern.permute.xlu0 16
        %6099 = vperm.xlu0 %6098, %v329
        %v6100 = vpop.permute.xlu0 %6099
        %6102 = vset.pattern.permute.xlu0 16
        %6103 = vperm.xlu0 %6102, %v330
        %v6104 = vpop.permute.xlu0 %6103
        %6106 = vset.pattern.permute.xlu0 16
        %6107 = vperm.xlu0 %6106, %v331
        %v6108 = vpop.permute.xlu0 %6107
        %6110 = vset.pattern.permute.xlu0 16
        %6111 = vperm.xlu0 %6110, %v332
        %v6112 = vpop.permute.xlu0 %6111
        %6114 = vset.pattern.permute.xlu0 16
        %6115 = vperm.xlu0 %6114, %v333
        %v6116 = vpop.permute.xlu0 %6115
        %6118 = vset.pattern.permute.xlu0 16
        %6119 = vperm.xlu0 %6118, %v334
        %v6120 = vpop.permute.xlu0 %6119
        %6122 = vset.pattern.permute.xlu0 16
        %6123 = vperm.xlu0 %6122, %v335
        %v6124 = vpop.permute.xlu0 %6123
        %6126 = vset.pattern.permute.xlu0 16
        %6127 = vperm.xlu0 %6126, %v336
        %v6128 = vpop.permute.xlu0 %6127
        %6130 = vset.pattern.permute.xlu0 16
        %6131 = vperm.xlu0 %6130, %v337
        %v6132 = vpop.permute.xlu0 %6131
        %6134 = vset.pattern.permute.xlu0 16
        %6135 = vperm.xlu0 %6134, %v338
        %v6136 = vpop.permute.xlu0 %6135
        %6138 = vset.pattern.permute.xlu0 16
        %6139 = vperm.xlu0 %6138, %v339
        %v6140 = vpop.permute.xlu0 %6139
        %6142 = vset.pattern.permute.xlu0 16
        %6143 = vperm.xlu0 %6142, %v340
        %v6144 = vpop.permute.xlu0 %6143
        %6146 = vset.pattern.permute.xlu0 16
        %6147 = vperm.xlu0 %6146, %v341
        %v6148 = vpop.permute.xlu0 %6147
        %6150 = vset.pattern.permute.xlu0 16
        %6151 = vperm.xlu0 %6150, %v342
        %v6152 = vpop.permute.xlu0 %6151
        %6154 = vset.pattern.permute.xlu0 16
        %6155 = vperm.xlu0 %6154, %v343
        %v6156 = vpop.permute.xlu0 %6155
        %6158 = vset.pattern.permute.xlu0 16
        %6159 = vperm.xlu0 %6158, %v344
        %v6160 = vpop.permute.xlu0 %6159
        %6162 = vset.pattern.permute.xlu0 16
        %6163 = vperm.xlu0 %6162, %v345
        %v6164 = vpop.permute.xlu0 %6163
        %6166 = vset.pattern.permute.xlu0 16
        %6167 = vperm.xlu0 %6166, %v346
        %v6168 = vpop.permute.xlu0 %6167
        %6170 = vset.pattern.permute.xlu0 16
        %6171 = vperm.xlu0 %6170, %v347
        %v6172 = vpop.permute.xlu0 %6171
        %6174 = vset.pattern.permute.xlu0 16
        %6175 = vperm.xlu0 %6174, %v348
        %v6176 = vpop.permute.xlu0 %6175
        %6178 = vset.pattern.permute.xlu0 16
        %6179 = vperm.xlu0 %6178, %v349
        %v6180 = vpop.permute.xlu0 %6179
        %6182 = vset.pattern.permute.xlu0 16
        %6183 = vperm.xlu0 %6182, %v350
        %v6184 = vpop.permute.xlu0 %6183
        %6186 = vset.pattern.permute.xlu0 16
        %6187 = vperm.xlu0 %6186, %v351
        %v6188 = vpop.permute.xlu0 %6187
        %6190 = vset.pattern.permute.xlu0 16
        %6191 = vperm.xlu0 %6190, %v352
        %v6192 = vpop.permute.xlu0 %6191
        %6194 = vset.pattern.permute.xlu0 16
        %6195 = vperm.xlu0 %6194, %v353
        %v6196 = vpop.permute.xlu0 %6195
        %6198 = vset.pattern.permute.xlu0 16
        %6199 = vperm.xlu0 %6198, %v354
        %v6200 = vpop.permute.xlu0 %6199
        %6202 = vset.pattern.permute.xlu0 16
        %6203 = vperm.xlu0 %6202, %v355
        %v6204 = vpop.permute.xlu0 %6203
        %6206 = vset.pattern.permute.xlu0 16
        %6207 = vperm.xlu0 %6206, %v356
        %v6208 = vpop.permute.xlu0 %6207
        %6210 = vset.pattern.permute.xlu0 16
        %6211 = vperm.xlu0 %6210, %v357
        %v6212 = vpop.permute.xlu0 %6211
        %6214 = vset.pattern.permute.xlu0 16
        %6215 = vperm.xlu0 %6214, %v358
        %v6216 = vpop.permute.xlu0 %6215
        %6218 = vset.pattern.permute.xlu0 16
        %6219 = vperm.xlu0 %6218, %v359
        %v6220 = vpop.permute.xlu0 %6219
        %6222 = vset.pattern.permute.xlu0 16
        %6223 = vperm.xlu0 %6222, %v360
        %v6224 = vpop.permute.xlu0 %6223
        %6226 = vset.pattern.permute.xlu0 16
        %6227 = vperm.xlu0 %6226, %v361
        %v6228 = vpop.permute.xlu0 %6227
        %6230 = vset.pattern.permute.xlu0 16
        %6231 = vperm.xlu0 %6230, %v362
        %v6232 = vpop.permute.xlu0 %6231
        %6234 = vset.pattern.permute.xlu0 16
        %6235 = vperm.xlu0 %6234, %v363
        %v6236 = vpop.permute.xlu0 %6235
        %6238 = vset.pattern.permute.xlu0 16
        %6239 = vperm.xlu0 %6238, %v364
        %v6240 = vpop.permute.xlu0 %6239
        %6242 = vset.pattern.permute.xlu0 16
        %6243 = vperm.xlu0 %6242, %v365
        %v6244 = vpop.permute.xlu0 %6243
        %6246 = vset.pattern.permute.xlu0 16
        %6247 = vperm.xlu0 %6246, %v366
        %v6248 = vpop.permute.xlu0 %6247
        %6250 = vset.pattern.permute.xlu0 16
        %6251 = vperm.xlu0 %6250, %v367
        %v6252 = vpop.permute.xlu0 %6251
        %6254 = vset.pattern.permute.xlu0 16
        %6255 = vperm.xlu0 %6254, %v368
        %v6256 = vpop.permute.xlu0 %6255
        %6258 = vset.pattern.permute.xlu0 16
        %6259 = vperm.xlu0 %6258, %v369
        %v6260 = vpop.permute.xlu0 %6259
        %6262 = vset.pattern.permute.xlu0 16
        %6263 = vperm.xlu0 %6262, %v370
        %v6264 = vpop.permute.xlu0 %6263
        %6266 = vset.pattern.permute.xlu0 16
        %6267 = vperm.xlu0 %6266, %v371
        %v6268 = vpop.permute.xlu0 %6267
        %6270 = vset.pattern.permute.xlu0 16
        %6271 = vperm.xlu0 %6270, %v372
        %v6272 = vpop.permute.xlu0 %6271
        %v6274 = vadd.f32 %v5954, %v6020
        %v6275 = vadd.f32 %v5955, %v6024
        %v6276 = vadd.f32 %v5956, %v6028
        %v6277 = vadd.f32 %v5957, %v6032
        %v6278 = vadd.f32 %v5958, %v6036
        %v6279 = vadd.f32 %v5959, %v6040
        %v6280 = vadd.f32 %v5960, %v6044
        %v6281 = vadd.f32 %v5961, %v6048
        %v6282 = vadd.f32 %v5962, %v6052
        %v6283 = vadd.f32 %v5963, %v6056
        %v6284 = vadd.f32 %v5964, %v6060
        %v6285 = vadd.f32 %v5965, %v6064
        %v6286 = vadd.f32 %v5966, %v6068
        %v6287 = vadd.f32 %v5967, %v6072
        %v6288 = vadd.f32 %v5968, %v6076
        %v6289 = vadd.f32 %v5969, %v6080
        %v6290 = vadd.f32 %v5970, %v6084
        %v6291 = vadd.f32 %v5971, %v6088
        %v6292 = vadd.f32 %v5972, %v6092
        %v6293 = vadd.f32 %v5973, %v6096
        %v6294 = vadd.f32 %v5974, %v6100
        %v6295 = vadd.f32 %v5975, %v6104
        %v6296 = vadd.f32 %v5976, %v6108
        %v6297 = vadd.f32 %v5977, %v6112
        %v6298 = vadd.f32 %v5978, %v6116
        %v6299 = vadd.f32 %v5979, %v6120
        %v6300 = vadd.f32 %v5980, %v6124
        %v6301 = vadd.f32 %v5981, %v6128
        %v6302 = vadd.f32 %v5982, %v6132
        %v6303 = vadd.f32 %v5983, %v6136
        %v6304 = vadd.f32 %v5984, %v6140
        %v6305 = vadd.f32 %v5985, %v6144
        %v6306 = vadd.f32 %v5986, %v6148
        %v6307 = vadd.f32 %v5987, %v6152
        %v6308 = vadd.f32 %v5988, %v6156
        %v6309 = vadd.f32 %v5989, %v6160
        %v6310 = vadd.f32 %v5990, %v6164
        %v6311 = vadd.f32 %v5991, %v6168
        %v6312 = vadd.f32 %v5992, %v6172
        %v6313 = vadd.f32 %v5993, %v6176
        %v6314 = vadd.f32 %v5994, %v6180
        %v6315 = vadd.f32 %v5995, %v6184
        %v6316 = vadd.f32 %v5996, %v6188
        %v6317 = vadd.f32 %v5997, %v6192
        %v6318 = vadd.f32 %v5998, %v6196
        %v6319 = vadd.f32 %v5999, %v6200
        %v6320 = vadd.f32 %v6000, %v6204
        %v6321 = vadd.f32 %v6001, %v6208
        %v6322 = vadd.f32 %v6002, %v6212
        %v6323 = vadd.f32 %v6003, %v6216
        %v6324 = vadd.f32 %v6004, %v6220
        %v6325 = vadd.f32 %v6005, %v6224
        %v6326 = vadd.f32 %v6006, %v6228
        %v6327 = vadd.f32 %v6007, %v6232
        %v6328 = vadd.f32 %v6008, %v6236
        %v6329 = vadd.f32 %v6009, %v6240
        %v6330 = vadd.f32 %v6010, %v6244
        %v6331 = vadd.f32 %v6011, %v6248
        %v6332 = vadd.f32 %v6012, %v6252
        %v6333 = vadd.f32 %v6013, %v6256
        %v6334 = vadd.f32 %v6014, %v6260
        %v6335 = vadd.f32 %v6015, %v6264
        %v6336 = vadd.f32 %v6016, %v6268
        %v6337 = vadd.f32 %v6017, %v6272
        %v6338 = vadd.f32 %v1943, %v4656
        %v6339 = vadd.f32 %v1944, %v4657
        %v6340 = vadd.f32 %v1945, %v4658
        %v6341 = vadd.f32 %v1946, %v4659
        %v6342 = vadd.f32 %v1947, %v4660
        %v6343 = vadd.f32 %v1948, %v4661
        %v6344 = vadd.f32 %v1949, %v4662
        %v6345 = vadd.f32 %v1950, %v4663
        %v6346 = vadd.f32 %v1951, %v4664
        %v6347 = vadd.f32 %v1952, %v4665
        %v6348 = vadd.f32 %v1953, %v4666
        %v6349 = vadd.f32 %v1954, %v4667
        %v6350 = vadd.f32 %v1955, %v4668
        %v6351 = vadd.f32 %v1956, %v4669
        %v6352 = vadd.f32 %v1957, %v4670
        %v6353 = vadd.f32 %v1958, %v4671
        %v6354 = vadd.f32 %v1959, %v4672
        %v6355 = vadd.f32 %v1960, %v4673
        %v6356 = vadd.f32 %v1961, %v4674
        %v6357 = vadd.f32 %v1962, %v4675
        %v6358 = vadd.f32 %v1963, %v4676
        %v6359 = vadd.f32 %v1964, %v4677
        %v6360 = vadd.f32 %v1965, %v4678
        %v6361 = vadd.f32 %v1966, %v4679
        %v6362 = vadd.f32 %v1967, %v4680
        %v6363 = vadd.f32 %v1968, %v4681
        %v6364 = vadd.f32 %v1969, %v4682
        %v6365 = vadd.f32 %v1970, %v4683
        %v6366 = vadd.f32 %v1971, %v4684
        %v6367 = vadd.f32 %v1972, %v4685
        %v6368 = vadd.f32 %v1973, %v4686
        %v6369 = vadd.f32 %v1974, %v4687
        %v6370 = vadd.f32 %v1975, %v4688
        %v6371 = vadd.f32 %v1976, %v4689
        %v6372 = vadd.f32 %v1977, %v4690
        %v6373 = vadd.f32 %v1978, %v4691
        %v6374 = vadd.f32 %v1979, %v4692
        %v6375 = vadd.f32 %v1980, %v4693
        %v6376 = vadd.f32 %v1981, %v4694
        %v6377 = vadd.f32 %v1982, %v4695
        %v6378 = vadd.f32 %v1983, %v4696
        %v6379 = vadd.f32 %v1984, %v4697
        %v6380 = vadd.f32 %v1985, %v4698
        %v6381 = vadd.f32 %v1986, %v4699
        %v6382 = vadd.f32 %v1987, %v4700
        %v6383 = vadd.f32 %v1988, %v4701
        %v6384 = vadd.f32 %v1989, %v4702
        %v6385 = vadd.f32 %v1990, %v4703
        %v6386 = vadd.f32 %v1991, %v4704
        %v6387 = vadd.f32 %v1992, %v4705
        %v6388 = vadd.f32 %v1993, %v4706
        %v6389 = vadd.f32 %v1994, %v4707
        %v6390 = vadd.f32 %v1995, %v4708
        %v6391 = vadd.f32 %v1996, %v4709
        %v6392 = vadd.f32 %v1997, %v4710
        %v6393 = vadd.f32 %v1998, %v4711
        %v6394 = vadd.f32 %v1999, %v4712
        %v6395 = vadd.f32 %v2000, %v4713
        %v6396 = vadd.f32 %v2001, %v4714
        %v6397 = vadd.f32 %v2002, %v4715
        %v6398 = vadd.f32 %v2003, %v4716
        %v6399 = vadd.f32 %v2004, %v4717
        %v6400 = vadd.f32 %v2005, %v4718
        %v6401 = vadd.f32 %v2006, %v4719
        %v6402 = vadd.f32 %v2583, %v5465
        %v6403 = vadd.f32 %v2584, %v5466
        %v6404 = vadd.f32 %v2585, %v5467
        %v6405 = vadd.f32 %v2586, %v5468
        %v6406 = vadd.f32 %v2587, %v5469
        %v6407 = vadd.f32 %v2588, %v5470
        %v6408 = vadd.f32 %v2589, %v5471
        %v6409 = vadd.f32 %v2590, %v5472
        %v6410 = vadd.f32 %v2591, %v5473
        %v6411 = vadd.f32 %v2592, %v5474
        %v6412 = vadd.f32 %v2593, %v5475
        %v6413 = vadd.f32 %v2594, %v5476
        %v6414 = vadd.f32 %v2595, %v5477
        %v6415 = vadd.f32 %v2596, %v5478
        %v6416 = vadd.f32 %v2597, %v5479
        %v6417 = vadd.f32 %v2598, %v5480
        %v6418 = vadd.f32 %v2599, %v5481
        %v6419 = vadd.f32 %v2600, %v5482
        %v6420 = vadd.f32 %v2601, %v5483
        %v6421 = vadd.f32 %v2602, %v5484
        %v6422 = vadd.f32 %v2603, %v5485
        %v6423 = vadd.f32 %v2604, %v5486
        %v6424 = vadd.f32 %v2605, %v5487
        %v6425 = vadd.f32 %v2606, %v5488
        %v6426 = vadd.f32 %v2607, %v5489
        %v6427 = vadd.f32 %v2608, %v5490
        %v6428 = vadd.f32 %v2609, %v5491
        %v6429 = vadd.f32 %v2610, %v5492
        %v6430 = vadd.f32 %v2611, %v5493
        %v6431 = vadd.f32 %v2612, %v5494
        %v6432 = vadd.f32 %v2613, %v5495
        %v6433 = vadd.f32 %v2614, %v5496
        %v6434 = vadd.f32 %v2615, %v5497
        %v6435 = vadd.f32 %v2616, %v5498
        %v6436 = vadd.f32 %v2617, %v5499
        %v6437 = vadd.f32 %v2618, %v5500
        %v6438 = vadd.f32 %v2619, %v5501
        %v6439 = vadd.f32 %v2620, %v5502
        %v6440 = vadd.f32 %v2621, %v5503
        %v6441 = vadd.f32 %v2622, %v5504
        %v6442 = vadd.f32 %v2623, %v5505
        %v6443 = vadd.f32 %v2624, %v5506
        %v6444 = vadd.f32 %v2625, %v5507
        %v6445 = vadd.f32 %v2626, %v5508
        %v6446 = vadd.f32 %v2627, %v5509
        %v6447 = vadd.f32 %v2628, %v5510
        %v6448 = vadd.f32 %v2629, %v5511
        %v6449 = vadd.f32 %v2630, %v5512
        %v6450 = vadd.f32 %v2631, %v5513
        %v6451 = vadd.f32 %v2632, %v5514
        %v6452 = vadd.f32 %v2633, %v5515
        %v6453 = vadd.f32 %v2634, %v5516
        %v6454 = vadd.f32 %v2635, %v5517
        %v6455 = vadd.f32 %v2636, %v5518
        %v6456 = vadd.f32 %v2637, %v5519
        %v6457 = vadd.f32 %v2638, %v5520
        %v6458 = vadd.f32 %v2639, %v5521
        %v6459 = vadd.f32 %v2640, %v5522
        %v6460 = vadd.f32 %v2641, %v5523
        %v6461 = vadd.f32 %v2642, %v5524
        %v6462 = vadd.f32 %v2643, %v5525
        %v6463 = vadd.f32 %v2644, %v5526
        %v6464 = vadd.f32 %v2645, %v5527
        %v6465 = vadd.f32 %v2646, %v5528
        %v6466 = vadd.f32 %v3223, %v6274
        %v6467 = vadd.f32 %v3224, %v6275
        %v6468 = vadd.f32 %v3225, %v6276
        %v6469 = vadd.f32 %v3226, %v6277
        %v6470 = vadd.f32 %v3227, %v6278
        %v6471 = vadd.f32 %v3228, %v6279
        %v6472 = vadd.f32 %v3229, %v6280
        %v6473 = vadd.f32 %v3230, %v6281
        %v6474 = vadd.f32 %v3231, %v6282
        %v6475 = vadd.f32 %v3232, %v6283
        %v6476 = vadd.f32 %v3233, %v6284
        %v6477 = vadd.f32 %v3234, %v6285
        %v6478 = vadd.f32 %v3235, %v6286
        %v6479 = vadd.f32 %v3236, %v6287
        %v6480 = vadd.f32 %v3237, %v6288
        %v6481 = vadd.f32 %v3238, %v6289
        %v6482 = vadd.f32 %v3239, %v6290
        %v6483 = vadd.f32 %v3240, %v6291
        %v6484 = vadd.f32 %v3241, %v6292
        %v6485 = vadd.f32 %v3242, %v6293
        %v6486 = vadd.f32 %v3243, %v6294
        %v6487 = vadd.f32 %v3244, %v6295
        %v6488 = vadd.f32 %v3245, %v6296
        %v6489 = vadd.f32 %v3246, %v6297
        %v6490 = vadd.f32 %v3247, %v6298
        %v6491 = vadd.f32 %v3248, %v6299
        %v6492 = vadd.f32 %v3249, %v6300
        %v6493 = vadd.f32 %v3250, %v6301
        %v6494 = vadd.f32 %v3251, %v6302
        %v6495 = vadd.f32 %v3252, %v6303
        %v6496 = vadd.f32 %v3253, %v6304
        %v6497 = vadd.f32 %v3254, %v6305
        %v6498 = vadd.f32 %v3255, %v6306
        %v6499 = vadd.f32 %v3256, %v6307
        %v6500 = vadd.f32 %v3257, %v6308
        %v6501 = vadd.f32 %v3258, %v6309
        %v6502 = vadd.f32 %v3259, %v6310
        %v6503 = vadd.f32 %v3260, %v6311
        %v6504 = vadd.f32 %v3261, %v6312
        %v6505 = vadd.f32 %v3262, %v6313
        %v6506 = vadd.f32 %v3263, %v6314
        %v6507 = vadd.f32 %v3264, %v6315
        %v6508 = vadd.f32 %v3265, %v6316
        %v6509 = vadd.f32 %v3266, %v6317
        %v6510 = vadd.f32 %v3267, %v6318
        %v6511 = vadd.f32 %v3268, %v6319
        %v6512 = vadd.f32 %v3269, %v6320
        %v6513 = vadd.f32 %v3270, %v6321
        %v6514 = vadd.f32 %v3271, %v6322
        %v6515 = vadd.f32 %v3272, %v6323
        %v6516 = vadd.f32 %v3273, %v6324
        %v6517 = vadd.f32 %v3274, %v6325
        %v6518 = vadd.f32 %v3275, %v6326
        %v6519 = vadd.f32 %v3276, %v6327
        %v6520 = vadd.f32 %v3277, %v6328
        %v6521 = vadd.f32 %v3278, %v6329
        %v6522 = vadd.f32 %v3279, %v6330
        %v6523 = vadd.f32 %v3280, %v6331
        %v6524 = vadd.f32 %v3281, %v6332
        %v6525 = vadd.f32 %v3282, %v6333
        %v6526 = vadd.f32 %v3283, %v6334
        %v6527 = vadd.f32 %v3284, %v6335
        %v6528 = vadd.f32 %v3285, %v6336
        %v6529 = vadd.f32 %v3286, %v6337
        %v6530 = vpack.c.bf16 %v4657, %v4656
        %v6531 = vpack.c.bf16 %v4659, %v4658
        %v6532 = vpack.c.bf16 %v4661, %v4660
        %v6533 = vpack.c.bf16 %v4663, %v4662
        %v6534 = vpack.c.bf16 %v4665, %v4664
        %v6535 = vpack.c.bf16 %v4667, %v4666
        %v6536 = vpack.c.bf16 %v4669, %v4668
        %v6537 = vpack.c.bf16 %v4671, %v4670
        %v6538 = vpack.c.bf16 %v4673, %v4672
        %v6539 = vpack.c.bf16 %v4675, %v4674
        %v6540 = vpack.c.bf16 %v4677, %v4676
        %v6541 = vpack.c.bf16 %v4679, %v4678
        %v6542 = vpack.c.bf16 %v4681, %v4680
        %v6543 = vpack.c.bf16 %v4683, %v4682
        %v6544 = vpack.c.bf16 %v4685, %v4684
        %v6545 = vpack.c.bf16 %v4687, %v4686
        %v6546 = vpack.c.bf16 %v4689, %v4688
        %v6547 = vpack.c.bf16 %v4691, %v4690
        %v6548 = vpack.c.bf16 %v4693, %v4692
        %v6549 = vpack.c.bf16 %v4695, %v4694
        %v6550 = vpack.c.bf16 %v4697, %v4696
        %v6551 = vpack.c.bf16 %v4699, %v4698
        %v6552 = vpack.c.bf16 %v4701, %v4700
        %v6553 = vpack.c.bf16 %v4703, %v4702
        %v6554 = vpack.c.bf16 %v4705, %v4704
        %v6555 = vpack.c.bf16 %v4707, %v4706
        %v6556 = vpack.c.bf16 %v4709, %v4708
        %v6557 = vpack.c.bf16 %v4711, %v4710
        %v6558 = vpack.c.bf16 %v4713, %v4712
        %v6559 = vpack.c.bf16 %v4715, %v4714
        %v6560 = vpack.c.bf16 %v4717, %v4716
        %v6561 = vpack.c.bf16 %v4719, %v4718
        %v6562 = vunpack.c.l.bf16 %v6530
        %v6563 = vunpack.c.h.bf16 %v6530
        %v6564 = vunpack.c.l.bf16 %v6531
        %v6565 = vunpack.c.h.bf16 %v6531
        %v6566 = vunpack.c.l.bf16 %v6532
        %v6567 = vunpack.c.h.bf16 %v6532
        %v6568 = vunpack.c.l.bf16 %v6533
        %v6569 = vunpack.c.h.bf16 %v6533
        %v6570 = vunpack.c.l.bf16 %v6534
        %v6571 = vunpack.c.h.bf16 %v6534
        %v6572 = vunpack.c.l.bf16 %v6535
        %v6573 = vunpack.c.h.bf16 %v6535
        %v6574 = vunpack.c.l.bf16 %v6536
        %v6575 = vunpack.c.h.bf16 %v6536
        %v6576 = vunpack.c.l.bf16 %v6537
        %v6577 = vunpack.c.h.bf16 %v6537
        %v6578 = vunpack.c.l.bf16 %v6538
        %v6579 = vunpack.c.h.bf16 %v6538
        %v6580 = vunpack.c.l.bf16 %v6539
        %v6581 = vunpack.c.h.bf16 %v6539
        %v6582 = vunpack.c.l.bf16 %v6540
        %v6583 = vunpack.c.h.bf16 %v6540
        %v6584 = vunpack.c.l.bf16 %v6541
        %v6585 = vunpack.c.h.bf16 %v6541
        %v6586 = vunpack.c.l.bf16 %v6542
        %v6587 = vunpack.c.h.bf16 %v6542
        %v6588 = vunpack.c.l.bf16 %v6543
        %v6589 = vunpack.c.h.bf16 %v6543
        %v6590 = vunpack.c.l.bf16 %v6544
        %v6591 = vunpack.c.h.bf16 %v6544
        %v6592 = vunpack.c.l.bf16 %v6545
        %v6593 = vunpack.c.h.bf16 %v6545
        %v6594 = vunpack.c.l.bf16 %v6546
        %v6595 = vunpack.c.h.bf16 %v6546
        %v6596 = vunpack.c.l.bf16 %v6547
        %v6597 = vunpack.c.h.bf16 %v6547
        %v6598 = vunpack.c.l.bf16 %v6548
        %v6599 = vunpack.c.h.bf16 %v6548
        %v6600 = vunpack.c.l.bf16 %v6549
        %v6601 = vunpack.c.h.bf16 %v6549
        %v6602 = vunpack.c.l.bf16 %v6550
        %v6603 = vunpack.c.h.bf16 %v6550
        %v6604 = vunpack.c.l.bf16 %v6551
        %v6605 = vunpack.c.h.bf16 %v6551
        %v6606 = vunpack.c.l.bf16 %v6552
        %v6607 = vunpack.c.h.bf16 %v6552
        %v6608 = vunpack.c.l.bf16 %v6553
        %v6609 = vunpack.c.h.bf16 %v6553
        %v6610 = vunpack.c.l.bf16 %v6554
        %v6611 = vunpack.c.h.bf16 %v6554
        %v6612 = vunpack.c.l.bf16 %v6555
        %v6613 = vunpack.c.h.bf16 %v6555
        %v6614 = vunpack.c.l.bf16 %v6556
        %v6615 = vunpack.c.h.bf16 %v6556
        %v6616 = vunpack.c.l.bf16 %v6557
        %v6617 = vunpack.c.h.bf16 %v6557
        %v6618 = vunpack.c.l.bf16 %v6558
        %v6619 = vunpack.c.h.bf16 %v6558
        %v6620 = vunpack.c.l.bf16 %v6559
        %v6621 = vunpack.c.h.bf16 %v6559
        %v6622 = vunpack.c.l.bf16 %v6560
        %v6623 = vunpack.c.h.bf16 %v6560
        %v6624 = vunpack.c.l.bf16 %v6561
        %v6625 = vunpack.c.h.bf16 %v6561
        %v6626 = vtanh.pop %v6562
        %v6627 = vtanh.pop %v6563
        %v6628 = vtanh.pop %v6564
        %v6629 = vtanh.pop %v6565
        %v6630 = vtanh.pop %v6566
        %v6631 = vtanh.pop %v6567
        %v6632 = vtanh.pop %v6568
        %v6633 = vtanh.pop %v6569
        %v6634 = vtanh.pop %v6570
        %v6635 = vtanh.pop %v6571
        %v6636 = vtanh.pop %v6572
        %v6637 = vtanh.pop %v6573
        %v6638 = vtanh.pop %v6574
        %v6639 = vtanh.pop %v6575
        %v6640 = vtanh.pop %v6576
        %v6641 = vtanh.pop %v6577
        %v6642 = vtanh.pop %v6578
        %v6643 = vtanh.pop %v6579
        %v6644 = vtanh.pop %v6580
        %v6645 = vtanh.pop %v6581
        %v6646 = vtanh.pop %v6582
        %v6647 = vtanh.pop %v6583
        %v6648 = vtanh.pop %v6584
        %v6649 = vtanh.pop %v6585
        %v6650 = vtanh.pop %v6586
        %v6651 = vtanh.pop %v6587
        %v6652 = vtanh.pop %v6588
        %v6653 = vtanh.pop %v6589
        %v6654 = vtanh.pop %v6590
        %v6655 = vtanh.pop %v6591
        %v6656 = vtanh.pop %v6592
        %v6657 = vtanh.pop %v6593
        %v6658 = vtanh.pop %v6594
        %v6659 = vtanh.pop %v6595
        %v6660 = vtanh.pop %v6596
        %v6661 = vtanh.pop %v6597
        %v6662 = vtanh.pop %v6598
        %v6663 = vtanh.pop %v6599
        %v6664 = vtanh.pop %v6600
        %v6665 = vtanh.pop %v6601
        %v6666 = vtanh.pop %v6602
        %v6667 = vtanh.pop %v6603
        %v6668 = vtanh.pop %v6604
        %v6669 = vtanh.pop %v6605
        %v6670 = vtanh.pop %v6606
        %v6671 = vtanh.pop %v6607
        %v6672 = vtanh.pop %v6608
        %v6673 = vtanh.pop %v6609
        %v6674 = vtanh.pop %v6610
        %v6675 = vtanh.pop %v6611
        %v6676 = vtanh.pop %v6612
        %v6677 = vtanh.pop %v6613
        %v6678 = vtanh.pop %v6614
        %v6679 = vtanh.pop %v6615
        %v6680 = vtanh.pop %v6616
        %v6681 = vtanh.pop %v6617
        %v6682 = vtanh.pop %v6618
        %v6683 = vtanh.pop %v6619
        %v6684 = vtanh.pop %v6620
        %v6685 = vtanh.pop %v6621
        %v6686 = vtanh.pop %v6622
        %v6687 = vtanh.pop %v6623
        %v6688 = vtanh.pop %v6624
        %v6689 = vtanh.pop %v6625
        %v6690 = vpack.c.bf16 %v6627, %v6626
        %v6691 = vpack.c.bf16 %v6629, %v6628
        %v6692 = vpack.c.bf16 %v6631, %v6630
        %v6693 = vpack.c.bf16 %v6633, %v6632
        %v6694 = vpack.c.bf16 %v6635, %v6634
        %v6695 = vpack.c.bf16 %v6637, %v6636
        %v6696 = vpack.c.bf16 %v6639, %v6638
        %v6697 = vpack.c.bf16 %v6641, %v6640
        %v6698 = vpack.c.bf16 %v6643, %v6642
        %v6699 = vpack.c.bf16 %v6645, %v6644
        %v6700 = vpack.c.bf16 %v6647, %v6646
        %v6701 = vpack.c.bf16 %v6649, %v6648
        %v6702 = vpack.c.bf16 %v6651, %v6650
        %v6703 = vpack.c.bf16 %v6653, %v6652
        %v6704 = vpack.c.bf16 %v6655, %v6654
        %v6705 = vpack.c.bf16 %v6657, %v6656
        %v6706 = vpack.c.bf16 %v6659, %v6658
        %v6707 = vpack.c.bf16 %v6661, %v6660
        %v6708 = vpack.c.bf16 %v6663, %v6662
        %v6709 = vpack.c.bf16 %v6665, %v6664
        %v6710 = vpack.c.bf16 %v6667, %v6666
        %v6711 = vpack.c.bf16 %v6669, %v6668
        %v6712 = vpack.c.bf16 %v6671, %v6670
        %v6713 = vpack.c.bf16 %v6673, %v6672
        %v6714 = vpack.c.bf16 %v6675, %v6674
        %v6715 = vpack.c.bf16 %v6677, %v6676
        %v6716 = vpack.c.bf16 %v6679, %v6678
        %v6717 = vpack.c.bf16 %v6681, %v6680
        %v6718 = vpack.c.bf16 %v6683, %v6682
        %v6719 = vpack.c.bf16 %v6685, %v6684
        %v6720 = vpack.c.bf16 %v6687, %v6686
        %v6721 = vpack.c.bf16 %v6689, %v6688
        %v6722 = vpack.c.bf16 %v5466, %v5465
        %v6723 = vpack.c.bf16 %v5468, %v5467
        %v6724 = vpack.c.bf16 %v5470, %v5469
        %v6725 = vpack.c.bf16 %v5472, %v5471
        %v6726 = vpack.c.bf16 %v5474, %v5473
        %v6727 = vpack.c.bf16 %v5476, %v5475
        %v6728 = vpack.c.bf16 %v5478, %v5477
        %v6729 = vpack.c.bf16 %v5480, %v5479
        %v6730 = vpack.c.bf16 %v5482, %v5481
        %v6731 = vpack.c.bf16 %v5484, %v5483
        %v6732 = vpack.c.bf16 %v5486, %v5485
        %v6733 = vpack.c.bf16 %v5488, %v5487
        %v6734 = vpack.c.bf16 %v5490, %v5489
        %v6735 = vpack.c.bf16 %v5492, %v5491
        %v6736 = vpack.c.bf16 %v5494, %v5493
        %v6737 = vpack.c.bf16 %v5496, %v5495
        %v6738 = vpack.c.bf16 %v5498, %v5497
        %v6739 = vpack.c.bf16 %v5500, %v5499
        %v6740 = vpack.c.bf16 %v5502, %v5501
        %v6741 = vpack.c.bf16 %v5504, %v5503
        %v6742 = vpack.c.bf16 %v5506, %v5505
        %v6743 = vpack.c.bf16 %v5508, %v5507
        %v6744 = vpack.c.bf16 %v5510, %v5509
        %v6745 = vpack.c.bf16 %v5512, %v5511
        %v6746 = vpack.c.bf16 %v5514, %v5513
        %v6747 = vpack.c.bf16 %v5516, %v5515
        %v6748 = vpack.c.bf16 %v5518, %v5517
        %v6749 = vpack.c.bf16 %v5520, %v5519
        %v6750 = vpack.c.bf16 %v5522, %v5521
        %v6751 = vpack.c.bf16 %v5524, %v5523
        %v6752 = vpack.c.bf16 %v5526, %v5525
        %v6753 = vpack.c.bf16 %v5528, %v5527
        %v6754 = vunpack.c.l.bf16 %v6722
        %v6755 = vunpack.c.h.bf16 %v6722
        %v6756 = vunpack.c.l.bf16 %v6723
        %v6757 = vunpack.c.h.bf16 %v6723
        %v6758 = vunpack.c.l.bf16 %v6724
        %v6759 = vunpack.c.h.bf16 %v6724
        %v6760 = vunpack.c.l.bf16 %v6725
        %v6761 = vunpack.c.h.bf16 %v6725
        %v6762 = vunpack.c.l.bf16 %v6726
        %v6763 = vunpack.c.h.bf16 %v6726
        %v6764 = vunpack.c.l.bf16 %v6727
        %v6765 = vunpack.c.h.bf16 %v6727
        %v6766 = vunpack.c.l.bf16 %v6728
        %v6767 = vunpack.c.h.bf16 %v6728
        %v6768 = vunpack.c.l.bf16 %v6729
        %v6769 = vunpack.c.h.bf16 %v6729
        %v6770 = vunpack.c.l.bf16 %v6730
        %v6771 = vunpack.c.h.bf16 %v6730
        %v6772 = vunpack.c.l.bf16 %v6731
        %v6773 = vunpack.c.h.bf16 %v6731
        %v6774 = vunpack.c.l.bf16 %v6732
        %v6775 = vunpack.c.h.bf16 %v6732
        %v6776 = vunpack.c.l.bf16 %v6733
        %v6777 = vunpack.c.h.bf16 %v6733
        %v6778 = vunpack.c.l.bf16 %v6734
        %v6779 = vunpack.c.h.bf16 %v6734
        %v6780 = vunpack.c.l.bf16 %v6735
        %v6781 = vunpack.c.h.bf16 %v6735
        %v6782 = vunpack.c.l.bf16 %v6736
        %v6783 = vunpack.c.h.bf16 %v6736
        %v6784 = vunpack.c.l.bf16 %v6737
        %v6785 = vunpack.c.h.bf16 %v6737
        %v6786 = vunpack.c.l.bf16 %v6738
        %v6787 = vunpack.c.h.bf16 %v6738
        %v6788 = vunpack.c.l.bf16 %v6739
        %v6789 = vunpack.c.h.bf16 %v6739
        %v6790 = vunpack.c.l.bf16 %v6740
        %v6791 = vunpack.c.h.bf16 %v6740
        %v6792 = vunpack.c.l.bf16 %v6741
        %v6793 = vunpack.c.h.bf16 %v6741
        %v6794 = vunpack.c.l.bf16 %v6742
        %v6795 = vunpack.c.h.bf16 %v6742
        %v6796 = vunpack.c.l.bf16 %v6743
        %v6797 = vunpack.c.h.bf16 %v6743
        %v6798 = vunpack.c.l.bf16 %v6744
        %v6799 = vunpack.c.h.bf16 %v6744
        %v6800 = vunpack.c.l.bf16 %v6745
        %v6801 = vunpack.c.h.bf16 %v6745
        %v6802 = vunpack.c.l.bf16 %v6746
        %v6803 = vunpack.c.h.bf16 %v6746
        %v6804 = vunpack.c.l.bf16 %v6747
        %v6805 = vunpack.c.h.bf16 %v6747
        %v6806 = vunpack.c.l.bf16 %v6748
        %v6807 = vunpack.c.h.bf16 %v6748
        %v6808 = vunpack.c.l.bf16 %v6749
        %v6809 = vunpack.c.h.bf16 %v6749
        %v6810 = vunpack.c.l.bf16 %v6750
        %v6811 = vunpack.c.h.bf16 %v6750
        %v6812 = vunpack.c.l.bf16 %v6751
        %v6813 = vunpack.c.h.bf16 %v6751
        %v6814 = vunpack.c.l.bf16 %v6752
        %v6815 = vunpack.c.h.bf16 %v6752
        %v6816 = vunpack.c.l.bf16 %v6753
        %v6817 = vunpack.c.h.bf16 %v6753
        %v6818 = vtanh.pop %v6754
        %v6819 = vtanh.pop %v6755
        %v6820 = vtanh.pop %v6756
        %v6821 = vtanh.pop %v6757
        %v6822 = vtanh.pop %v6758
        %v6823 = vtanh.pop %v6759
        %v6824 = vtanh.pop %v6760
        %v6825 = vtanh.pop %v6761
        %v6826 = vtanh.pop %v6762
        %v6827 = vtanh.pop %v6763
        %v6828 = vtanh.pop %v6764
        %v6829 = vtanh.pop %v6765
        %v6830 = vtanh.pop %v6766
        %v6831 = vtanh.pop %v6767
        %v6832 = vtanh.pop %v6768
        %v6833 = vtanh.pop %v6769
        %v6834 = vtanh.pop %v6770
        %v6835 = vtanh.pop %v6771
        %v6836 = vtanh.pop %v6772
        %v6837 = vtanh.pop %v6773
        %v6838 = vtanh.pop %v6774
        %v6839 = vtanh.pop %v6775
        %v6840 = vtanh.pop %v6776
        %v6841 = vtanh.pop %v6777
        %v6842 = vtanh.pop %v6778
        %v6843 = vtanh.pop %v6779
        %v6844 = vtanh.pop %v6780
        %v6845 = vtanh.pop %v6781
        %v6846 = vtanh.pop %v6782
        %v6847 = vtanh.pop %v6783
        %v6848 = vtanh.pop %v6784
        %v6849 = vtanh.pop %v6785
        %v6850 = vtanh.pop %v6786
        %v6851 = vtanh.pop %v6787
        %v6852 = vtanh.pop %v6788
        %v6853 = vtanh.pop %v6789
        %v6854 = vtanh.pop %v6790
        %v6855 = vtanh.pop %v6791
        %v6856 = vtanh.pop %v6792
        %v6857 = vtanh.pop %v6793
        %v6858 = vtanh.pop %v6794
        %v6859 = vtanh.pop %v6795
        %v6860 = vtanh.pop %v6796
        %v6861 = vtanh.pop %v6797
        %v6862 = vtanh.pop %v6798
        %v6863 = vtanh.pop %v6799
        %v6864 = vtanh.pop %v6800
        %v6865 = vtanh.pop %v6801
        %v6866 = vtanh.pop %v6802
        %v6867 = vtanh.pop %v6803
        %v6868 = vtanh.pop %v6804
        %v6869 = vtanh.pop %v6805
        %v6870 = vtanh.pop %v6806
        %v6871 = vtanh.pop %v6807
        %v6872 = vtanh.pop %v6808
        %v6873 = vtanh.pop %v6809
        %v6874 = vtanh.pop %v6810
        %v6875 = vtanh.pop %v6811
        %v6876 = vtanh.pop %v6812
        %v6877 = vtanh.pop %v6813
        %v6878 = vtanh.pop %v6814
        %v6879 = vtanh.pop %v6815
        %v6880 = vtanh.pop %v6816
        %v6881 = vtanh.pop %v6817
        %v6882 = vpack.c.bf16 %v6819, %v6818
        %v6883 = vpack.c.bf16 %v6821, %v6820
        %v6884 = vpack.c.bf16 %v6823, %v6822
        %v6885 = vpack.c.bf16 %v6825, %v6824
        %v6886 = vpack.c.bf16 %v6827, %v6826
        %v6887 = vpack.c.bf16 %v6829, %v6828
        %v6888 = vpack.c.bf16 %v6831, %v6830
        %v6889 = vpack.c.bf16 %v6833, %v6832
        %v6890 = vpack.c.bf16 %v6835, %v6834
        %v6891 = vpack.c.bf16 %v6837, %v6836
        %v6892 = vpack.c.bf16 %v6839, %v6838
        %v6893 = vpack.c.bf16 %v6841, %v6840
        %v6894 = vpack.c.bf16 %v6843, %v6842
        %v6895 = vpack.c.bf16 %v6845, %v6844
        %v6896 = vpack.c.bf16 %v6847, %v6846
        %v6897 = vpack.c.bf16 %v6849, %v6848
        %v6898 = vpack.c.bf16 %v6851, %v6850
        %v6899 = vpack.c.bf16 %v6853, %v6852
        %v6900 = vpack.c.bf16 %v6855, %v6854
        %v6901 = vpack.c.bf16 %v6857, %v6856
        %v6902 = vpack.c.bf16 %v6859, %v6858
        %v6903 = vpack.c.bf16 %v6861, %v6860
        %v6904 = vpack.c.bf16 %v6863, %v6862
        %v6905 = vpack.c.bf16 %v6865, %v6864
        %v6906 = vpack.c.bf16 %v6867, %v6866
        %v6907 = vpack.c.bf16 %v6869, %v6868
        %v6908 = vpack.c.bf16 %v6871, %v6870
        %v6909 = vpack.c.bf16 %v6873, %v6872
        %v6910 = vpack.c.bf16 %v6875, %v6874
        %v6911 = vpack.c.bf16 %v6877, %v6876
        %v6912 = vpack.c.bf16 %v6879, %v6878
        %v6913 = vpack.c.bf16 %v6881, %v6880
        %v6914 = vpack.c.bf16 %v6275, %v6274
        %v6915 = vpack.c.bf16 %v6277, %v6276
        %v6916 = vpack.c.bf16 %v6279, %v6278
        %v6917 = vpack.c.bf16 %v6281, %v6280
        %v6918 = vpack.c.bf16 %v6283, %v6282
        %v6919 = vpack.c.bf16 %v6285, %v6284
        %v6920 = vpack.c.bf16 %v6287, %v6286
        %v6921 = vpack.c.bf16 %v6289, %v6288
        %v6922 = vpack.c.bf16 %v6291, %v6290
        %v6923 = vpack.c.bf16 %v6293, %v6292
        %v6924 = vpack.c.bf16 %v6295, %v6294
        %v6925 = vpack.c.bf16 %v6297, %v6296
        %v6926 = vpack.c.bf16 %v6299, %v6298
        %v6927 = vpack.c.bf16 %v6301, %v6300
        %v6928 = vpack.c.bf16 %v6303, %v6302
        %v6929 = vpack.c.bf16 %v6305, %v6304
        %v6930 = vpack.c.bf16 %v6307, %v6306
        %v6931 = vpack.c.bf16 %v6309, %v6308
        %v6932 = vpack.c.bf16 %v6311, %v6310
        %v6933 = vpack.c.bf16 %v6313, %v6312
        %v6934 = vpack.c.bf16 %v6315, %v6314
        %v6935 = vpack.c.bf16 %v6317, %v6316
        %v6936 = vpack.c.bf16 %v6319, %v6318
        %v6937 = vpack.c.bf16 %v6321, %v6320
        %v6938 = vpack.c.bf16 %v6323, %v6322
        %v6939 = vpack.c.bf16 %v6325, %v6324
        %v6940 = vpack.c.bf16 %v6327, %v6326
        %v6941 = vpack.c.bf16 %v6329, %v6328
        %v6942 = vpack.c.bf16 %v6331, %v6330
        %v6943 = vpack.c.bf16 %v6333, %v6332
        %v6944 = vpack.c.bf16 %v6335, %v6334
        %v6945 = vpack.c.bf16 %v6337, %v6336
        %v6946 = vunpack.c.l.bf16 %v6914
        %v6947 = vunpack.c.h.bf16 %v6914
        %v6948 = vunpack.c.l.bf16 %v6915
        %v6949 = vunpack.c.h.bf16 %v6915
        %v6950 = vunpack.c.l.bf16 %v6916
        %v6951 = vunpack.c.h.bf16 %v6916
        %v6952 = vunpack.c.l.bf16 %v6917
        %v6953 = vunpack.c.h.bf16 %v6917
        %v6954 = vunpack.c.l.bf16 %v6918
        %v6955 = vunpack.c.h.bf16 %v6918
        %v6956 = vunpack.c.l.bf16 %v6919
        %v6957 = vunpack.c.h.bf16 %v6919
        %v6958 = vunpack.c.l.bf16 %v6920
        %v6959 = vunpack.c.h.bf16 %v6920
        %v6960 = vunpack.c.l.bf16 %v6921
        %v6961 = vunpack.c.h.bf16 %v6921
        %v6962 = vunpack.c.l.bf16 %v6922
        %v6963 = vunpack.c.h.bf16 %v6922
        %v6964 = vunpack.c.l.bf16 %v6923
        %v6965 = vunpack.c.h.bf16 %v6923
        %v6966 = vunpack.c.l.bf16 %v6924
        %v6967 = vunpack.c.h.bf16 %v6924
        %v6968 = vunpack.c.l.bf16 %v6925
        %v6969 = vunpack.c.h.bf16 %v6925
        %v6970 = vunpack.c.l.bf16 %v6926
        %v6971 = vunpack.c.h.bf16 %v6926
        %v6972 = vunpack.c.l.bf16 %v6927
        %v6973 = vunpack.c.h.bf16 %v6927
        %v6974 = vunpack.c.l.bf16 %v6928
        %v6975 = vunpack.c.h.bf16 %v6928
        %v6976 = vunpack.c.l.bf16 %v6929
        %v6977 = vunpack.c.h.bf16 %v6929
        %v6978 = vunpack.c.l.bf16 %v6930
        %v6979 = vunpack.c.h.bf16 %v6930
        %v6980 = vunpack.c.l.bf16 %v6931
        %v6981 = vunpack.c.h.bf16 %v6931
        %v6982 = vunpack.c.l.bf16 %v6932
        %v6983 = vunpack.c.h.bf16 %v6932
        %v6984 = vunpack.c.l.bf16 %v6933
        %v6985 = vunpack.c.h.bf16 %v6933
        %v6986 = vunpack.c.l.bf16 %v6934
        %v6987 = vunpack.c.h.bf16 %v6934
        %v6988 = vunpack.c.l.bf16 %v6935
        %v6989 = vunpack.c.h.bf16 %v6935
        %v6990 = vunpack.c.l.bf16 %v6936
        %v6991 = vunpack.c.h.bf16 %v6936
        %v6992 = vunpack.c.l.bf16 %v6937
        %v6993 = vunpack.c.h.bf16 %v6937
        %v6994 = vunpack.c.l.bf16 %v6938
        %v6995 = vunpack.c.h.bf16 %v6938
        %v6996 = vunpack.c.l.bf16 %v6939
        %v6997 = vunpack.c.h.bf16 %v6939
        %v6998 = vunpack.c.l.bf16 %v6940
        %v6999 = vunpack.c.h.bf16 %v6940
        %v7000 = vunpack.c.l.bf16 %v6941
        %v7001 = vunpack.c.h.bf16 %v6941
        %v7002 = vunpack.c.l.bf16 %v6942
        %v7003 = vunpack.c.h.bf16 %v6942
        %v7004 = vunpack.c.l.bf16 %v6943
        %v7005 = vunpack.c.h.bf16 %v6943
        %v7006 = vunpack.c.l.bf16 %v6944
        %v7007 = vunpack.c.h.bf16 %v6944
        %v7008 = vunpack.c.l.bf16 %v6945
        %v7009 = vunpack.c.h.bf16 %v6945
        %v7010 = vtanh.pop %v6946
        %v7011 = vtanh.pop %v6947
        %v7012 = vtanh.pop %v6948
        %v7013 = vtanh.pop %v6949
        %v7014 = vtanh.pop %v6950
        %v7015 = vtanh.pop %v6951
        %v7016 = vtanh.pop %v6952
        %v7017 = vtanh.pop %v6953
        %v7018 = vtanh.pop %v6954
        %v7019 = vtanh.pop %v6955
        %v7020 = vtanh.pop %v6956
        %v7021 = vtanh.pop %v6957
        %v7022 = vtanh.pop %v6958
        %v7023 = vtanh.pop %v6959
        %v7024 = vtanh.pop %v6960
        %v7025 = vtanh.pop %v6961
        %v7026 = vtanh.pop %v6962
        %v7027 = vtanh.pop %v6963
        %v7028 = vtanh.pop %v6964
        %v7029 = vtanh.pop %v6965
        %v7030 = vtanh.pop %v6966
        %v7031 = vtanh.pop %v6967
        %v7032 = vtanh.pop %v6968
        %v7033 = vtanh.pop %v6969
        %v7034 = vtanh.pop %v6970
        %v7035 = vtanh.pop %v6971
        %v7036 = vtanh.pop %v6972
        %v7037 = vtanh.pop %v6973
        %v7038 = vtanh.pop %v6974
        %v7039 = vtanh.pop %v6975
        %v7040 = vtanh.pop %v6976
        %v7041 = vtanh.pop %v6977
        %v7042 = vtanh.pop %v6978
        %v7043 = vtanh.pop %v6979
        %v7044 = vtanh.pop %v6980
        %v7045 = vtanh.pop %v6981
        %v7046 = vtanh.pop %v6982
        %v7047 = vtanh.pop %v6983
        %v7048 = vtanh.pop %v6984
        %v7049 = vtanh.pop %v6985
        %v7050 = vtanh.pop %v6986
        %v7051 = vtanh.pop %v6987
        %v7052 = vtanh.pop %v6988
        %v7053 = vtanh.pop %v6989
        %v7054 = vtanh.pop %v6990
        %v7055 = vtanh.pop %v6991
        %v7056 = vtanh.pop %v6992
        %v7057 = vtanh.pop %v6993
        %v7058 = vtanh.pop %v6994
        %v7059 = vtanh.pop %v6995
        %v7060 = vtanh.pop %v6996
        %v7061 = vtanh.pop %v6997
        %v7062 = vtanh.pop %v6998
        %v7063 = vtanh.pop %v6999
        %v7064 = vtanh.pop %v7000
        %v7065 = vtanh.pop %v7001
        %v7066 = vtanh.pop %v7002
        %v7067 = vtanh.pop %v7003
        %v7068 = vtanh.pop %v7004
        %v7069 = vtanh.pop %v7005
        %v7070 = vtanh.pop %v7006
        %v7071 = vtanh.pop %v7007
        %v7072 = vtanh.pop %v7008
        %v7073 = vtanh.pop %v7009
        %v7074 = vpack.c.bf16 %v7011, %v7010
        %v7075 = vpack.c.bf16 %v7013, %v7012
        %v7076 = vpack.c.bf16 %v7015, %v7014
        %v7077 = vpack.c.bf16 %v7017, %v7016
        %v7078 = vpack.c.bf16 %v7019, %v7018
        %v7079 = vpack.c.bf16 %v7021, %v7020
        %v7080 = vpack.c.bf16 %v7023, %v7022
        %v7081 = vpack.c.bf16 %v7025, %v7024
        %v7082 = vpack.c.bf16 %v7027, %v7026
        %v7083 = vpack.c.bf16 %v7029, %v7028
        %v7084 = vpack.c.bf16 %v7031, %v7030
        %v7085 = vpack.c.bf16 %v7033, %v7032
        %v7086 = vpack.c.bf16 %v7035, %v7034
        %v7087 = vpack.c.bf16 %v7037, %v7036
        %v7088 = vpack.c.bf16 %v7039, %v7038
        %v7089 = vpack.c.bf16 %v7041, %v7040
        %v7090 = vpack.c.bf16 %v7043, %v7042
        %v7091 = vpack.c.bf16 %v7045, %v7044
        %v7092 = vpack.c.bf16 %v7047, %v7046
        %v7093 = vpack.c.bf16 %v7049, %v7048
        %v7094 = vpack.c.bf16 %v7051, %v7050
        %v7095 = vpack.c.bf16 %v7053, %v7052
        %v7096 = vpack.c.bf16 %v7055, %v7054
        %v7097 = vpack.c.bf16 %v7057, %v7056
        %v7098 = vpack.c.bf16 %v7059, %v7058
        %v7099 = vpack.c.bf16 %v7061, %v7060
        %v7100 = vpack.c.bf16 %v7063, %v7062
        %v7101 = vpack.c.bf16 %v7065, %v7064
        %v7102 = vpack.c.bf16 %v7067, %v7066
        %v7103 = vpack.c.bf16 %v7069, %v7068
        %v7104 = vpack.c.bf16 %v7071, %v7070
        %v7105 = vpack.c.bf16 %v7073, %v7072
        %7106 = vmatpush.bf16.msra.mxu0 %v3902
        %7107 = vmatpush.bf16.msra.mxu0 %v3901
        %7108 = vmatpush.bf16.msra.mxu0 %v3900
        %7109 = vmatpush.bf16.msra.mxu0 %v3899
        %7110 = vmatpush.bf16.msra.mxu0 %v3898
        %7111 = vmatpush.bf16.msra.mxu0 %v3897
        %7112 = vmatpush.bf16.msra.mxu0 %v3896
        %7113 = vmatpush.bf16.msra.mxu0 %v3895
        %7114 = vmatmul.bf16.gmra.mxu0 %v6690
        %v7115 = vpop.f32.mrf.mxu0
        %v7116 = vadd.f32 0.0, %v7115
        %v7117 = vpop.f32.mrf.mxu0
        %v7118 = vadd.f32 0.0, %v7117
        %7119 = vmatmul.bf16.gmra.mxu0 %v6691
        %v7120 = vpop.f32.mrf.mxu0
        %v7121 = vadd.f32 0.0, %v7120
        %v7122 = vpop.f32.mrf.mxu0
        %v7123 = vadd.f32 0.0, %v7122
        %7124 = vmatmul.bf16.gmra.mxu0 %v6692
        %v7125 = vpop.f32.mrf.mxu0
        %v7126 = vadd.f32 0.0, %v7125
        %v7127 = vpop.f32.mrf.mxu0
        %v7128 = vadd.f32 0.0, %v7127
        %7129 = vmatmul.bf16.gmra.mxu0 %v6693
        %v7130 = vpop.f32.mrf.mxu0
        %v7131 = vadd.f32 0.0, %v7130
        %v7132 = vpop.f32.mrf.mxu0
        %v7133 = vadd.f32 0.0, %v7132
        %7134 = vmatmul.bf16.gmra.mxu0 %v6694
        %v7135 = vpop.f32.mrf.mxu0
        %v7136 = vadd.f32 0.0, %v7135
        %v7137 = vpop.f32.mrf.mxu0
        %v7138 = vadd.f32 0.0, %v7137
        %7139 = vmatmul.bf16.gmra.mxu0 %v6695
        %v7140 = vpop.f32.mrf.mxu0
        %v7141 = vadd.f32 0.0, %v7140
        %v7142 = vpop.f32.mrf.mxu0
        %v7143 = vadd.f32 0.0, %v7142
        %7144 = vmatmul.bf16.gmra.mxu0 %v6696
        %v7145 = vpop.f32.mrf.mxu0
        %v7146 = vadd.f32 0.0, %v7145
        %v7147 = vpop.f32.mrf.mxu0
        %v7148 = vadd.f32 0.0, %v7147
        %7149 = vmatmul.bf16.gmra.mxu0 %v6697
        %v7150 = vpop.f32.mrf.mxu0
        %v7151 = vadd.f32 0.0, %v7150
        %v7152 = vpop.f32.mrf.mxu0
        %v7153 = vadd.f32 0.0, %v7152
        %7154 = vmatmul.bf16.gmra.mxu0 %v6698
        %v7155 = vpop.f32.mrf.mxu0
        %v7156 = vadd.f32 0.0, %v7155
        %v7157 = vpop.f32.mrf.mxu0
        %v7158 = vadd.f32 0.0, %v7157
        %7159 = vmatmul.bf16.gmra.mxu0 %v6699
        %v7160 = vpop.f32.mrf.mxu0
        %v7161 = vadd.f32 0.0, %v7160
        %v7162 = vpop.f32.mrf.mxu0
        %v7163 = vadd.f32 0.0, %v7162
        %7164 = vmatmul.bf16.gmra.mxu0 %v6700
        %v7165 = vpop.f32.mrf.mxu0
        %v7166 = vadd.f32 0.0, %v7165
        %v7167 = vpop.f32.mrf.mxu0
        %v7168 = vadd.f32 0.0, %v7167
        %7169 = vmatmul.bf16.gmra.mxu0 %v6701
        %v7170 = vpop.f32.mrf.mxu0
        %v7171 = vadd.f32 0.0, %v7170
        %v7172 = vpop.f32.mrf.mxu0
        %v7173 = vadd.f32 0.0, %v7172
        %7174 = vmatmul.bf16.gmra.mxu0 %v6702
        %v7175 = vpop.f32.mrf.mxu0
        %v7176 = vadd.f32 0.0, %v7175
        %v7177 = vpop.f32.mrf.mxu0
        %v7178 = vadd.f32 0.0, %v7177
        %7179 = vmatmul.bf16.gmra.mxu0 %v6703
        %v7180 = vpop.f32.mrf.mxu0
        %v7181 = vadd.f32 0.0, %v7180
        %v7182 = vpop.f32.mrf.mxu0
        %v7183 = vadd.f32 0.0, %v7182
        %7184 = vmatmul.bf16.gmra.mxu0 %v6704
        %v7185 = vpop.f32.mrf.mxu0
        %v7186 = vadd.f32 0.0, %v7185
        %v7187 = vpop.f32.mrf.mxu0
        %v7188 = vadd.f32 0.0, %v7187
        %7189 = vmatmul.bf16.gmra.mxu0 %v6705
        %v7190 = vpop.f32.mrf.mxu0
        %v7191 = vadd.f32 0.0, %v7190
        %v7192 = vpop.f32.mrf.mxu0
        %v7193 = vadd.f32 0.0, %v7192
        %7194 = vmatmul.bf16.gmra.mxu0 %v6706
        %v7195 = vpop.f32.mrf.mxu0
        %v7196 = vadd.f32 0.0, %v7195
        %v7197 = vpop.f32.mrf.mxu0
        %v7198 = vadd.f32 0.0, %v7197
        %7199 = vmatmul.bf16.gmra.mxu0 %v6707
        %v7200 = vpop.f32.mrf.mxu0
        %v7201 = vadd.f32 0.0, %v7200
        %v7202 = vpop.f32.mrf.mxu0
        %v7203 = vadd.f32 0.0, %v7202
        %7204 = vmatmul.bf16.gmra.mxu0 %v6708
        %v7205 = vpop.f32.mrf.mxu0
        %v7206 = vadd.f32 0.0, %v7205
        %v7207 = vpop.f32.mrf.mxu0
        %v7208 = vadd.f32 0.0, %v7207
        %7209 = vmatmul.bf16.gmra.mxu0 %v6709
        %v7210 = vpop.f32.mrf.mxu0
        %v7211 = vadd.f32 0.0, %v7210
        %v7212 = vpop.f32.mrf.mxu0
        %v7213 = vadd.f32 0.0, %v7212
        %7214 = vmatmul.bf16.gmra.mxu0 %v6710
        %v7215 = vpop.f32.mrf.mxu0
        %v7216 = vadd.f32 0.0, %v7215
        %v7217 = vpop.f32.mrf.mxu0
        %v7218 = vadd.f32 0.0, %v7217
        %7219 = vmatmul.bf16.gmra.mxu0 %v6711
        %v7220 = vpop.f32.mrf.mxu0
        %v7221 = vadd.f32 0.0, %v7220
        %v7222 = vpop.f32.mrf.mxu0
        %v7223 = vadd.f32 0.0, %v7222
        %7224 = vmatmul.bf16.gmra.mxu0 %v6712
        %v7225 = vpop.f32.mrf.mxu0
        %v7226 = vadd.f32 0.0, %v7225
        %v7227 = vpop.f32.mrf.mxu0
        %v7228 = vadd.f32 0.0, %v7227
        %7229 = vmatmul.bf16.gmra.mxu0 %v6713
        %v7230 = vpop.f32.mrf.mxu0
        %v7231 = vadd.f32 0.0, %v7230
        %v7232 = vpop.f32.mrf.mxu0
        %v7233 = vadd.f32 0.0, %v7232
        %7234 = vmatmul.bf16.gmra.mxu0 %v6714
        %v7235 = vpop.f32.mrf.mxu0
        %v7236 = vadd.f32 0.0, %v7235
        %v7237 = vpop.f32.mrf.mxu0
        %v7238 = vadd.f32 0.0, %v7237
        %7239 = vmatmul.bf16.gmra.mxu0 %v6715
        %v7240 = vpop.f32.mrf.mxu0
        %v7241 = vadd.f32 0.0, %v7240
        %v7242 = vpop.f32.mrf.mxu0
        %v7243 = vadd.f32 0.0, %v7242
        %7244 = vmatmul.bf16.gmra.mxu0 %v6716
        %v7245 = vpop.f32.mrf.mxu0
        %v7246 = vadd.f32 0.0, %v7245
        %v7247 = vpop.f32.mrf.mxu0
        %v7248 = vadd.f32 0.0, %v7247
        %7249 = vmatmul.bf16.gmra.mxu0 %v6717
        %v7250 = vpop.f32.mrf.mxu0
        %v7251 = vadd.f32 0.0, %v7250
        %v7252 = vpop.f32.mrf.mxu0
        %v7253 = vadd.f32 0.0, %v7252
        %7254 = vmatmul.bf16.gmra.mxu0 %v6718
        %v7255 = vpop.f32.mrf.mxu0
        %v7256 = vadd.f32 0.0, %v7255
        %v7257 = vpop.f32.mrf.mxu0
        %v7258 = vadd.f32 0.0, %v7257
        %7259 = vmatmul.bf16.gmra.mxu0 %v6719
        %v7260 = vpop.f32.mrf.mxu0
        %v7261 = vadd.f32 0.0, %v7260
        %v7262 = vpop.f32.mrf.mxu0
        %v7263 = vadd.f32 0.0, %v7262
        %7264 = vmatmul.bf16.gmra.mxu0 %v6720
        %v7265 = vpop.f32.mrf.mxu0
        %v7266 = vadd.f32 0.0, %v7265
        %v7267 = vpop.f32.mrf.mxu0
        %v7268 = vadd.f32 0.0, %v7267
        %7269 = vmatmul.bf16.gmra.mxu0 %v6721
        %v7270 = vpop.f32.mrf.mxu0
        %v7271 = vadd.f32 0.0, %v7270
        %v7272 = vpop.f32.mrf.mxu0
        %v7273 = vadd.f32 0.0, %v7272
        %7274 = vdwg.mxu0
        %7275 = vset.pattern.permute.xlu0 2
        %7276 = vperm.xlu0 %7275, %v309
        %v7277 = vpop.permute.xlu0 %7276
        %7279 = vset.pattern.permute.xlu0 2
        %7280 = vperm.xlu0 %7279, %v310
        %v7281 = vpop.permute.xlu0 %7280
        %7283 = vset.pattern.permute.xlu0 2
        %7284 = vperm.xlu0 %7283, %v311
        %v7285 = vpop.permute.xlu0 %7284
        %7287 = vset.pattern.permute.xlu0 2
        %7288 = vperm.xlu0 %7287, %v312
        %v7289 = vpop.permute.xlu0 %7288
        %7291 = vset.pattern.permute.xlu0 2
        %7292 = vperm.xlu0 %7291, %v313
        %v7293 = vpop.permute.xlu0 %7292
        %7295 = vset.pattern.permute.xlu0 2
        %7296 = vperm.xlu0 %7295, %v314
        %v7297 = vpop.permute.xlu0 %7296
        %7299 = vset.pattern.permute.xlu0 2
        %7300 = vperm.xlu0 %7299, %v315
        %v7301 = vpop.permute.xlu0 %7300
        %7303 = vset.pattern.permute.xlu0 2
        %7304 = vperm.xlu0 %7303, %v316
        %v7305 = vpop.permute.xlu0 %7304
        %7307 = vset.pattern.permute.xlu0 2
        %7308 = vperm.xlu0 %7307, %v317
        %v7309 = vpop.permute.xlu0 %7308
        %7311 = vset.pattern.permute.xlu0 2
        %7312 = vperm.xlu0 %7311, %v318
        %v7313 = vpop.permute.xlu0 %7312
        %7315 = vset.pattern.permute.xlu0 2
        %7316 = vperm.xlu0 %7315, %v319
        %v7317 = vpop.permute.xlu0 %7316
        %7319 = vset.pattern.permute.xlu0 2
        %7320 = vperm.xlu0 %7319, %v320
        %v7321 = vpop.permute.xlu0 %7320
        %7323 = vset.pattern.permute.xlu0 2
        %7324 = vperm.xlu0 %7323, %v321
        %v7325 = vpop.permute.xlu0 %7324
        %7327 = vset.pattern.permute.xlu0 2
        %7328 = vperm.xlu0 %7327, %v322
        %v7329 = vpop.permute.xlu0 %7328
        %7331 = vset.pattern.permute.xlu0 2
        %7332 = vperm.xlu0 %7331, %v323
        %v7333 = vpop.permute.xlu0 %7332
        %7335 = vset.pattern.permute.xlu0 2
        %7336 = vperm.xlu0 %7335, %v324
        %v7337 = vpop.permute.xlu0 %7336
        %7339 = vset.pattern.permute.xlu0 2
        %7340 = vperm.xlu0 %7339, %v325
        %v7341 = vpop.permute.xlu0 %7340
        %7343 = vset.pattern.permute.xlu0 2
        %7344 = vperm.xlu0 %7343, %v326
        %v7345 = vpop.permute.xlu0 %7344
        %7347 = vset.pattern.permute.xlu0 2
        %7348 = vperm.xlu0 %7347, %v327
        %v7349 = vpop.permute.xlu0 %7348
        %7351 = vset.pattern.permute.xlu0 2
        %7352 = vperm.xlu0 %7351, %v328
        %v7353 = vpop.permute.xlu0 %7352
        %7355 = vset.pattern.permute.xlu0 2
        %7356 = vperm.xlu0 %7355, %v329
        %v7357 = vpop.permute.xlu0 %7356
        %7359 = vset.pattern.permute.xlu0 2
        %7360 = vperm.xlu0 %7359, %v330
        %v7361 = vpop.permute.xlu0 %7360
        %7363 = vset.pattern.permute.xlu0 2
        %7364 = vperm.xlu0 %7363, %v331
        %v7365 = vpop.permute.xlu0 %7364
        %7367 = vset.pattern.permute.xlu0 2
        %7368 = vperm.xlu0 %7367, %v332
        %v7369 = vpop.permute.xlu0 %7368
        %7371 = vset.pattern.permute.xlu0 2
        %7372 = vperm.xlu0 %7371, %v333
        %v7373 = vpop.permute.xlu0 %7372
        %7375 = vset.pattern.permute.xlu0 2
        %7376 = vperm.xlu0 %7375, %v334
        %v7377 = vpop.permute.xlu0 %7376
        %7379 = vset.pattern.permute.xlu0 2
        %7380 = vperm.xlu0 %7379, %v335
        %v7381 = vpop.permute.xlu0 %7380
        %7383 = vset.pattern.permute.xlu0 2
        %7384 = vperm.xlu0 %7383, %v336
        %v7385 = vpop.permute.xlu0 %7384
        %7387 = vset.pattern.permute.xlu0 2
        %7388 = vperm.xlu0 %7387, %v337
        %v7389 = vpop.permute.xlu0 %7388
        %7391 = vset.pattern.permute.xlu0 2
        %7392 = vperm.xlu0 %7391, %v338
        %v7393 = vpop.permute.xlu0 %7392
        %7395 = vset.pattern.permute.xlu0 2
        %7396 = vperm.xlu0 %7395, %v339
        %v7397 = vpop.permute.xlu0 %7396
        %7399 = vset.pattern.permute.xlu0 2
        %7400 = vperm.xlu0 %7399, %v340
        %v7401 = vpop.permute.xlu0 %7400
        %7403 = vset.pattern.permute.xlu0 2
        %7404 = vperm.xlu0 %7403, %v341
        %v7405 = vpop.permute.xlu0 %7404
        %7407 = vset.pattern.permute.xlu0 2
        %7408 = vperm.xlu0 %7407, %v342
        %v7409 = vpop.permute.xlu0 %7408
        %7411 = vset.pattern.permute.xlu0 2
        %7412 = vperm.xlu0 %7411, %v343
        %v7413 = vpop.permute.xlu0 %7412
        %7415 = vset.pattern.permute.xlu0 2
        %7416 = vperm.xlu0 %7415, %v344
        %v7417 = vpop.permute.xlu0 %7416
        %7419 = vset.pattern.permute.xlu0 2
        %7420 = vperm.xlu0 %7419, %v345
        %v7421 = vpop.permute.xlu0 %7420
        %7423 = vset.pattern.permute.xlu0 2
        %7424 = vperm.xlu0 %7423, %v346
        %v7425 = vpop.permute.xlu0 %7424
        %7427 = vset.pattern.permute.xlu0 2
        %7428 = vperm.xlu0 %7427, %v347
        %v7429 = vpop.permute.xlu0 %7428
        %7431 = vset.pattern.permute.xlu0 2
        %7432 = vperm.xlu0 %7431, %v348
        %v7433 = vpop.permute.xlu0 %7432
        %7435 = vset.pattern.permute.xlu0 2
        %7436 = vperm.xlu0 %7435, %v349
        %v7437 = vpop.permute.xlu0 %7436
        %7439 = vset.pattern.permute.xlu0 2
        %7440 = vperm.xlu0 %7439, %v350
        %v7441 = vpop.permute.xlu0 %7440
        %7443 = vset.pattern.permute.xlu0 2
        %7444 = vperm.xlu0 %7443, %v351
        %v7445 = vpop.permute.xlu0 %7444
        %7447 = vset.pattern.permute.xlu0 2
        %7448 = vperm.xlu0 %7447, %v352
        %v7449 = vpop.permute.xlu0 %7448
        %7451 = vset.pattern.permute.xlu0 2
        %7452 = vperm.xlu0 %7451, %v353
        %v7453 = vpop.permute.xlu0 %7452
        %7455 = vset.pattern.permute.xlu0 2
        %7456 = vperm.xlu0 %7455, %v354
        %v7457 = vpop.permute.xlu0 %7456
        %7459 = vset.pattern.permute.xlu0 2
        %7460 = vperm.xlu0 %7459, %v355
        %v7461 = vpop.permute.xlu0 %7460
        %7463 = vset.pattern.permute.xlu0 2
        %7464 = vperm.xlu0 %7463, %v356
        %v7465 = vpop.permute.xlu0 %7464
        %7467 = vset.pattern.permute.xlu0 2
        %7468 = vperm.xlu0 %7467, %v357
        %v7469 = vpop.permute.xlu0 %7468
        %7471 = vset.pattern.permute.xlu0 2
        %7472 = vperm.xlu0 %7471, %v358
        %v7473 = vpop.permute.xlu0 %7472
        %7475 = vset.pattern.permute.xlu0 2
        %7476 = vperm.xlu0 %7475, %v359
        %v7477 = vpop.permute.xlu0 %7476
        %7479 = vset.pattern.permute.xlu0 2
        %7480 = vperm.xlu0 %7479, %v360
        %v7481 = vpop.permute.xlu0 %7480
        %7483 = vset.pattern.permute.xlu0 2
        %7484 = vperm.xlu0 %7483, %v361
        %v7485 = vpop.permute.xlu0 %7484
        %7487 = vset.pattern.permute.xlu0 2
        %7488 = vperm.xlu0 %7487, %v362
        %v7489 = vpop.permute.xlu0 %7488
        %7491 = vset.pattern.permute.xlu0 2
        %7492 = vperm.xlu0 %7491, %v363
        %v7493 = vpop.permute.xlu0 %7492
        %7495 = vset.pattern.permute.xlu0 2
        %7496 = vperm.xlu0 %7495, %v364
        %v7497 = vpop.permute.xlu0 %7496
        %7499 = vset.pattern.permute.xlu0 2
        %7500 = vperm.xlu0 %7499, %v365
        %v7501 = vpop.permute.xlu0 %7500
        %7503 = vset.pattern.permute.xlu0 2
        %7504 = vperm.xlu0 %7503, %v366
        %v7505 = vpop.permute.xlu0 %7504
        %7507 = vset.pattern.permute.xlu0 2
        %7508 = vperm.xlu0 %7507, %v367
        %v7509 = vpop.permute.xlu0 %7508
        %7511 = vset.pattern.permute.xlu0 2
        %7512 = vperm.xlu0 %7511, %v368
        %v7513 = vpop.permute.xlu0 %7512
        %7515 = vset.pattern.permute.xlu0 2
        %7516 = vperm.xlu0 %7515, %v369
        %v7517 = vpop.permute.xlu0 %7516
        %7519 = vset.pattern.permute.xlu0 2
        %7520 = vperm.xlu0 %7519, %v370
        %v7521 = vpop.permute.xlu0 %7520
        %7523 = vset.pattern.permute.xlu0 2
        %7524 = vperm.xlu0 %7523, %v371
        %v7525 = vpop.permute.xlu0 %7524
        %7527 = vset.pattern.permute.xlu0 2
        %7528 = vperm.xlu0 %7527, %v372
        %v7529 = vpop.permute.xlu0 %7528
        %v7531 = vmul.f32 %v7116, %v7277
        %v7532 = vmul.f32 %v7118, %v7281
        %v7533 = vmul.f32 %v7121, %v7285
        %v7534 = vmul.f32 %v7123, %v7289
        %v7535 = vmul.f32 %v7126, %v7293
        %v7536 = vmul.f32 %v7128, %v7297
        %v7537 = vmul.f32 %v7131, %v7301
        %v7538 = vmul.f32 %v7133, %v7305
        %v7539 = vmul.f32 %v7136, %v7309
        %v7540 = vmul.f32 %v7138, %v7313
        %v7541 = vmul.f32 %v7141, %v7317
        %v7542 = vmul.f32 %v7143, %v7321
        %v7543 = vmul.f32 %v7146, %v7325
        %v7544 = vmul.f32 %v7148, %v7329
        %v7545 = vmul.f32 %v7151, %v7333
        %v7546 = vmul.f32 %v7153, %v7337
        %v7547 = vmul.f32 %v7156, %v7341
        %v7548 = vmul.f32 %v7158, %v7345
        %v7549 = vmul.f32 %v7161, %v7349
        %v7550 = vmul.f32 %v7163, %v7353
        %v7551 = vmul.f32 %v7166, %v7357
        %v7552 = vmul.f32 %v7168, %v7361
        %v7553 = vmul.f32 %v7171, %v7365
        %v7554 = vmul.f32 %v7173, %v7369
        %v7555 = vmul.f32 %v7176, %v7373
        %v7556 = vmul.f32 %v7178, %v7377
        %v7557 = vmul.f32 %v7181, %v7381
        %v7558 = vmul.f32 %v7183, %v7385
        %v7559 = vmul.f32 %v7186, %v7389
        %v7560 = vmul.f32 %v7188, %v7393
        %v7561 = vmul.f32 %v7191, %v7397
        %v7562 = vmul.f32 %v7193, %v7401
        %v7563 = vmul.f32 %v7196, %v7405
        %v7564 = vmul.f32 %v7198, %v7409
        %v7565 = vmul.f32 %v7201, %v7413
        %v7566 = vmul.f32 %v7203, %v7417
        %v7567 = vmul.f32 %v7206, %v7421
        %v7568 = vmul.f32 %v7208, %v7425
        %v7569 = vmul.f32 %v7211, %v7429
        %v7570 = vmul.f32 %v7213, %v7433
        %v7571 = vmul.f32 %v7216, %v7437
        %v7572 = vmul.f32 %v7218, %v7441
        %v7573 = vmul.f32 %v7221, %v7445
        %v7574 = vmul.f32 %v7223, %v7449
        %v7575 = vmul.f32 %v7226, %v7453
        %v7576 = vmul.f32 %v7228, %v7457
        %v7577 = vmul.f32 %v7231, %v7461
        %v7578 = vmul.f32 %v7233, %v7465
        %v7579 = vmul.f32 %v7236, %v7469
        %v7580 = vmul.f32 %v7238, %v7473
        %v7581 = vmul.f32 %v7241, %v7477
        %v7582 = vmul.f32 %v7243, %v7481
        %v7583 = vmul.f32 %v7246, %v7485
        %v7584 = vmul.f32 %v7248, %v7489
        %v7585 = vmul.f32 %v7251, %v7493
        %v7586 = vmul.f32 %v7253, %v7497
        %v7587 = vmul.f32 %v7256, %v7501
        %v7588 = vmul.f32 %v7258, %v7505
        %v7589 = vmul.f32 %v7261, %v7509
        %v7590 = vmul.f32 %v7263, %v7513
        %v7591 = vmul.f32 %v7266, %v7517
        %v7592 = vmul.f32 %v7268, %v7521
        %v7593 = vmul.f32 %v7271, %v7525
        %v7594 = vmul.f32 %v7273, %v7529
        %7595 = vset.pattern.permute.xlu0 5
        %7596 = vperm.xlu0 %7595, %v309
        %v7597 = vpop.permute.xlu0 %7596
        %7599 = vset.pattern.permute.xlu0 5
        %7600 = vperm.xlu0 %7599, %v310
        %v7601 = vpop.permute.xlu0 %7600
        %7603 = vset.pattern.permute.xlu0 5
        %7604 = vperm.xlu0 %7603, %v311
        %v7605 = vpop.permute.xlu0 %7604
        %7607 = vset.pattern.permute.xlu0 5
        %7608 = vperm.xlu0 %7607, %v312
        %v7609 = vpop.permute.xlu0 %7608
        %7611 = vset.pattern.permute.xlu0 5
        %7612 = vperm.xlu0 %7611, %v313
        %v7613 = vpop.permute.xlu0 %7612
        %7615 = vset.pattern.permute.xlu0 5
        %7616 = vperm.xlu0 %7615, %v314
        %v7617 = vpop.permute.xlu0 %7616
        %7619 = vset.pattern.permute.xlu0 5
        %7620 = vperm.xlu0 %7619, %v315
        %v7621 = vpop.permute.xlu0 %7620
        %7623 = vset.pattern.permute.xlu0 5
        %7624 = vperm.xlu0 %7623, %v316
        %v7625 = vpop.permute.xlu0 %7624
        %7627 = vset.pattern.permute.xlu0 5
        %7628 = vperm.xlu0 %7627, %v317
        %v7629 = vpop.permute.xlu0 %7628
        %7631 = vset.pattern.permute.xlu0 5
        %7632 = vperm.xlu0 %7631, %v318
        %v7633 = vpop.permute.xlu0 %7632
        %7635 = vset.pattern.permute.xlu0 5
        %7636 = vperm.xlu0 %7635, %v319
        %v7637 = vpop.permute.xlu0 %7636
        %7639 = vset.pattern.permute.xlu0 5
        %7640 = vperm.xlu0 %7639, %v320
        %v7641 = vpop.permute.xlu0 %7640
        %7643 = vset.pattern.permute.xlu0 5
        %7644 = vperm.xlu0 %7643, %v321
        %v7645 = vpop.permute.xlu0 %7644
        %7647 = vset.pattern.permute.xlu0 5
        %7648 = vperm.xlu0 %7647, %v322
        %v7649 = vpop.permute.xlu0 %7648
        %7651 = vset.pattern.permute.xlu0 5
        %7652 = vperm.xlu0 %7651, %v323
        %v7653 = vpop.permute.xlu0 %7652
        %7655 = vset.pattern.permute.xlu0 5
        %7656 = vperm.xlu0 %7655, %v324
        %v7657 = vpop.permute.xlu0 %7656
        %7659 = vset.pattern.permute.xlu0 5
        %7660 = vperm.xlu0 %7659, %v325
        %v7661 = vpop.permute.xlu0 %7660
        %7663 = vset.pattern.permute.xlu0 5
        %7664 = vperm.xlu0 %7663, %v326
        %v7665 = vpop.permute.xlu0 %7664
        %7667 = vset.pattern.permute.xlu0 5
        %7668 = vperm.xlu0 %7667, %v327
        %v7669 = vpop.permute.xlu0 %7668
        %7671 = vset.pattern.permute.xlu0 5
        %7672 = vperm.xlu0 %7671, %v328
        %v7673 = vpop.permute.xlu0 %7672
        %7675 = vset.pattern.permute.xlu0 5
        %7676 = vperm.xlu0 %7675, %v329
        %v7677 = vpop.permute.xlu0 %7676
        %7679 = vset.pattern.permute.xlu0 5
        %7680 = vperm.xlu0 %7679, %v330
        %v7681 = vpop.permute.xlu0 %7680
        %7683 = vset.pattern.permute.xlu0 5
        %7684 = vperm.xlu0 %7683, %v331
        %v7685 = vpop.permute.xlu0 %7684
        %7687 = vset.pattern.permute.xlu0 5
        %7688 = vperm.xlu0 %7687, %v332
        %v7689 = vpop.permute.xlu0 %7688
        %7691 = vset.pattern.permute.xlu0 5
        %7692 = vperm.xlu0 %7691, %v333
        %v7693 = vpop.permute.xlu0 %7692
        %7695 = vset.pattern.permute.xlu0 5
        %7696 = vperm.xlu0 %7695, %v334
        %v7697 = vpop.permute.xlu0 %7696
        %7699 = vset.pattern.permute.xlu0 5
        %7700 = vperm.xlu0 %7699, %v335
        %v7701 = vpop.permute.xlu0 %7700
        %7703 = vset.pattern.permute.xlu0 5
        %7704 = vperm.xlu0 %7703, %v336
        %v7705 = vpop.permute.xlu0 %7704
        %7707 = vset.pattern.permute.xlu0 5
        %7708 = vperm.xlu0 %7707, %v337
        %v7709 = vpop.permute.xlu0 %7708
        %7711 = vset.pattern.permute.xlu0 5
        %7712 = vperm.xlu0 %7711, %v338
        %v7713 = vpop.permute.xlu0 %7712
        %7715 = vset.pattern.permute.xlu0 5
        %7716 = vperm.xlu0 %7715, %v339
        %v7717 = vpop.permute.xlu0 %7716
        %7719 = vset.pattern.permute.xlu0 5
        %7720 = vperm.xlu0 %7719, %v340
        %v7721 = vpop.permute.xlu0 %7720
        %7723 = vset.pattern.permute.xlu0 5
        %7724 = vperm.xlu0 %7723, %v341
        %v7725 = vpop.permute.xlu0 %7724
        %7727 = vset.pattern.permute.xlu0 5
        %7728 = vperm.xlu0 %7727, %v342
        %v7729 = vpop.permute.xlu0 %7728
        %7731 = vset.pattern.permute.xlu0 5
        %7732 = vperm.xlu0 %7731, %v343
        %v7733 = vpop.permute.xlu0 %7732
        %7735 = vset.pattern.permute.xlu0 5
        %7736 = vperm.xlu0 %7735, %v344
        %v7737 = vpop.permute.xlu0 %7736
        %7739 = vset.pattern.permute.xlu0 5
        %7740 = vperm.xlu0 %7739, %v345
        %v7741 = vpop.permute.xlu0 %7740
        %7743 = vset.pattern.permute.xlu0 5
        %7744 = vperm.xlu0 %7743, %v346
        %v7745 = vpop.permute.xlu0 %7744
        %7747 = vset.pattern.permute.xlu0 5
        %7748 = vperm.xlu0 %7747, %v347
        %v7749 = vpop.permute.xlu0 %7748
        %7751 = vset.pattern.permute.xlu0 5
        %7752 = vperm.xlu0 %7751, %v348
        %v7753 = vpop.permute.xlu0 %7752
        %7755 = vset.pattern.permute.xlu0 5
        %7756 = vperm.xlu0 %7755, %v349
        %v7757 = vpop.permute.xlu0 %7756
        %7759 = vset.pattern.permute.xlu0 5
        %7760 = vperm.xlu0 %7759, %v350
        %v7761 = vpop.permute.xlu0 %7760
        %7763 = vset.pattern.permute.xlu0 5
        %7764 = vperm.xlu0 %7763, %v351
        %v7765 = vpop.permute.xlu0 %7764
        %7767 = vset.pattern.permute.xlu0 5
        %7768 = vperm.xlu0 %7767, %v352
        %v7769 = vpop.permute.xlu0 %7768
        %7771 = vset.pattern.permute.xlu0 5
        %7772 = vperm.xlu0 %7771, %v353
        %v7773 = vpop.permute.xlu0 %7772
        %7775 = vset.pattern.permute.xlu0 5
        %7776 = vperm.xlu0 %7775, %v354
        %v7777 = vpop.permute.xlu0 %7776
        %7779 = vset.pattern.permute.xlu0 5
        %7780 = vperm.xlu0 %7779, %v355
        %v7781 = vpop.permute.xlu0 %7780
        %7783 = vset.pattern.permute.xlu0 5
        %7784 = vperm.xlu0 %7783, %v356
        %v7785 = vpop.permute.xlu0 %7784
        %7787 = vset.pattern.permute.xlu0 5
        %7788 = vperm.xlu0 %7787, %v357
        %v7789 = vpop.permute.xlu0 %7788
        %7791 = vset.pattern.permute.xlu0 5
        %7792 = vperm.xlu0 %7791, %v358
        %v7793 = vpop.permute.xlu0 %7792
        %7795 = vset.pattern.permute.xlu0 5
        %7796 = vperm.xlu0 %7795, %v359
        %v7797 = vpop.permute.xlu0 %7796
        %7799 = vset.pattern.permute.xlu0 5
        %7800 = vperm.xlu0 %7799, %v360
        %v7801 = vpop.permute.xlu0 %7800
        %7803 = vset.pattern.permute.xlu0 5
        %7804 = vperm.xlu0 %7803, %v361
        %v7805 = vpop.permute.xlu0 %7804
        %7807 = vset.pattern.permute.xlu0 5
        %7808 = vperm.xlu0 %7807, %v362
        %v7809 = vpop.permute.xlu0 %7808
        %7811 = vset.pattern.permute.xlu0 5
        %7812 = vperm.xlu0 %7811, %v363
        %v7813 = vpop.permute.xlu0 %7812
        %7815 = vset.pattern.permute.xlu0 5
        %7816 = vperm.xlu0 %7815, %v364
        %v7817 = vpop.permute.xlu0 %7816
        %7819 = vset.pattern.permute.xlu0 5
        %7820 = vperm.xlu0 %7819, %v365
        %v7821 = vpop.permute.xlu0 %7820
        %7823 = vset.pattern.permute.xlu0 5
        %7824 = vperm.xlu0 %7823, %v366
        %v7825 = vpop.permute.xlu0 %7824
        %7827 = vset.pattern.permute.xlu0 5
        %7828 = vperm.xlu0 %7827, %v367
        %v7829 = vpop.permute.xlu0 %7828
        %7831 = vset.pattern.permute.xlu0 5
        %7832 = vperm.xlu0 %7831, %v368
        %v7833 = vpop.permute.xlu0 %7832
        %7835 = vset.pattern.permute.xlu0 5
        %7836 = vperm.xlu0 %7835, %v369
        %v7837 = vpop.permute.xlu0 %7836
        %7839 = vset.pattern.permute.xlu0 5
        %7840 = vperm.xlu0 %7839, %v370
        %v7841 = vpop.permute.xlu0 %7840
        %7843 = vset.pattern.permute.xlu0 5
        %7844 = vperm.xlu0 %7843, %v371
        %v7845 = vpop.permute.xlu0 %7844
        %7847 = vset.pattern.permute.xlu0 5
        %7848 = vperm.xlu0 %7847, %v372
        %v7849 = vpop.permute.xlu0 %7848
        %v7851 = vadd.f32 %v7531, %v7597
        %v7852 = vadd.f32 %v7532, %v7601
        %v7853 = vadd.f32 %v7533, %v7605
        %v7854 = vadd.f32 %v7534, %v7609
        %v7855 = vadd.f32 %v7535, %v7613
        %v7856 = vadd.f32 %v7536, %v7617
        %v7857 = vadd.f32 %v7537, %v7621
        %v7858 = vadd.f32 %v7538, %v7625
        %v7859 = vadd.f32 %v7539, %v7629
        %v7860 = vadd.f32 %v7540, %v7633
        %v7861 = vadd.f32 %v7541, %v7637
        %v7862 = vadd.f32 %v7542, %v7641
        %v7863 = vadd.f32 %v7543, %v7645
        %v7864 = vadd.f32 %v7544, %v7649
        %v7865 = vadd.f32 %v7545, %v7653
        %v7866 = vadd.f32 %v7546, %v7657
        %v7867 = vadd.f32 %v7547, %v7661
        %v7868 = vadd.f32 %v7548, %v7665
        %v7869 = vadd.f32 %v7549, %v7669
        %v7870 = vadd.f32 %v7550, %v7673
        %v7871 = vadd.f32 %v7551, %v7677
        %v7872 = vadd.f32 %v7552, %v7681
        %v7873 = vadd.f32 %v7553, %v7685
        %v7874 = vadd.f32 %v7554, %v7689
        %v7875 = vadd.f32 %v7555, %v7693
        %v7876 = vadd.f32 %v7556, %v7697
        %v7877 = vadd.f32 %v7557, %v7701
        %v7878 = vadd.f32 %v7558, %v7705
        %v7879 = vadd.f32 %v7559, %v7709
        %v7880 = vadd.f32 %v7560, %v7713
        %v7881 = vadd.f32 %v7561, %v7717
        %v7882 = vadd.f32 %v7562, %v7721
        %v7883 = vadd.f32 %v7563, %v7725
        %v7884 = vadd.f32 %v7564, %v7729
        %v7885 = vadd.f32 %v7565, %v7733
        %v7886 = vadd.f32 %v7566, %v7737
        %v7887 = vadd.f32 %v7567, %v7741
        %v7888 = vadd.f32 %v7568, %v7745
        %v7889 = vadd.f32 %v7569, %v7749
        %v7890 = vadd.f32 %v7570, %v7753
        %v7891 = vadd.f32 %v7571, %v7757
        %v7892 = vadd.f32 %v7572, %v7761
        %v7893 = vadd.f32 %v7573, %v7765
        %v7894 = vadd.f32 %v7574, %v7769
        %v7895 = vadd.f32 %v7575, %v7773
        %v7896 = vadd.f32 %v7576, %v7777
        %v7897 = vadd.f32 %v7577, %v7781
        %v7898 = vadd.f32 %v7578, %v7785
        %v7899 = vadd.f32 %v7579, %v7789
        %v7900 = vadd.f32 %v7580, %v7793
        %v7901 = vadd.f32 %v7581, %v7797
        %v7902 = vadd.f32 %v7582, %v7801
        %v7903 = vadd.f32 %v7583, %v7805
        %v7904 = vadd.f32 %v7584, %v7809
        %v7905 = vadd.f32 %v7585, %v7813
        %v7906 = vadd.f32 %v7586, %v7817
        %v7907 = vadd.f32 %v7587, %v7821
        %v7908 = vadd.f32 %v7588, %v7825
        %v7909 = vadd.f32 %v7589, %v7829
        %v7910 = vadd.f32 %v7590, %v7833
        %v7911 = vadd.f32 %v7591, %v7837
        %v7912 = vadd.f32 %v7592, %v7841
        %v7913 = vadd.f32 %v7593, %v7845
        %v7914 = vadd.f32 %v7594, %v7849
        %7915 = vmatpush.bf16.msra.mxu0 %v3902
        %7916 = vmatpush.bf16.msra.mxu0 %v3901
        %7917 = vmatpush.bf16.msra.mxu0 %v3900
        %7918 = vmatpush.bf16.msra.mxu0 %v3899
        %7919 = vmatpush.bf16.msra.mxu0 %v3898
        %7920 = vmatpush.bf16.msra.mxu0 %v3897
        %7921 = vmatpush.bf16.msra.mxu0 %v3896
        %7922 = vmatpush.bf16.msra.mxu0 %v3895
        %7923 = vmatmul.bf16.gmra.mxu0 %v6882
        %v7924 = vpop.f32.mrf.mxu0
        %v7925 = vadd.f32 0.0, %v7924
        %v7926 = vpop.f32.mrf.mxu0
        %v7927 = vadd.f32 0.0, %v7926
        %7928 = vmatmul.bf16.gmra.mxu0 %v6883
        %v7929 = vpop.f32.mrf.mxu0
        %v7930 = vadd.f32 0.0, %v7929
        %v7931 = vpop.f32.mrf.mxu0
        %v7932 = vadd.f32 0.0, %v7931
        %7933 = vmatmul.bf16.gmra.mxu0 %v6884
        %v7934 = vpop.f32.mrf.mxu0
        %v7935 = vadd.f32 0.0, %v7934
        %v7936 = vpop.f32.mrf.mxu0
        %v7937 = vadd.f32 0.0, %v7936
        %7938 = vmatmul.bf16.gmra.mxu0 %v6885
        %v7939 = vpop.f32.mrf.mxu0
        %v7940 = vadd.f32 0.0, %v7939
        %v7941 = vpop.f32.mrf.mxu0
        %v7942 = vadd.f32 0.0, %v7941
        %7943 = vmatmul.bf16.gmra.mxu0 %v6886
        %v7944 = vpop.f32.mrf.mxu0
        %v7945 = vadd.f32 0.0, %v7944
        %v7946 = vpop.f32.mrf.mxu0
        %v7947 = vadd.f32 0.0, %v7946
        %7948 = vmatmul.bf16.gmra.mxu0 %v6887
        %v7949 = vpop.f32.mrf.mxu0
        %v7950 = vadd.f32 0.0, %v7949
        %v7951 = vpop.f32.mrf.mxu0
        %v7952 = vadd.f32 0.0, %v7951
        %7953 = vmatmul.bf16.gmra.mxu0 %v6888
        %v7954 = vpop.f32.mrf.mxu0
        %v7955 = vadd.f32 0.0, %v7954
        %v7956 = vpop.f32.mrf.mxu0
        %v7957 = vadd.f32 0.0, %v7956
        %7958 = vmatmul.bf16.gmra.mxu0 %v6889
        %v7959 = vpop.f32.mrf.mxu0
        %v7960 = vadd.f32 0.0, %v7959
        %v7961 = vpop.f32.mrf.mxu0
        %v7962 = vadd.f32 0.0, %v7961
        %7963 = vmatmul.bf16.gmra.mxu0 %v6890
        %v7964 = vpop.f32.mrf.mxu0
        %v7965 = vadd.f32 0.0, %v7964
        %v7966 = vpop.f32.mrf.mxu0
        %v7967 = vadd.f32 0.0, %v7966
        %7968 = vmatmul.bf16.gmra.mxu0 %v6891
        %v7969 = vpop.f32.mrf.mxu0
        %v7970 = vadd.f32 0.0, %v7969
        %v7971 = vpop.f32.mrf.mxu0
        %v7972 = vadd.f32 0.0, %v7971
        %7973 = vmatmul.bf16.gmra.mxu0 %v6892
        %v7974 = vpop.f32.mrf.mxu0
        %v7975 = vadd.f32 0.0, %v7974
        %v7976 = vpop.f32.mrf.mxu0
        %v7977 = vadd.f32 0.0, %v7976
        %7978 = vmatmul.bf16.gmra.mxu0 %v6893
        %v7979 = vpop.f32.mrf.mxu0
        %v7980 = vadd.f32 0.0, %v7979
        %v7981 = vpop.f32.mrf.mxu0
        %v7982 = vadd.f32 0.0, %v7981
        %7983 = vmatmul.bf16.gmra.mxu0 %v6894
        %v7984 = vpop.f32.mrf.mxu0
        %v7985 = vadd.f32 0.0, %v7984
        %v7986 = vpop.f32.mrf.mxu0
        %v7987 = vadd.f32 0.0, %v7986
        %7988 = vmatmul.bf16.gmra.mxu0 %v6895
        %v7989 = vpop.f32.mrf.mxu0
        %v7990 = vadd.f32 0.0, %v7989
        %v7991 = vpop.f32.mrf.mxu0
        %v7992 = vadd.f32 0.0, %v7991
        %7993 = vmatmul.bf16.gmra.mxu0 %v6896
        %v7994 = vpop.f32.mrf.mxu0
        %v7995 = vadd.f32 0.0, %v7994
        %v7996 = vpop.f32.mrf.mxu0
        %v7997 = vadd.f32 0.0, %v7996
        %7998 = vmatmul.bf16.gmra.mxu0 %v6897
        %v7999 = vpop.f32.mrf.mxu0
        %v8000 = vadd.f32 0.0, %v7999
        %v8001 = vpop.f32.mrf.mxu0
        %v8002 = vadd.f32 0.0, %v8001
        %8003 = vmatmul.bf16.gmra.mxu0 %v6898
        %v8004 = vpop.f32.mrf.mxu0
        %v8005 = vadd.f32 0.0, %v8004
        %v8006 = vpop.f32.mrf.mxu0
        %v8007 = vadd.f32 0.0, %v8006
        %8008 = vmatmul.bf16.gmra.mxu0 %v6899
        %v8009 = vpop.f32.mrf.mxu0
        %v8010 = vadd.f32 0.0, %v8009
        %v8011 = vpop.f32.mrf.mxu0
        %v8012 = vadd.f32 0.0, %v8011
        %8013 = vmatmul.bf16.gmra.mxu0 %v6900
        %v8014 = vpop.f32.mrf.mxu0
        %v8015 = vadd.f32 0.0, %v8014
        %v8016 = vpop.f32.mrf.mxu0
        %v8017 = vadd.f32 0.0, %v8016
        %8018 = vmatmul.bf16.gmra.mxu0 %v6901
        %v8019 = vpop.f32.mrf.mxu0
        %v8020 = vadd.f32 0.0, %v8019
        %v8021 = vpop.f32.mrf.mxu0
        %v8022 = vadd.f32 0.0, %v8021
        %8023 = vmatmul.bf16.gmra.mxu0 %v6902
        %v8024 = vpop.f32.mrf.mxu0
        %v8025 = vadd.f32 0.0, %v8024
        %v8026 = vpop.f32.mrf.mxu0
        %v8027 = vadd.f32 0.0, %v8026
        %8028 = vmatmul.bf16.gmra.mxu0 %v6903
        %v8029 = vpop.f32.mrf.mxu0
        %v8030 = vadd.f32 0.0, %v8029
        %v8031 = vpop.f32.mrf.mxu0
        %v8032 = vadd.f32 0.0, %v8031
        %8033 = vmatmul.bf16.gmra.mxu0 %v6904
        %v8034 = vpop.f32.mrf.mxu0
        %v8035 = vadd.f32 0.0, %v8034
        %v8036 = vpop.f32.mrf.mxu0
        %v8037 = vadd.f32 0.0, %v8036
        %8038 = vmatmul.bf16.gmra.mxu0 %v6905
        %v8039 = vpop.f32.mrf.mxu0
        %v8040 = vadd.f32 0.0, %v8039
        %v8041 = vpop.f32.mrf.mxu0
        %v8042 = vadd.f32 0.0, %v8041
        %8043 = vmatmul.bf16.gmra.mxu0 %v6906
        %v8044 = vpop.f32.mrf.mxu0
        %v8045 = vadd.f32 0.0, %v8044
        %v8046 = vpop.f32.mrf.mxu0
        %v8047 = vadd.f32 0.0, %v8046
        %8048 = vmatmul.bf16.gmra.mxu0 %v6907
        %v8049 = vpop.f32.mrf.mxu0
        %v8050 = vadd.f32 0.0, %v8049
        %v8051 = vpop.f32.mrf.mxu0
        %v8052 = vadd.f32 0.0, %v8051
        %8053 = vmatmul.bf16.gmra.mxu0 %v6908
        %v8054 = vpop.f32.mrf.mxu0
        %v8055 = vadd.f32 0.0, %v8054
        %v8056 = vpop.f32.mrf.mxu0
        %v8057 = vadd.f32 0.0, %v8056
        %8058 = vmatmul.bf16.gmra.mxu0 %v6909
        %v8059 = vpop.f32.mrf.mxu0
        %v8060 = vadd.f32 0.0, %v8059
        %v8061 = vpop.f32.mrf.mxu0
        %v8062 = vadd.f32 0.0, %v8061
        %8063 = vmatmul.bf16.gmra.mxu0 %v6910
        %v8064 = vpop.f32.mrf.mxu0
        %v8065 = vadd.f32 0.0, %v8064
        %v8066 = vpop.f32.mrf.mxu0
        %v8067 = vadd.f32 0.0, %v8066
        %8068 = vmatmul.bf16.gmra.mxu0 %v6911
        %v8069 = vpop.f32.mrf.mxu0
        %v8070 = vadd.f32 0.0, %v8069
        %v8071 = vpop.f32.mrf.mxu0
        %v8072 = vadd.f32 0.0, %v8071
        %8073 = vmatmul.bf16.gmra.mxu0 %v6912
        %v8074 = vpop.f32.mrf.mxu0
        %v8075 = vadd.f32 0.0, %v8074
        %v8076 = vpop.f32.mrf.mxu0
        %v8077 = vadd.f32 0.0, %v8076
        %8078 = vmatmul.bf16.gmra.mxu0 %v6913
        %v8079 = vpop.f32.mrf.mxu0
        %v8080 = vadd.f32 0.0, %v8079
        %v8081 = vpop.f32.mrf.mxu0
        %v8082 = vadd.f32 0.0, %v8081
        %8083 = vdwg.mxu0
        %8084 = vset.pattern.permute.xlu0 8
        %8085 = vperm.xlu0 %8084, %v309
        %v8086 = vpop.permute.xlu0 %8085
        %8088 = vset.pattern.permute.xlu0 8
        %8089 = vperm.xlu0 %8088, %v310
        %v8090 = vpop.permute.xlu0 %8089
        %8092 = vset.pattern.permute.xlu0 8
        %8093 = vperm.xlu0 %8092, %v311
        %v8094 = vpop.permute.xlu0 %8093
        %8096 = vset.pattern.permute.xlu0 8
        %8097 = vperm.xlu0 %8096, %v312
        %v8098 = vpop.permute.xlu0 %8097
        %8100 = vset.pattern.permute.xlu0 8
        %8101 = vperm.xlu0 %8100, %v313
        %v8102 = vpop.permute.xlu0 %8101
        %8104 = vset.pattern.permute.xlu0 8
        %8105 = vperm.xlu0 %8104, %v314
        %v8106 = vpop.permute.xlu0 %8105
        %8108 = vset.pattern.permute.xlu0 8
        %8109 = vperm.xlu0 %8108, %v315
        %v8110 = vpop.permute.xlu0 %8109
        %8112 = vset.pattern.permute.xlu0 8
        %8113 = vperm.xlu0 %8112, %v316
        %v8114 = vpop.permute.xlu0 %8113
        %8116 = vset.pattern.permute.xlu0 8
        %8117 = vperm.xlu0 %8116, %v317
        %v8118 = vpop.permute.xlu0 %8117
        %8120 = vset.pattern.permute.xlu0 8
        %8121 = vperm.xlu0 %8120, %v318
        %v8122 = vpop.permute.xlu0 %8121
        %8124 = vset.pattern.permute.xlu0 8
        %8125 = vperm.xlu0 %8124, %v319
        %v8126 = vpop.permute.xlu0 %8125
        %8128 = vset.pattern.permute.xlu0 8
        %8129 = vperm.xlu0 %8128, %v320
        %v8130 = vpop.permute.xlu0 %8129
        %8132 = vset.pattern.permute.xlu0 8
        %8133 = vperm.xlu0 %8132, %v321
        %v8134 = vpop.permute.xlu0 %8133
        %8136 = vset.pattern.permute.xlu0 8
        %8137 = vperm.xlu0 %8136, %v322
        %v8138 = vpop.permute.xlu0 %8137
        %8140 = vset.pattern.permute.xlu0 8
        %8141 = vperm.xlu0 %8140, %v323
        %v8142 = vpop.permute.xlu0 %8141
        %8144 = vset.pattern.permute.xlu0 8
        %8145 = vperm.xlu0 %8144, %v324
        %v8146 = vpop.permute.xlu0 %8145
        %8148 = vset.pattern.permute.xlu0 8
        %8149 = vperm.xlu0 %8148, %v325
        %v8150 = vpop.permute.xlu0 %8149
        %8152 = vset.pattern.permute.xlu0 8
        %8153 = vperm.xlu0 %8152, %v326
        %v8154 = vpop.permute.xlu0 %8153
        %8156 = vset.pattern.permute.xlu0 8
        %8157 = vperm.xlu0 %8156, %v327
        %v8158 = vpop.permute.xlu0 %8157
        %8160 = vset.pattern.permute.xlu0 8
        %8161 = vperm.xlu0 %8160, %v328
        %v8162 = vpop.permute.xlu0 %8161
        %8164 = vset.pattern.permute.xlu0 8
        %8165 = vperm.xlu0 %8164, %v329
        %v8166 = vpop.permute.xlu0 %8165
        %8168 = vset.pattern.permute.xlu0 8
        %8169 = vperm.xlu0 %8168, %v330
        %v8170 = vpop.permute.xlu0 %8169
        %8172 = vset.pattern.permute.xlu0 8
        %8173 = vperm.xlu0 %8172, %v331
        %v8174 = vpop.permute.xlu0 %8173
        %8176 = vset.pattern.permute.xlu0 8
        %8177 = vperm.xlu0 %8176, %v332
        %v8178 = vpop.permute.xlu0 %8177
        %8180 = vset.pattern.permute.xlu0 8
        %8181 = vperm.xlu0 %8180, %v333
        %v8182 = vpop.permute.xlu0 %8181
        %8184 = vset.pattern.permute.xlu0 8
        %8185 = vperm.xlu0 %8184, %v334
        %v8186 = vpop.permute.xlu0 %8185
        %8188 = vset.pattern.permute.xlu0 8
        %8189 = vperm.xlu0 %8188, %v335
        %v8190 = vpop.permute.xlu0 %8189
        %8192 = vset.pattern.permute.xlu0 8
        %8193 = vperm.xlu0 %8192, %v336
        %v8194 = vpop.permute.xlu0 %8193
        %8196 = vset.pattern.permute.xlu0 8
        %8197 = vperm.xlu0 %8196, %v337
        %v8198 = vpop.permute.xlu0 %8197
        %8200 = vset.pattern.permute.xlu0 8
        %8201 = vperm.xlu0 %8200, %v338
        %v8202 = vpop.permute.xlu0 %8201
        %8204 = vset.pattern.permute.xlu0 8
        %8205 = vperm.xlu0 %8204, %v339
        %v8206 = vpop.permute.xlu0 %8205
        %8208 = vset.pattern.permute.xlu0 8
        %8209 = vperm.xlu0 %8208, %v340
        %v8210 = vpop.permute.xlu0 %8209
        %8212 = vset.pattern.permute.xlu0 8
        %8213 = vperm.xlu0 %8212, %v341
        %v8214 = vpop.permute.xlu0 %8213
        %8216 = vset.pattern.permute.xlu0 8
        %8217 = vperm.xlu0 %8216, %v342
        %v8218 = vpop.permute.xlu0 %8217
        %8220 = vset.pattern.permute.xlu0 8
        %8221 = vperm.xlu0 %8220, %v343
        %v8222 = vpop.permute.xlu0 %8221
        %8224 = vset.pattern.permute.xlu0 8
        %8225 = vperm.xlu0 %8224, %v344
        %v8226 = vpop.permute.xlu0 %8225
        %8228 = vset.pattern.permute.xlu0 8
        %8229 = vperm.xlu0 %8228, %v345
        %v8230 = vpop.permute.xlu0 %8229
        %8232 = vset.pattern.permute.xlu0 8
        %8233 = vperm.xlu0 %8232, %v346
        %v8234 = vpop.permute.xlu0 %8233
        %8236 = vset.pattern.permute.xlu0 8
        %8237 = vperm.xlu0 %8236, %v347
        %v8238 = vpop.permute.xlu0 %8237
        %8240 = vset.pattern.permute.xlu0 8
        %8241 = vperm.xlu0 %8240, %v348
        %v8242 = vpop.permute.xlu0 %8241
        %8244 = vset.pattern.permute.xlu0 8
        %8245 = vperm.xlu0 %8244, %v349
        %v8246 = vpop.permute.xlu0 %8245
        %8248 = vset.pattern.permute.xlu0 8
        %8249 = vperm.xlu0 %8248, %v350
        %v8250 = vpop.permute.xlu0 %8249
        %8252 = vset.pattern.permute.xlu0 8
        %8253 = vperm.xlu0 %8252, %v351
        %v8254 = vpop.permute.xlu0 %8253
        %8256 = vset.pattern.permute.xlu0 8
        %8257 = vperm.xlu0 %8256, %v352
        %v8258 = vpop.permute.xlu0 %8257
        %8260 = vset.pattern.permute.xlu0 8
        %8261 = vperm.xlu0 %8260, %v353
        %v8262 = vpop.permute.xlu0 %8261
        %8264 = vset.pattern.permute.xlu0 8
        %8265 = vperm.xlu0 %8264, %v354
        %v8266 = vpop.permute.xlu0 %8265
        %8268 = vset.pattern.permute.xlu0 8
        %8269 = vperm.xlu0 %8268, %v355
        %v8270 = vpop.permute.xlu0 %8269
        %8272 = vset.pattern.permute.xlu0 8
        %8273 = vperm.xlu0 %8272, %v356
        %v8274 = vpop.permute.xlu0 %8273
        %8276 = vset.pattern.permute.xlu0 8
        %8277 = vperm.xlu0 %8276, %v357
        %v8278 = vpop.permute.xlu0 %8277
        %8280 = vset.pattern.permute.xlu0 8
        %8281 = vperm.xlu0 %8280, %v358
        %v8282 = vpop.permute.xlu0 %8281
        %8284 = vset.pattern.permute.xlu0 8
        %8285 = vperm.xlu0 %8284, %v359
        %v8286 = vpop.permute.xlu0 %8285
        %8288 = vset.pattern.permute.xlu0 8
        %8289 = vperm.xlu0 %8288, %v360
        %v8290 = vpop.permute.xlu0 %8289
        %8292 = vset.pattern.permute.xlu0 8
        %8293 = vperm.xlu0 %8292, %v361
        %v8294 = vpop.permute.xlu0 %8293
        %8296 = vset.pattern.permute.xlu0 8
        %8297 = vperm.xlu0 %8296, %v362
        %v8298 = vpop.permute.xlu0 %8297
        %8300 = vset.pattern.permute.xlu0 8
        %8301 = vperm.xlu0 %8300, %v363
        %v8302 = vpop.permute.xlu0 %8301
        %8304 = vset.pattern.permute.xlu0 8
        %8305 = vperm.xlu0 %8304, %v364
        %v8306 = vpop.permute.xlu0 %8305
        %8308 = vset.pattern.permute.xlu0 8
        %8309 = vperm.xlu0 %8308, %v365
        %v8310 = vpop.permute.xlu0 %8309
        %8312 = vset.pattern.permute.xlu0 8
        %8313 = vperm.xlu0 %8312, %v366
        %v8314 = vpop.permute.xlu0 %8313
        %8316 = vset.pattern.permute.xlu0 8
        %8317 = vperm.xlu0 %8316, %v367
        %v8318 = vpop.permute.xlu0 %8317
        %8320 = vset.pattern.permute.xlu0 8
        %8321 = vperm.xlu0 %8320, %v368
        %v8322 = vpop.permute.xlu0 %8321
        %8324 = vset.pattern.permute.xlu0 8
        %8325 = vperm.xlu0 %8324, %v369
        %v8326 = vpop.permute.xlu0 %8325
        %8328 = vset.pattern.permute.xlu0 8
        %8329 = vperm.xlu0 %8328, %v370
        %v8330 = vpop.permute.xlu0 %8329
        %8332 = vset.pattern.permute.xlu0 8
        %8333 = vperm.xlu0 %8332, %v371
        %v8334 = vpop.permute.xlu0 %8333
        %8336 = vset.pattern.permute.xlu0 8
        %8337 = vperm.xlu0 %8336, %v372
        %v8338 = vpop.permute.xlu0 %8337
        %v8340 = vmul.f32 %v7925, %v8086
        %v8341 = vmul.f32 %v7927, %v8090
        %v8342 = vmul.f32 %v7930, %v8094
        %v8343 = vmul.f32 %v7932, %v8098
        %v8344 = vmul.f32 %v7935, %v8102
        %v8345 = vmul.f32 %v7937, %v8106
        %v8346 = vmul.f32 %v7940, %v8110
        %v8347 = vmul.f32 %v7942, %v8114
        %v8348 = vmul.f32 %v7945, %v8118
        %v8349 = vmul.f32 %v7947, %v8122
        %v8350 = vmul.f32 %v7950, %v8126
        %v8351 = vmul.f32 %v7952, %v8130
        %v8352 = vmul.f32 %v7955, %v8134
        %v8353 = vmul.f32 %v7957, %v8138
        %v8354 = vmul.f32 %v7960, %v8142
        %v8355 = vmul.f32 %v7962, %v8146
        %v8356 = vmul.f32 %v7965, %v8150
        %v8357 = vmul.f32 %v7967, %v8154
        %v8358 = vmul.f32 %v7970, %v8158
        %v8359 = vmul.f32 %v7972, %v8162
        %v8360 = vmul.f32 %v7975, %v8166
        %v8361 = vmul.f32 %v7977, %v8170
        %v8362 = vmul.f32 %v7980, %v8174
        %v8363 = vmul.f32 %v7982, %v8178
        %v8364 = vmul.f32 %v7985, %v8182
        %v8365 = vmul.f32 %v7987, %v8186
        %v8366 = vmul.f32 %v7990, %v8190
        %v8367 = vmul.f32 %v7992, %v8194
        %v8368 = vmul.f32 %v7995, %v8198
        %v8369 = vmul.f32 %v7997, %v8202
        %v8370 = vmul.f32 %v8000, %v8206
        %v8371 = vmul.f32 %v8002, %v8210
        %v8372 = vmul.f32 %v8005, %v8214
        %v8373 = vmul.f32 %v8007, %v8218
        %v8374 = vmul.f32 %v8010, %v8222
        %v8375 = vmul.f32 %v8012, %v8226
        %v8376 = vmul.f32 %v8015, %v8230
        %v8377 = vmul.f32 %v8017, %v8234
        %v8378 = vmul.f32 %v8020, %v8238
        %v8379 = vmul.f32 %v8022, %v8242
        %v8380 = vmul.f32 %v8025, %v8246
        %v8381 = vmul.f32 %v8027, %v8250
        %v8382 = vmul.f32 %v8030, %v8254
        %v8383 = vmul.f32 %v8032, %v8258
        %v8384 = vmul.f32 %v8035, %v8262
        %v8385 = vmul.f32 %v8037, %v8266
        %v8386 = vmul.f32 %v8040, %v8270
        %v8387 = vmul.f32 %v8042, %v8274
        %v8388 = vmul.f32 %v8045, %v8278
        %v8389 = vmul.f32 %v8047, %v8282
        %v8390 = vmul.f32 %v8050, %v8286
        %v8391 = vmul.f32 %v8052, %v8290
        %v8392 = vmul.f32 %v8055, %v8294
        %v8393 = vmul.f32 %v8057, %v8298
        %v8394 = vmul.f32 %v8060, %v8302
        %v8395 = vmul.f32 %v8062, %v8306
        %v8396 = vmul.f32 %v8065, %v8310
        %v8397 = vmul.f32 %v8067, %v8314
        %v8398 = vmul.f32 %v8070, %v8318
        %v8399 = vmul.f32 %v8072, %v8322
        %v8400 = vmul.f32 %v8075, %v8326
        %v8401 = vmul.f32 %v8077, %v8330
        %v8402 = vmul.f32 %v8080, %v8334
        %v8403 = vmul.f32 %v8082, %v8338
        %8404 = vset.pattern.permute.xlu0 11
        %8405 = vperm.xlu0 %8404, %v309
        %v8406 = vpop.permute.xlu0 %8405
        %8408 = vset.pattern.permute.xlu0 11
        %8409 = vperm.xlu0 %8408, %v310
        %v8410 = vpop.permute.xlu0 %8409
        %8412 = vset.pattern.permute.xlu0 11
        %8413 = vperm.xlu0 %8412, %v311
        %v8414 = vpop.permute.xlu0 %8413
        %8416 = vset.pattern.permute.xlu0 11
        %8417 = vperm.xlu0 %8416, %v312
        %v8418 = vpop.permute.xlu0 %8417
        %8420 = vset.pattern.permute.xlu0 11
        %8421 = vperm.xlu0 %8420, %v313
        %v8422 = vpop.permute.xlu0 %8421
        %8424 = vset.pattern.permute.xlu0 11
        %8425 = vperm.xlu0 %8424, %v314
        %v8426 = vpop.permute.xlu0 %8425
        %8428 = vset.pattern.permute.xlu0 11
        %8429 = vperm.xlu0 %8428, %v315
        %v8430 = vpop.permute.xlu0 %8429
        %8432 = vset.pattern.permute.xlu0 11
        %8433 = vperm.xlu0 %8432, %v316
        %v8434 = vpop.permute.xlu0 %8433
        %8436 = vset.pattern.permute.xlu0 11
        %8437 = vperm.xlu0 %8436, %v317
        %v8438 = vpop.permute.xlu0 %8437
        %8440 = vset.pattern.permute.xlu0 11
        %8441 = vperm.xlu0 %8440, %v318
        %v8442 = vpop.permute.xlu0 %8441
        %8444 = vset.pattern.permute.xlu0 11
        %8445 = vperm.xlu0 %8444, %v319
        %v8446 = vpop.permute.xlu0 %8445
        %8448 = vset.pattern.permute.xlu0 11
        %8449 = vperm.xlu0 %8448, %v320
        %v8450 = vpop.permute.xlu0 %8449
        %8452 = vset.pattern.permute.xlu0 11
        %8453 = vperm.xlu0 %8452, %v321
        %v8454 = vpop.permute.xlu0 %8453
        %8456 = vset.pattern.permute.xlu0 11
        %8457 = vperm.xlu0 %8456, %v322
        %v8458 = vpop.permute.xlu0 %8457
        %8460 = vset.pattern.permute.xlu0 11
        %8461 = vperm.xlu0 %8460, %v323
        %v8462 = vpop.permute.xlu0 %8461
        %8464 = vset.pattern.permute.xlu0 11
        %8465 = vperm.xlu0 %8464, %v324
        %v8466 = vpop.permute.xlu0 %8465
        %8468 = vset.pattern.permute.xlu0 11
        %8469 = vperm.xlu0 %8468, %v325
        %v8470 = vpop.permute.xlu0 %8469
        %8472 = vset.pattern.permute.xlu0 11
        %8473 = vperm.xlu0 %8472, %v326
        %v8474 = vpop.permute.xlu0 %8473
        %8476 = vset.pattern.permute.xlu0 11
        %8477 = vperm.xlu0 %8476, %v327
        %v8478 = vpop.permute.xlu0 %8477
        %8480 = vset.pattern.permute.xlu0 11
        %8481 = vperm.xlu0 %8480, %v328
        %v8482 = vpop.permute.xlu0 %8481
        %8484 = vset.pattern.permute.xlu0 11
        %8485 = vperm.xlu0 %8484, %v329
        %v8486 = vpop.permute.xlu0 %8485
        %8488 = vset.pattern.permute.xlu0 11
        %8489 = vperm.xlu0 %8488, %v330
        %v8490 = vpop.permute.xlu0 %8489
        %8492 = vset.pattern.permute.xlu0 11
        %8493 = vperm.xlu0 %8492, %v331
        %v8494 = vpop.permute.xlu0 %8493
        %8496 = vset.pattern.permute.xlu0 11
        %8497 = vperm.xlu0 %8496, %v332
        %v8498 = vpop.permute.xlu0 %8497
        %8500 = vset.pattern.permute.xlu0 11
        %8501 = vperm.xlu0 %8500, %v333
        %v8502 = vpop.permute.xlu0 %8501
        %8504 = vset.pattern.permute.xlu0 11
        %8505 = vperm.xlu0 %8504, %v334
        %v8506 = vpop.permute.xlu0 %8505
        %8508 = vset.pattern.permute.xlu0 11
        %8509 = vperm.xlu0 %8508, %v335
        %v8510 = vpop.permute.xlu0 %8509
        %8512 = vset.pattern.permute.xlu0 11
        %8513 = vperm.xlu0 %8512, %v336
        %v8514 = vpop.permute.xlu0 %8513
        %8516 = vset.pattern.permute.xlu0 11
        %8517 = vperm.xlu0 %8516, %v337
        %v8518 = vpop.permute.xlu0 %8517
        %8520 = vset.pattern.permute.xlu0 11
        %8521 = vperm.xlu0 %8520, %v338
        %v8522 = vpop.permute.xlu0 %8521
        %8524 = vset.pattern.permute.xlu0 11
        %8525 = vperm.xlu0 %8524, %v339
        %v8526 = vpop.permute.xlu0 %8525
        %8528 = vset.pattern.permute.xlu0 11
        %8529 = vperm.xlu0 %8528, %v340
        %v8530 = vpop.permute.xlu0 %8529
        %8532 = vset.pattern.permute.xlu0 11
        %8533 = vperm.xlu0 %8532, %v341
        %v8534 = vpop.permute.xlu0 %8533
        %8536 = vset.pattern.permute.xlu0 11
        %8537 = vperm.xlu0 %8536, %v342
        %v8538 = vpop.permute.xlu0 %8537
        %8540 = vset.pattern.permute.xlu0 11
        %8541 = vperm.xlu0 %8540, %v343
        %v8542 = vpop.permute.xlu0 %8541
        %8544 = vset.pattern.permute.xlu0 11
        %8545 = vperm.xlu0 %8544, %v344
        %v8546 = vpop.permute.xlu0 %8545
        %8548 = vset.pattern.permute.xlu0 11
        %8549 = vperm.xlu0 %8548, %v345
        %v8550 = vpop.permute.xlu0 %8549
        %8552 = vset.pattern.permute.xlu0 11
        %8553 = vperm.xlu0 %8552, %v346
        %v8554 = vpop.permute.xlu0 %8553
        %8556 = vset.pattern.permute.xlu0 11
        %8557 = vperm.xlu0 %8556, %v347
        %v8558 = vpop.permute.xlu0 %8557
        %8560 = vset.pattern.permute.xlu0 11
        %8561 = vperm.xlu0 %8560, %v348
        %v8562 = vpop.permute.xlu0 %8561
        %8564 = vset.pattern.permute.xlu0 11
        %8565 = vperm.xlu0 %8564, %v349
        %v8566 = vpop.permute.xlu0 %8565
        %8568 = vset.pattern.permute.xlu0 11
        %8569 = vperm.xlu0 %8568, %v350
        %v8570 = vpop.permute.xlu0 %8569
        %8572 = vset.pattern.permute.xlu0 11
        %8573 = vperm.xlu0 %8572, %v351
        %v8574 = vpop.permute.xlu0 %8573
        %8576 = vset.pattern.permute.xlu0 11
        %8577 = vperm.xlu0 %8576, %v352
        %v8578 = vpop.permute.xlu0 %8577
        %8580 = vset.pattern.permute.xlu0 11
        %8581 = vperm.xlu0 %8580, %v353
        %v8582 = vpop.permute.xlu0 %8581
        %8584 = vset.pattern.permute.xlu0 11
        %8585 = vperm.xlu0 %8584, %v354
        %v8586 = vpop.permute.xlu0 %8585
        %8588 = vset.pattern.permute.xlu0 11
        %8589 = vperm.xlu0 %8588, %v355
        %v8590 = vpop.permute.xlu0 %8589
        %8592 = vset.pattern.permute.xlu0 11
        %8593 = vperm.xlu0 %8592, %v356
        %v8594 = vpop.permute.xlu0 %8593
        %8596 = vset.pattern.permute.xlu0 11
        %8597 = vperm.xlu0 %8596, %v357
        %v8598 = vpop.permute.xlu0 %8597
        %8600 = vset.pattern.permute.xlu0 11
        %8601 = vperm.xlu0 %8600, %v358
        %v8602 = vpop.permute.xlu0 %8601
        %8604 = vset.pattern.permute.xlu0 11
        %8605 = vperm.xlu0 %8604, %v359
        %v8606 = vpop.permute.xlu0 %8605
        %8608 = vset.pattern.permute.xlu0 11
        %8609 = vperm.xlu0 %8608, %v360
        %v8610 = vpop.permute.xlu0 %8609
        %8612 = vset.pattern.permute.xlu0 11
        %8613 = vperm.xlu0 %8612, %v361
        %v8614 = vpop.permute.xlu0 %8613
        %8616 = vset.pattern.permute.xlu0 11
        %8617 = vperm.xlu0 %8616, %v362
        %v8618 = vpop.permute.xlu0 %8617
        %8620 = vset.pattern.permute.xlu0 11
        %8621 = vperm.xlu0 %8620, %v363
        %v8622 = vpop.permute.xlu0 %8621
        %8624 = vset.pattern.permute.xlu0 11
        %8625 = vperm.xlu0 %8624, %v364
        %v8626 = vpop.permute.xlu0 %8625
        %8628 = vset.pattern.permute.xlu0 11
        %8629 = vperm.xlu0 %8628, %v365
        %v8630 = vpop.permute.xlu0 %8629
        %8632 = vset.pattern.permute.xlu0 11
        %8633 = vperm.xlu0 %8632, %v366
        %v8634 = vpop.permute.xlu0 %8633
        %8636 = vset.pattern.permute.xlu0 11
        %8637 = vperm.xlu0 %8636, %v367
        %v8638 = vpop.permute.xlu0 %8637
        %8640 = vset.pattern.permute.xlu0 11
        %8641 = vperm.xlu0 %8640, %v368
        %v8642 = vpop.permute.xlu0 %8641
        %8644 = vset.pattern.permute.xlu0 11
        %8645 = vperm.xlu0 %8644, %v369
        %v8646 = vpop.permute.xlu0 %8645
        %8648 = vset.pattern.permute.xlu0 11
        %8649 = vperm.xlu0 %8648, %v370
        %v8650 = vpop.permute.xlu0 %8649
        %8652 = vset.pattern.permute.xlu0 11
        %8653 = vperm.xlu0 %8652, %v371
        %v8654 = vpop.permute.xlu0 %8653
        %8656 = vset.pattern.permute.xlu0 11
        %8657 = vperm.xlu0 %8656, %v372
        %v8658 = vpop.permute.xlu0 %8657
        %v8660 = vadd.f32 %v8340, %v8406
        %v8661 = vadd.f32 %v8341, %v8410
        %v8662 = vadd.f32 %v8342, %v8414
        %v8663 = vadd.f32 %v8343, %v8418
        %v8664 = vadd.f32 %v8344, %v8422
        %v8665 = vadd.f32 %v8345, %v8426
        %v8666 = vadd.f32 %v8346, %v8430
        %v8667 = vadd.f32 %v8347, %v8434
        %v8668 = vadd.f32 %v8348, %v8438
        %v8669 = vadd.f32 %v8349, %v8442
        %v8670 = vadd.f32 %v8350, %v8446
        %v8671 = vadd.f32 %v8351, %v8450
        %v8672 = vadd.f32 %v8352, %v8454
        %v8673 = vadd.f32 %v8353, %v8458
        %v8674 = vadd.f32 %v8354, %v8462
        %v8675 = vadd.f32 %v8355, %v8466
        %v8676 = vadd.f32 %v8356, %v8470
        %v8677 = vadd.f32 %v8357, %v8474
        %v8678 = vadd.f32 %v8358, %v8478
        %v8679 = vadd.f32 %v8359, %v8482
        %v8680 = vadd.f32 %v8360, %v8486
        %v8681 = vadd.f32 %v8361, %v8490
        %v8682 = vadd.f32 %v8362, %v8494
        %v8683 = vadd.f32 %v8363, %v8498
        %v8684 = vadd.f32 %v8364, %v8502
        %v8685 = vadd.f32 %v8365, %v8506
        %v8686 = vadd.f32 %v8366, %v8510
        %v8687 = vadd.f32 %v8367, %v8514
        %v8688 = vadd.f32 %v8368, %v8518
        %v8689 = vadd.f32 %v8369, %v8522
        %v8690 = vadd.f32 %v8370, %v8526
        %v8691 = vadd.f32 %v8371, %v8530
        %v8692 = vadd.f32 %v8372, %v8534
        %v8693 = vadd.f32 %v8373, %v8538
        %v8694 = vadd.f32 %v8374, %v8542
        %v8695 = vadd.f32 %v8375, %v8546
        %v8696 = vadd.f32 %v8376, %v8550
        %v8697 = vadd.f32 %v8377, %v8554
        %v8698 = vadd.f32 %v8378, %v8558
        %v8699 = vadd.f32 %v8379, %v8562
        %v8700 = vadd.f32 %v8380, %v8566
        %v8701 = vadd.f32 %v8381, %v8570
        %v8702 = vadd.f32 %v8382, %v8574
        %v8703 = vadd.f32 %v8383, %v8578
        %v8704 = vadd.f32 %v8384, %v8582
        %v8705 = vadd.f32 %v8385, %v8586
        %v8706 = vadd.f32 %v8386, %v8590
        %v8707 = vadd.f32 %v8387, %v8594
        %v8708 = vadd.f32 %v8388, %v8598
        %v8709 = vadd.f32 %v8389, %v8602
        %v8710 = vadd.f32 %v8390, %v8606
        %v8711 = vadd.f32 %v8391, %v8610
        %v8712 = vadd.f32 %v8392, %v8614
        %v8713 = vadd.f32 %v8393, %v8618
        %v8714 = vadd.f32 %v8394, %v8622
        %v8715 = vadd.f32 %v8395, %v8626
        %v8716 = vadd.f32 %v8396, %v8630
        %v8717 = vadd.f32 %v8397, %v8634
        %v8718 = vadd.f32 %v8398, %v8638
        %v8719 = vadd.f32 %v8399, %v8642
        %v8720 = vadd.f32 %v8400, %v8646
        %v8721 = vadd.f32 %v8401, %v8650
        %v8722 = vadd.f32 %v8402, %v8654
        %v8723 = vadd.f32 %v8403, %v8658
        %8724 = vmatpush.bf16.msra.mxu0 %v3902
        %8725 = vmatpush.bf16.msra.mxu0 %v3901
        %8726 = vmatpush.bf16.msra.mxu0 %v3900
        %8727 = vmatpush.bf16.msra.mxu0 %v3899
        %8728 = vmatpush.bf16.msra.mxu0 %v3898
        %8729 = vmatpush.bf16.msra.mxu0 %v3897
        %8730 = vmatpush.bf16.msra.mxu0 %v3896
        %8731 = vmatpush.bf16.msra.mxu0 %v3895
        %8732 = vmatmul.bf16.gmra.mxu0 %v7074
        %v8733 = vpop.f32.mrf.mxu0
        %v8734 = vadd.f32 0.0, %v8733
        %v8735 = vpop.f32.mrf.mxu0
        %v8736 = vadd.f32 0.0, %v8735
        %8737 = vmatmul.bf16.gmra.mxu0 %v7075
        %v8738 = vpop.f32.mrf.mxu0
        %v8739 = vadd.f32 0.0, %v8738
        %v8740 = vpop.f32.mrf.mxu0
        %v8741 = vadd.f32 0.0, %v8740
        %8742 = vmatmul.bf16.gmra.mxu0 %v7076
        %v8743 = vpop.f32.mrf.mxu0
        %v8744 = vadd.f32 0.0, %v8743
        %v8745 = vpop.f32.mrf.mxu0
        %v8746 = vadd.f32 0.0, %v8745
        %8747 = vmatmul.bf16.gmra.mxu0 %v7077
        %v8748 = vpop.f32.mrf.mxu0
        %v8749 = vadd.f32 0.0, %v8748
        %v8750 = vpop.f32.mrf.mxu0
        %v8751 = vadd.f32 0.0, %v8750
        %8752 = vmatmul.bf16.gmra.mxu0 %v7078
        %v8753 = vpop.f32.mrf.mxu0
        %v8754 = vadd.f32 0.0, %v8753
        %v8755 = vpop.f32.mrf.mxu0
        %v8756 = vadd.f32 0.0, %v8755
        %8757 = vmatmul.bf16.gmra.mxu0 %v7079
        %v8758 = vpop.f32.mrf.mxu0
        %v8759 = vadd.f32 0.0, %v8758
        %v8760 = vpop.f32.mrf.mxu0
        %v8761 = vadd.f32 0.0, %v8760
        %8762 = vmatmul.bf16.gmra.mxu0 %v7080
        %v8763 = vpop.f32.mrf.mxu0
        %v8764 = vadd.f32 0.0, %v8763
        %v8765 = vpop.f32.mrf.mxu0
        %v8766 = vadd.f32 0.0, %v8765
        %8767 = vmatmul.bf16.gmra.mxu0 %v7081
        %v8768 = vpop.f32.mrf.mxu0
        %v8769 = vadd.f32 0.0, %v8768
        %v8770 = vpop.f32.mrf.mxu0
        %v8771 = vadd.f32 0.0, %v8770
        %8772 = vmatmul.bf16.gmra.mxu0 %v7082
        %v8773 = vpop.f32.mrf.mxu0
        %v8774 = vadd.f32 0.0, %v8773
        %v8775 = vpop.f32.mrf.mxu0
        %v8776 = vadd.f32 0.0, %v8775
        %8777 = vmatmul.bf16.gmra.mxu0 %v7083
        %v8778 = vpop.f32.mrf.mxu0
        %v8779 = vadd.f32 0.0, %v8778
        %v8780 = vpop.f32.mrf.mxu0
        %v8781 = vadd.f32 0.0, %v8780
        %8782 = vmatmul.bf16.gmra.mxu0 %v7084
        %v8783 = vpop.f32.mrf.mxu0
        %v8784 = vadd.f32 0.0, %v8783
        %v8785 = vpop.f32.mrf.mxu0
        %v8786 = vadd.f32 0.0, %v8785
        %8787 = vmatmul.bf16.gmra.mxu0 %v7085
        %v8788 = vpop.f32.mrf.mxu0
        %v8789 = vadd.f32 0.0, %v8788
        %v8790 = vpop.f32.mrf.mxu0
        %v8791 = vadd.f32 0.0, %v8790
        %8792 = vmatmul.bf16.gmra.mxu0 %v7086
        %v8793 = vpop.f32.mrf.mxu0
        %v8794 = vadd.f32 0.0, %v8793
        %v8795 = vpop.f32.mrf.mxu0
        %v8796 = vadd.f32 0.0, %v8795
        %8797 = vmatmul.bf16.gmra.mxu0 %v7087
        %v8798 = vpop.f32.mrf.mxu0
        %v8799 = vadd.f32 0.0, %v8798
        %v8800 = vpop.f32.mrf.mxu0
        %v8801 = vadd.f32 0.0, %v8800
        %8802 = vmatmul.bf16.gmra.mxu0 %v7088
        %v8803 = vpop.f32.mrf.mxu0
        %v8804 = vadd.f32 0.0, %v8803
        %v8805 = vpop.f32.mrf.mxu0
        %v8806 = vadd.f32 0.0, %v8805
        %8807 = vmatmul.bf16.gmra.mxu0 %v7089
        %v8808 = vpop.f32.mrf.mxu0
        %v8809 = vadd.f32 0.0, %v8808
        %v8810 = vpop.f32.mrf.mxu0
        %v8811 = vadd.f32 0.0, %v8810
        %8812 = vmatmul.bf16.gmra.mxu0 %v7090
        %v8813 = vpop.f32.mrf.mxu0
        %v8814 = vadd.f32 0.0, %v8813
        %v8815 = vpop.f32.mrf.mxu0
        %v8816 = vadd.f32 0.0, %v8815
        %8817 = vmatmul.bf16.gmra.mxu0 %v7091
        %v8818 = vpop.f32.mrf.mxu0
        %v8819 = vadd.f32 0.0, %v8818
        %v8820 = vpop.f32.mrf.mxu0
        %v8821 = vadd.f32 0.0, %v8820
        %8822 = vmatmul.bf16.gmra.mxu0 %v7092
        %v8823 = vpop.f32.mrf.mxu0
        %v8824 = vadd.f32 0.0, %v8823
        %v8825 = vpop.f32.mrf.mxu0
        %v8826 = vadd.f32 0.0, %v8825
        %8827 = vmatmul.bf16.gmra.mxu0 %v7093
        %v8828 = vpop.f32.mrf.mxu0
        %v8829 = vadd.f32 0.0, %v8828
        %v8830 = vpop.f32.mrf.mxu0
        %v8831 = vadd.f32 0.0, %v8830
        %8832 = vmatmul.bf16.gmra.mxu0 %v7094
        %v8833 = vpop.f32.mrf.mxu0
        %v8834 = vadd.f32 0.0, %v8833
        %v8835 = vpop.f32.mrf.mxu0
        %v8836 = vadd.f32 0.0, %v8835
        %8837 = vmatmul.bf16.gmra.mxu0 %v7095
        %v8838 = vpop.f32.mrf.mxu0
        %v8839 = vadd.f32 0.0, %v8838
        %v8840 = vpop.f32.mrf.mxu0
        %v8841 = vadd.f32 0.0, %v8840
        %8842 = vmatmul.bf16.gmra.mxu0 %v7096
        %v8843 = vpop.f32.mrf.mxu0
        %v8844 = vadd.f32 0.0, %v8843
        %v8845 = vpop.f32.mrf.mxu0
        %v8846 = vadd.f32 0.0, %v8845
        %8847 = vmatmul.bf16.gmra.mxu0 %v7097
        %v8848 = vpop.f32.mrf.mxu0
        %v8849 = vadd.f32 0.0, %v8848
        %v8850 = vpop.f32.mrf.mxu0
        %v8851 = vadd.f32 0.0, %v8850
        %8852 = vmatmul.bf16.gmra.mxu0 %v7098
        %v8853 = vpop.f32.mrf.mxu0
        %v8854 = vadd.f32 0.0, %v8853
        %v8855 = vpop.f32.mrf.mxu0
        %v8856 = vadd.f32 0.0, %v8855
        %8857 = vmatmul.bf16.gmra.mxu0 %v7099
        %v8858 = vpop.f32.mrf.mxu0
        %v8859 = vadd.f32 0.0, %v8858
        %v8860 = vpop.f32.mrf.mxu0
        %v8861 = vadd.f32 0.0, %v8860
        %8862 = vmatmul.bf16.gmra.mxu0 %v7100
        %v8863 = vpop.f32.mrf.mxu0
        %v8864 = vadd.f32 0.0, %v8863
        %v8865 = vpop.f32.mrf.mxu0
        %v8866 = vadd.f32 0.0, %v8865
        %8867 = vmatmul.bf16.gmra.mxu0 %v7101
        %v8868 = vpop.f32.mrf.mxu0
        %v8869 = vadd.f32 0.0, %v8868
        %v8870 = vpop.f32.mrf.mxu0
        %v8871 = vadd.f32 0.0, %v8870
        %8872 = vmatmul.bf16.gmra.mxu0 %v7102
        %v8873 = vpop.f32.mrf.mxu0
        %v8874 = vadd.f32 0.0, %v8873
        %v8875 = vpop.f32.mrf.mxu0
        %v8876 = vadd.f32 0.0, %v8875
        %8877 = vmatmul.bf16.gmra.mxu0 %v7103
        %v8878 = vpop.f32.mrf.mxu0
        %v8879 = vadd.f32 0.0, %v8878
        %v8880 = vpop.f32.mrf.mxu0
        %v8881 = vadd.f32 0.0, %v8880
        %8882 = vmatmul.bf16.gmra.mxu0 %v7104
        %v8883 = vpop.f32.mrf.mxu0
        %v8884 = vadd.f32 0.0, %v8883
        %v8885 = vpop.f32.mrf.mxu0
        %v8886 = vadd.f32 0.0, %v8885
        %8887 = vmatmul.bf16.gmra.mxu0 %v7105
        %v8888 = vpop.f32.mrf.mxu0
        %v8889 = vadd.f32 0.0, %v8888
        %v8890 = vpop.f32.mrf.mxu0
        %v8891 = vadd.f32 0.0, %v8890
        %8892 = vdwg.mxu0
        %8893 = vset.pattern.permute.xlu0 14
        %8894 = vperm.xlu0 %8893, %v309
        %v8895 = vpop.permute.xlu0 %8894
        %8897 = vset.pattern.permute.xlu0 14
        %8898 = vperm.xlu0 %8897, %v310
        %v8899 = vpop.permute.xlu0 %8898
        %8901 = vset.pattern.permute.xlu0 14
        %8902 = vperm.xlu0 %8901, %v311
        %v8903 = vpop.permute.xlu0 %8902
        %8905 = vset.pattern.permute.xlu0 14
        %8906 = vperm.xlu0 %8905, %v312
        %v8907 = vpop.permute.xlu0 %8906
        %8909 = vset.pattern.permute.xlu0 14
        %8910 = vperm.xlu0 %8909, %v313
        %v8911 = vpop.permute.xlu0 %8910
        %8913 = vset.pattern.permute.xlu0 14
        %8914 = vperm.xlu0 %8913, %v314
        %v8915 = vpop.permute.xlu0 %8914
        %8917 = vset.pattern.permute.xlu0 14
        %8918 = vperm.xlu0 %8917, %v315
        %v8919 = vpop.permute.xlu0 %8918
        %8921 = vset.pattern.permute.xlu0 14
        %8922 = vperm.xlu0 %8921, %v316
        %v8923 = vpop.permute.xlu0 %8922
        %8925 = vset.pattern.permute.xlu0 14
        %8926 = vperm.xlu0 %8925, %v317
        %v8927 = vpop.permute.xlu0 %8926
        %8929 = vset.pattern.permute.xlu0 14
        %8930 = vperm.xlu0 %8929, %v318
        %v8931 = vpop.permute.xlu0 %8930
        %8933 = vset.pattern.permute.xlu0 14
        %8934 = vperm.xlu0 %8933, %v319
        %v8935 = vpop.permute.xlu0 %8934
        %8937 = vset.pattern.permute.xlu0 14
        %8938 = vperm.xlu0 %8937, %v320
        %v8939 = vpop.permute.xlu0 %8938
        %8941 = vset.pattern.permute.xlu0 14
        %8942 = vperm.xlu0 %8941, %v321
        %v8943 = vpop.permute.xlu0 %8942
        %8945 = vset.pattern.permute.xlu0 14
        %8946 = vperm.xlu0 %8945, %v322
        %v8947 = vpop.permute.xlu0 %8946
        %8949 = vset.pattern.permute.xlu0 14
        %8950 = vperm.xlu0 %8949, %v323
        %v8951 = vpop.permute.xlu0 %8950
        %8953 = vset.pattern.permute.xlu0 14
        %8954 = vperm.xlu0 %8953, %v324
        %v8955 = vpop.permute.xlu0 %8954
        %8957 = vset.pattern.permute.xlu0 14
        %8958 = vperm.xlu0 %8957, %v325
        %v8959 = vpop.permute.xlu0 %8958
        %8961 = vset.pattern.permute.xlu0 14
        %8962 = vperm.xlu0 %8961, %v326
        %v8963 = vpop.permute.xlu0 %8962
        %8965 = vset.pattern.permute.xlu0 14
        %8966 = vperm.xlu0 %8965, %v327
        %v8967 = vpop.permute.xlu0 %8966
        %8969 = vset.pattern.permute.xlu0 14
        %8970 = vperm.xlu0 %8969, %v328
        %v8971 = vpop.permute.xlu0 %8970
        %8973 = vset.pattern.permute.xlu0 14
        %8974 = vperm.xlu0 %8973, %v329
        %v8975 = vpop.permute.xlu0 %8974
        %8977 = vset.pattern.permute.xlu0 14
        %8978 = vperm.xlu0 %8977, %v330
        %v8979 = vpop.permute.xlu0 %8978
        %8981 = vset.pattern.permute.xlu0 14
        %8982 = vperm.xlu0 %8981, %v331
        %v8983 = vpop.permute.xlu0 %8982
        %8985 = vset.pattern.permute.xlu0 14
        %8986 = vperm.xlu0 %8985, %v332
        %v8987 = vpop.permute.xlu0 %8986
        %8989 = vset.pattern.permute.xlu0 14
        %8990 = vperm.xlu0 %8989, %v333
        %v8991 = vpop.permute.xlu0 %8990
        %8993 = vset.pattern.permute.xlu0 14
        %8994 = vperm.xlu0 %8993, %v334
        %v8995 = vpop.permute.xlu0 %8994
        %8997 = vset.pattern.permute.xlu0 14
        %8998 = vperm.xlu0 %8997, %v335
        %v8999 = vpop.permute.xlu0 %8998
        %9001 = vset.pattern.permute.xlu0 14
        %9002 = vperm.xlu0 %9001, %v336
        %v9003 = vpop.permute.xlu0 %9002
        %9005 = vset.pattern.permute.xlu0 14
        %9006 = vperm.xlu0 %9005, %v337
        %v9007 = vpop.permute.xlu0 %9006
        %9009 = vset.pattern.permute.xlu0 14
        %9010 = vperm.xlu0 %9009, %v338
        %v9011 = vpop.permute.xlu0 %9010
        %9013 = vset.pattern.permute.xlu0 14
        %9014 = vperm.xlu0 %9013, %v339
        %v9015 = vpop.permute.xlu0 %9014
        %9017 = vset.pattern.permute.xlu0 14
        %9018 = vperm.xlu0 %9017, %v340
        %v9019 = vpop.permute.xlu0 %9018
        %9021 = vset.pattern.permute.xlu0 14
        %9022 = vperm.xlu0 %9021, %v341
        %v9023 = vpop.permute.xlu0 %9022
        %9025 = vset.pattern.permute.xlu0 14
        %9026 = vperm.xlu0 %9025, %v342
        %v9027 = vpop.permute.xlu0 %9026
        %9029 = vset.pattern.permute.xlu0 14
        %9030 = vperm.xlu0 %9029, %v343
        %v9031 = vpop.permute.xlu0 %9030
        %9033 = vset.pattern.permute.xlu0 14
        %9034 = vperm.xlu0 %9033, %v344
        %v9035 = vpop.permute.xlu0 %9034
        %9037 = vset.pattern.permute.xlu0 14
        %9038 = vperm.xlu0 %9037, %v345
        %v9039 = vpop.permute.xlu0 %9038
        %9041 = vset.pattern.permute.xlu0 14
        %9042 = vperm.xlu0 %9041, %v346
        %v9043 = vpop.permute.xlu0 %9042
        %9045 = vset.pattern.permute.xlu0 14
        %9046 = vperm.xlu0 %9045, %v347
        %v9047 = vpop.permute.xlu0 %9046
        %9049 = vset.pattern.permute.xlu0 14
        %9050 = vperm.xlu0 %9049, %v348
        %v9051 = vpop.permute.xlu0 %9050
        %9053 = vset.pattern.permute.xlu0 14
        %9054 = vperm.xlu0 %9053, %v349
        %v9055 = vpop.permute.xlu0 %9054
        %9057 = vset.pattern.permute.xlu0 14
        %9058 = vperm.xlu0 %9057, %v350
        %v9059 = vpop.permute.xlu0 %9058
        %9061 = vset.pattern.permute.xlu0 14
        %9062 = vperm.xlu0 %9061, %v351
        %v9063 = vpop.permute.xlu0 %9062
        %9065 = vset.pattern.permute.xlu0 14
        %9066 = vperm.xlu0 %9065, %v352
        %v9067 = vpop.permute.xlu0 %9066
        %9069 = vset.pattern.permute.xlu0 14
        %9070 = vperm.xlu0 %9069, %v353
        %v9071 = vpop.permute.xlu0 %9070
        %9073 = vset.pattern.permute.xlu0 14
        %9074 = vperm.xlu0 %9073, %v354
        %v9075 = vpop.permute.xlu0 %9074
        %9077 = vset.pattern.permute.xlu0 14
        %9078 = vperm.xlu0 %9077, %v355
        %v9079 = vpop.permute.xlu0 %9078
        %9081 = vset.pattern.permute.xlu0 14
        %9082 = vperm.xlu0 %9081, %v356
        %v9083 = vpop.permute.xlu0 %9082
        %9085 = vset.pattern.permute.xlu0 14
        %9086 = vperm.xlu0 %9085, %v357
        %v9087 = vpop.permute.xlu0 %9086
        %9089 = vset.pattern.permute.xlu0 14
        %9090 = vperm.xlu0 %9089, %v358
        %v9091 = vpop.permute.xlu0 %9090
        %9093 = vset.pattern.permute.xlu0 14
        %9094 = vperm.xlu0 %9093, %v359
        %v9095 = vpop.permute.xlu0 %9094
        %9097 = vset.pattern.permute.xlu0 14
        %9098 = vperm.xlu0 %9097, %v360
        %v9099 = vpop.permute.xlu0 %9098
        %9101 = vset.pattern.permute.xlu0 14
        %9102 = vperm.xlu0 %9101, %v361
        %v9103 = vpop.permute.xlu0 %9102
        %9105 = vset.pattern.permute.xlu0 14
        %9106 = vperm.xlu0 %9105, %v362
        %v9107 = vpop.permute.xlu0 %9106
        %9109 = vset.pattern.permute.xlu0 14
        %9110 = vperm.xlu0 %9109, %v363
        %v9111 = vpop.permute.xlu0 %9110
        %9113 = vset.pattern.permute.xlu0 14
        %9114 = vperm.xlu0 %9113, %v364
        %v9115 = vpop.permute.xlu0 %9114
        %9117 = vset.pattern.permute.xlu0 14
        %9118 = vperm.xlu0 %9117, %v365
        %v9119 = vpop.permute.xlu0 %9118
        %9121 = vset.pattern.permute.xlu0 14
        %9122 = vperm.xlu0 %9121, %v366
        %v9123 = vpop.permute.xlu0 %9122
        %9125 = vset.pattern.permute.xlu0 14
        %9126 = vperm.xlu0 %9125, %v367
        %v9127 = vpop.permute.xlu0 %9126
        %9129 = vset.pattern.permute.xlu0 14
        %9130 = vperm.xlu0 %9129, %v368
        %v9131 = vpop.permute.xlu0 %9130
        %9133 = vset.pattern.permute.xlu0 14
        %9134 = vperm.xlu0 %9133, %v369
        %v9135 = vpop.permute.xlu0 %9134
        %9137 = vset.pattern.permute.xlu0 14
        %9138 = vperm.xlu0 %9137, %v370
        %v9139 = vpop.permute.xlu0 %9138
        %9141 = vset.pattern.permute.xlu0 14
        %9142 = vperm.xlu0 %9141, %v371
        %v9143 = vpop.permute.xlu0 %9142
        %9145 = vset.pattern.permute.xlu0 14
        %9146 = vperm.xlu0 %9145, %v372
        %v9147 = vpop.permute.xlu0 %9146
        %v9149 = vmul.f32 %v8734, %v8895
        %v9150 = vmul.f32 %v8736, %v8899
        %v9151 = vmul.f32 %v8739, %v8903
        %v9152 = vmul.f32 %v8741, %v8907
        %v9153 = vmul.f32 %v8744, %v8911
        %v9154 = vmul.f32 %v8746, %v8915
        %v9155 = vmul.f32 %v8749, %v8919
        %v9156 = vmul.f32 %v8751, %v8923
        %v9157 = vmul.f32 %v8754, %v8927
        %v9158 = vmul.f32 %v8756, %v8931
        %v9159 = vmul.f32 %v8759, %v8935
        %v9160 = vmul.f32 %v8761, %v8939
        %v9161 = vmul.f32 %v8764, %v8943
        %v9162 = vmul.f32 %v8766, %v8947
        %v9163 = vmul.f32 %v8769, %v8951
        %v9164 = vmul.f32 %v8771, %v8955
        %v9165 = vmul.f32 %v8774, %v8959
        %v9166 = vmul.f32 %v8776, %v8963
        %v9167 = vmul.f32 %v8779, %v8967
        %v9168 = vmul.f32 %v8781, %v8971
        %v9169 = vmul.f32 %v8784, %v8975
        %v9170 = vmul.f32 %v8786, %v8979
        %v9171 = vmul.f32 %v8789, %v8983
        %v9172 = vmul.f32 %v8791, %v8987
        %v9173 = vmul.f32 %v8794, %v8991
        %v9174 = vmul.f32 %v8796, %v8995
        %v9175 = vmul.f32 %v8799, %v8999
        %v9176 = vmul.f32 %v8801, %v9003
        %v9177 = vmul.f32 %v8804, %v9007
        %v9178 = vmul.f32 %v8806, %v9011
        %v9179 = vmul.f32 %v8809, %v9015
        %v9180 = vmul.f32 %v8811, %v9019
        %v9181 = vmul.f32 %v8814, %v9023
        %v9182 = vmul.f32 %v8816, %v9027
        %v9183 = vmul.f32 %v8819, %v9031
        %v9184 = vmul.f32 %v8821, %v9035
        %v9185 = vmul.f32 %v8824, %v9039
        %v9186 = vmul.f32 %v8826, %v9043
        %v9187 = vmul.f32 %v8829, %v9047
        %v9188 = vmul.f32 %v8831, %v9051
        %v9189 = vmul.f32 %v8834, %v9055
        %v9190 = vmul.f32 %v8836, %v9059
        %v9191 = vmul.f32 %v8839, %v9063
        %v9192 = vmul.f32 %v8841, %v9067
        %v9193 = vmul.f32 %v8844, %v9071
        %v9194 = vmul.f32 %v8846, %v9075
        %v9195 = vmul.f32 %v8849, %v9079
        %v9196 = vmul.f32 %v8851, %v9083
        %v9197 = vmul.f32 %v8854, %v9087
        %v9198 = vmul.f32 %v8856, %v9091
        %v9199 = vmul.f32 %v8859, %v9095
        %v9200 = vmul.f32 %v8861, %v9099
        %v9201 = vmul.f32 %v8864, %v9103
        %v9202 = vmul.f32 %v8866, %v9107
        %v9203 = vmul.f32 %v8869, %v9111
        %v9204 = vmul.f32 %v8871, %v9115
        %v9205 = vmul.f32 %v8874, %v9119
        %v9206 = vmul.f32 %v8876, %v9123
        %v9207 = vmul.f32 %v8879, %v9127
        %v9208 = vmul.f32 %v8881, %v9131
        %v9209 = vmul.f32 %v8884, %v9135
        %v9210 = vmul.f32 %v8886, %v9139
        %v9211 = vmul.f32 %v8889, %v9143
        %v9212 = vmul.f32 %v8891, %v9147
        %9213 = vset.pattern.permute.xlu0 17
        %9214 = vperm.xlu0 %9213, %v309
        %v9215 = vpop.permute.xlu0 %9214
        %9217 = vset.pattern.permute.xlu0 17
        %9218 = vperm.xlu0 %9217, %v310
        %v9219 = vpop.permute.xlu0 %9218
        %9221 = vset.pattern.permute.xlu0 17
        %9222 = vperm.xlu0 %9221, %v311
        %v9223 = vpop.permute.xlu0 %9222
        %9225 = vset.pattern.permute.xlu0 17
        %9226 = vperm.xlu0 %9225, %v312
        %v9227 = vpop.permute.xlu0 %9226
        %9229 = vset.pattern.permute.xlu0 17
        %9230 = vperm.xlu0 %9229, %v313
        %v9231 = vpop.permute.xlu0 %9230
        %9233 = vset.pattern.permute.xlu0 17
        %9234 = vperm.xlu0 %9233, %v314
        %v9235 = vpop.permute.xlu0 %9234
        %9237 = vset.pattern.permute.xlu0 17
        %9238 = vperm.xlu0 %9237, %v315
        %v9239 = vpop.permute.xlu0 %9238
        %9241 = vset.pattern.permute.xlu0 17
        %9242 = vperm.xlu0 %9241, %v316
        %v9243 = vpop.permute.xlu0 %9242
        %9245 = vset.pattern.permute.xlu0 17
        %9246 = vperm.xlu0 %9245, %v317
        %v9247 = vpop.permute.xlu0 %9246
        %9249 = vset.pattern.permute.xlu0 17
        %9250 = vperm.xlu0 %9249, %v318
        %v9251 = vpop.permute.xlu0 %9250
        %9253 = vset.pattern.permute.xlu0 17
        %9254 = vperm.xlu0 %9253, %v319
        %v9255 = vpop.permute.xlu0 %9254
        %9257 = vset.pattern.permute.xlu0 17
        %9258 = vperm.xlu0 %9257, %v320
        %v9259 = vpop.permute.xlu0 %9258
        %9261 = vset.pattern.permute.xlu0 17
        %9262 = vperm.xlu0 %9261, %v321
        %v9263 = vpop.permute.xlu0 %9262
        %9265 = vset.pattern.permute.xlu0 17
        %9266 = vperm.xlu0 %9265, %v322
        %v9267 = vpop.permute.xlu0 %9266
        %9269 = vset.pattern.permute.xlu0 17
        %9270 = vperm.xlu0 %9269, %v323
        %v9271 = vpop.permute.xlu0 %9270
        %9273 = vset.pattern.permute.xlu0 17
        %9274 = vperm.xlu0 %9273, %v324
        %v9275 = vpop.permute.xlu0 %9274
        %9277 = vset.pattern.permute.xlu0 17
        %9278 = vperm.xlu0 %9277, %v325
        %v9279 = vpop.permute.xlu0 %9278
        %9281 = vset.pattern.permute.xlu0 17
        %9282 = vperm.xlu0 %9281, %v326
        %v9283 = vpop.permute.xlu0 %9282
        %9285 = vset.pattern.permute.xlu0 17
        %9286 = vperm.xlu0 %9285, %v327
        %v9287 = vpop.permute.xlu0 %9286
        %9289 = vset.pattern.permute.xlu0 17
        %9290 = vperm.xlu0 %9289, %v328
        %v9291 = vpop.permute.xlu0 %9290
        %9293 = vset.pattern.permute.xlu0 17
        %9294 = vperm.xlu0 %9293, %v329
        %v9295 = vpop.permute.xlu0 %9294
        %9297 = vset.pattern.permute.xlu0 17
        %9298 = vperm.xlu0 %9297, %v330
        %v9299 = vpop.permute.xlu0 %9298
        %9301 = vset.pattern.permute.xlu0 17
        %9302 = vperm.xlu0 %9301, %v331
        %v9303 = vpop.permute.xlu0 %9302
        %9305 = vset.pattern.permute.xlu0 17
        %9306 = vperm.xlu0 %9305, %v332
        %v9307 = vpop.permute.xlu0 %9306
        %9309 = vset.pattern.permute.xlu0 17
        %9310 = vperm.xlu0 %9309, %v333
        %v9311 = vpop.permute.xlu0 %9310
        %9313 = vset.pattern.permute.xlu0 17
        %9314 = vperm.xlu0 %9313, %v334
        %v9315 = vpop.permute.xlu0 %9314
        %9317 = vset.pattern.permute.xlu0 17
        %9318 = vperm.xlu0 %9317, %v335
        %v9319 = vpop.permute.xlu0 %9318
        %9321 = vset.pattern.permute.xlu0 17
        %9322 = vperm.xlu0 %9321, %v336
        %v9323 = vpop.permute.xlu0 %9322
        %9325 = vset.pattern.permute.xlu0 17
        %9326 = vperm.xlu0 %9325, %v337
        %v9327 = vpop.permute.xlu0 %9326
        %9329 = vset.pattern.permute.xlu0 17
        %9330 = vperm.xlu0 %9329, %v338
        %v9331 = vpop.permute.xlu0 %9330
        %9333 = vset.pattern.permute.xlu0 17
        %9334 = vperm.xlu0 %9333, %v339
        %v9335 = vpop.permute.xlu0 %9334
        %9337 = vset.pattern.permute.xlu0 17
        %9338 = vperm.xlu0 %9337, %v340
        %v9339 = vpop.permute.xlu0 %9338
        %9341 = vset.pattern.permute.xlu0 17
        %9342 = vperm.xlu0 %9341, %v341
        %v9343 = vpop.permute.xlu0 %9342
        %9345 = vset.pattern.permute.xlu0 17
        %9346 = vperm.xlu0 %9345, %v342
        %v9347 = vpop.permute.xlu0 %9346
        %9349 = vset.pattern.permute.xlu0 17
        %9350 = vperm.xlu0 %9349, %v343
        %v9351 = vpop.permute.xlu0 %9350
        %9353 = vset.pattern.permute.xlu0 17
        %9354 = vperm.xlu0 %9353, %v344
        %v9355 = vpop.permute.xlu0 %9354
        %9357 = vset.pattern.permute.xlu0 17
        %9358 = vperm.xlu0 %9357, %v345
        %v9359 = vpop.permute.xlu0 %9358
        %9361 = vset.pattern.permute.xlu0 17
        %9362 = vperm.xlu0 %9361, %v346
        %v9363 = vpop.permute.xlu0 %9362
        %9365 = vset.pattern.permute.xlu0 17
        %9366 = vperm.xlu0 %9365, %v347
        %v9367 = vpop.permute.xlu0 %9366
        %9369 = vset.pattern.permute.xlu0 17
        %9370 = vperm.xlu0 %9369, %v348
        %v9371 = vpop.permute.xlu0 %9370
        %9373 = vset.pattern.permute.xlu0 17
        %9374 = vperm.xlu0 %9373, %v349
        %v9375 = vpop.permute.xlu0 %9374
        %9377 = vset.pattern.permute.xlu0 17
        %9378 = vperm.xlu0 %9377, %v350
        %v9379 = vpop.permute.xlu0 %9378
        %9381 = vset.pattern.permute.xlu0 17
        %9382 = vperm.xlu0 %9381, %v351
        %v9383 = vpop.permute.xlu0 %9382
        %9385 = vset.pattern.permute.xlu0 17
        %9386 = vperm.xlu0 %9385, %v352
        %v9387 = vpop.permute.xlu0 %9386
        %9389 = vset.pattern.permute.xlu0 17
        %9390 = vperm.xlu0 %9389, %v353
        %v9391 = vpop.permute.xlu0 %9390
        %9393 = vset.pattern.permute.xlu0 17
        %9394 = vperm.xlu0 %9393, %v354
        %v9395 = vpop.permute.xlu0 %9394
        %9397 = vset.pattern.permute.xlu0 17
        %9398 = vperm.xlu0 %9397, %v355
        %v9399 = vpop.permute.xlu0 %9398
        %9401 = vset.pattern.permute.xlu0 17
        %9402 = vperm.xlu0 %9401, %v356
        %v9403 = vpop.permute.xlu0 %9402
        %9405 = vset.pattern.permute.xlu0 17
        %9406 = vperm.xlu0 %9405, %v357
        %v9407 = vpop.permute.xlu0 %9406
        %9409 = vset.pattern.permute.xlu0 17
        %9410 = vperm.xlu0 %9409, %v358
        %v9411 = vpop.permute.xlu0 %9410
        %9413 = vset.pattern.permute.xlu0 17
        %9414 = vperm.xlu0 %9413, %v359
        %v9415 = vpop.permute.xlu0 %9414
        %9417 = vset.pattern.permute.xlu0 17
        %9418 = vperm.xlu0 %9417, %v360
        %v9419 = vpop.permute.xlu0 %9418
        %9421 = vset.pattern.permute.xlu0 17
        %9422 = vperm.xlu0 %9421, %v361
        %v9423 = vpop.permute.xlu0 %9422
        %9425 = vset.pattern.permute.xlu0 17
        %9426 = vperm.xlu0 %9425, %v362
        %v9427 = vpop.permute.xlu0 %9426
        %9429 = vset.pattern.permute.xlu0 17
        %9430 = vperm.xlu0 %9429, %v363
        %v9431 = vpop.permute.xlu0 %9430
        %9433 = vset.pattern.permute.xlu0 17
        %9434 = vperm.xlu0 %9433, %v364
        %v9435 = vpop.permute.xlu0 %9434
        %9437 = vset.pattern.permute.xlu0 17
        %9438 = vperm.xlu0 %9437, %v365
        %v9439 = vpop.permute.xlu0 %9438
        %9441 = vset.pattern.permute.xlu0 17
        %9442 = vperm.xlu0 %9441, %v366
        %v9443 = vpop.permute.xlu0 %9442
        %9445 = vset.pattern.permute.xlu0 17
        %9446 = vperm.xlu0 %9445, %v367
        %v9447 = vpop.permute.xlu0 %9446
        %9449 = vset.pattern.permute.xlu0 17
        %9450 = vperm.xlu0 %9449, %v368
        %v9451 = vpop.permute.xlu0 %9450
        %9453 = vset.pattern.permute.xlu0 17
        %9454 = vperm.xlu0 %9453, %v369
        %v9455 = vpop.permute.xlu0 %9454
        %9457 = vset.pattern.permute.xlu0 17
        %9458 = vperm.xlu0 %9457, %v370
        %v9459 = vpop.permute.xlu0 %9458
        %9461 = vset.pattern.permute.xlu0 17
        %9462 = vperm.xlu0 %9461, %v371
        %v9463 = vpop.permute.xlu0 %9462
        %9465 = vset.pattern.permute.xlu0 17
        %9466 = vperm.xlu0 %9465, %v372
        %v9467 = vpop.permute.xlu0 %9466
        %v9469 = vadd.f32 %v9149, %v9215
        %v9470 = vadd.f32 %v9150, %v9219
        %v9471 = vadd.f32 %v9151, %v9223
        %v9472 = vadd.f32 %v9152, %v9227
        %v9473 = vadd.f32 %v9153, %v9231
        %v9474 = vadd.f32 %v9154, %v9235
        %v9475 = vadd.f32 %v9155, %v9239
        %v9476 = vadd.f32 %v9156, %v9243
        %v9477 = vadd.f32 %v9157, %v9247
        %v9478 = vadd.f32 %v9158, %v9251
        %v9479 = vadd.f32 %v9159, %v9255
        %v9480 = vadd.f32 %v9160, %v9259
        %v9481 = vadd.f32 %v9161, %v9263
        %v9482 = vadd.f32 %v9162, %v9267
        %v9483 = vadd.f32 %v9163, %v9271
        %v9484 = vadd.f32 %v9164, %v9275
        %v9485 = vadd.f32 %v9165, %v9279
        %v9486 = vadd.f32 %v9166, %v9283
        %v9487 = vadd.f32 %v9167, %v9287
        %v9488 = vadd.f32 %v9168, %v9291
        %v9489 = vadd.f32 %v9169, %v9295
        %v9490 = vadd.f32 %v9170, %v9299
        %v9491 = vadd.f32 %v9171, %v9303
        %v9492 = vadd.f32 %v9172, %v9307
        %v9493 = vadd.f32 %v9173, %v9311
        %v9494 = vadd.f32 %v9174, %v9315
        %v9495 = vadd.f32 %v9175, %v9319
        %v9496 = vadd.f32 %v9176, %v9323
        %v9497 = vadd.f32 %v9177, %v9327
        %v9498 = vadd.f32 %v9178, %v9331
        %v9499 = vadd.f32 %v9179, %v9335
        %v9500 = vadd.f32 %v9180, %v9339
        %v9501 = vadd.f32 %v9181, %v9343
        %v9502 = vadd.f32 %v9182, %v9347
        %v9503 = vadd.f32 %v9183, %v9351
        %v9504 = vadd.f32 %v9184, %v9355
        %v9505 = vadd.f32 %v9185, %v9359
        %v9506 = vadd.f32 %v9186, %v9363
        %v9507 = vadd.f32 %v9187, %v9367
        %v9508 = vadd.f32 %v9188, %v9371
        %v9509 = vadd.f32 %v9189, %v9375
        %v9510 = vadd.f32 %v9190, %v9379
        %v9511 = vadd.f32 %v9191, %v9383
        %v9512 = vadd.f32 %v9192, %v9387
        %v9513 = vadd.f32 %v9193, %v9391
        %v9514 = vadd.f32 %v9194, %v9395
        %v9515 = vadd.f32 %v9195, %v9399
        %v9516 = vadd.f32 %v9196, %v9403
        %v9517 = vadd.f32 %v9197, %v9407
        %v9518 = vadd.f32 %v9198, %v9411
        %v9519 = vadd.f32 %v9199, %v9415
        %v9520 = vadd.f32 %v9200, %v9419
        %v9521 = vadd.f32 %v9201, %v9423
        %v9522 = vadd.f32 %v9202, %v9427
        %v9523 = vadd.f32 %v9203, %v9431
        %v9524 = vadd.f32 %v9204, %v9435
        %v9525 = vadd.f32 %v9205, %v9439
        %v9526 = vadd.f32 %v9206, %v9443
        %v9527 = vadd.f32 %v9207, %v9447
        %v9528 = vadd.f32 %v9208, %v9451
        %v9529 = vadd.f32 %v9209, %v9455
        %v9530 = vadd.f32 %v9210, %v9459
        %v9531 = vadd.f32 %v9211, %v9463
        %v9532 = vadd.f32 %v9212, %v9467
        %v9533 = vadd.f32 %v6338, %v7851
        %v9534 = vadd.f32 %v6339, %v7852
        %v9535 = vadd.f32 %v6340, %v7853
        %v9536 = vadd.f32 %v6341, %v7854
        %v9537 = vadd.f32 %v6342, %v7855
        %v9538 = vadd.f32 %v6343, %v7856
        %v9539 = vadd.f32 %v6344, %v7857
        %v9540 = vadd.f32 %v6345, %v7858
        %v9541 = vadd.f32 %v6346, %v7859
        %v9542 = vadd.f32 %v6347, %v7860
        %v9543 = vadd.f32 %v6348, %v7861
        %v9544 = vadd.f32 %v6349, %v7862
        %v9545 = vadd.f32 %v6350, %v7863
        %v9546 = vadd.f32 %v6351, %v7864
        %v9547 = vadd.f32 %v6352, %v7865
        %v9548 = vadd.f32 %v6353, %v7866
        %v9549 = vadd.f32 %v6354, %v7867
        %v9550 = vadd.f32 %v6355, %v7868
        %v9551 = vadd.f32 %v6356, %v7869
        %v9552 = vadd.f32 %v6357, %v7870
        %v9553 = vadd.f32 %v6358, %v7871
        %v9554 = vadd.f32 %v6359, %v7872
        %v9555 = vadd.f32 %v6360, %v7873
        %v9556 = vadd.f32 %v6361, %v7874
        %v9557 = vadd.f32 %v6362, %v7875
        %v9558 = vadd.f32 %v6363, %v7876
        %v9559 = vadd.f32 %v6364, %v7877
        %v9560 = vadd.f32 %v6365, %v7878
        %v9561 = vadd.f32 %v6366, %v7879
        %v9562 = vadd.f32 %v6367, %v7880
        %v9563 = vadd.f32 %v6368, %v7881
        %v9564 = vadd.f32 %v6369, %v7882
        %v9565 = vadd.f32 %v6370, %v7883
        %v9566 = vadd.f32 %v6371, %v7884
        %v9567 = vadd.f32 %v6372, %v7885
        %v9568 = vadd.f32 %v6373, %v7886
        %v9569 = vadd.f32 %v6374, %v7887
        %v9570 = vadd.f32 %v6375, %v7888
        %v9571 = vadd.f32 %v6376, %v7889
        %v9572 = vadd.f32 %v6377, %v7890
        %v9573 = vadd.f32 %v6378, %v7891
        %v9574 = vadd.f32 %v6379, %v7892
        %v9575 = vadd.f32 %v6380, %v7893
        %v9576 = vadd.f32 %v6381, %v7894
        %v9577 = vadd.f32 %v6382, %v7895
        %v9578 = vadd.f32 %v6383, %v7896
        %v9579 = vadd.f32 %v6384, %v7897
        %v9580 = vadd.f32 %v6385, %v7898
        %v9581 = vadd.f32 %v6386, %v7899
        %v9582 = vadd.f32 %v6387, %v7900
        %v9583 = vadd.f32 %v6388, %v7901
        %v9584 = vadd.f32 %v6389, %v7902
        %v9585 = vadd.f32 %v6390, %v7903
        %v9586 = vadd.f32 %v6391, %v7904
        %v9587 = vadd.f32 %v6392, %v7905
        %v9588 = vadd.f32 %v6393, %v7906
        %v9589 = vadd.f32 %v6394, %v7907
        %v9590 = vadd.f32 %v6395, %v7908
        %v9591 = vadd.f32 %v6396, %v7909
        %v9592 = vadd.f32 %v6397, %v7910
        %v9593 = vadd.f32 %v6398, %v7911
        %v9594 = vadd.f32 %v6399, %v7912
        %v9595 = vadd.f32 %v6400, %v7913
        %v9596 = vadd.f32 %v6401, %v7914
        %v9597 = vadd.f32 %v6402, %v8660
        %v9598 = vadd.f32 %v6403, %v8661
        %v9599 = vadd.f32 %v6404, %v8662
        %v9600 = vadd.f32 %v6405, %v8663
        %v9601 = vadd.f32 %v6406, %v8664
        %v9602 = vadd.f32 %v6407, %v8665
        %v9603 = vadd.f32 %v6408, %v8666
        %v9604 = vadd.f32 %v6409, %v8667
        %v9605 = vadd.f32 %v6410, %v8668
        %v9606 = vadd.f32 %v6411, %v8669
        %v9607 = vadd.f32 %v6412, %v8670
        %v9608 = vadd.f32 %v6413, %v8671
        %v9609 = vadd.f32 %v6414, %v8672
        %v9610 = vadd.f32 %v6415, %v8673
        %v9611 = vadd.f32 %v6416, %v8674
        %v9612 = vadd.f32 %v6417, %v8675
        %v9613 = vadd.f32 %v6418, %v8676
        %v9614 = vadd.f32 %v6419, %v8677
        %v9615 = vadd.f32 %v6420, %v8678
        %v9616 = vadd.f32 %v6421, %v8679
        %v9617 = vadd.f32 %v6422, %v8680
        %v9618 = vadd.f32 %v6423, %v8681
        %v9619 = vadd.f32 %v6424, %v8682
        %v9620 = vadd.f32 %v6425, %v8683
        %v9621 = vadd.f32 %v6426, %v8684
        %v9622 = vadd.f32 %v6427, %v8685
        %v9623 = vadd.f32 %v6428, %v8686
        %v9624 = vadd.f32 %v6429, %v8687
        %v9625 = vadd.f32 %v6430, %v8688
        %v9626 = vadd.f32 %v6431, %v8689
        %v9627 = vadd.f32 %v6432, %v8690
        %v9628 = vadd.f32 %v6433, %v8691
        %v9629 = vadd.f32 %v6434, %v8692
        %v9630 = vadd.f32 %v6435, %v8693
        %v9631 = vadd.f32 %v6436, %v8694
        %v9632 = vadd.f32 %v6437, %v8695
        %v9633 = vadd.f32 %v6438, %v8696
        %v9634 = vadd.f32 %v6439, %v8697
        %v9635 = vadd.f32 %v6440, %v8698
        %v9636 = vadd.f32 %v6441, %v8699
        %v9637 = vadd.f32 %v6442, %v8700
        %v9638 = vadd.f32 %v6443, %v8701
        %v9639 = vadd.f32 %v6444, %v8702
        %v9640 = vadd.f32 %v6445, %v8703
        %v9641 = vadd.f32 %v6446, %v8704
        %v9642 = vadd.f32 %v6447, %v8705
        %v9643 = vadd.f32 %v6448, %v8706
        %v9644 = vadd.f32 %v6449, %v8707
        %v9645 = vadd.f32 %v6450, %v8708
        %v9646 = vadd.f32 %v6451, %v8709
        %v9647 = vadd.f32 %v6452, %v8710
        %v9648 = vadd.f32 %v6453, %v8711
        %v9649 = vadd.f32 %v6454, %v8712
        %v9650 = vadd.f32 %v6455, %v8713
        %v9651 = vadd.f32 %v6456, %v8714
        %v9652 = vadd.f32 %v6457, %v8715
        %v9653 = vadd.f32 %v6458, %v8716
        %v9654 = vadd.f32 %v6459, %v8717
        %v9655 = vadd.f32 %v6460, %v8718
        %v9656 = vadd.f32 %v6461, %v8719
        %v9657 = vadd.f32 %v6462, %v8720
        %v9658 = vadd.f32 %v6463, %v8721
        %v9659 = vadd.f32 %v6464, %v8722
        %v9660 = vadd.f32 %v6465, %v8723
        %v9661 = vadd.f32 %v6466, %v9469
        %v9662 = vadd.f32 %v6467, %v9470
        %v9663 = vadd.f32 %v6468, %v9471
        %v9664 = vadd.f32 %v6469, %v9472
        %v9665 = vadd.f32 %v6470, %v9473
        %v9666 = vadd.f32 %v6471, %v9474
        %v9667 = vadd.f32 %v6472, %v9475
        %v9668 = vadd.f32 %v6473, %v9476
        %v9669 = vadd.f32 %v6474, %v9477
        %v9670 = vadd.f32 %v6475, %v9478
        %v9671 = vadd.f32 %v6476, %v9479
        %v9672 = vadd.f32 %v6477, %v9480
        %v9673 = vadd.f32 %v6478, %v9481
        %v9674 = vadd.f32 %v6479, %v9482
        %v9675 = vadd.f32 %v6480, %v9483
        %v9676 = vadd.f32 %v6481, %v9484
        %v9677 = vadd.f32 %v6482, %v9485
        %v9678 = vadd.f32 %v6483, %v9486
        %v9679 = vadd.f32 %v6484, %v9487
        %v9680 = vadd.f32 %v6485, %v9488
        %v9681 = vadd.f32 %v6486, %v9489
        %v9682 = vadd.f32 %v6487, %v9490
        %v9683 = vadd.f32 %v6488, %v9491
        %v9684 = vadd.f32 %v6489, %v9492
        %v9685 = vadd.f32 %v6490, %v9493
        %v9686 = vadd.f32 %v6491, %v9494
        %v9687 = vadd.f32 %v6492, %v9495
        %v9688 = vadd.f32 %v6493, %v9496
        %v9689 = vadd.f32 %v6494, %v9497
        %v9690 = vadd.f32 %v6495, %v9498
        %v9691 = vadd.f32 %v6496, %v9499
        %v9692 = vadd.f32 %v6497, %v9500
        %v9693 = vadd.f32 %v6498, %v9501
        %v9694 = vadd.f32 %v6499, %v9502
        %v9695 = vadd.f32 %v6500, %v9503
        %v9696 = vadd.f32 %v6501, %v9504
        %v9697 = vadd.f32 %v6502, %v9505
        %v9698 = vadd.f32 %v6503, %v9506
        %v9699 = vadd.f32 %v6504, %v9507
        %v9700 = vadd.f32 %v6505, %v9508
        %v9701 = vadd.f32 %v6506, %v9509
        %v9702 = vadd.f32 %v6507, %v9510
        %v9703 = vadd.f32 %v6508, %v9511
        %v9704 = vadd.f32 %v6509, %v9512
        %v9705 = vadd.f32 %v6510, %v9513
        %v9706 = vadd.f32 %v6511, %v9514
        %v9707 = vadd.f32 %v6512, %v9515
        %v9708 = vadd.f32 %v6513, %v9516
        %v9709 = vadd.f32 %v6514, %v9517
        %v9710 = vadd.f32 %v6515, %v9518
        %v9711 = vadd.f32 %v6516, %v9519
        %v9712 = vadd.f32 %v6517, %v9520
        %v9713 = vadd.f32 %v6518, %v9521
        %v9714 = vadd.f32 %v6519, %v9522
        %v9715 = vadd.f32 %v6520, %v9523
        %v9716 = vadd.f32 %v6521, %v9524
        %v9717 = vadd.f32 %v6522, %v9525
        %v9718 = vadd.f32 %v6523, %v9526
        %v9719 = vadd.f32 %v6524, %v9527
        %v9720 = vadd.f32 %v6525, %v9528
        %v9721 = vadd.f32 %v6526, %v9529
        %v9722 = vadd.f32 %v6527, %v9530
        %v9723 = vadd.f32 %v6528, %v9531
        %v9724 = vadd.f32 %v6529, %v9532
        %9725 = vset.pattern.permute.xlu0 18
        %9726 = vperm.xlu0 %9725, %v309
        %v9727 = vpop.permute.xlu0 %9726
        %9729 = vset.pattern.permute.xlu0 18
        %9730 = vperm.xlu0 %9729, %v310
        %v9731 = vpop.permute.xlu0 %9730
        %9733 = vset.pattern.permute.xlu0 18
        %9734 = vperm.xlu0 %9733, %v311
        %v9735 = vpop.permute.xlu0 %9734
        %9737 = vset.pattern.permute.xlu0 18
        %9738 = vperm.xlu0 %9737, %v312
        %v9739 = vpop.permute.xlu0 %9738
        %9741 = vset.pattern.permute.xlu0 18
        %9742 = vperm.xlu0 %9741, %v313
        %v9743 = vpop.permute.xlu0 %9742
        %9745 = vset.pattern.permute.xlu0 18
        %9746 = vperm.xlu0 %9745, %v314
        %v9747 = vpop.permute.xlu0 %9746
        %9749 = vset.pattern.permute.xlu0 18
        %9750 = vperm.xlu0 %9749, %v315
        %v9751 = vpop.permute.xlu0 %9750
        %9753 = vset.pattern.permute.xlu0 18
        %9754 = vperm.xlu0 %9753, %v316
        %v9755 = vpop.permute.xlu0 %9754
        %9757 = vset.pattern.permute.xlu0 18
        %9758 = vperm.xlu0 %9757, %v317
        %v9759 = vpop.permute.xlu0 %9758
        %9761 = vset.pattern.permute.xlu0 18
        %9762 = vperm.xlu0 %9761, %v318
        %v9763 = vpop.permute.xlu0 %9762
        %9765 = vset.pattern.permute.xlu0 18
        %9766 = vperm.xlu0 %9765, %v319
        %v9767 = vpop.permute.xlu0 %9766
        %9769 = vset.pattern.permute.xlu0 18
        %9770 = vperm.xlu0 %9769, %v320
        %v9771 = vpop.permute.xlu0 %9770
        %9773 = vset.pattern.permute.xlu0 18
        %9774 = vperm.xlu0 %9773, %v321
        %v9775 = vpop.permute.xlu0 %9774
        %9777 = vset.pattern.permute.xlu0 18
        %9778 = vperm.xlu0 %9777, %v322
        %v9779 = vpop.permute.xlu0 %9778
        %9781 = vset.pattern.permute.xlu0 18
        %9782 = vperm.xlu0 %9781, %v323
        %v9783 = vpop.permute.xlu0 %9782
        %9785 = vset.pattern.permute.xlu0 18
        %9786 = vperm.xlu0 %9785, %v324
        %v9787 = vpop.permute.xlu0 %9786
        %9789 = vset.pattern.permute.xlu0 18
        %9790 = vperm.xlu0 %9789, %v325
        %v9791 = vpop.permute.xlu0 %9790
        %9793 = vset.pattern.permute.xlu0 18
        %9794 = vperm.xlu0 %9793, %v326
        %v9795 = vpop.permute.xlu0 %9794
        %9797 = vset.pattern.permute.xlu0 18
        %9798 = vperm.xlu0 %9797, %v327
        %v9799 = vpop.permute.xlu0 %9798
        %9801 = vset.pattern.permute.xlu0 18
        %9802 = vperm.xlu0 %9801, %v328
        %v9803 = vpop.permute.xlu0 %9802
        %9805 = vset.pattern.permute.xlu0 18
        %9806 = vperm.xlu0 %9805, %v329
        %v9807 = vpop.permute.xlu0 %9806
        %9809 = vset.pattern.permute.xlu0 18
        %9810 = vperm.xlu0 %9809, %v330
        %v9811 = vpop.permute.xlu0 %9810
        %9813 = vset.pattern.permute.xlu0 18
        %9814 = vperm.xlu0 %9813, %v331
        %v9815 = vpop.permute.xlu0 %9814
        %9817 = vset.pattern.permute.xlu0 18
        %9818 = vperm.xlu0 %9817, %v332
        %v9819 = vpop.permute.xlu0 %9818
        %9821 = vset.pattern.permute.xlu0 18
        %9822 = vperm.xlu0 %9821, %v333
        %v9823 = vpop.permute.xlu0 %9822
        %9825 = vset.pattern.permute.xlu0 18
        %9826 = vperm.xlu0 %9825, %v334
        %v9827 = vpop.permute.xlu0 %9826
        %9829 = vset.pattern.permute.xlu0 18
        %9830 = vperm.xlu0 %9829, %v335
        %v9831 = vpop.permute.xlu0 %9830
        %9833 = vset.pattern.permute.xlu0 18
        %9834 = vperm.xlu0 %9833, %v336
        %v9835 = vpop.permute.xlu0 %9834
        %9837 = vset.pattern.permute.xlu0 18
        %9838 = vperm.xlu0 %9837, %v337
        %v9839 = vpop.permute.xlu0 %9838
        %9841 = vset.pattern.permute.xlu0 18
        %9842 = vperm.xlu0 %9841, %v338
        %v9843 = vpop.permute.xlu0 %9842
        %9845 = vset.pattern.permute.xlu0 18
        %9846 = vperm.xlu0 %9845, %v339
        %v9847 = vpop.permute.xlu0 %9846
        %9849 = vset.pattern.permute.xlu0 18
        %9850 = vperm.xlu0 %9849, %v340
        %v9851 = vpop.permute.xlu0 %9850
        %9853 = vset.pattern.permute.xlu0 18
        %9854 = vperm.xlu0 %9853, %v341
        %v9855 = vpop.permute.xlu0 %9854
        %9857 = vset.pattern.permute.xlu0 18
        %9858 = vperm.xlu0 %9857, %v342
        %v9859 = vpop.permute.xlu0 %9858
        %9861 = vset.pattern.permute.xlu0 18
        %9862 = vperm.xlu0 %9861, %v343
        %v9863 = vpop.permute.xlu0 %9862
        %9865 = vset.pattern.permute.xlu0 18
        %9866 = vperm.xlu0 %9865, %v344
        %v9867 = vpop.permute.xlu0 %9866
        %9869 = vset.pattern.permute.xlu0 18
        %9870 = vperm.xlu0 %9869, %v345
        %v9871 = vpop.permute.xlu0 %9870
        %9873 = vset.pattern.permute.xlu0 18
        %9874 = vperm.xlu0 %9873, %v346
        %v9875 = vpop.permute.xlu0 %9874
        %9877 = vset.pattern.permute.xlu0 18
        %9878 = vperm.xlu0 %9877, %v347
        %v9879 = vpop.permute.xlu0 %9878
        %9881 = vset.pattern.permute.xlu0 18
        %9882 = vperm.xlu0 %9881, %v348
        %v9883 = vpop.permute.xlu0 %9882
        %9885 = vset.pattern.permute.xlu0 18
        %9886 = vperm.xlu0 %9885, %v349
        %v9887 = vpop.permute.xlu0 %9886
        %9889 = vset.pattern.permute.xlu0 18
        %9890 = vperm.xlu0 %9889, %v350
        %v9891 = vpop.permute.xlu0 %9890
        %9893 = vset.pattern.permute.xlu0 18
        %9894 = vperm.xlu0 %9893, %v351
        %v9895 = vpop.permute.xlu0 %9894
        %9897 = vset.pattern.permute.xlu0 18
        %9898 = vperm.xlu0 %9897, %v352
        %v9899 = vpop.permute.xlu0 %9898
        %9901 = vset.pattern.permute.xlu0 18
        %9902 = vperm.xlu0 %9901, %v353
        %v9903 = vpop.permute.xlu0 %9902
        %9905 = vset.pattern.permute.xlu0 18
        %9906 = vperm.xlu0 %9905, %v354
        %v9907 = vpop.permute.xlu0 %9906
        %9909 = vset.pattern.permute.xlu0 18
        %9910 = vperm.xlu0 %9909, %v355
        %v9911 = vpop.permute.xlu0 %9910
        %9913 = vset.pattern.permute.xlu0 18
        %9914 = vperm.xlu0 %9913, %v356
        %v9915 = vpop.permute.xlu0 %9914
        %9917 = vset.pattern.permute.xlu0 18
        %9918 = vperm.xlu0 %9917, %v357
        %v9919 = vpop.permute.xlu0 %9918
        %9921 = vset.pattern.permute.xlu0 18
        %9922 = vperm.xlu0 %9921, %v358
        %v9923 = vpop.permute.xlu0 %9922
        %9925 = vset.pattern.permute.xlu0 18
        %9926 = vperm.xlu0 %9925, %v359
        %v9927 = vpop.permute.xlu0 %9926
        %9929 = vset.pattern.permute.xlu0 18
        %9930 = vperm.xlu0 %9929, %v360
        %v9931 = vpop.permute.xlu0 %9930
        %9933 = vset.pattern.permute.xlu0 18
        %9934 = vperm.xlu0 %9933, %v361
        %v9935 = vpop.permute.xlu0 %9934
        %9937 = vset.pattern.permute.xlu0 18
        %9938 = vperm.xlu0 %9937, %v362
        %v9939 = vpop.permute.xlu0 %9938
        %9941 = vset.pattern.permute.xlu0 18
        %9942 = vperm.xlu0 %9941, %v363
        %v9943 = vpop.permute.xlu0 %9942
        %9945 = vset.pattern.permute.xlu0 18
        %9946 = vperm.xlu0 %9945, %v364
        %v9947 = vpop.permute.xlu0 %9946
        %9949 = vset.pattern.permute.xlu0 18
        %9950 = vperm.xlu0 %9949, %v365
        %v9951 = vpop.permute.xlu0 %9950
        %9953 = vset.pattern.permute.xlu0 18
        %9954 = vperm.xlu0 %9953, %v366
        %v9955 = vpop.permute.xlu0 %9954
        %9957 = vset.pattern.permute.xlu0 18
        %9958 = vperm.xlu0 %9957, %v367
        %v9959 = vpop.permute.xlu0 %9958
        %9961 = vset.pattern.permute.xlu0 18
        %9962 = vperm.xlu0 %9961, %v368
        %v9963 = vpop.permute.xlu0 %9962
        %9965 = vset.pattern.permute.xlu0 18
        %9966 = vperm.xlu0 %9965, %v369
        %v9967 = vpop.permute.xlu0 %9966
        %9969 = vset.pattern.permute.xlu0 18
        %9970 = vperm.xlu0 %9969, %v370
        %v9971 = vpop.permute.xlu0 %9970
        %9973 = vset.pattern.permute.xlu0 18
        %9974 = vperm.xlu0 %9973, %v371
        %v9975 = vpop.permute.xlu0 %9974
        %9977 = vset.pattern.permute.xlu0 18
        %9978 = vperm.xlu0 %9977, %v372
        %v9979 = vpop.permute.xlu0 %9978
        %v9981 = vmul.f32 %v9533, %v9727
        %v9982 = vmul.f32 %v9534, %v9731
        %v9983 = vmul.f32 %v9535, %v9735
        %v9984 = vmul.f32 %v9536, %v9739
        %v9985 = vmul.f32 %v9537, %v9743
        %v9986 = vmul.f32 %v9538, %v9747
        %v9987 = vmul.f32 %v9539, %v9751
        %v9988 = vmul.f32 %v9540, %v9755
        %v9989 = vmul.f32 %v9541, %v9759
        %v9990 = vmul.f32 %v9542, %v9763
        %v9991 = vmul.f32 %v9543, %v9767
        %v9992 = vmul.f32 %v9544, %v9771
        %v9993 = vmul.f32 %v9545, %v9775
        %v9994 = vmul.f32 %v9546, %v9779
        %v9995 = vmul.f32 %v9547, %v9783
        %v9996 = vmul.f32 %v9548, %v9787
        %v9997 = vmul.f32 %v9549, %v9791
        %v9998 = vmul.f32 %v9550, %v9795
        %v9999 = vmul.f32 %v9551, %v9799
        %v10000 = vmul.f32 %v9552, %v9803
        %v10001 = vmul.f32 %v9553, %v9807
        %v10002 = vmul.f32 %v9554, %v9811
        %v10003 = vmul.f32 %v9555, %v9815
        %v10004 = vmul.f32 %v9556, %v9819
        %v10005 = vmul.f32 %v9557, %v9823
        %v10006 = vmul.f32 %v9558, %v9827
        %v10007 = vmul.f32 %v9559, %v9831
        %v10008 = vmul.f32 %v9560, %v9835
        %v10009 = vmul.f32 %v9561, %v9839
        %v10010 = vmul.f32 %v9562, %v9843
        %v10011 = vmul.f32 %v9563, %v9847
        %v10012 = vmul.f32 %v9564, %v9851
        %v10013 = vmul.f32 %v9565, %v9855
        %v10014 = vmul.f32 %v9566, %v9859
        %v10015 = vmul.f32 %v9567, %v9863
        %v10016 = vmul.f32 %v9568, %v9867
        %v10017 = vmul.f32 %v9569, %v9871
        %v10018 = vmul.f32 %v9570, %v9875
        %v10019 = vmul.f32 %v9571, %v9879
        %v10020 = vmul.f32 %v9572, %v9883
        %v10021 = vmul.f32 %v9573, %v9887
        %v10022 = vmul.f32 %v9574, %v9891
        %v10023 = vmul.f32 %v9575, %v9895
        %v10024 = vmul.f32 %v9576, %v9899
        %v10025 = vmul.f32 %v9577, %v9903
        %v10026 = vmul.f32 %v9578, %v9907
        %v10027 = vmul.f32 %v9579, %v9911
        %v10028 = vmul.f32 %v9580, %v9915
        %v10029 = vmul.f32 %v9581, %v9919
        %v10030 = vmul.f32 %v9582, %v9923
        %v10031 = vmul.f32 %v9583, %v9927
        %v10032 = vmul.f32 %v9584, %v9931
        %v10033 = vmul.f32 %v9585, %v9935
        %v10034 = vmul.f32 %v9586, %v9939
        %v10035 = vmul.f32 %v9587, %v9943
        %v10036 = vmul.f32 %v9588, %v9947
        %v10037 = vmul.f32 %v9589, %v9951
        %v10038 = vmul.f32 %v9590, %v9955
        %v10039 = vmul.f32 %v9591, %v9959
        %v10040 = vmul.f32 %v9592, %v9963
        %v10041 = vmul.f32 %v9593, %v9967
        %v10042 = vmul.f32 %v9594, %v9971
        %v10043 = vmul.f32 %v9595, %v9975
        %v10044 = vmul.f32 %v9596, %v9979
        %v10045 = vadd.f32 %v9597, %v9981
        %v10046 = vadd.f32 %v9598, %v9982
        %v10047 = vadd.f32 %v9599, %v9983
        %v10048 = vadd.f32 %v9600, %v9984
        %v10049 = vadd.f32 %v9601, %v9985
        %v10050 = vadd.f32 %v9602, %v9986
        %v10051 = vadd.f32 %v9603, %v9987
        %v10052 = vadd.f32 %v9604, %v9988
        %v10053 = vadd.f32 %v9605, %v9989
        %v10054 = vadd.f32 %v9606, %v9990
        %v10055 = vadd.f32 %v9607, %v9991
        %v10056 = vadd.f32 %v9608, %v9992
        %v10057 = vadd.f32 %v9609, %v9993
        %v10058 = vadd.f32 %v9610, %v9994
        %v10059 = vadd.f32 %v9611, %v9995
        %v10060 = vadd.f32 %v9612, %v9996
        %v10061 = vadd.f32 %v9613, %v9997
        %v10062 = vadd.f32 %v9614, %v9998
        %v10063 = vadd.f32 %v9615, %v9999
        %v10064 = vadd.f32 %v9616, %v10000
        %v10065 = vadd.f32 %v9617, %v10001
        %v10066 = vadd.f32 %v9618, %v10002
        %v10067 = vadd.f32 %v9619, %v10003
        %v10068 = vadd.f32 %v9620, %v10004
        %v10069 = vadd.f32 %v9621, %v10005
        %v10070 = vadd.f32 %v9622, %v10006
        %v10071 = vadd.f32 %v9623, %v10007
        %v10072 = vadd.f32 %v9624, %v10008
        %v10073 = vadd.f32 %v9625, %v10009
        %v10074 = vadd.f32 %v9626, %v10010
        %v10075 = vadd.f32 %v9627, %v10011
        %v10076 = vadd.f32 %v9628, %v10012
        %v10077 = vadd.f32 %v9629, %v10013
        %v10078 = vadd.f32 %v9630, %v10014
        %v10079 = vadd.f32 %v9631, %v10015
        %v10080 = vadd.f32 %v9632, %v10016
        %v10081 = vadd.f32 %v9633, %v10017
        %v10082 = vadd.f32 %v9634, %v10018
        %v10083 = vadd.f32 %v9635, %v10019
        %v10084 = vadd.f32 %v9636, %v10020
        %v10085 = vadd.f32 %v9637, %v10021
        %v10086 = vadd.f32 %v9638, %v10022
        %v10087 = vadd.f32 %v9639, %v10023
        %v10088 = vadd.f32 %v9640, %v10024
        %v10089 = vadd.f32 %v9641, %v10025
        %v10090 = vadd.f32 %v9642, %v10026
        %v10091 = vadd.f32 %v9643, %v10027
        %v10092 = vadd.f32 %v9644, %v10028
        %v10093 = vadd.f32 %v9645, %v10029
        %v10094 = vadd.f32 %v9646, %v10030
        %v10095 = vadd.f32 %v9647, %v10031
        %v10096 = vadd.f32 %v9648, %v10032
        %v10097 = vadd.f32 %v9649, %v10033
        %v10098 = vadd.f32 %v9650, %v10034
        %v10099 = vadd.f32 %v9651, %v10035
        %v10100 = vadd.f32 %v9652, %v10036
        %v10101 = vadd.f32 %v9653, %v10037
        %v10102 = vadd.f32 %v9654, %v10038
        %v10103 = vadd.f32 %v9655, %v10039
        %v10104 = vadd.f32 %v9656, %v10040
        %v10105 = vadd.f32 %v9657, %v10041
        %v10106 = vadd.f32 %v9658, %v10042
        %v10107 = vadd.f32 %v9659, %v10043
        %v10108 = vadd.f32 %v9660, %v10044
        %v10109 = vmul.f32 %v10045, 0.33333334
        %v10110 = vmul.f32 %v10046, 0.33333334
        %v10111 = vmul.f32 %v10047, 0.33333334
        %v10112 = vmul.f32 %v10048, 0.33333334
        %v10113 = vmul.f32 %v10049, 0.33333334
        %v10114 = vmul.f32 %v10050, 0.33333334
        %v10115 = vmul.f32 %v10051, 0.33333334
        %v10116 = vmul.f32 %v10052, 0.33333334
        %v10117 = vmul.f32 %v10053, 0.33333334
        %v10118 = vmul.f32 %v10054, 0.33333334
        %v10119 = vmul.f32 %v10055, 0.33333334
        %v10120 = vmul.f32 %v10056, 0.33333334
        %v10121 = vmul.f32 %v10057, 0.33333334
        %v10122 = vmul.f32 %v10058, 0.33333334
        %v10123 = vmul.f32 %v10059, 0.33333334
        %v10124 = vmul.f32 %v10060, 0.33333334
        %v10125 = vmul.f32 %v10061, 0.33333334
        %v10126 = vmul.f32 %v10062, 0.33333334
        %v10127 = vmul.f32 %v10063, 0.33333334
        %v10128 = vmul.f32 %v10064, 0.33333334
        %v10129 = vmul.f32 %v10065, 0.33333334
        %v10130 = vmul.f32 %v10066, 0.33333334
        %v10131 = vmul.f32 %v10067, 0.33333334
        %v10132 = vmul.f32 %v10068, 0.33333334
        %v10133 = vmul.f32 %v10069, 0.33333334
        %v10134 = vmul.f32 %v10070, 0.33333334
        %v10135 = vmul.f32 %v10071, 0.33333334
        %v10136 = vmul.f32 %v10072, 0.33333334
        %v10137 = vmul.f32 %v10073, 0.33333334
        %v10138 = vmul.f32 %v10074, 0.33333334
        %v10139 = vmul.f32 %v10075, 0.33333334
        %v10140 = vmul.f32 %v10076, 0.33333334
        %v10141 = vmul.f32 %v10077, 0.33333334
        %v10142 = vmul.f32 %v10078, 0.33333334
        %v10143 = vmul.f32 %v10079, 0.33333334
        %v10144 = vmul.f32 %v10080, 0.33333334
        %v10145 = vmul.f32 %v10081, 0.33333334
        %v10146 = vmul.f32 %v10082, 0.33333334
        %v10147 = vmul.f32 %v10083, 0.33333334
        %v10148 = vmul.f32 %v10084, 0.33333334
        %v10149 = vmul.f32 %v10085, 0.33333334
        %v10150 = vmul.f32 %v10086, 0.33333334
        %v10151 = vmul.f32 %v10087, 0.33333334
        %v10152 = vmul.f32 %v10088, 0.33333334
        %v10153 = vmul.f32 %v10089, 0.33333334
        %v10154 = vmul.f32 %v10090, 0.33333334
        %v10155 = vmul.f32 %v10091, 0.33333334
        %v10156 = vmul.f32 %v10092, 0.33333334
        %v10157 = vmul.f32 %v10093, 0.33333334
        %v10158 = vmul.f32 %v10094, 0.33333334
        %v10159 = vmul.f32 %v10095, 0.33333334
        %v10160 = vmul.f32 %v10096, 0.33333334
        %v10161 = vmul.f32 %v10097, 0.33333334
        %v10162 = vmul.f32 %v10098, 0.33333334
        %v10163 = vmul.f32 %v10099, 0.33333334
        %v10164 = vmul.f32 %v10100, 0.33333334
        %v10165 = vmul.f32 %v10101, 0.33333334
        %v10166 = vmul.f32 %v10102, 0.33333334
        %v10167 = vmul.f32 %v10103, 0.33333334
        %v10168 = vmul.f32 %v10104, 0.33333334
        %v10169 = vmul.f32 %v10105, 0.33333334
        %v10170 = vmul.f32 %v10106, 0.33333334
        %v10171 = vmul.f32 %v10107, 0.33333334
        %v10172 = vmul.f32 %v10108, 0.33333334
        %v10173 = vmul.f32 %v10109, 1.442695
        %v10174 = vpow.pop %v10173
        %v10175 = vmul.f32 %v10110, 1.442695
        %v10176 = vpow.pop %v10175
        %v10177 = vmul.f32 %v10111, 1.442695
        %v10178 = vpow.pop %v10177
        %v10179 = vmul.f32 %v10112, 1.442695
        %v10180 = vpow.pop %v10179
        %v10181 = vmul.f32 %v10113, 1.442695
        %v10182 = vpow.pop %v10181
        %v10183 = vmul.f32 %v10114, 1.442695
        %v10184 = vpow.pop %v10183
        %v10185 = vmul.f32 %v10115, 1.442695
        %v10186 = vpow.pop %v10185
        %v10187 = vmul.f32 %v10116, 1.442695
        %v10188 = vpow.pop %v10187
        %v10189 = vmul.f32 %v10117, 1.442695
        %v10190 = vpow.pop %v10189
        %v10191 = vmul.f32 %v10118, 1.442695
        %v10192 = vpow.pop %v10191
        %v10193 = vmul.f32 %v10119, 1.442695
        %v10194 = vpow.pop %v10193
        %v10195 = vmul.f32 %v10120, 1.442695
        %v10196 = vpow.pop %v10195
        %v10197 = vmul.f32 %v10121, 1.442695
        %v10198 = vpow.pop %v10197
        %v10199 = vmul.f32 %v10122, 1.442695
        %v10200 = vpow.pop %v10199
        %v10201 = vmul.f32 %v10123, 1.442695
        %v10202 = vpow.pop %v10201
        %v10203 = vmul.f32 %v10124, 1.442695
        %v10204 = vpow.pop %v10203
        %v10205 = vmul.f32 %v10125, 1.442695
        %v10206 = vpow.pop %v10205
        %v10207 = vmul.f32 %v10126, 1.442695
        %v10208 = vpow.pop %v10207
        %v10209 = vmul.f32 %v10127, 1.442695
        %v10210 = vpow.pop %v10209
        %v10211 = vmul.f32 %v10128, 1.442695
        %v10212 = vpow.pop %v10211
        %v10213 = vmul.f32 %v10129, 1.442695
        %v10214 = vpow.pop %v10213
        %v10215 = vmul.f32 %v10130, 1.442695
        %v10216 = vpow.pop %v10215
        %v10217 = vmul.f32 %v10131, 1.442695
        %v10218 = vpow.pop %v10217
        %v10219 = vmul.f32 %v10132, 1.442695
        %v10220 = vpow.pop %v10219
        %v10221 = vmul.f32 %v10133, 1.442695
        %v10222 = vpow.pop %v10221
        %v10223 = vmul.f32 %v10134, 1.442695
        %v10224 = vpow.pop %v10223
        %v10225 = vmul.f32 %v10135, 1.442695
        %v10226 = vpow.pop %v10225
        %v10227 = vmul.f32 %v10136, 1.442695
        %v10228 = vpow.pop %v10227
        %v10229 = vmul.f32 %v10137, 1.442695
        %v10230 = vpow.pop %v10229
        %v10231 = vmul.f32 %v10138, 1.442695
        %v10232 = vpow.pop %v10231
        %v10233 = vmul.f32 %v10139, 1.442695
        %v10234 = vpow.pop %v10233
        %v10235 = vmul.f32 %v10140, 1.442695
        %v10236 = vpow.pop %v10235
        %v10237 = vmul.f32 %v10141, 1.442695
        %v10238 = vpow.pop %v10237
        %v10239 = vmul.f32 %v10142, 1.442695
        %v10240 = vpow.pop %v10239
        %v10241 = vmul.f32 %v10143, 1.442695
        %v10242 = vpow.pop %v10241
        %v10243 = vmul.f32 %v10144, 1.442695
        %v10244 = vpow.pop %v10243
        %v10245 = vmul.f32 %v10145, 1.442695
        %v10246 = vpow.pop %v10245
        %v10247 = vmul.f32 %v10146, 1.442695
        %v10248 = vpow.pop %v10247
        %v10249 = vmul.f32 %v10147, 1.442695
        %v10250 = vpow.pop %v10249
        %v10251 = vmul.f32 %v10148, 1.442695
        %v10252 = vpow.pop %v10251
        %v10253 = vmul.f32 %v10149, 1.442695
        %v10254 = vpow.pop %v10253
        %v10255 = vmul.f32 %v10150, 1.442695
        %v10256 = vpow.pop %v10255
        %v10257 = vmul.f32 %v10151, 1.442695
        %v10258 = vpow.pop %v10257
        %v10259 = vmul.f32 %v10152, 1.442695
        %v10260 = vpow.pop %v10259
        %v10261 = vmul.f32 %v10153, 1.442695
        %v10262 = vpow.pop %v10261
        %v10263 = vmul.f32 %v10154, 1.442695
        %v10264 = vpow.pop %v10263
        %v10265 = vmul.f32 %v10155, 1.442695
        %v10266 = vpow.pop %v10265
        %v10267 = vmul.f32 %v10156, 1.442695
        %v10268 = vpow.pop %v10267
        %v10269 = vmul.f32 %v10157, 1.442695
        %v10270 = vpow.pop %v10269
        %v10271 = vmul.f32 %v10158, 1.442695
        %v10272 = vpow.pop %v10271
        %v10273 = vmul.f32 %v10159, 1.442695
        %v10274 = vpow.pop %v10273
        %v10275 = vmul.f32 %v10160, 1.442695
        %v10276 = vpow.pop %v10275
        %v10277 = vmul.f32 %v10161, 1.442695
        %v10278 = vpow.pop %v10277
        %v10279 = vmul.f32 %v10162, 1.442695
        %v10280 = vpow.pop %v10279
        %v10281 = vmul.f32 %v10163, 1.442695
        %v10282 = vpow.pop %v10281
        %v10283 = vmul.f32 %v10164, 1.442695
        %v10284 = vpow.pop %v10283
        %v10285 = vmul.f32 %v10165, 1.442695
        %v10286 = vpow.pop %v10285
        %v10287 = vmul.f32 %v10166, 1.442695
        %v10288 = vpow.pop %v10287
        %v10289 = vmul.f32 %v10167, 1.442695
        %v10290 = vpow.pop %v10289
        %v10291 = vmul.f32 %v10168, 1.442695
        %v10292 = vpow.pop %v10291
        %v10293 = vmul.f32 %v10169, 1.442695
        %v10294 = vpow.pop %v10293
        %v10295 = vmul.f32 %v10170, 1.442695
        %v10296 = vpow.pop %v10295
        %v10297 = vmul.f32 %v10171, 1.442695
        %v10298 = vpow.pop %v10297
        %v10299 = vmul.f32 %v10172, 1.442695
        %v10300 = vpow.pop %v10299
        %10301 = vst [vmem:[%s281] sm:$0xff] %v10174
        %10302 = vst [vmem:[%s281 + $0x8] sm:$0xff] %v10176
        %10303 = vst [vmem:[%s281 + $0x10] sm:$0xff] %v10178
        %10304 = vst [vmem:[%s281 + $0x18] sm:$0xff] %v10180
        %10305 = vst [vmem:[%s281 + $0x20] sm:$0xff] %v10182
        %10306 = vst [vmem:[%s281 + $0x28] sm:$0xff] %v10184
        %10307 = vst [vmem:[%s281 + $0x30] sm:$0xff] %v10186
        %10308 = vst [vmem:[%s281 + $0x38] sm:$0xff] %v10188
        %10309 = vst [vmem:[%s281 + $0x40] sm:$0xff] %v10190
        %10310 = vst [vmem:[%s281 + $0x48] sm:$0xff] %v10192
        %10311 = vst [vmem:[%s281 + $0x50] sm:$0xff] %v10194
        %10312 = vst [vmem:[%s281 + $0x58] sm:$0xff] %v10196
        %10313 = vst [vmem:[%s281 + $0x60] sm:$0xff] %v10198
        %10314 = vst [vmem:[%s281 + $0x68] sm:$0xff] %v10200
        %10315 = vst [vmem:[%s281 + $0x70] sm:$0xff] %v10202
        %10316 = vst [vmem:[%s281 + $0x78] sm:$0xff] %v10204
        %10317 = vst [vmem:[%s281 + $0x80] sm:$0xff] %v10206
        %10318 = vst [vmem:[%s281 + $0x88] sm:$0xff] %v10208
        %10319 = vst [vmem:[%s281 + $0x90] sm:$0xff] %v10210
        %10320 = vst [vmem:[%s281 + $0x98] sm:$0xff] %v10212
        %10321 = vst [vmem:[%s281 + $0xa0] sm:$0xff] %v10214
        %10322 = vst [vmem:[%s281 + $0xa8] sm:$0xff] %v10216
        %10323 = vst [vmem:[%s281 + $0xb0] sm:$0xff] %v10218
        %10324 = vst [vmem:[%s281 + $0xb8] sm:$0xff] %v10220
        %10325 = vst [vmem:[%s281 + $0xc0] sm:$0xff] %v10222
        %10326 = vst [vmem:[%s281 + $0xc8] sm:$0xff] %v10224
        %10327 = vst [vmem:[%s281 + $0xd0] sm:$0xff] %v10226
        %10328 = vst [vmem:[%s281 + $0xd8] sm:$0xff] %v10228
        %10329 = vst [vmem:[%s281 + $0xe0] sm:$0xff] %v10230
        %10330 = vst [vmem:[%s281 + $0xe8] sm:$0xff] %v10232
        %10331 = vst [vmem:[%s281 + $0xf0] sm:$0xff] %v10234
        %10332 = vst [vmem:[%s281 + $0xf8] sm:$0xff] %v10236
        %10333 = vst [vmem:[%s281 + $0x100] sm:$0xff] %v10238
        %10334 = vst [vmem:[%s281 + $0x108] sm:$0xff] %v10240
        %10335 = vst [vmem:[%s281 + $0x110] sm:$0xff] %v10242
        %10336 = vst [vmem:[%s281 + $0x118] sm:$0xff] %v10244
        %10337 = vst [vmem:[%s281 + $0x120] sm:$0xff] %v10246
        %10338 = vst [vmem:[%s281 + $0x128] sm:$0xff] %v10248
        %10339 = vst [vmem:[%s281 + $0x130] sm:$0xff] %v10250
        %10340 = vst [vmem:[%s281 + $0x138] sm:$0xff] %v10252
        %10341 = vst [vmem:[%s281 + $0x140] sm:$0xff] %v10254
        %10342 = vst [vmem:[%s281 + $0x148] sm:$0xff] %v10256
        %10343 = vst [vmem:[%s281 + $0x150] sm:$0xff] %v10258
        %10344 = vst [vmem:[%s281 + $0x158] sm:$0xff] %v10260
        %10345 = vst [vmem:[%s281 + $0x160] sm:$0xff] %v10262
        %10346 = vst [vmem:[%s281 + $0x168] sm:$0xff] %v10264
        %10347 = vst [vmem:[%s281 + $0x170] sm:$0xff] %v10266
        %10348 = vst [vmem:[%s281 + $0x178] sm:$0xff] %v10268
        %10349 = vst [vmem:[%s281 + $0x180] sm:$0xff] %v10270
        %10350 = vst [vmem:[%s281 + $0x188] sm:$0xff] %v10272
        %10351 = vst [vmem:[%s281 + $0x190] sm:$0xff] %v10274
        %10352 = vst [vmem:[%s281 + $0x198] sm:$0xff] %v10276
        %10353 = vst [vmem:[%s281 + $0x1a0] sm:$0xff] %v10278
        %10354 = vst [vmem:[%s281 + $0x1a8] sm:$0xff] %v10280
        %10355 = vst [vmem:[%s281 + $0x1b0] sm:$0xff] %v10282
        %10356 = vst [vmem:[%s281 + $0x1b8] sm:$0xff] %v10284
        %10357 = vst [vmem:[%s281 + $0x1c0] sm:$0xff] %v10286
        %10358 = vst [vmem:[%s281 + $0x1c8] sm:$0xff] %v10288
        %10359 = vst [vmem:[%s281 + $0x1d0] sm:$0xff] %v10290
        %10360 = vst [vmem:[%s281 + $0x1d8] sm:$0xff] %v10292
        %10361 = vst [vmem:[%s281 + $0x1e0] sm:$0xff] %v10294
        %10362 = vst [vmem:[%s281 + $0x1e8] sm:$0xff] %v10296
        %10363 = vst [vmem:[%s281 + $0x1f0] sm:$0xff] %v10298
        %10364 = vst [vmem:[%s281 + $0x1f8] sm:$0xff] %v10300
        %v10365 = vmul.f32 %v9661, 0.33333334
        %v10366 = vmul.f32 %v9662, 0.33333334
        %v10367 = vmul.f32 %v9663, 0.33333334
        %v10368 = vmul.f32 %v9664, 0.33333334
        %v10369 = vmul.f32 %v9665, 0.33333334
        %v10370 = vmul.f32 %v9666, 0.33333334
        %v10371 = vmul.f32 %v9667, 0.33333334
        %v10372 = vmul.f32 %v9668, 0.33333334
        %v10373 = vmul.f32 %v9669, 0.33333334
        %v10374 = vmul.f32 %v9670, 0.33333334
        %v10375 = vmul.f32 %v9671, 0.33333334
        %v10376 = vmul.f32 %v9672, 0.33333334
        %v10377 = vmul.f32 %v9673, 0.33333334
        %v10378 = vmul.f32 %v9674, 0.33333334
        %v10379 = vmul.f32 %v9675, 0.33333334
        %v10380 = vmul.f32 %v9676, 0.33333334
        %v10381 = vmul.f32 %v9677, 0.33333334
        %v10382 = vmul.f32 %v9678, 0.33333334
        %v10383 = vmul.f32 %v9679, 0.33333334
        %v10384 = vmul.f32 %v9680, 0.33333334
        %v10385 = vmul.f32 %v9681, 0.33333334
        %v10386 = vmul.f32 %v9682, 0.33333334
        %v10387 = vmul.f32 %v9683, 0.33333334
        %v10388 = vmul.f32 %v9684, 0.33333334
        %v10389 = vmul.f32 %v9685, 0.33333334
        %v10390 = vmul.f32 %v9686, 0.33333334
        %v10391 = vmul.f32 %v9687, 0.33333334
        %v10392 = vmul.f32 %v9688, 0.33333334
        %v10393 = vmul.f32 %v9689, 0.33333334
        %v10394 = vmul.f32 %v9690, 0.33333334
        %v10395 = vmul.f32 %v9691, 0.33333334
        %v10396 = vmul.f32 %v9692, 0.33333334
        %v10397 = vmul.f32 %v9693, 0.33333334
        %v10398 = vmul.f32 %v9694, 0.33333334
        %v10399 = vmul.f32 %v9695, 0.33333334
        %v10400 = vmul.f32 %v9696, 0.33333334
        %v10401 = vmul.f32 %v9697, 0.33333334
        %v10402 = vmul.f32 %v9698, 0.33333334
        %v10403 = vmul.f32 %v9699, 0.33333334
        %v10404 = vmul.f32 %v9700, 0.33333334
        %v10405 = vmul.f32 %v9701, 0.33333334
        %v10406 = vmul.f32 %v9702, 0.33333334
        %v10407 = vmul.f32 %v9703, 0.33333334
        %v10408 = vmul.f32 %v9704, 0.33333334
        %v10409 = vmul.f32 %v9705, 0.33333334
        %v10410 = vmul.f32 %v9706, 0.33333334
        %v10411 = vmul.f32 %v9707, 0.33333334
        %v10412 = vmul.f32 %v9708, 0.33333334
        %v10413 = vmul.f32 %v9709, 0.33333334
        %v10414 = vmul.f32 %v9710, 0.33333334
        %v10415 = vmul.f32 %v9711, 0.33333334
        %v10416 = vmul.f32 %v9712, 0.33333334
        %v10417 = vmul.f32 %v9713, 0.33333334
        %v10418 = vmul.f32 %v9714, 0.33333334
        %v10419 = vmul.f32 %v9715, 0.33333334
        %v10420 = vmul.f32 %v9716, 0.33333334
        %v10421 = vmul.f32 %v9717, 0.33333334
        %v10422 = vmul.f32 %v9718, 0.33333334
        %v10423 = vmul.f32 %v9719, 0.33333334
        %v10424 = vmul.f32 %v9720, 0.33333334
        %v10425 = vmul.f32 %v9721, 0.33333334
        %v10426 = vmul.f32 %v9722, 0.33333334
        %v10427 = vmul.f32 %v9723, 0.33333334
        %v10428 = vmul.f32 %v9724, 0.33333334
        %v10429 = vmul.f32 %v10365, 1.442695
        %v10430 = vpow.pop %v10429
        %v10431 = vmul.f32 %v10366, 1.442695
        %v10432 = vpow.pop %v10431
        %v10433 = vmul.f32 %v10367, 1.442695
        %v10434 = vpow.pop %v10433
        %v10435 = vmul.f32 %v10368, 1.442695
        %v10436 = vpow.pop %v10435
        %v10437 = vmul.f32 %v10369, 1.442695
        %v10438 = vpow.pop %v10437
        %v10439 = vmul.f32 %v10370, 1.442695
        %v10440 = vpow.pop %v10439
        %v10441 = vmul.f32 %v10371, 1.442695
        %v10442 = vpow.pop %v10441
        %v10443 = vmul.f32 %v10372, 1.442695
        %v10444 = vpow.pop %v10443
        %v10445 = vmul.f32 %v10373, 1.442695
        %v10446 = vpow.pop %v10445
        %v10447 = vmul.f32 %v10374, 1.442695
        %v10448 = vpow.pop %v10447
        %v10449 = vmul.f32 %v10375, 1.442695
        %v10450 = vpow.pop %v10449
        %v10451 = vmul.f32 %v10376, 1.442695
        %v10452 = vpow.pop %v10451
        %v10453 = vmul.f32 %v10377, 1.442695
        %v10454 = vpow.pop %v10453
        %v10455 = vmul.f32 %v10378, 1.442695
        %v10456 = vpow.pop %v10455
        %v10457 = vmul.f32 %v10379, 1.442695
        %v10458 = vpow.pop %v10457
        %v10459 = vmul.f32 %v10380, 1.442695
        %v10460 = vpow.pop %v10459
        %v10461 = vmul.f32 %v10381, 1.442695
        %v10462 = vpow.pop %v10461
        %v10463 = vmul.f32 %v10382, 1.442695
        %v10464 = vpow.pop %v10463
        %v10465 = vmul.f32 %v10383, 1.442695
        %v10466 = vpow.pop %v10465
        %v10467 = vmul.f32 %v10384, 1.442695
        %v10468 = vpow.pop %v10467
        %v10469 = vmul.f32 %v10385, 1.442695
        %v10470 = vpow.pop %v10469
        %v10471 = vmul.f32 %v10386, 1.442695
        %v10472 = vpow.pop %v10471
        %v10473 = vmul.f32 %v10387, 1.442695
        %v10474 = vpow.pop %v10473
        %v10475 = vmul.f32 %v10388, 1.442695
        %v10476 = vpow.pop %v10475
        %v10477 = vmul.f32 %v10389, 1.442695
        %v10478 = vpow.pop %v10477
        %v10479 = vmul.f32 %v10390, 1.442695
        %v10480 = vpow.pop %v10479
        %v10481 = vmul.f32 %v10391, 1.442695
        %v10482 = vpow.pop %v10481
        %v10483 = vmul.f32 %v10392, 1.442695
        %v10484 = vpow.pop %v10483
        %v10485 = vmul.f32 %v10393, 1.442695
        %v10486 = vpow.pop %v10485
        %v10487 = vmul.f32 %v10394, 1.442695
        %v10488 = vpow.pop %v10487
        %v10489 = vmul.f32 %v10395, 1.442695
        %v10490 = vpow.pop %v10489
        %v10491 = vmul.f32 %v10396, 1.442695
        %v10492 = vpow.pop %v10491
        %v10493 = vmul.f32 %v10397, 1.442695
        %v10494 = vpow.pop %v10493
        %v10495 = vmul.f32 %v10398, 1.442695
        %v10496 = vpow.pop %v10495
        %v10497 = vmul.f32 %v10399, 1.442695
        %v10498 = vpow.pop %v10497
        %v10499 = vmul.f32 %v10400, 1.442695
        %v10500 = vpow.pop %v10499
        %v10501 = vmul.f32 %v10401, 1.442695
        %v10502 = vpow.pop %v10501
        %v10503 = vmul.f32 %v10402, 1.442695
        %v10504 = vpow.pop %v10503
        %v10505 = vmul.f32 %v10403, 1.442695
        %v10506 = vpow.pop %v10505
        %v10507 = vmul.f32 %v10404, 1.442695
        %v10508 = vpow.pop %v10507
        %v10509 = vmul.f32 %v10405, 1.442695
        %v10510 = vpow.pop %v10509
        %v10511 = vmul.f32 %v10406, 1.442695
        %v10512 = vpow.pop %v10511
        %v10513 = vmul.f32 %v10407, 1.442695
        %v10514 = vpow.pop %v10513
        %v10515 = vmul.f32 %v10408, 1.442695
        %v10516 = vpow.pop %v10515
        %v10517 = vmul.f32 %v10409, 1.442695
        %v10518 = vpow.pop %v10517
        %v10519 = vmul.f32 %v10410, 1.442695
        %v10520 = vpow.pop %v10519
        %v10521 = vmul.f32 %v10411, 1.442695
        %v10522 = vpow.pop %v10521
        %v10523 = vmul.f32 %v10412, 1.442695
        %v10524 = vpow.pop %v10523
        %v10525 = vmul.f32 %v10413, 1.442695
        %v10526 = vpow.pop %v10525
        %v10527 = vmul.f32 %v10414, 1.442695
        %v10528 = vpow.pop %v10527
        %v10529 = vmul.f32 %v10415, 1.442695
        %v10530 = vpow.pop %v10529
        %v10531 = vmul.f32 %v10416, 1.442695
        %v10532 = vpow.pop %v10531
        %v10533 = vmul.f32 %v10417, 1.442695
        %v10534 = vpow.pop %v10533
        %v10535 = vmul.f32 %v10418, 1.442695
        %v10536 = vpow.pop %v10535
        %v10537 = vmul.f32 %v10419, 1.442695
        %v10538 = vpow.pop %v10537
        %v10539 = vmul.f32 %v10420, 1.442695
        %v10540 = vpow.pop %v10539
        %v10541 = vmul.f32 %v10421, 1.442695
        %v10542 = vpow.pop %v10541
        %v10543 = vmul.f32 %v10422, 1.442695
        %v10544 = vpow.pop %v10543
        %v10545 = vmul.f32 %v10423, 1.442695
        %v10546 = vpow.pop %v10545
        %v10547 = vmul.f32 %v10424, 1.442695
        %v10548 = vpow.pop %v10547
        %v10549 = vmul.f32 %v10425, 1.442695
        %v10550 = vpow.pop %v10549
        %v10551 = vmul.f32 %v10426, 1.442695
        %v10552 = vpow.pop %v10551
        %v10553 = vmul.f32 %v10427, 1.442695
        %v10554 = vpow.pop %v10553
        %v10555 = vmul.f32 %v10428, 1.442695
        %v10556 = vpow.pop %v10555
        %10557 = vst [vmem:[%s288] sm:$0xff] %v10430
        %10558 = vst [vmem:[%s288 + $0x8] sm:$0xff] %v10432
        %10559 = vst [vmem:[%s288 + $0x10] sm:$0xff] %v10434
        %10560 = vst [vmem:[%s288 + $0x18] sm:$0xff] %v10436
        %10561 = vst [vmem:[%s288 + $0x20] sm:$0xff] %v10438
        %10562 = vst [vmem:[%s288 + $0x28] sm:$0xff] %v10440
        %10563 = vst [vmem:[%s288 + $0x30] sm:$0xff] %v10442
        %10564 = vst [vmem:[%s288 + $0x38] sm:$0xff] %v10444
        %10565 = vst [vmem:[%s288 + $0x40] sm:$0xff] %v10446
        %10566 = vst [vmem:[%s288 + $0x48] sm:$0xff] %v10448
        %10567 = vst [vmem:[%s288 + $0x50] sm:$0xff] %v10450
        %10568 = vst [vmem:[%s288 + $0x58] sm:$0xff] %v10452
        %10569 = vst [vmem:[%s288 + $0x60] sm:$0xff] %v10454
        %10570 = vst [vmem:[%s288 + $0x68] sm:$0xff] %v10456
        %10571 = vst [vmem:[%s288 + $0x70] sm:$0xff] %v10458
        %10572 = vst [vmem:[%s288 + $0x78] sm:$0xff] %v10460
        %10573 = vst [vmem:[%s288 + $0x80] sm:$0xff] %v10462
        %10574 = vst [vmem:[%s288 + $0x88] sm:$0xff] %v10464
        %10575 = vst [vmem:[%s288 + $0x90] sm:$0xff] %v10466
        %10576 = vst [vmem:[%s288 + $0x98] sm:$0xff] %v10468
        %10577 = vst [vmem:[%s288 + $0xa0] sm:$0xff] %v10470
        %10578 = vst [vmem:[%s288 + $0xa8] sm:$0xff] %v10472
        %10579 = vst [vmem:[%s288 + $0xb0] sm:$0xff] %v10474
        %10580 = vst [vmem:[%s288 + $0xb8] sm:$0xff] %v10476
        %10581 = vst [vmem:[%s288 + $0xc0] sm:$0xff] %v10478
        %10582 = vst [vmem:[%s288 + $0xc8] sm:$0xff] %v10480
        %10583 = vst [vmem:[%s288 + $0xd0] sm:$0xff] %v10482
        %10584 = vst [vmem:[%s288 + $0xd8] sm:$0xff] %v10484
        %10585 = vst [vmem:[%s288 + $0xe0] sm:$0xff] %v10486
        %10586 = vst [vmem:[%s288 + $0xe8] sm:$0xff] %v10488
        %10587 = vst [vmem:[%s288 + $0xf0] sm:$0xff] %v10490
        %10588 = vst [vmem:[%s288 + $0xf8] sm:$0xff] %v10492
        %10589 = vst [vmem:[%s288 + $0x100] sm:$0xff] %v10494
        %10590 = vst [vmem:[%s288 + $0x108] sm:$0xff] %v10496
        %10591 = vst [vmem:[%s288 + $0x110] sm:$0xff] %v10498
        %10592 = vst [vmem:[%s288 + $0x118] sm:$0xff] %v10500
        %10593 = vst [vmem:[%s288 + $0x120] sm:$0xff] %v10502
        %10594 = vst [vmem:[%s288 + $0x128] sm:$0xff] %v10504
        %10595 = vst [vmem:[%s288 + $0x130] sm:$0xff] %v10506
        %10596 = vst [vmem:[%s288 + $0x138] sm:$0xff] %v10508
        %10597 = vst [vmem:[%s288 + $0x140] sm:$0xff] %v10510
        %10598 = vst [vmem:[%s288 + $0x148] sm:$0xff] %v10512
        %10599 = vst [vmem:[%s288 + $0x150] sm:$0xff] %v10514
        %10600 = vst [vmem:[%s288 + $0x158] sm:$0xff] %v10516
        %10601 = vst [vmem:[%s288 + $0x160] sm:$0xff] %v10518
        %10602 = vst [vmem:[%s288 + $0x168] sm:$0xff] %v10520
        %10603 = vst [vmem:[%s288 + $0x170] sm:$0xff] %v10522
        %10604 = vst [vmem:[%s288 + $0x178] sm:$0xff] %v10524
        %10605 = vst [vmem:[%s288 + $0x180] sm:$0xff] %v10526
        %10606 = vst [vmem:[%s288 + $0x188] sm:$0xff] %v10528
        %10607 = vst [vmem:[%s288 + $0x190] sm:$0xff] %v10530
        %10608 = vst [vmem:[%s288 + $0x198] sm:$0xff] %v10532
        %10609 = vst [vmem:[%s288 + $0x1a0] sm:$0xff] %v10534
        %10610 = vst [vmem:[%s288 + $0x1a8] sm:$0xff] %v10536
        %10611 = vst [vmem:[%s288 + $0x1b0] sm:$0xff] %v10538
        %10612 = vst [vmem:[%s288 + $0x1b8] sm:$0xff] %v10540
        %10613 = vst [vmem:[%s288 + $0x1c0] sm:$0xff] %v10542
        %10614 = vst [vmem:[%s288 + $0x1c8] sm:$0xff] %v10544
        %10615 = vst [vmem:[%s288 + $0x1d0] sm:$0xff] %v10546
        %10616 = vst [vmem:[%s288 + $0x1d8] sm:$0xff] %v10548
        %10617 = vst [vmem:[%s288 + $0x1e0] sm:$0xff] %v10550
        %10618 = vst [vmem:[%s288 + $0x1e8] sm:$0xff] %v10552
        %10619 = vst [vmem:[%s288 + $0x1f0] sm:$0xff] %v10554
        %10620 = vst [vmem:[%s288 + $0x1f8] sm:$0xff] %v10556
        %s10621 = sand.u32 %s152, 1
        %s10622 = scalar_lea.sflag [#allocation3], %s10621
        %s10623 = sand.u32 %s152, 1
        %s10624 = smul.addr %s10623, 512
        %s10625 = scalar_lea.vmem [#allocation2], %s10624
        %s10626 = sand.u32 %s178, 1
        %s10627 = scalar_lea.sflag [#allocation5], %s10626
        %s10628 = sand.u32 %s178, 1
        %s10629 = smul.addr %s10628, 512
        %s10630 = scalar_lea.vmem [#allocation4], %s10629
        // Predicated region
        $region41: #{tpu_custom_call.1} parent=39 // pred_check
          %p10631 = pneg %p162
        $region42: #{tpu_custom_call.1} parent=39 // pred_check_branch
          %10633 = sbr.rel (%p10631) target = $region44
        $region43: #{tpu_custom_call.1} parent=39 // pred_region
          %s10634 = smul.u32 64, %s24
          %10636 = vsyncadd %s10622, 0
          %s10637 = smul.addr %s10634, 8
          %s10638 = scalar_lea.hbm %s5, %s10637
          %s10639 = sshll.u32 %s10625, 4
          %s10640 = int_to_ptr.vmem [resolvable:$true] %s10639
          %s10641 = sshll.u32 %s10638, 4
          %s10642 = int_to_ptr.hbm [resolvable:$true] %s10641
          %10647 = dma.vmem_to_hbm [thread:$0]  %s10640, 8192, %s10642, %s10622, 128, 128, 8
        $region44: #{tpu_custom_call.1} parent=39 // pred_fallthru
          _
        // Predicated region
        $region45: #{tpu_custom_call.1} parent=39 // pred_check
          %p10648 = pneg %p188
        $region46: #{tpu_custom_call.1} parent=39 // pred_check_branch
          %10650 = sbr.rel (%p10648) target = $region48
        $region47: #{tpu_custom_call.1} parent=39 // pred_region
          %s10651 = smul.u32 64, %s24
          %10653 = vsyncadd %s10627, 0
          %s10654 = smul.addr %s10651, 8
          %s10655 = scalar_lea.hbm %s6, %s10654
          %s10656 = sshll.u32 %s10630, 4
          %s10657 = int_to_ptr.vmem [resolvable:$true] %s10656
          %s10658 = sshll.u32 %s10655, 4
          %s10659 = int_to_ptr.hbm [resolvable:$true] %s10658
          %10664 = dma.vmem_to_hbm [thread:$0]  %s10657, 8192, %s10659, %s10627, 128, 128, 8
        $region48: #{tpu_custom_call.1} parent=39 // pred_fallthru
          _
      $region40: #{tpu_custom_call.1} parent=5 // pred_fallthru
        _
      %p10665 = scmp.le.s32.totalorder 2, %s19
      // Predicated region
      $region49: #{tpu_custom_call.1} parent=5 // pred_check
        %p10666 = pneg %p10665
      $region50: #{tpu_custom_call.1} parent=5 // pred_check_branch
        %10668 = sbr.rel (%p10666) target = $region52
      $region51: #{tpu_custom_call.1} parent=5 // pred_region
        %s10669 = ssub.s32 %s19, 2
        // Predicated region
        $region53: #{tpu_custom_call.1} parent=51 // pred_check
          %p10670 = pneg %p168
        $region54: #{tpu_custom_call.1} parent=51 // pred_check_branch
          %10672 = sbr.rel (%p10670) target = $region56
        $region55: #{tpu_custom_call.1} parent=51 // pred_region
          %s10673 = sand.u32 %s153, 1
          %s10674 = scalar_lea.sflag [#allocation3], %s10673
          %s10675 = sand.u32 %s153, 1
          %s10676 = smul.addr %s10675, 512
          %s10677 = scalar_lea.vmem [#allocation2], %s10676
          %10679 = dma.done %s10674, 8192
        $region56: #{tpu_custom_call.1} parent=51 // pred_fallthru
          _
        // Predicated region
        $region57: #{tpu_custom_call.1} parent=51 // pred_check
          %p10680 = pneg %p194
        $region58: #{tpu_custom_call.1} parent=51 // pred_check_branch
          %10682 = sbr.rel (%p10680) target = $region60
        $region59: #{tpu_custom_call.1} parent=51 // pred_region
          %s10683 = sand.u32 %s179, 1
          %s10684 = scalar_lea.sflag [#allocation5], %s10683
          %s10685 = sand.u32 %s179, 1
          %s10686 = smul.addr %s10685, 512
          %s10687 = scalar_lea.vmem [#allocation4], %s10686
          %10689 = dma.done %s10684, 8192
        $region60: #{tpu_custom_call.1} parent=51 // pred_fallthru
          _
      $region52: #{tpu_custom_call.1} parent=5 // pred_fallthru
        _
    $region6: #{tpu_custom_call.1} parent=1 // loop_footer
      %s23 = sadd.s32 1, %s19
    $region7: #{tpu_custom_call.1} parent=1 // loop_footer_branch
      %18 = sbr.rel target = $region3
    $region8: #{tpu_custom_call.1} parent=1 // loop_exit
      _
    %10690 = vsyncpa [#allocation3], 1
    %s10691 = scalar_lea.sflag [#allocation3], 1
    %10692 = vsyncpa %s10691, 1
    %10693 = vsyncpa [#allocation5], 1
    %s10694 = scalar_lea.sflag [#allocation5], 1
    %10695 = vsyncpa %s10694, 1

</llo_original>
